<compile_context>
chip_gen: v5e
topology: v5e:2x2
jax: 0.10.0
libtpu: 0.0.40
codegen_flags: <defaults>
</compile_context>

<pallas_src>
import functools

import jax
import jax.numpy as jnp
import numpy as np
from jax.experimental import pallas as pl
from jax.experimental.pallas import tpu as pltpu

LAT_DIM = 128
_SELU_ALPHA = 1.6732632423543772
_SELU_SCALE = 1.0507009873554805

_VMEM = pl.BlockSpec(memory_space=pltpu.MemorySpace.VMEM)


def _cdiv(a, b):
    return (a + b - 1) // b


def _round_up(a, b):
    return _cdiv(a, b) * b


def _selu(x):
    return _SELU_SCALE * jnp.where(x > 0.0, x, _SELU_ALPHA * (jnp.exp(x) - 1.0))


# ---------------------------------------------------------------------------
# Pallas kernels
# ---------------------------------------------------------------------------
def _gemm_kernel(a_ref, w_ref, b_ref, o_ref, *, act):
    acc = jnp.dot(a_ref[...], w_ref[...], preferred_element_type=jnp.float32)
    acc = acc + b_ref[...]
    if act == "relu":
        acc = jnp.maximum(acc, 0.0)
    elif act == "selu":
        acc = _selu(acc)
    o_ref[...] = acc


def gemm_bias_act(a, w_pad, b_pad, act="none", tm=512):
    """a:[M,K] f32 x w_pad:[K,Np] (Np % 128 == 0) + b_pad:[1,Np], fused act.

    Small M -> one whole-array block (launch-overhead dominated).
    Large M -> 1-D "parallel" grid over M tiles of tm rows so v7x can shard
    rows across its two TensorCores (harmless on single-TC v5e/v6e).
    """
    M, K = a.shape
    Np = w_pad.shape[1]
    kern = functools.partial(_gemm_kernel, act=act)

    if M < 2 * tm:
        return pl.pallas_call(
            kern,
            out_shape=jax.ShapeDtypeStruct((M, Np), jnp.float32),
            in_specs=[_VMEM, _VMEM, _VMEM],
            out_specs=_VMEM,
        )(a, w_pad, b_pad)

    Mp = _round_up(M, tm)
    if Mp != M:
        a = jnp.pad(a, ((0, Mp - M), (0, 0)))
    out = pl.pallas_call(
        kern,
        out_shape=jax.ShapeDtypeStruct((Mp, Np), jnp.float32),
        grid=(Mp // tm,),
        in_specs=[
            pl.BlockSpec((tm, K), lambda i: (i, 0)),
            pl.BlockSpec((K, Np), lambda i: (0, 0)),
            pl.BlockSpec((1, Np), lambda i: (0, 0)),
        ],
        out_specs=pl.BlockSpec((tm, Np), lambda i: (i, 0)),
        compiler_params=pltpu.CompilerParams(
            dimension_semantics=("parallel",)),
    )(a, w_pad, b_pad)
    return out[:M]


def _dense_stack_kernel(h_ref, eps_ref, y_ref,
                        w0_ref, b0_ref, w1_ref, b1_ref, w2_ref, b2_ref,
                        w3z_ref, w3y_ref, b3_ref, w4_ref, b4_ref,
                        zmean_ref, zlogvar_ref, z_ref, d_ref):
    """linear_0 -> (linear_1, linear_2) -> sampling -> linear_3 -> linear_4,
    all VMEM-resident in a single kernel invocation."""
    f32 = jnp.float32
    h = _selu(jnp.dot(h_ref[...], w0_ref[...], preferred_element_type=f32)
              + b0_ref[...])
    zm = jnp.dot(h, w1_ref[...], preferred_element_type=f32) + b1_ref[...]
    zl = jnp.dot(h, w2_ref[...], preferred_element_type=f32) + b2_ref[...]
    z = jnp.exp(0.5 * zl) * eps_ref[...] + zm
    # linear_3 on cat(z, y_arg): the y_arg column is applied as a rank-1 term,
    # which avoids an in-kernel concatenation.
    d = jnp.dot(z, w3z_ref[...], preferred_element_type=f32)
    d = _selu(d + y_ref[...] * w3y_ref[...] + b3_ref[...])
    d = _selu(jnp.dot(d, w4_ref[...], preferred_element_type=f32) + b4_ref[...])
    zmean_ref[...] = zm
    zlogvar_ref[...] = zl
    z_ref[...] = z
    d_ref[...] = d


def dense_stack(pp, h, eps, y_arg):
    B = h.shape[0]
    n4 = pp["lin4_w"].shape[1]
    out_shapes = (
        jax.ShapeDtypeStruct((B, LAT_DIM), jnp.float32),
        jax.ShapeDtypeStruct((B, LAT_DIM), jnp.float32),
        jax.ShapeDtypeStruct((B, LAT_DIM), jnp.float32),
        jax.ShapeDtypeStruct((B, n4), jnp.float32),
    )
    return pl.pallas_call(
        _dense_stack_kernel,
        out_shape=out_shapes,
        in_specs=[_VMEM] * 14,
        out_specs=(_VMEM, _VMEM, _VMEM, _VMEM),
    )(h, eps, y_arg.reshape(B, 1),
      pp["lin0_w"], pp["lin0_b"], pp["lin1_w"], pp["lin1_b"],
      pp["lin2_w"], pp["lin2_b"], pp["lin3_wz"], pp["lin3_wy"], pp["lin3_b"],
      pp["lin4_w"], pp["lin4_b"])


def _convt_softmax_kernel(a_ref, w_ref, b_ref, mask_ref, o_ref):
    """Final ConvTranspose2d (phase-packed GEMM) + ReLU + masked row-softmax,
    one batch element per grid step."""
    acc = jnp.dot(a_ref[0], w_ref[...], preferred_element_type=jnp.float32)
    acc = jnp.maximum(acc + b_ref[...], 0.0)          # ReLU, [R, Np]
    valid = mask_ref[...] > 0.5
    masked = jnp.where(valid, acc, -1e30)
    m = jnp.max(jnp.max(masked, axis=1, keepdims=True), axis=0, keepdims=True)
    e = jnp.where(valid, jnp.exp(acc - m), 0.0)
    s = jnp.sum(jnp.sum(e, axis=1, keepdims=True), axis=0, keepdims=True)
    r = pl.reciprocal(s, approx=True)                 # EUP slot (free vs VALU)
    r = r * (2.0 - s * r)                             # one Newton step
    o_ref[0] = e * r


# ---------------------------------------------------------------------------
# Conv / conv-transpose wrappers (thin XLA patch-extraction glue + Pallas GEMM)
# ---------------------------------------------------------------------------
def _im2col(x, kh, kw, sh, sw, keep_batch=False):
    """x:[B,H,W,C] -> patch matrix with K ordered (kh, kw, C)."""
    B, H, W, C = x.shape
    oh = (H - kh) // sh + 1
    ow = (W - kw) // sw + 1
    taps = []
    for i in range(kh):
        for j in range(kw):
            taps.append(x[:, i:i + sh * (oh - 1) + 1:sh,
                            j:j + sw * (ow - 1) + 1:sw, :])
    p = jnp.stack(taps, axis=3)                       # [B, OH, OW, kh*kw, C]
    if keep_batch:
        return p.reshape(B, oh * ow, kh * kw * C), oh, ow
    return p.reshape(B * oh * ow, kh * kw * C), oh, ow


def conv2d_nhwc(x, wmat, bias, oc, kh, kw, stride, act):
    """Valid-padding Conv2d on NHWC activations; GEMM (bias+act fused) in Pallas."""
    B = x.shape[0]
    a, oh, ow = _im2col(x, kh, kw, *stride)
    out = gemm_bias_act(a, wmat, bias, act)           # [M, Np] lane-dense
    return out[:, :oc].reshape(B, oh, ow, oc)


def _convt_geometry(x, kh, kw, stride, out_pad):
    B, H, W, C = x.shape
    sh, sw = stride
    OH = (H - 1) * sh + kh + out_pad[0]
    OW = (W - 1) * sw + kw + out_pad[1]
    kmh, kmw = _cdiv(kh, sh), _cdiv(kw, sw)           # per-phase (macro) kernel
    Mh, Mw = _cdiv(OH, sh), _cdiv(OW, sw)             # per-phase output extents
    xp = jnp.pad(x, ((0, 0), (kmh - 1, Mh - H), (kmw - 1, Mw - W), (0, 0)))
    return xp, OH, OW, kmh, kmw, Mh, Mw


def conv_transpose2d_nhwc(x, wmat, bias, oc, kh, kw, stride, out_pad, act):
    """ConvTranspose2d via sub-pixel (stride-phase) decomposition.

    All sh*sw output phases are packed into the GEMM N dimension, so each layer
    is one stride-1 GEMM over the UNdilated input (no 75%-zero dilated im2col),
    followed by a cheap XLA phase interleave + crop.
    """
    B = x.shape[0]
    sh, sw = stride
    xp, OH, OW, kmh, kmw, Mh, Mw = _convt_geometry(x, kh, kw, stride, out_pad)
    a, _, _ = _im2col(xp, kmh, kmw, 1, 1)             # [B*Mh*Mw, kmh*kmw*C]
    out = gemm_bias_act(a, wmat, bias, act)           # [B*Mh*Mw, Np]
    out = out[:, :sh * sw * oc].reshape(B, Mh, Mw, sh, sw, oc)
    out = out.transpose(0, 1, 3, 2, 4, 5).reshape(B, Mh * sh, Mw * sw, oc)
    return out[:, :OH, :OW, :]


def conv_transpose2d_softmax_nhwc(x, wmat, bias, oc, kh, kw, stride, out_pad):
    """Final ConvTranspose2d + ReLU + per-sample softmax, fused in one kernel.

    The softmax is computed on the phase-packed GEMM output with a
    compile-time validity mask (softmax commutes with the phase-interleave
    permutation), then the tiny interleave/crop happens in XLA.
    """
    B = x.shape[0]
    sh, sw = stride
    xp, OH, OW, kmh, kmw, Mh, Mw = _convt_geometry(x, kh, kw, stride, out_pad)
    a, _, _ = _im2col(xp, kmh, kmw, 1, 1, keep_batch=True)  # [B, R, K]
    R, K = a.shape[1], a.shape[2]
    Np = wmat.shape[1]

    # Compile-time constant mask: which (row, lane) entries are real outputs.
    r = np.arange(R)
    mh, mw = r // Mw, r % Mw
    n = np.arange(Np)
    g = n // oc
    ph, pw = g // sw, g % sw
    valid = ((n < sh * sw * oc)[None, :]
             & ((mh[:, None] * sh + ph[None, :]) < OH)
             & ((mw[:, None] * sw + pw[None, :]) < OW))
    mask = jnp.asarray(valid.astype(np.float32))

    out = pl.pallas_call(
        _convt_softmax_kernel,
        out_shape=jax.ShapeDtypeStruct((B, R, Np), jnp.float32),
        grid=(B,),
        in_specs=[
            pl.BlockSpec((1, R, K), lambda b: (b, 0, 0)),
            pl.BlockSpec((K, Np), lambda b: (0, 0)),
            pl.BlockSpec((1, Np), lambda b: (0, 0)),
            pl.BlockSpec((R, Np), lambda b: (0, 0)),
        ],
        out_specs=pl.BlockSpec((1, R, Np), lambda b: (b, 0, 0)),
        compiler_params=pltpu.CompilerParams(
            dimension_semantics=("parallel",)),
    )(a, wmat, bias, mask)

    out = out[:, :, :sh * sw * oc].reshape(B, Mh, Mw, sh, sw, oc)
    out = out.transpose(0, 1, 3, 2, 4, 5).reshape(B, Mh * sh, Mw * sw, oc)
    return out[:, :OH, :OW, 0]                        # [B, OH, OW]


# ---------------------------------------------------------------------------
# Parameters: PyTorch layouts -> one-time GEMM-ready re-layout
# ---------------------------------------------------------------------------
def init_params(key):
    """Synthetic parameters in the PyTorch layouts of MolecularICVAE."""
    def nrm(k, shape, scale=0.05):
        return scale * jax.random.normal(k, shape, dtype=jnp.float32)

    ks = jax.random.split(key, 22)
    return {
        "conv1_w": nrm(ks[0], (16, 1, 11, 3)),   "conv1_b": nrm(ks[1], (16,)),
        "conv2_w": nrm(ks[2], (32, 16, 11, 3)),  "conv2_b": nrm(ks[3], (32,)),
        "conv3_w": nrm(ks[4], (64, 32, 11, 3)),  "conv3_b": nrm(ks[5], (64,)),
        "lin0_w": nrm(ks[6], (256, 1344)),       "lin0_b": nrm(ks[7], (256,)),
        "lin1_w": nrm(ks[8], (LAT_DIM, 256)),    "lin1_b": nrm(ks[9], (LAT_DIM,)),
        "lin2_w": nrm(ks[10], (LAT_DIM, 256)),   "lin2_b": nrm(ks[11], (LAT_DIM,)),
        "lin3_w": nrm(ks[12], (256, 129)),       "lin3_b": nrm(ks[13], (256,)),
        "lin4_w": nrm(ks[14], (1344, 256)),      "lin4_b": nrm(ks[15], (1344,)),
        "conv4_w": nrm(ks[16], (64, 32, 11, 3)), "conv4_b": nrm(ks[17], (32,)),
        "conv5_w": nrm(ks[18], (32, 16, 11, 3)), "conv5_b": nrm(ks[19], (16,)),
        "conv6_w": nrm(ks[20], (16, 1, 11, 3)),  "conv6_b": nrm(ks[21], (1,)),
    }


def prepare_params(p):
    """One-time (eager, init-time) conversion of PyTorch-layout weights into
    channels-last, N-padded (128-lane) GEMM matrices; conv-transpose kernels
    are converted into phase-packed form.  Nothing here runs per forward."""

    def pad_n(w2d, b1d):
        k, n = w2d.shape
        npad = _round_up(n, 128)
        w2d = jnp.pad(w2d, ((0, 0), (0, npad - n)))
        b2d = jnp.pad(b1d, ((0, npad - n),)).reshape(1, npad)
        return w2d.astype(jnp.float32), b2d.astype(jnp.float32)

    def conv_wmat(w):                                 # [OC,C,kh,kw] -> [kh*kw*C, OC]
        oc, c, kh, kw = w.shape
        return jnp.transpose(w, (2, 3, 1, 0)).reshape(kh * kw * c, oc)

    def convT_phase_wmat(w, sh, sw):                  # [IC,OC,kh,kw] -> [kmh*kmw*IC, sh*sw*OC]
        ic, oc, kh, kw = w.shape
        kmh, kmw = _cdiv(kh, sh), _cdiv(kw, sw)
        w_np = np.asarray(w)
        m = np.zeros((kmh, kmw, ic, sh * sw * oc), dtype=np.float32)
        for a in range(kmh):
            for bb in range(kmw):
                for ph in range(sh):
                    for pw in range(sw):
                        i = sh * (kmh - 1 - a) + ph
                        j = sw * (kmw - 1 - bb) + pw
                        if i < kh and j < kw:
                            g = ph * sw + pw
                            m[a, bb, :, g * oc:(g + 1) * oc] = w_np[:, :, i, j]
        return jnp.asarray(m.reshape(kmh * kmw * ic, sh * sw * oc))

    pp = {}
    for name in ("conv1", "conv2", "conv3"):
        w, b = pad_n(conv_wmat(p[name + "_w"]), p[name + "_b"])
        pp[name + "_w"], pp[name + "_b"] = w, b
    for name in ("conv4", "conv5", "conv6"):
        w, b = pad_n(convT_phase_wmat(p[name + "_w"], 2, 2),
                     jnp.tile(p[name + "_b"], 4))     # bias repeated per phase
        pp[name + "_w"], pp[name + "_b"] = w, b

    # linear_0: rows reordered from PyTorch's (C,H,W) flatten to our (H,W,C).
    w0 = p["lin0_w"].reshape(256, 64, 7, 3).transpose(0, 2, 3, 1) \
                    .reshape(256, 1344).T
    pp["lin0_w"], pp["lin0_b"] = pad_n(w0, p["lin0_b"])
    pp["lin1_w"], pp["lin1_b"] = pad_n(p["lin1_w"].T, p["lin1_b"])
    pp["lin2_w"], pp["lin2_b"] = pad_n(p["lin2_w"].T, p["lin2_b"])
    # linear_3: split z columns from the y_arg column.
    pp["lin3_wz"], pp["lin3_b"] = pad_n(p["lin3_w"][:, :LAT_DIM].T, p["lin3_b"])
    pp["lin3_wy"] = p["lin3_w"][:, LAT_DIM:].T.astype(jnp.float32)   # [1, 256]
    # linear_4: columns reordered to (H,W,C) so the output reshapes to NHWC.
    w4 = p["lin4_w"].reshape(64, 7, 3, 256).transpose(1, 2, 0, 3) \
                    .reshape(1344, 256).T
    b4 = p["lin4_b"].reshape(64, 7, 3).transpose(1, 2, 0).reshape(1344)
    pp["lin4_w"], pp["lin4_b"] = pad_n(w4, b4)
    return pp


# ---------------------------------------------------------------------------
# Forward pass (mirrors MolecularICVAE.forward)
# ---------------------------------------------------------------------------
def molecular_icvae_forward(pp, x, y, y_arg, eps):
    """x: [B,1,119,33] (NCHW, as in PyTorch), y: [B,33], y_arg: [B], eps: [B,128]."""
    B = x.shape[0]
    # condition row appended along H, activations switched to channels-last
    x_nhwc = jnp.transpose(x, (0, 2, 3, 1))                          # [B,119,33,1]
    h = jnp.concatenate([x_nhwc, y.reshape(B, 1, -1, 1)], axis=1)    # [B,120,33,1]

    # ---- encoder ------------------------------------------------------------
    h = conv2d_nhwc(h, pp["conv1_w"], pp["conv1_b"], 16, 11, 3, (2, 2), "relu")
    h = conv2d_nhwc(h, pp["conv2_w"], pp["conv2_b"], 32, 11, 3, (2, 2), "relu")
    h = conv2d_nhwc(h, pp["conv3_w"], pp["conv3_b"], 64, 11, 3, (2, 2), "relu")
    h = h.reshape(B, -1)                                             # [B,1344] (H,W,C)

    # ---- fused dense stack + VAE sampling (single pallas_call) --------------
    z_mean, z_logvar, z, d = dense_stack(pp, h, eps, y_arg)

    # ---- decoder -------------------------------------------------------------
    d = d[:, :1344].reshape(B, 7, 3, 64)                             # NHWC
    d = conv_transpose2d_nhwc(d, pp["conv4_w"], pp["conv4_b"], 32, 11, 3,
                              (2, 2), (0, 0), "relu")
    d = conv_transpose2d_nhwc(d, pp["conv5_w"], pp["conv5_b"], 16, 11, 3,
                              (2, 2), (0, 1), "relu")
    # final layer: ConvTranspose2d + ReLU + softmax fused into one kernel
    dec = conv_transpose2d_softmax_nhwc(d, pp["conv6_w"], pp["conv6_b"], 1,
                                        11, 3, (2, 2), (1, 0))       # [B,120,33]
    return dec, z_mean, z_logvar, z


# ---------------------------------------------------------------------------
# Pure-JAX reference (for the numerical check only)
# ---------------------------------------------------------------------------
def reference_forward(p, x, y, y_arg, eps):
    hi = jax.lax.Precision.HIGHEST
    dn = ("NCHW", "OIHW", "NCHW")
    relu, selu = jax.nn.relu, jax.nn.selu
    B = x.shape[0]

    def conv(h, w, b, stride):
        o = jax.lax.conv_general_dilated(h, w, stride, "VALID",
                                         dimension_numbers=dn, precision=hi)
        return o + b.reshape(1, -1, 1, 1)

    def convT(h, w, b, stride, out_pad):
        Bh, ic, H, W = h.shape
        sh, sw = stride
        kh, kw = w.shape[2], w.shape[3]
        hd = jnp.zeros((Bh, ic, (H - 1) * sh + 1, (W - 1) * sw + 1), h.dtype)
        hd = hd.at[:, :, ::sh, ::sw].set(h)
        hp = jnp.pad(hd, ((0, 0), (0, 0),
                          (kh - 1, kh - 1 + out_pad[0]),
                          (kw - 1, kw - 1 + out_pad[1])))
        wc = jnp.transpose(w[:, :, ::-1, ::-1], (1, 0, 2, 3))
        o = jax.lax.conv_general_dilated(hp, wc, (1, 1), "VALID",
                                         dimension_numbers=dn, precision=hi)
        return o + b.reshape(1, -1, 1, 1)

    def lin(v, w, b):
        return jnp.dot(v, w.T, precision=hi) + b

    x_cond = jnp.concatenate([x, y.reshape(B, 1, 1, -1)], axis=2)
    h = relu(conv(x_cond, p["conv1_w"], p["conv1_b"], (2, 2)))
    h = relu(conv(h, p["conv2_w"], p["conv2_b"], (2, 2)))
    h = relu(conv(h, p["conv3_w"], p["conv3_b"], (2, 2)))
    h = h.reshape(B, -1)
    h = selu(lin(h, p["lin0_w"], p["lin0_b"]))
    z_mean = lin(h, p["lin1_w"], p["lin1_b"])
    z_logvar = lin(h, p["lin2_w"], p["lin2_b"])
    z = jnp.exp(0.5 * z_logvar) * eps + z_mean
    zc = jnp.concatenate([z, y_arg[:, None]], axis=1)
    d = selu(lin(zc, p["lin3_w"], p["lin3_b"]))
    d = selu(lin(d, p["lin4_w"], p["lin4_b"]))
    d = d.reshape(B, 64, 7, 3)
    d = relu(convT(d, p["conv4_w"], p["conv4_b"], (2, 2), (0, 0)))
    d = relu(convT(d, p["conv5_w"], p["conv5_b"], (2, 2), (0, 1)))
    d = relu(convT(d, p["conv6_w"], p["conv6_b"], (2, 2), (1, 0)))
    y1 = jax.nn.softmax(d.reshape(B, -1), axis=1)
    return y1.reshape(B, d.shape[2], d.shape[3]), z_mean, z_logvar, z


if __name__ == "__main__":
    key = jax.random.PRNGKey(0)
    kx, ky, kya, keps, kparams = jax.random.split(key, 5)

    B = 2
    x = jax.random.normal(kx, (B, 1, 119, 33), dtype=jnp.float32)
    y = jax.random.normal(ky, (B, 33), dtype=jnp.float32)
    y_arg = jax.random.normal(kya, (B,), dtype=jnp.float32)
    # epsilon = 0.01 * randn (precomputed deterministically, as in .sampling())
    eps = 0.01 * jax.random.normal(keps, (B, LAT_DIM), dtype=jnp.float32)

    params = init_params(kparams)
    prep = prepare_params(params)          # one-time weight re-layout

    fwd = jax.jit(molecular_icvae_forward)
    dec, z_mean, z_logvar, z = fwd(prep, x, y, y_arg, eps)
    jax.block_until_ready((dec, z_mean, z_logvar, z))

    assert dec.shape == (B, 120, 33)
    assert z_mean.shape == (B, LAT_DIM)
    assert z_logvar.shape == (B, LAT_DIM)
    assert z.shape == (B, LAT_DIM)
    # softmax rows sum to 1
    assert jnp.allclose(jnp.sum(dec.reshape(B, -1), axis=1), 1.0, atol=1e-4)

    # numerical check against a pure-JAX reference of the PyTorch module
    rdec, rzm, rzl, rz = jax.jit(reference_forward)(params, x, y, y_arg, eps)
    for got, ref in ((dec, rdec), (z_mean, rzm), (z_logvar, rzl), (z, rz)):
        assert jnp.allclose(got, ref, rtol=1e-2, atol=1e-5), \
            float(jnp.max(jnp.abs(got - ref)))

    print("KERNEL_OK")
</pallas_src>

<mosaic_0001>
module attributes {stable_mosaic.version = 11 : i64} {
  func.func @_gemm_kernel(%arg0: i32, %arg1: memref<512x33xf32, #tpu.memory_space<vmem>>, %arg2: memref<33x128xf32, #tpu.memory_space<vmem>>, %arg3: memref<1x128xf32, #tpu.memory_space<vmem>>, %arg4: memref<512x128xf32, #tpu.memory_space<vmem>>) attributes {dimension_semantics = [#tpu.dimension_semantics<parallel>], iteration_bounds = array<i64: 4>, scalar_prefetch = 0 : i64, scratch_operands = 0 : i64, tpu.core_type = #tpu.core_type<tc>, window_params = [{transform_indices = @transform_0, window_bounds = array<i64: 512, 33>}, {pipeline_mode = #tpu.pipeline_mode<synchronous>, transform_indices = @transform_1, window_bounds = array<i64: 33, 128>}, {pipeline_mode = #tpu.pipeline_mode<synchronous>, transform_indices = @transform_2, window_bounds = array<i64: 1, 128>}, {transform_indices = @transform_3, window_bounds = array<i64: 512, 128>}]} {
    %c0 = arith.constant 0 : index
    %c0_0 = arith.constant 0 : index
    %0 = vector.load %arg1[%c0, %c0_0] : memref<512x33xf32, #tpu.memory_space<vmem>>, vector<512x33xf32>
    %c0_1 = arith.constant 0 : index
    %c0_2 = arith.constant 0 : index
    %1 = vector.load %arg2[%c0_1, %c0_2] : memref<33x128xf32, #tpu.memory_space<vmem>>, vector<33x128xf32>
    %cst = arith.constant dense<0.000000e+00> : vector<512x128xf32>
    %2 = tpu.matmul %0, %1, %cst {dimension_numbers = #tpu.dot_dimension_numbers<[1], [0], [0], [1], [0, 0, 1, 1], [], []>} : vector<512x33xf32>, vector<33x128xf32>, vector<512x128xf32> -> vector<512x128xf32>
    %c0_3 = arith.constant 0 : index
    %c0_4 = arith.constant 0 : index
    %3 = vector.load %arg3[%c0_3, %c0_4] : memref<1x128xf32, #tpu.memory_space<vmem>>, vector<1x128xf32>
    %4 = vector.broadcast %3 : vector<1x128xf32> to vector<512x128xf32>
    %5 = arith.addf %2, %4 : vector<512x128xf32>
    %cst_5 = arith.constant 0.000000e+00 : f32
    %6 = vector.broadcast %cst_5 : f32 to vector<512x128xf32>
    %7 = arith.maximumf %5, %6 : vector<512x128xf32>
    %c0_6 = arith.constant 0 : index
    %c0_7 = arith.constant 0 : index
    %8 = vector.load %arg4[%c0_6, %c0_7] : memref<512x128xf32, #tpu.memory_space<vmem>>, vector<512x128xf32>
    tpu.vector_store %arg4[%c0_6, %c0_7], %7 {strides = array<i32>} : memref<512x128xf32, #tpu.memory_space<vmem>>, vector<512x128xf32>,
    return
  }
  func.func @transform_0(%arg0: i32) -> (i32, i32) {
    %c0_i32 = arith.constant 0 : i32
    %c0_i32_0 = arith.constant 0 : i32
    return %arg0, %c0_i32 : i32, i32
  }
  func.func @transform_1(%arg0: i32) -> (i32, i32) {
    %c0_i32 = arith.constant 0 : i32
    %c0_i32_0 = arith.constant 0 : i32
    %c0_i32_1 = arith.constant 0 : i32
    return %c0_i32, %c0_i32_0 : i32, i32
  }
  func.func @transform_2(%arg0: i32) -> (i32, i32) {
    %c0_i32 = arith.constant 0 : i32
    %c0_i32_0 = arith.constant 0 : i32
    %c0_i32_1 = arith.constant 0 : i32
    return %c0_i32, %c0_i32_0 : i32, i32
  }
  func.func @transform_3(%arg0: i32) -> (i32, i32) {
    %c0_i32 = arith.constant 0 : i32
    %c0_i32_0 = arith.constant 0 : i32
    return %arg0, %c0_i32 : i32, i32
  }
}

module attributes {stable_mosaic.version = 11 : i64} {
  func.func @_gemm_kernel(%arg0: memref<322x528xf32, #tpu.memory_space<vmem>>, %arg1: memref<528x128xf32, #tpu.memory_space<vmem>>, %arg2: memref<1x128xf32, #tpu.memory_space<vmem>>, %arg3: memref<322x128xf32, #tpu.memory_space<vmem>>) attributes {dimension_semantics = [], scalar_prefetch = 0 : i64, scratch_operands = 0 : i64, tpu.core_type = #tpu.core_type<tc>} {
    %c0 = arith.constant 0 : index
    %c0_0 = arith.constant 0 : index
    %0 = vector.load %arg0[%c0, %c0_0] : memref<322x528xf32, #tpu.memory_space<vmem>>, vector<322x528xf32>
    %c0_1 = arith.constant 0 : index
    %c0_2 = arith.constant 0 : index
    %1 = vector.load %arg1[%c0_1, %c0_2] : memref<528x128xf32, #tpu.memory_space<vmem>>, vector<528x128xf32>
    %cst = arith.constant dense<0.000000e+00> : vector<322x128xf32>
    %2 = tpu.matmul %0, %1, %cst {dimension_numbers = #tpu.dot_dimension_numbers<[1], [0], [0], [1], [0, 0, 1, 1], [], []>} : vector<322x528xf32>, vector<528x128xf32>, vector<322x128xf32> -> vector<322x128xf32>
    %c0_3 = arith.constant 0 : index
    %c0_4 = arith.constant 0 : index
    %3 = vector.load %arg2[%c0_3, %c0_4] : memref<1x128xf32, #tpu.memory_space<vmem>>, vector<1x128xf32>
    %4 = vector.broadcast %3 : vector<1x128xf32> to vector<322x128xf32>
    %5 = arith.addf %2, %4 : vector<322x128xf32>
    %cst_5 = arith.constant 0.000000e+00 : f32
    %6 = vector.broadcast %cst_5 : f32 to vector<322x128xf32>
    %7 = arith.maximumf %5, %6 : vector<322x128xf32>
    %c0_6 = arith.constant 0 : index
    %c0_7 = arith.constant 0 : index
    %8 = vector.load %arg3[%c0_6, %c0_7] : memref<322x128xf32, #tpu.memory_space<vmem>>, vector<322x128xf32>
    tpu.vector_store %arg3[%c0_6, %c0_7], %7 {strides = array<i32>} : memref<322x128xf32, #tpu.memory_space<vmem>>, vector<322x128xf32>,
    return
  }
}

module attributes {stable_mosaic.version = 11 : i64} {
  func.func @_gemm_kernel(%arg0: memref<42x1056xf32, #tpu.memory_space<vmem>>, %arg1: memref<1056x128xf32, #tpu.memory_space<vmem>>, %arg2: memref<1x128xf32, #tpu.memory_space<vmem>>, %arg3: memref<42x128xf32, #tpu.memory_space<vmem>>) attributes {dimension_semantics = [], scalar_prefetch = 0 : i64, scratch_operands = 0 : i64, tpu.core_type = #tpu.core_type<tc>} {
    %c0 = arith.constant 0 : index
    %c0_0 = arith.constant 0 : index
    %0 = vector.load %arg0[%c0, %c0_0] : memref<42x1056xf32, #tpu.memory_space<vmem>>, vector<42x1056xf32>
    %c0_1 = arith.constant 0 : index
    %c0_2 = arith.constant 0 : index
    %1 = vector.load %arg1[%c0_1, %c0_2] : memref<1056x128xf32, #tpu.memory_space<vmem>>, vector<1056x128xf32>
    %cst = arith.constant dense<0.000000e+00> : vector<42x128xf32>
    %2 = tpu.matmul %0, %1, %cst {dimension_numbers = #tpu.dot_dimension_numbers<[1], [0], [0], [1], [0, 0, 1, 1], [], []>} : vector<42x1056xf32>, vector<1056x128xf32>, vector<42x128xf32> -> vector<42x128xf32>
    %c0_3 = arith.constant 0 : index
    %c0_4 = arith.constant 0 : index
    %3 = vector.load %arg2[%c0_3, %c0_4] : memref<1x128xf32, #tpu.memory_space<vmem>>, vector<1x128xf32>
    %4 = vector.broadcast %3 : vector<1x128xf32> to vector<42x128xf32>
    %5 = arith.addf %2, %4 : vector<42x128xf32>
    %cst_5 = arith.constant 0.000000e+00 : f32
    %6 = vector.broadcast %cst_5 : f32 to vector<42x128xf32>
    %7 = arith.maximumf %5, %6 : vector<42x128xf32>
    %c0_6 = arith.constant 0 : index
    %c0_7 = arith.constant 0 : index
    %8 = vector.load %arg3[%c0_6, %c0_7] : memref<42x128xf32, #tpu.memory_space<vmem>>, vector<42x128xf32>
    tpu.vector_store %arg3[%c0_6, %c0_7], %7 {strides = array<i32>} : memref<42x128xf32, #tpu.memory_space<vmem>>, vector<42x128xf32>,
    return
  }
}

module attributes {stable_mosaic.version = 11 : i64} {
  func.func @_dense_stack_kernel(%arg0: memref<2x1344xf32, #tpu.memory_space<vmem>>, %arg1: memref<2x128xf32, #tpu.memory_space<vmem>>, %arg2: memref<2x1xf32, #tpu.memory_space<vmem>>, %arg3: memref<1344x256xf32, #tpu.memory_space<vmem>>, %arg4: memref<1x256xf32, #tpu.memory_space<vmem>>, %arg5: memref<256x128xf32, #tpu.memory_space<vmem>>, %arg6: memref<1x128xf32, #tpu.memory_space<vmem>>, %arg7: memref<256x128xf32, #tpu.memory_space<vmem>>, %arg8: memref<1x128xf32, #tpu.memory_space<vmem>>, %arg9: memref<128x256xf32, #tpu.memory_space<vmem>>, %arg10: memref<1x256xf32, #tpu.memory_space<vmem>>, %arg11: memref<1x256xf32, #tpu.memory_space<vmem>>, %arg12: memref<256x1408xf32, #tpu.memory_space<vmem>>, %arg13: memref<1x1408xf32, #tpu.memory_space<vmem>>, %arg14: memref<2x128xf32, #tpu.memory_space<vmem>>, %arg15: memref<2x128xf32, #tpu.memory_space<vmem>>, %arg16: memref<2x128xf32, #tpu.memory_space<vmem>>, %arg17: memref<2x1408xf32, #tpu.memory_space<vmem>>) attributes {dimension_semantics = [], scalar_prefetch = 0 : i64, scratch_operands = 0 : i64, tpu.core_type = #tpu.core_type<tc>} {
    %c0 = arith.constant 0 : index
    %c0_0 = arith.constant 0 : index
    %0 = vector.load %arg0[%c0, %c0_0] : memref<2x1344xf32, #tpu.memory_space<vmem>>, vector<2x1344xf32>
    %c0_1 = arith.constant 0 : index
    %c0_2 = arith.constant 0 : index
    %1 = vector.load %arg3[%c0_1, %c0_2] : memref<1344x256xf32, #tpu.memory_space<vmem>>, vector<1344x256xf32>
    %cst = arith.constant dense<0.000000e+00> : vector<2x256xf32>
    %2 = tpu.matmul %0, %1, %cst {dimension_numbers = #tpu.dot_dimension_numbers<[1], [0], [0], [1], [0, 0, 1, 1], [], []>} : vector<2x1344xf32>, vector<1344x256xf32>, vector<2x256xf32> -> vector<2x256xf32>
    %c0_3 = arith.constant 0 : index
    %c0_4 = arith.constant 0 : index
    %3 = vector.load %arg4[%c0_3, %c0_4] : memref<1x256xf32, #tpu.memory_space<vmem>>, vector<1x256xf32>
    %4 = vector.broadcast %3 : vector<1x256xf32> to vector<2x256xf32>
    %5 = arith.addf %2, %4 : vector<2x256xf32>
    %cst_5 = arith.constant 0.000000e+00 : f32
    %6 = vector.broadcast %cst_5 : f32 to vector<2x256xf32>
    %7 = arith.cmpf ogt, %5, %6 : vector<2x256xf32>
    %8 = math.exp %5 : vector<2x256xf32>
    %cst_6 = arith.constant 1.000000e+00 : f32
    %9 = vector.broadcast %cst_6 : f32 to vector<2x256xf32>
    %10 = arith.subf %8, %9 : vector<2x256xf32>
    %cst_7 = arith.constant 1.67326319 : f32
    %11 = vector.broadcast %cst_7 : f32 to vector<2x256xf32>
    %12 = arith.mulf %11, %10 : vector<2x256xf32>
    %13 = arith.select %7, %5, %12 : vector<2x256xi1>, vector<2x256xf32>
    %cst_8 = arith.constant 1.05070102 : f32
    %14 = vector.broadcast %cst_8 : f32 to vector<2x256xf32>
    %15 = arith.mulf %14, %13 : vector<2x256xf32>
    %c0_9 = arith.constant 0 : index
    %c0_10 = arith.constant 0 : index
    %16 = vector.load %arg5[%c0_9, %c0_10] : memref<256x128xf32, #tpu.memory_space<vmem>>, vector<256x128xf32>
    %cst_11 = arith.constant dense<0.000000e+00> : vector<2x128xf32>
    %17 = tpu.matmul %15, %16, %cst_11 {dimension_numbers = #tpu.dot_dimension_numbers<[1], [0], [0], [1], [0, 0, 1, 1], [], []>} : vector<2x256xf32>, vector<256x128xf32>, vector<2x128xf32> -> vector<2x128xf32>
    %c0_12 = arith.constant 0 : index
    %c0_13 = arith.constant 0 : index
    %18 = vector.load %arg6[%c0_12, %c0_13] : memref<1x128xf32, #tpu.memory_space<vmem>>, vector<1x128xf32>
    %19 = vector.broadcast %18 : vector<1x128xf32> to vector<2x128xf32>
    %20 = arith.addf %17, %19 : vector<2x128xf32>
    %c0_14 = arith.constant 0 : index
    %c0_15 = arith.constant 0 : index
    %21 = vector.load %arg7[%c0_14, %c0_15] : memref<256x128xf32, #tpu.memory_space<vmem>>, vector<256x128xf32>
    %cst_16 = arith.constant dense<0.000000e+00> : vector<2x128xf32>
    %22 = tpu.matmul %15, %21, %cst_16 {dimension_numbers = #tpu.dot_dimension_numbers<[1], [0], [0], [1], [0, 0, 1, 1], [], []>} : vector<2x256xf32>, vector<256x128xf32>, vector<2x128xf32> -> vector<2x128xf32>
    %c0_17 = arith.constant 0 : index
    %c0_18 = arith.constant 0 : index
    %23 = vector.load %arg8[%c0_17, %c0_18] : memref<1x128xf32, #tpu.memory_space<vmem>>, vector<1x128xf32>
    %24 = vector.broadcast %23 : vector<1x128xf32> to vector<2x128xf32>
    %25 = arith.addf %22, %24 : vector<2x128xf32>
    %cst_19 = arith.constant 5.000000e-01 : f32
    %26 = vector.broadcast %cst_19 : f32 to vector<2x128xf32>
    %27 = arith.mulf %26, %25 : vector<2x128xf32>
    %28 = math.exp %27 : vector<2x128xf32>
    %c0_20 = arith.constant 0 : index
    %c0_21 = arith.constant 0 : index
    %29 = vector.load %arg1[%c0_20, %c0_21] : memref<2x128xf32, #tpu.memory_space<vmem>>, vector<2x128xf32>
    %30 = arith.mulf %28, %29 : vector<2x128xf32>
    %31 = arith.addf %30, %20 : vector<2x128xf32>
    %c0_22 = arith.constant 0 : index
    %c0_23 = arith.constant 0 : index
    %32 = vector.load %arg9[%c0_22, %c0_23] : memref<128x256xf32, #tpu.memory_space<vmem>>, vector<128x256xf32>
    %cst_24 = arith.constant dense<0.000000e+00> : vector<2x256xf32>
    %33 = tpu.matmul %31, %32, %cst_24 {dimension_numbers = #tpu.dot_dimension_numbers<[1], [0], [0], [1], [0, 0, 1, 1], [], []>} : vector<2x128xf32>, vector<128x256xf32>, vector<2x256xf32> -> vector<2x256xf32>
    %c0_25 = arith.constant 0 : index
    %c0_26 = arith.constant 0 : index
    %34 = vector.load %arg2[%c0_25, %c0_26] : memref<2x1xf32, #tpu.memory_space<vmem>>, vector<2x1xf32>
    %c0_27 = arith.constant 0 : index
    %c0_28 = arith.constant 0 : index
    %35 = vector.load %arg10[%c0_27, %c0_28] : memref<1x256xf32, #tpu.memory_space<vmem>>, vector<1x256xf32>
    %36 = vector.broadcast %34 : vector<2x1xf32> to vector<2x256xf32>
    %37 = vector.broadcast %35 : vector<1x256xf32> to vector<2x256xf32>
    %38 = arith.mulf %36, %37 : vector<2x256xf32>
    %39 = arith.addf %33, %38 : vector<2x256xf32>
    %c0_29 = arith.constant 0 : index
    %c0_30 = arith.constant 0 : index
    %40 = vector.load %arg11[%c0_29, %c0_30] : memref<1x256xf32, #tpu.memory_space<vmem>>, vector<1x256xf32>
    %41 = vector.broadcast %40 : vector<1x256xf32> to vector<2x256xf32>
    %42 = arith.addf %39, %41 : vector<2x256xf32>
    %cst_31 = arith.constant 0.000000e+00 : f32
    %43 = vector.broadcast %cst_31 : f32 to vector<2x256xf32>
    %44 = arith.cmpf ogt, %42, %43 : vector<2x256xf32>
    %45 = math.exp %42 : vector<2x256xf32>
    %cst_32 = arith.constant 1.000000e+00 : f32
    %46 = vector.broadcast %cst_32 : f32 to vector<2x256xf32>
    %47 = arith.subf %45, %46 : vector<2x256xf32>
    %cst_33 = arith.constant 1.67326319 : f32
    %48 = vector.broadcast %cst_33 : f32 to vector<2x256xf32>
    %49 = arith.mulf %48, %47 : vector<2x256xf32>
    %50 = arith.select %44, %42, %49 : vector<2x256xi1>, vector<2x256xf32>
    %cst_34 = arith.constant 1.05070102 : f32
    %51 = vector.broadcast %cst_34 : f32 to vector<2x256xf32>
    %52 = arith.mulf %51, %50 : vector<2x256xf32>
    %c0_35 = arith.constant 0 : index
    %c0_36 = arith.constant 0 : index
    %53 = vector.load %arg12[%c0_35, %c0_36] : memref<256x1408xf32, #tpu.memory_space<vmem>>, vector<256x1408xf32>
    %cst_37 = arith.constant dense<0.000000e+00> : vector<2x1408xf32>
    %54 = tpu.matmul %52, %53, %cst_37 {dimension_numbers = #tpu.dot_dimension_numbers<[1], [0], [0], [1], [0, 0, 1, 1], [], []>} : vector<2x256xf32>, vector<256x1408xf32>, vector<2x1408xf32> -> vector<2x1408xf32>
    %c0_38 = arith.constant 0 : index
    %c0_39 = arith.constant 0 : index
    %55 = vector.load %arg13[%c0_38, %c0_39] : memref<1x1408xf32, #tpu.memory_space<vmem>>, vector<1x1408xf32>
    %56 = vector.broadcast %55 : vector<1x1408xf32> to vector<2x1408xf32>
    %57 = arith.addf %54, %56 : vector<2x1408xf32>
    %cst_40 = arith.constant 0.000000e+00 : f32
    %58 = vector.broadcast %cst_40 : f32 to vector<2x1408xf32>
    %59 = arith.cmpf ogt, %57, %58 : vector<2x1408xf32>
    %60 = math.exp %57 : vector<2x1408xf32>
    %cst_41 = arith.constant 1.000000e+00 : f32
    %61 = vector.broadcast %cst_41 : f32 to vector<2x1408xf32>
    %62 = arith.subf %60, %61 : vector<2x1408xf32>
    %cst_42 = arith.constant 1.67326319 : f32
    %63 = vector.broadcast %cst_42 : f32 to vector<2x1408xf32>
    %64 = arith.mulf %63, %62 : vector<2x1408xf32>
    %65 = arith.select %59, %57, %64 : vector<2x1408xi1>, vector<2x1408xf32>
    %cst_43 = arith.constant 1.05070102 : f32
    %66 = vector.broadcast %cst_43 : f32 to vector<2x1408xf32>
    %67 = arith.mulf %66, %65 : vector<2x1408xf32>
    %c0_44 = arith.constant 0 : index
    %c0_45 = arith.constant 0 : index
    %68 = vector.load %arg14[%c0_44, %c0_45] : memref<2x128xf32, #tpu.memory_space<vmem>>, vector<2x128xf32>
    tpu.vector_store %arg14[%c0_44, %c0_45], %20 {strides = array<i32>} : memref<2x128xf32, #tpu.memory_space<vmem>>, vector<2x128xf32>,
    %c0_46 = arith.constant 0 : index
    %c0_47 = arith.constant 0 : index
    %69 = vector.load %arg15[%c0_46, %c0_47] : memref<2x128xf32, #tpu.memory_space<vmem>>, vector<2x128xf32>
    tpu.vector_store %arg15[%c0_46, %c0_47], %25 {strides = array<i32>} : memref<2x128xf32, #tpu.memory_space<vmem>>, vector<2x128xf32>,
    %c0_48 = arith.constant 0 : index
    %c0_49 = arith.constant 0 : index
    %70 = vector.load %arg16[%c0_48, %c0_49] : memref<2x128xf32, #tpu.memory_space<vmem>>, vector<2x128xf32>
    tpu.vector_store %arg16[%c0_48, %c0_49], %31 {strides = array<i32>} : memref<2x128xf32, #tpu.memory_space<vmem>>, vector<2x128xf32>,
    %c0_50 = arith.constant 0 : index
    %c0_51 = arith.constant 0 : index
    %71 = vector.load %arg17[%c0_50, %c0_51] : memref<2x1408xf32, #tpu.memory_space<vmem>>, vector<2x1408xf32>
    tpu.vector_store %arg17[%c0_50, %c0_51], %67 {strides = array<i32>} : memref<2x1408xf32, #tpu.memory_space<vmem>>, vector<2x1408xf32>,
    return
  }
}

module attributes {stable_mosaic.version = 11 : i64} {
  func.func @_gemm_kernel(%arg0: memref<96x768xf32, #tpu.memory_space<vmem>>, %arg1: memref<768x128xf32, #tpu.memory_space<vmem>>, %arg2: memref<1x128xf32, #tpu.memory_space<vmem>>, %arg3: memref<96x128xf32, #tpu.memory_space<vmem>>) attributes {dimension_semantics = [], scalar_prefetch = 0 : i64, scratch_operands = 0 : i64, tpu.core_type = #tpu.core_type<tc>} {
    %c0 = arith.constant 0 : index
    %c0_0 = arith.constant 0 : index
    %0 = vector.load %arg0[%c0, %c0_0] : memref<96x768xf32, #tpu.memory_space<vmem>>, vector<96x768xf32>
    %c0_1 = arith.constant 0 : index
    %c0_2 = arith.constant 0 : index
    %1 = vector.load %arg1[%c0_1, %c0_2] : memref<768x128xf32, #tpu.memory_space<vmem>>, vector<768x128xf32>
    %cst = arith.constant dense<0.000000e+00> : vector<96x128xf32>
    %2 = tpu.matmul %0, %1, %cst {dimension_numbers = #tpu.dot_dimension_numbers<[1], [0], [0], [1], [0, 0, 1, 1], [], []>} : vector<96x768xf32>, vector<768x128xf32>, vector<96x128xf32> -> vector<96x128xf32>
    %c0_3 = arith.constant 0 : index
    %c0_4 = arith.constant 0 : index
    %3 = vector.load %arg2[%c0_3, %c0_4] : memref<1x128xf32, #tpu.memory_space<vmem>>, vector<1x128xf32>
    %4 = vector.broadcast %3 : vector<1x128xf32> to vector<96x128xf32>
    %5 = arith.addf %2, %4 : vector<96x128xf32>
    %cst_5 = arith.constant 0.000000e+00 : f32
    %6 = vector.broadcast %cst_5 : f32 to vector<96x128xf32>
    %7 = arith.maximumf %5, %6 : vector<96x128xf32>
    %c0_6 = arith.constant 0 : index
    %c0_7 = arith.constant 0 : index
    %8 = vector.load %arg3[%c0_6, %c0_7] : memref<96x128xf32, #tpu.memory_space<vmem>>, vector<96x128xf32>
    tpu.vector_store %arg3[%c0_6, %c0_7], %7 {strides = array<i32>} : memref<96x128xf32, #tpu.memory_space<vmem>>, vector<96x128xf32>,
    return
  }
}

module attributes {stable_mosaic.version = 11 : i64} {
  func.func @_gemm_kernel(%arg0: memref<448x384xf32, #tpu.memory_space<vmem>>, %arg1: memref<384x128xf32, #tpu.memory_space<vmem>>, %arg2: memref<1x128xf32, #tpu.memory_space<vmem>>, %arg3: memref<448x128xf32, #tpu.memory_space<vmem>>) attributes {dimension_semantics = [], scalar_prefetch = 0 : i64, scratch_operands = 0 : i64, tpu.core_type = #tpu.core_type<tc>} {
    %c0 = arith.constant 0 : index
    %c0_0 = arith.constant 0 : index
    %0 = vector.load %arg0[%c0, %c0_0] : memref<448x384xf32, #tpu.memory_space<vmem>>, vector<448x384xf32>
    %c0_1 = arith.constant 0 : index
    %c0_2 = arith.constant 0 : index
    %1 = vector.load %arg1[%c0_1, %c0_2] : memref<384x128xf32, #tpu.memory_space<vmem>>, vector<384x128xf32>
    %cst = arith.constant dense<0.000000e+00> : vector<448x128xf32>
    %2 = tpu.matmul %0, %1, %cst {dimension_numbers = #tpu.dot_dimension_numbers<[1], [0], [0], [1], [0, 0, 1, 1], [], []>} : vector<448x384xf32>, vector<384x128xf32>, vector<448x128xf32> -> vector<448x128xf32>
    %c0_3 = arith.constant 0 : index
    %c0_4 = arith.constant 0 : index
    %3 = vector.load %arg2[%c0_3, %c0_4] : memref<1x128xf32, #tpu.memory_space<vmem>>, vector<1x128xf32>
    %4 = vector.broadcast %3 : vector<1x128xf32> to vector<448x128xf32>
    %5 = arith.addf %2, %4 : vector<448x128xf32>
    %cst_5 = arith.constant 0.000000e+00 : f32
    %6 = vector.broadcast %cst_5 : f32 to vector<448x128xf32>
    %7 = arith.maximumf %5, %6 : vector<448x128xf32>
    %c0_6 = arith.constant 0 : index
    %c0_7 = arith.constant 0 : index
    %8 = vector.load %arg3[%c0_6, %c0_7] : memref<448x128xf32, #tpu.memory_space<vmem>>, vector<448x128xf32>
    tpu.vector_store %arg3[%c0_6, %c0_7], %7 {strides = array<i32>} : memref<448x128xf32, #tpu.memory_space<vmem>>, vector<448x128xf32>,
    return
  }
}

module attributes {stable_mosaic.version = 11 : i64} {
  func.func @_convt_softmax_kernel(%arg0: i32, %arg1: memref<1x1020x192xf32, #tpu.memory_space<vmem>>, %arg2: memref<192x128xf32, #tpu.memory_space<vmem>>, %arg3: memref<1x128xf32, #tpu.memory_space<vmem>>, %arg4: memref<1020x128xf32, #tpu.memory_space<vmem>>, %arg5: memref<1x1020x128xf32, #tpu.memory_space<vmem>>) attributes {dimension_semantics = [#tpu.dimension_semantics<parallel>], iteration_bounds = array<i64: 2>, scalar_prefetch = 0 : i64, scratch_operands = 0 : i64, tpu.core_type = #tpu.core_type<tc>, window_params = [{transform_indices = @transform_0, window_bounds = array<i64: 1, 1020, 192>}, {pipeline_mode = #tpu.pipeline_mode<synchronous>, transform_indices = @transform_1, window_bounds = array<i64: 192, 128>}, {pipeline_mode = #tpu.pipeline_mode<synchronous>, transform_indices = @transform_2, window_bounds = array<i64: 1, 128>}, {pipeline_mode = #tpu.pipeline_mode<synchronous>, transform_indices = @transform_3, window_bounds = array<i64: 1020, 128>}, {transform_indices = @transform_4, window_bounds = array<i64: 1, 1020, 128>}]} {
    %c0 = arith.constant 0 : index
    %c0_0 = arith.constant 0 : index
    %c0_1 = arith.constant 0 : index
    %0 = vector.load %arg1[%c0, %c0_0, %c0_1] : memref<1x1020x192xf32, #tpu.memory_space<vmem>>, vector<1x1020x192xf32>
    %1 = vector.shape_cast %0 : vector<1x1020x192xf32> to vector<1020x192xf32>
    %c0_2 = arith.constant 0 : index
    %c0_3 = arith.constant 0 : index
    %2 = vector.load %arg2[%c0_2, %c0_3] : memref<192x128xf32, #tpu.memory_space<vmem>>, vector<192x128xf32>
    %cst = arith.constant dense<0.000000e+00> : vector<1020x128xf32>
    %3 = tpu.matmul %1, %2, %cst {dimension_numbers = #tpu.dot_dimension_numbers<[1], [0], [0], [1], [0, 0, 1, 1], [], []>} : vector<1020x192xf32>, vector<192x128xf32>, vector<1020x128xf32> -> vector<1020x128xf32>
    %c0_4 = arith.constant 0 : index
    %c0_5 = arith.constant 0 : index
    %4 = vector.load %arg3[%c0_4, %c0_5] : memref<1x128xf32, #tpu.memory_space<vmem>>, vector<1x128xf32>
    %5 = vector.broadcast %4 : vector<1x128xf32> to vector<1020x128xf32>
    %6 = arith.addf %3, %5 : vector<1020x128xf32>
    %cst_6 = arith.constant 0.000000e+00 : f32
    %7 = vector.broadcast %cst_6 : f32 to vector<1020x128xf32>
    %8 = arith.maximumf %6, %7 : vector<1020x128xf32>
    %c0_7 = arith.constant 0 : index
    %c0_8 = arith.constant 0 : index
    %9 = vector.load %arg4[%c0_7, %c0_8] : memref<1020x128xf32, #tpu.memory_space<vmem>>, vector<1020x128xf32>
    %cst_9 = arith.constant 5.000000e-01 : f32
    %10 = vector.broadcast %cst_9 : f32 to vector<1020x128xf32>
    %11 = arith.cmpf ogt, %9, %10 : vector<1020x128xf32>
    %cst_10 = arith.constant -1.000000e+30 : f32
    %12 = vector.broadcast %cst_10 : f32 to vector<1020x128xf32>
    %13 = arith.select %11, %8, %12 : vector<1020x128xi1>, vector<1020x128xf32>
    %cst_11 = arith.constant dense<0xFF800000> : vector<1020xf32>
    %14 = vector.multi_reduction <maximumf>, %13, %cst_11 [1] : vector<1020x128xf32> to vector<1020xf32>
    %15 = vector.shape_cast %14 : vector<1020xf32> to vector<1020x1xf32>
    %cst_12 = arith.constant dense<0xFF800000> : vector<1xf32>
    %16 = vector.multi_reduction <maximumf>, %15, %cst_12 [0] : vector<1020x1xf32> to vector<1xf32>
    %17 = vector.shape_cast %16 : vector<1xf32> to vector<1x1xf32>
    %18 = vector.broadcast %17 : vector<1x1xf32> to vector<1020x128xf32>
    %19 = arith.subf %8, %18 : vector<1020x128xf32>
    %20 = math.exp %19 : vector<1020x128xf32>
    %cst_13 = arith.constant 0.000000e+00 : f32
    %21 = vector.broadcast %cst_13 : f32 to vector<1020x128xf32>
    %22 = arith.select %11, %20, %21 : vector<1020x128xi1>, vector<1020x128xf32>
    %cst_14 = arith.constant dense<0.000000e+00> : vector<1020xf32>
    %23 = vector.multi_reduction <add>, %22, %cst_14 [1] : vector<1020x128xf32> to vector<1020xf32>
    %24 = vector.shape_cast %23 : vector<1020xf32> to vector<1020x1xf32>
    %cst_15 = arith.constant dense<0.000000e+00> : vector<1xf32>
    %25 = vector.multi_reduction <add>, %24, %cst_15 [0] : vector<1020x1xf32> to vector<1xf32>
    %26 = vector.shape_cast %25 : vector<1xf32> to vector<1x1xf32>
    %27 = tpu.reciprocal %26 {approx = true} : vector<1x1xf32> -> vector<1x1xf32>
    %28 = arith.mulf %26, %27 : vector<1x1xf32>
    %cst_16 = arith.constant 2.000000e+00 : f32
    %29 = vector.broadcast %cst_16 : f32 to vector<1x1xf32>
    %30 = arith.subf %29, %28 : vector<1x1xf32>
    %31 = arith.mulf %27, %30 : vector<1x1xf32>
    %32 = vector.broadcast %31 : vector<1x1xf32> to vector<1020x128xf32>
    %33 = arith.mulf %22, %32 : vector<1020x128xf32>
    %c0_17 = arith.constant 0 : index
    %c0_18 = arith.constant 0 : index
    %c0_19 = arith.constant 0 : index
    %34 = vector.load %arg5[%c0_17, %c0_18, %c0_19] : memref<1x1020x128xf32, #tpu.memory_space<vmem>>, vector<1x1020x128xf32>
    %35 = vector.shape_cast %34 : vector<1x1020x128xf32> to vector<1020x128xf32>
    %36 = vector.shape_cast %33 : vector<1020x128xf32> to vector<1x1020x128xf32>
    tpu.vector_store %arg5[%c0_17, %c0_18, %c0_19], %36 {strides = array<i32>} : memref<1x1020x128xf32, #tpu.memory_space<vmem>>, vector<1x1020x128xf32>,
    return
  }
  func.func @transform_0(%arg0: i32) -> (i32, i32, i32) {
    %c0_i32 = arith.constant 0 : i32
    %c0_i32_0 = arith.constant 0 : i32
    %c0_i32_1 = arith.constant 0 : i32
    return %arg0, %c0_i32, %c0_i32_0 : i32, i32, i32
  }
  func.func @transform_1(%arg0: i32) -> (i32, i32) {
    %c0_i32 = arith.constant 0 : i32
    %c0_i32_0 = arith.constant 0 : i32
    %c0_i32_1 = arith.constant 0 : i32
    return %c0_i32, %c0_i32_0 : i32, i32
  }
  func.func @transform_2(%arg0: i32) -> (i32, i32) {
    %c0_i32 = arith.constant 0 : i32
    %c0_i32_0 = arith.constant 0 : i32
    %c0_i32_1 = arith.constant 0 : i32
    return %c0_i32, %c0_i32_0 : i32, i32
  }
  func.func @transform_3(%arg0: i32) -> (i32, i32) {
    %c0_i32 = arith.constant 0 : i32
    %c0_i32_0 = arith.constant 0 : i32
    %c0_i32_1 = arith.constant 0 : i32
    return %c0_i32, %c0_i32_0 : i32, i32
  }
  func.func @transform_4(%arg0: i32) -> (i32, i32, i32) {
    %c0_i32 = arith.constant 0 : i32
    %c0_i32_0 = arith.constant 0 : i32
    %c0_i32_1 = arith.constant 0 : i32
    return %arg0, %c0_i32, %c0_i32_0 : i32, i32, i32
  }
}

</mosaic_0001>

<llo_original>
// kernel: molecular_icvae_forward.7
$region0: #{molecular_icvae_forward.7}
  #allocation0 [shape = 'u32[]', space=smem, size = 0x4, offset = 0x4, fixed_abs, tag = 'smem constant byte address 0x4 - core index']
  #allocation1 [shape = 'u32[72,128]{1,0:T(1,128)}', space=vmem, size = 0x9000, scoped, tag = 'internal scratch']
  %s0 = inlined_call_operand.vmem [shape: f32[2048,33], index: 0, kind: input, shape index: {}]
  %s1 = inlined_call_operand.vmem [shape: f32[33,128], index: 1, kind: input, shape index: {}]
  %s2 = inlined_call_operand.vmem [shape: f32[1,128], index: 2, kind: input, shape index: {}]
  %s3 = inlined_call_operand.vmem [shape: f32[2048,128], index: 3, kind: output, shape index: {}]
  %s4 = sld [smem:[#allocation0]]
  $region45: #{molecular_icvae_forward.7} parent=0
    _
  %s6 = ssub.s32 1, %s4
  %s7 = scalar_select 0, %s6, %s4
  loop: start=0, step=1, limit=6
  $region2: #{molecular_icvae_forward.7} parent=0 // loop_pre_header
    _
  $region3: #{molecular_icvae_forward.7} parent=0 // loop_header
    %s9 = sphi 0, %s13
    %p10 = scmp.ge.s32.totalorder %s9, 6
    %s19 = sphi 0, %s21
    %s22 = sphi 0, %s19
    %s23 = sphi 0, %s22
    %s39 = sphi 0, %s23
    %s43 = sphi 0, %s43
    %s45 = sphi 0, %s43
    %s46 = sphi 0, %s45
    %s60 = sphi 0, %s46
    %s64 = sphi 0, %s64
    %s66 = sphi 0, %s64
    %s67 = sphi 0, %s66
    %s81 = sphi 0, %s67
    %s87 = sphi 0, %s89
    %s90 = sphi 0, %s87
    %s91 = sphi 0, %s90
    %s107 = sphi 0, %s91
  $region4: #{molecular_icvae_forward.7} parent=0 // loop_header_branch
    %12 = sbr.rel (%p10) target = $region8
  $region5: #{molecular_icvae_forward.7} parent=0 // loop_body
    %s14 = ssub.s32 %s9, 1
    %s15 = ssub.s32 %s9, 2
    %s16 = sadd.s32 %s9, 1
    %s17 = ssub.s32 %s9, %s16
    %p18 = scmp.eq.s32.totalorder %s17, 0
    %s20 = sadd.s32 %s19, 1
    %s21 = scalar_select %p18, %s19, %s20
    %p24 = pneg %p18
    %p25 = scmp.eq.s32.totalorder %s9, 3
    %p26 = por %p24, %p25
    %p27 = scmp.ne.s32.totalorder %s19, %s22
    %p28 = scmp.eq.s32.totalorder %s9, 0
    %p29 = por %p27, %p28
    %p30 = scmp.ne.s32.totalorder %s19, %s22
    %p31 = scmp.eq.s32.totalorder %s14, 3
    %p32 = por %p30, %p31
    %p33 = scmp.ne.s32.totalorder %s22, %s23
    %p34 = scmp.eq.s32.totalorder %s14, 0
    %p35 = por %p33, %p34
    %p36 = scmp.ne.s32.totalorder %s22, %s23
    %p37 = scmp.eq.s32.totalorder %s15, 3
    %p38 = por %p36, %p37
    %p40 = scmp.ne.s32.totalorder %s23, %s39
    %p41 = scmp.eq.s32.totalorder %s15, 0
    %p42 = por %p40, %p41
    %s44 = sadd.s32 %s43, 1
    %p47 = scmp.eq.s32.totalorder %s9, 3
    %p48 = scmp.ne.s32.totalorder %s43, %s45
    %p49 = scmp.eq.s32.totalorder %s9, 0
    %p50 = por %p48, %p49
    %p51 = scmp.ne.s32.totalorder %s43, %s45
    %p52 = scmp.eq.s32.totalorder %s14, 3
    %p53 = por %p51, %p52
    %p54 = scmp.ne.s32.totalorder %s45, %s46
    %p55 = scmp.eq.s32.totalorder %s14, 0
    %p56 = por %p54, %p55
    %p57 = scmp.ne.s32.totalorder %s45, %s46
    %p58 = scmp.eq.s32.totalorder %s15, 3
    %p59 = por %p57, %p58
    %p61 = scmp.ne.s32.totalorder %s46, %s60
    %p62 = scmp.eq.s32.totalorder %s15, 0
    %p63 = por %p61, %p62
    %s65 = sadd.s32 %s64, 1
    %p68 = scmp.eq.s32.totalorder %s9, 3
    %p69 = scmp.ne.s32.totalorder %s64, %s66
    %p70 = scmp.eq.s32.totalorder %s9, 0
    %p71 = por %p69, %p70
    %p72 = scmp.ne.s32.totalorder %s64, %s66
    %p73 = scmp.eq.s32.totalorder %s14, 3
    %p74 = por %p72, %p73
    %p75 = scmp.ne.s32.totalorder %s66, %s67
    %p76 = scmp.eq.s32.totalorder %s14, 0
    %p77 = por %p75, %p76
    %p78 = scmp.ne.s32.totalorder %s66, %s67
    %p79 = scmp.eq.s32.totalorder %s15, 3
    %p80 = por %p78, %p79
    %p82 = scmp.ne.s32.totalorder %s67, %s81
    %p83 = scmp.eq.s32.totalorder %s15, 0
    %p84 = por %p82, %p83
    %s85 = ssub.s32 %s9, %s16
    %p86 = scmp.eq.s32.totalorder %s85, 0
    %s88 = sadd.s32 %s87, 1
    %s89 = scalar_select %p86, %s87, %s88
    %p92 = pneg %p86
    %p93 = scmp.eq.s32.totalorder %s9, 3
    %p94 = por %p92, %p93
    %p95 = scmp.ne.s32.totalorder %s87, %s90
    %p96 = scmp.eq.s32.totalorder %s9, 0
    %p97 = por %p95, %p96
    %p98 = scmp.ne.s32.totalorder %s87, %s90
    %p99 = scmp.eq.s32.totalorder %s14, 3
    %p100 = por %p98, %p99
    %p101 = scmp.ne.s32.totalorder %s90, %s91
    %p102 = scmp.eq.s32.totalorder %s14, 0
    %p103 = por %p101, %p102
    %p104 = scmp.ne.s32.totalorder %s90, %s91
    %p105 = scmp.eq.s32.totalorder %s15, 3
    %p106 = por %p104, %p105
    %p108 = scmp.ne.s32.totalorder %s91, %s107
    %p109 = scmp.eq.s32.totalorder %s15, 0
    %p110 = por %p108, %p109
    %p111 = scmp.le.s32.totalorder 1, %s9
    %p112 = scmp.lt.s32.totalorder %s9, 5
    %p113 = pnand %p111, %p112
    %p114 = pneg %p113
    // Predicated region
    $region9: #{molecular_icvae_forward.7} parent=5 // pred_check
      _
    $region10: #{molecular_icvae_forward.7} parent=5 // pred_check_branch
      %116 = sbr.rel (%p113) target = $region12
    $region11: #{molecular_icvae_forward.7} parent=5 // pred_region
      %s117 = ssub.s32 %s9, 1
      // Predicated region
      $region13: #{molecular_icvae_forward.7} parent=11 // pred_check
        %p118 = pneg %p56
      $region14: #{molecular_icvae_forward.7} parent=11 // pred_check_branch
        %120 = sbr.rel (%p118) target = $region16
      $region15: #{molecular_icvae_forward.7} parent=11 // pred_region
        _
      $region16: #{molecular_icvae_forward.7} parent=11 // pred_fallthru
        _
      // Predicated region
      $region17: #{molecular_icvae_forward.7} parent=11 // pred_check
        %p121 = pneg %p77
      $region18: #{molecular_icvae_forward.7} parent=11 // pred_check_branch
        %123 = sbr.rel (%p121) target = $region20
      $region19: #{molecular_icvae_forward.7} parent=11 // pred_region
        _
      $region20: #{molecular_icvae_forward.7} parent=11 // pred_fallthru
        _
    $region12: #{molecular_icvae_forward.7} parent=5 // pred_fallthru
      _
    %p124 = scmp.lt.s32.totalorder %s9, 4
    // Predicated region
    $region21: #{molecular_icvae_forward.7} parent=5 // pred_check
      %p125 = pneg %p124
    $region22: #{molecular_icvae_forward.7} parent=5 // pred_check_branch
      %127 = sbr.rel (%p125) target = $region24
    $region23: #{molecular_icvae_forward.7} parent=5 // pred_region
      // Predicated region
      $region25: #{molecular_icvae_forward.7} parent=23 // pred_check
        %p128 = pneg %p29
      $region26: #{molecular_icvae_forward.7} parent=23 // pred_check_branch
        %130 = sbr.rel (%p128) target = $region28
      $region27: #{molecular_icvae_forward.7} parent=23 // pred_region
        %s131 = smul.u32 64, %s9
        %p132 = scmp.lt.s32.totalorder %s131, 255
        %s133 = scalar_select %p132, %s131, 255
        %s134 = smul.addr %s133, 8
        %s135 = scalar_lea.vmem %s0, %s134
        %s136 = smul.u32 64, %s9
      $region28: #{molecular_icvae_forward.7} parent=23 // pred_fallthru
        _
    $region24: #{molecular_icvae_forward.7} parent=5 // pred_fallthru
      _
    %p137 = scmp.le.s32.totalorder 1, %s9
    %p138 = scmp.lt.s32.totalorder %s9, 5
    %p139 = pnand %p137, %p138
    %p140 = pneg %p139
    // Predicated region
    $region29: #{molecular_icvae_forward.7} parent=5 // pred_check
      _
    $region30: #{molecular_icvae_forward.7} parent=5 // pred_check_branch
      %142 = sbr.rel (%p139) target = $region32
    $region31: #{molecular_icvae_forward.7} parent=5 // pred_region
      %s143 = ssub.s32 %s9, 1
      %s144 = smul.u32 64, %s14
      %p145 = scmp.lt.s32.totalorder %s144, 255
      %s146 = scalar_select %p145, %s144, 255
      %s147 = smul.addr %s146, 8
      %s148 = scalar_lea.vmem %s0, %s147
      %p149 = pneg %p35
      %p150 = pneg %p32
      %p151 = pneg %p56
      %p152 = pneg %p53
      %p153 = pneg %p77
      %p154 = pneg %p74
      %p155 = pneg %p103
      %p156 = pneg %p100
      %s157 = smul.u32 64, %s14
      %p158 = scmp.lt.s32.totalorder %s157, 255
      %s159 = scalar_select %p158, %s157, 255
      %s160 = smul.addr %s159, 8
      %s161 = scalar_lea.vmem %s3, %s160
      %s162 = smul.u32 64, %s14
      %p163 = scmp.lt.s32.totalorder %s162, 255
      %s164 = scalar_select %p163, %s162, 255
      %s165 = smul.addr %s164, 8
      %s166 = scalar_lea.vmem %s0, %s165
      %s167 = smul.u32 64, %s14
      %s168 = smul.u32 64, %s14
      %p169 = scmp.lt.s32.totalorder %s168, 255
      %s170 = scalar_select %p169, %s168, 255
      %s171 = smul.addr %s170, 8
      %s172 = scalar_lea.vmem %s3, %s171
      %s173 = smul.u32 64, %s14
      %v174 = vld [vmem:[%s166] sm:$0xff]
      %v175 = vld [vmem:[%s166 + $0x8] sm:$0xff]
      %v176 = vld [vmem:[%s166 + $0x10] sm:$0xff]
      %v177 = vld [vmem:[%s166 + $0x18] sm:$0xff]
      %v178 = vld [vmem:[%s166 + $0x20] sm:$0xff]
      %v179 = vld [vmem:[%s166 + $0x28] sm:$0xff]
      %v180 = vld [vmem:[%s166 + $0x30] sm:$0xff]
      %v181 = vld [vmem:[%s166 + $0x38] sm:$0xff]
      %v182 = vld [vmem:[%s166 + $0x40] sm:$0xff]
      %v183 = vld [vmem:[%s166 + $0x48] sm:$0xff]
      %v184 = vld [vmem:[%s166 + $0x50] sm:$0xff]
      %v185 = vld [vmem:[%s166 + $0x58] sm:$0xff]
      %v186 = vld [vmem:[%s166 + $0x60] sm:$0xff]
      %v187 = vld [vmem:[%s166 + $0x68] sm:$0xff]
      %v188 = vld [vmem:[%s166 + $0x70] sm:$0xff]
      %v189 = vld [vmem:[%s166 + $0x78] sm:$0xff]
      %v190 = vld [vmem:[%s166 + $0x80] sm:$0xff]
      %v191 = vld [vmem:[%s166 + $0x88] sm:$0xff]
      %v192 = vld [vmem:[%s166 + $0x90] sm:$0xff]
      %v193 = vld [vmem:[%s166 + $0x98] sm:$0xff]
      %v194 = vld [vmem:[%s166 + $0xa0] sm:$0xff]
      %v195 = vld [vmem:[%s166 + $0xa8] sm:$0xff]
      %v196 = vld [vmem:[%s166 + $0xb0] sm:$0xff]
      %v197 = vld [vmem:[%s166 + $0xb8] sm:$0xff]
      %v198 = vld [vmem:[%s166 + $0xc0] sm:$0xff]
      %v199 = vld [vmem:[%s166 + $0xc8] sm:$0xff]
      %v200 = vld [vmem:[%s166 + $0xd0] sm:$0xff]
      %v201 = vld [vmem:[%s166 + $0xd8] sm:$0xff]
      %v202 = vld [vmem:[%s166 + $0xe0] sm:$0xff]
      %v203 = vld [vmem:[%s166 + $0xe8] sm:$0xff]
      %v204 = vld [vmem:[%s166 + $0xf0] sm:$0xff]
      %v205 = vld [vmem:[%s166 + $0xf8] sm:$0xff]
      %v206 = vld [vmem:[%s166 + $0x100] sm:$0xff]
      %v207 = vld [vmem:[%s166 + $0x108] sm:$0xff]
      %v208 = vld [vmem:[%s166 + $0x110] sm:$0xff]
      %v209 = vld [vmem:[%s166 + $0x118] sm:$0xff]
      %v210 = vld [vmem:[%s166 + $0x120] sm:$0xff]
      %v211 = vld [vmem:[%s166 + $0x128] sm:$0xff]
      %v212 = vld [vmem:[%s166 + $0x130] sm:$0xff]
      %v213 = vld [vmem:[%s166 + $0x138] sm:$0xff]
      %v214 = vld [vmem:[%s166 + $0x140] sm:$0xff]
      %v215 = vld [vmem:[%s166 + $0x148] sm:$0xff]
      %v216 = vld [vmem:[%s166 + $0x150] sm:$0xff]
      %v217 = vld [vmem:[%s166 + $0x158] sm:$0xff]
      %v218 = vld [vmem:[%s166 + $0x160] sm:$0xff]
      %v219 = vld [vmem:[%s166 + $0x168] sm:$0xff]
      %v220 = vld [vmem:[%s166 + $0x170] sm:$0xff]
      %v221 = vld [vmem:[%s166 + $0x178] sm:$0xff]
      %v222 = vld [vmem:[%s166 + $0x180] sm:$0xff]
      %v223 = vld [vmem:[%s166 + $0x188] sm:$0xff]
      %v224 = vld [vmem:[%s166 + $0x190] sm:$0xff]
      %v225 = vld [vmem:[%s166 + $0x198] sm:$0xff]
      %v226 = vld [vmem:[%s166 + $0x1a0] sm:$0xff]
      %v227 = vld [vmem:[%s166 + $0x1a8] sm:$0xff]
      %v228 = vld [vmem:[%s166 + $0x1b0] sm:$0xff]
      %v229 = vld [vmem:[%s166 + $0x1b8] sm:$0xff]
      %v230 = vld [vmem:[%s166 + $0x1c0] sm:$0xff]
      %v231 = vld [vmem:[%s166 + $0x1c8] sm:$0xff]
      %v232 = vld [vmem:[%s166 + $0x1d0] sm:$0xff]
      %v233 = vld [vmem:[%s166 + $0x1d8] sm:$0xff]
      %v234 = vld [vmem:[%s166 + $0x1e0] sm:$0xff]
      %v235 = vld [vmem:[%s166 + $0x1e8] sm:$0xff]
      %v236 = vld [vmem:[%s166 + $0x1f0] sm:$0xff]
      %v237 = vld [vmem:[%s166 + $0x1f8] sm:$0xff]
      %v238 = vld [vmem:[%s1] sm:$0xff]
      %v239 = vld [vmem:[%s1 + $0x8] sm:$0xff]
      %v240 = vld [vmem:[%s1 + $0x10] sm:$0xff]
      %v241 = vld [vmem:[%s1 + $0x18] sm:$0xff]
      %v242 = vld [vmem:[%s1 + $0x20] sm:$0x1]
      %v243 = vld [vmem:[%s2] sm:$0x1]
      %v245 = vperm.slane %v243, 0
      %vm247 = vcmask 269312
      %v249 = vsel %vm247, %v174, 0
      %v252 = vsel %vm247, %v175, 0
      %v255 = vsel %vm247, %v176, 0
      %v258 = vsel %vm247, %v177, 0
      %v261 = vsel %vm247, %v178, 0
      %v264 = vsel %vm247, %v179, 0
      %v267 = vsel %vm247, %v180, 0
      %v270 = vsel %vm247, %v181, 0
      %v273 = vsel %vm247, %v182, 0
      %v276 = vsel %vm247, %v183, 0
      %v279 = vsel %vm247, %v184, 0
      %v282 = vsel %vm247, %v185, 0
      %v285 = vsel %vm247, %v186, 0
      %v288 = vsel %vm247, %v187, 0
      %v291 = vsel %vm247, %v188, 0
      %v294 = vsel %vm247, %v189, 0
      %v297 = vsel %vm247, %v190, 0
      %v300 = vsel %vm247, %v191, 0
      %v303 = vsel %vm247, %v192, 0
      %v306 = vsel %vm247, %v193, 0
      %v309 = vsel %vm247, %v194, 0
      %v312 = vsel %vm247, %v195, 0
      %v315 = vsel %vm247, %v196, 0
      %v318 = vsel %vm247, %v197, 0
      %v321 = vsel %vm247, %v198, 0
      %v324 = vsel %vm247, %v199, 0
      %v327 = vsel %vm247, %v200, 0
      %v330 = vsel %vm247, %v201, 0
      %v333 = vsel %vm247, %v202, 0
      %v336 = vsel %vm247, %v203, 0
      %v339 = vsel %vm247, %v204, 0
      %v342 = vsel %vm247, %v205, 0
      %v345 = vsel %vm247, %v206, 0
      %v348 = vsel %vm247, %v207, 0
      %v351 = vsel %vm247, %v208, 0
      %v354 = vsel %vm247, %v209, 0
      %v357 = vsel %vm247, %v210, 0
      %v360 = vsel %vm247, %v211, 0
      %v363 = vsel %vm247, %v212, 0
      %v366 = vsel %vm247, %v213, 0
      %v369 = vsel %vm247, %v214, 0
      %v372 = vsel %vm247, %v215, 0
      %v375 = vsel %vm247, %v216, 0
      %v378 = vsel %vm247, %v217, 0
      %v381 = vsel %vm247, %v218, 0
      %v384 = vsel %vm247, %v219, 0
      %v387 = vsel %vm247, %v220, 0
      %v390 = vsel %vm247, %v221, 0
      %v393 = vsel %vm247, %v222, 0
      %v396 = vsel %vm247, %v223, 0
      %v399 = vsel %vm247, %v224, 0
      %v402 = vsel %vm247, %v225, 0
      %v405 = vsel %vm247, %v226, 0
      %v408 = vsel %vm247, %v227, 0
      %v411 = vsel %vm247, %v228, 0
      %v414 = vsel %vm247, %v229, 0
      %v417 = vsel %vm247, %v230, 0
      %v420 = vsel %vm247, %v231, 0
      %v423 = vsel %vm247, %v232, 0
      %v426 = vsel %vm247, %v233, 0
      %v429 = vsel %vm247, %v234, 0
      %v432 = vsel %vm247, %v235, 0
      %v435 = vsel %vm247, %v236, 0
      %v438 = vsel %vm247, %v237, 0
      %vm440 = vcmask 1040384
      %v442 = vsel %vm440, %v242, 0
      %444 = vmatpush.msra.mxu0 0.0
      %445 = vmatpush.msra.mxu0 0.0
      %446 = vmatpush.msra.mxu0 0.0
      %447 = vmatpush.msra.mxu0 0.0
      %448 = vmatpush.msra.mxu0 0.0
      %449 = vmatpush.msra.mxu0 0.0
      %450 = vmatpush.msra.mxu0 0.0
      %451 = vmatpush.msra.mxu0 0.0
      %452 = vmatpush.msra.mxu0 0.0
      %453 = vmatpush.msra.mxu0 0.0
      %454 = vmatpush.msra.mxu0 0.0
      %455 = vmatpush.msra.mxu0 %v442
      %456 = vmatpush.msra.mxu0 %v241
      %457 = vmatpush.msra.mxu0 %v240
      %458 = vmatpush.msra.mxu0 %v239
      %459 = vmatpush.msra.mxu0 %v238
      %460 = vmatmul.f32.gmra.mxu0 %v249
      %v461 = vpop.f32.mrf.mxu0
      %v462 = vadd.f32 %v245, %v461
      %463 = vmatmul.f32.gmra.mxu0 %v252
      %v464 = vpop.f32.mrf.mxu0
      %v465 = vadd.f32 %v245, %v464
      %466 = vmatmul.f32.gmra.mxu0 %v255
      %v467 = vpop.f32.mrf.mxu0
      %v468 = vadd.f32 %v245, %v467
      %469 = vmatmul.f32.gmra.mxu0 %v258
      %v470 = vpop.f32.mrf.mxu0
      %v471 = vadd.f32 %v245, %v470
      %472 = vmatmul.f32.gmra.mxu0 %v261
      %v473 = vpop.f32.mrf.mxu0
      %v474 = vadd.f32 %v245, %v473
      %475 = vmatmul.f32.gmra.mxu0 %v264
      %v476 = vpop.f32.mrf.mxu0
      %v477 = vadd.f32 %v245, %v476
      %478 = vmatmul.f32.gmra.mxu0 %v267
      %v479 = vpop.f32.mrf.mxu0
      %v480 = vadd.f32 %v245, %v479
      %481 = vmatmul.f32.gmra.mxu0 %v270
      %v482 = vpop.f32.mrf.mxu0
      %v483 = vadd.f32 %v245, %v482
      %484 = vmatmul.f32.gmra.mxu0 %v273
      %v485 = vpop.f32.mrf.mxu0
      %v486 = vadd.f32 %v245, %v485
      %487 = vmatmul.f32.gmra.mxu0 %v276
      %v488 = vpop.f32.mrf.mxu0
      %v489 = vadd.f32 %v245, %v488
      %490 = vmatmul.f32.gmra.mxu0 %v279
      %v491 = vpop.f32.mrf.mxu0
      %v492 = vadd.f32 %v245, %v491
      %493 = vmatmul.f32.gmra.mxu0 %v282
      %v494 = vpop.f32.mrf.mxu0
      %v495 = vadd.f32 %v245, %v494
      %496 = vmatmul.f32.gmra.mxu0 %v285
      %v497 = vpop.f32.mrf.mxu0
      %v498 = vadd.f32 %v245, %v497
      %499 = vmatmul.f32.gmra.mxu0 %v288
      %v500 = vpop.f32.mrf.mxu0
      %v501 = vadd.f32 %v245, %v500
      %502 = vmatmul.f32.gmra.mxu0 %v291
      %v503 = vpop.f32.mrf.mxu0
      %v504 = vadd.f32 %v245, %v503
      %505 = vmatmul.f32.gmra.mxu0 %v294
      %v506 = vpop.f32.mrf.mxu0
      %v507 = vadd.f32 %v245, %v506
      %508 = vmatmul.f32.gmra.mxu0 %v297
      %v509 = vpop.f32.mrf.mxu0
      %v510 = vadd.f32 %v245, %v509
      %511 = vmatmul.f32.gmra.mxu0 %v300
      %v512 = vpop.f32.mrf.mxu0
      %v513 = vadd.f32 %v245, %v512
      %514 = vmatmul.f32.gmra.mxu0 %v303
      %v515 = vpop.f32.mrf.mxu0
      %v516 = vadd.f32 %v245, %v515
      %517 = vmatmul.f32.gmra.mxu0 %v306
      %v518 = vpop.f32.mrf.mxu0
      %v519 = vadd.f32 %v245, %v518
      %520 = vmatmul.f32.gmra.mxu0 %v309
      %v521 = vpop.f32.mrf.mxu0
      %v522 = vadd.f32 %v245, %v521
      %523 = vmatmul.f32.gmra.mxu0 %v312
      %v524 = vpop.f32.mrf.mxu0
      %v525 = vadd.f32 %v245, %v524
      %526 = vmatmul.f32.gmra.mxu0 %v315
      %v527 = vpop.f32.mrf.mxu0
      %v528 = vadd.f32 %v245, %v527
      %529 = vmatmul.f32.gmra.mxu0 %v318
      %v530 = vpop.f32.mrf.mxu0
      %v531 = vadd.f32 %v245, %v530
      %532 = vmatmul.f32.gmra.mxu0 %v321
      %v533 = vpop.f32.mrf.mxu0
      %v534 = vadd.f32 %v245, %v533
      %535 = vmatmul.f32.gmra.mxu0 %v324
      %v536 = vpop.f32.mrf.mxu0
      %v537 = vadd.f32 %v245, %v536
      %538 = vmatmul.f32.gmra.mxu0 %v327
      %v539 = vpop.f32.mrf.mxu0
      %v540 = vadd.f32 %v245, %v539
      %541 = vmatmul.f32.gmra.mxu0 %v330
      %v542 = vpop.f32.mrf.mxu0
      %v543 = vadd.f32 %v245, %v542
      %544 = vmatmul.f32.gmra.mxu0 %v333
      %v545 = vpop.f32.mrf.mxu0
      %v546 = vadd.f32 %v245, %v545
      %547 = vmatmul.f32.gmra.mxu0 %v336
      %v548 = vpop.f32.mrf.mxu0
      %v549 = vadd.f32 %v245, %v548
      %550 = vmatmul.f32.gmra.mxu0 %v339
      %v551 = vpop.f32.mrf.mxu0
      %v552 = vadd.f32 %v245, %v551
      %553 = vmatmul.f32.gmra.mxu0 %v342
      %v554 = vpop.f32.mrf.mxu0
      %v555 = vadd.f32 %v245, %v554
      %556 = vmatmul.f32.gmra.mxu0 %v345
      %v557 = vpop.f32.mrf.mxu0
      %v558 = vadd.f32 %v245, %v557
      %559 = vmatmul.f32.gmra.mxu0 %v348
      %v560 = vpop.f32.mrf.mxu0
      %v561 = vadd.f32 %v245, %v560
      %562 = vmatmul.f32.gmra.mxu0 %v351
      %v563 = vpop.f32.mrf.mxu0
      %v564 = vadd.f32 %v245, %v563
      %565 = vmatmul.f32.gmra.mxu0 %v354
      %v566 = vpop.f32.mrf.mxu0
      %v567 = vadd.f32 %v245, %v566
      %568 = vmatmul.f32.gmra.mxu0 %v357
      %v569 = vpop.f32.mrf.mxu0
      %v570 = vadd.f32 %v245, %v569
      %571 = vmatmul.f32.gmra.mxu0 %v360
      %v572 = vpop.f32.mrf.mxu0
      %v573 = vadd.f32 %v245, %v572
      %574 = vmatmul.f32.gmra.mxu0 %v363
      %v575 = vpop.f32.mrf.mxu0
      %v576 = vadd.f32 %v245, %v575
      %577 = vmatmul.f32.gmra.mxu0 %v366
      %v578 = vpop.f32.mrf.mxu0
      %v579 = vadd.f32 %v245, %v578
      %580 = vmatmul.f32.gmra.mxu0 %v369
      %v581 = vpop.f32.mrf.mxu0
      %v582 = vadd.f32 %v245, %v581
      %583 = vmatmul.f32.gmra.mxu0 %v372
      %v584 = vpop.f32.mrf.mxu0
      %v585 = vadd.f32 %v245, %v584
      %586 = vmatmul.f32.gmra.mxu0 %v375
      %v587 = vpop.f32.mrf.mxu0
      %v588 = vadd.f32 %v245, %v587
      %589 = vmatmul.f32.gmra.mxu0 %v378
      %v590 = vpop.f32.mrf.mxu0
      %v591 = vadd.f32 %v245, %v590
      %592 = vmatmul.f32.gmra.mxu0 %v381
      %v593 = vpop.f32.mrf.mxu0
      %v594 = vadd.f32 %v245, %v593
      %595 = vmatmul.f32.gmra.mxu0 %v384
      %v596 = vpop.f32.mrf.mxu0
      %v597 = vadd.f32 %v245, %v596
      %598 = vmatmul.f32.gmra.mxu0 %v387
      %v599 = vpop.f32.mrf.mxu0
      %v600 = vadd.f32 %v245, %v599
      %601 = vmatmul.f32.gmra.mxu0 %v390
      %v602 = vpop.f32.mrf.mxu0
      %v603 = vadd.f32 %v245, %v602
      %604 = vmatmul.f32.gmra.mxu0 %v393
      %v605 = vpop.f32.mrf.mxu0
      %v606 = vadd.f32 %v245, %v605
      %607 = vmatmul.f32.gmra.mxu0 %v396
      %v608 = vpop.f32.mrf.mxu0
      %v609 = vadd.f32 %v245, %v608
      %610 = vmatmul.f32.gmra.mxu0 %v399
      %v611 = vpop.f32.mrf.mxu0
      %v612 = vadd.f32 %v245, %v611
      %613 = vmatmul.f32.gmra.mxu0 %v402
      %v614 = vpop.f32.mrf.mxu0
      %v615 = vadd.f32 %v245, %v614
      %616 = vmatmul.f32.gmra.mxu0 %v405
      %v617 = vpop.f32.mrf.mxu0
      %v618 = vadd.f32 %v245, %v617
      %619 = vmatmul.f32.gmra.mxu0 %v408
      %v620 = vpop.f32.mrf.mxu0
      %v621 = vadd.f32 %v245, %v620
      %622 = vmatmul.f32.gmra.mxu0 %v411
      %v623 = vpop.f32.mrf.mxu0
      %v624 = vadd.f32 %v245, %v623
      %625 = vmatmul.f32.gmra.mxu0 %v414
      %v626 = vpop.f32.mrf.mxu0
      %v627 = vadd.f32 %v245, %v626
      %628 = vmatmul.f32.gmra.mxu0 %v417
      %v629 = vpop.f32.mrf.mxu0
      %v630 = vadd.f32 %v245, %v629
      %631 = vmatmul.f32.gmra.mxu0 %v420
      %v632 = vpop.f32.mrf.mxu0
      %v633 = vadd.f32 %v245, %v632
      %634 = vmatmul.f32.gmra.mxu0 %v423
      %v635 = vpop.f32.mrf.mxu0
      %v636 = vadd.f32 %v245, %v635
      %637 = vmatmul.f32.gmra.mxu0 %v426
      %v638 = vpop.f32.mrf.mxu0
      %v639 = vadd.f32 %v245, %v638
      %640 = vmatmul.f32.gmra.mxu0 %v429
      %v641 = vpop.f32.mrf.mxu0
      %v642 = vadd.f32 %v245, %v641
      %643 = vmatmul.f32.gmra.mxu0 %v432
      %v644 = vpop.f32.mrf.mxu0
      %v645 = vadd.f32 %v245, %v644
      %646 = vmatmul.f32.gmra.mxu0 %v435
      %v647 = vpop.f32.mrf.mxu0
      %v648 = vadd.f32 %v245, %v647
      %649 = vmatmul.f32.gmra.mxu0 %v438
      %v650 = vpop.f32.mrf.mxu0
      %v651 = vadd.f32 %v245, %v650
      %652 = vdwg.mxu0
      %v653 = vmax.f32 %v462, 0.0
      %v654 = vmax.f32 %v465, 0.0
      %v655 = vmax.f32 %v468, 0.0
      %v656 = vmax.f32 %v471, 0.0
      %v657 = vmax.f32 %v474, 0.0
      %v658 = vmax.f32 %v477, 0.0
      %v659 = vmax.f32 %v480, 0.0
      %v660 = vmax.f32 %v483, 0.0
      %v661 = vmax.f32 %v486, 0.0
      %v662 = vmax.f32 %v489, 0.0
      %v663 = vmax.f32 %v492, 0.0
      %v664 = vmax.f32 %v495, 0.0
      %v665 = vmax.f32 %v498, 0.0
      %v666 = vmax.f32 %v501, 0.0
      %v667 = vmax.f32 %v504, 0.0
      %v668 = vmax.f32 %v507, 0.0
      %v669 = vmax.f32 %v510, 0.0
      %v670 = vmax.f32 %v513, 0.0
      %v671 = vmax.f32 %v516, 0.0
      %v672 = vmax.f32 %v519, 0.0
      %v673 = vmax.f32 %v522, 0.0
      %v674 = vmax.f32 %v525, 0.0
      %v675 = vmax.f32 %v528, 0.0
      %v676 = vmax.f32 %v531, 0.0
      %v677 = vmax.f32 %v534, 0.0
      %v678 = vmax.f32 %v537, 0.0
      %v679 = vmax.f32 %v540, 0.0
      %v680 = vmax.f32 %v543, 0.0
      %v681 = vmax.f32 %v546, 0.0
      %v682 = vmax.f32 %v549, 0.0
      %v683 = vmax.f32 %v552, 0.0
      %v684 = vmax.f32 %v555, 0.0
      %v685 = vmax.f32 %v558, 0.0
      %v686 = vmax.f32 %v561, 0.0
      %v687 = vmax.f32 %v564, 0.0
      %v688 = vmax.f32 %v567, 0.0
      %v689 = vmax.f32 %v570, 0.0
      %v690 = vmax.f32 %v573, 0.0
      %v691 = vmax.f32 %v576, 0.0
      %v692 = vmax.f32 %v579, 0.0
      %v693 = vmax.f32 %v582, 0.0
      %v694 = vmax.f32 %v585, 0.0
      %v695 = vmax.f32 %v588, 0.0
      %v696 = vmax.f32 %v591, 0.0
      %v697 = vmax.f32 %v594, 0.0
      %v698 = vmax.f32 %v597, 0.0
      %v699 = vmax.f32 %v600, 0.0
      %v700 = vmax.f32 %v603, 0.0
      %v701 = vmax.f32 %v606, 0.0
      %v702 = vmax.f32 %v609, 0.0
      %v703 = vmax.f32 %v612, 0.0
      %v704 = vmax.f32 %v615, 0.0
      %v705 = vmax.f32 %v618, 0.0
      %v706 = vmax.f32 %v621, 0.0
      %v707 = vmax.f32 %v624, 0.0
      %v708 = vmax.f32 %v627, 0.0
      %v709 = vmax.f32 %v630, 0.0
      %v710 = vmax.f32 %v633, 0.0
      %v711 = vmax.f32 %v636, 0.0
      %v712 = vmax.f32 %v639, 0.0
      %v713 = vmax.f32 %v642, 0.0
      %v714 = vmax.f32 %v645, 0.0
      %v715 = vmax.f32 %v648, 0.0
      %v716 = vmax.f32 %v651, 0.0
      %717 = vst [vmem:[%s172] sm:$0xff] %v653
      %718 = vst [vmem:[%s172 + $0x8] sm:$0xff] %v654
      %719 = vst [vmem:[%s172 + $0x10] sm:$0xff] %v655
      %720 = vst [vmem:[%s172 + $0x18] sm:$0xff] %v656
      %721 = vst [vmem:[%s172 + $0x20] sm:$0xff] %v657
      %722 = vst [vmem:[%s172 + $0x28] sm:$0xff] %v658
      %723 = vst [vmem:[%s172 + $0x30] sm:$0xff] %v659
      %724 = vst [vmem:[%s172 + $0x38] sm:$0xff] %v660
      %725 = vst [vmem:[%s172 + $0x40] sm:$0xff] %v661
      %726 = vst [vmem:[%s172 + $0x48] sm:$0xff] %v662
      %727 = vst [vmem:[%s172 + $0x50] sm:$0xff] %v663
      %728 = vst [vmem:[%s172 + $0x58] sm:$0xff] %v664
      %729 = vst [vmem:[%s172 + $0x60] sm:$0xff] %v665
      %730 = vst [vmem:[%s172 + $0x68] sm:$0xff] %v666
      %731 = vst [vmem:[%s172 + $0x70] sm:$0xff] %v667
      %732 = vst [vmem:[%s172 + $0x78] sm:$0xff] %v668
      %733 = vst [vmem:[%s172 + $0x80] sm:$0xff] %v669
      %734 = vst [vmem:[%s172 + $0x88] sm:$0xff] %v670
      %735 = vst [vmem:[%s172 + $0x90] sm:$0xff] %v671
      %736 = vst [vmem:[%s172 + $0x98] sm:$0xff] %v672
      %737 = vst [vmem:[%s172 + $0xa0] sm:$0xff] %v673
      %738 = vst [vmem:[%s172 + $0xa8] sm:$0xff] %v674
      %739 = vst [vmem:[%s172 + $0xb0] sm:$0xff] %v675
      %740 = vst [vmem:[%s172 + $0xb8] sm:$0xff] %v676
      %741 = vst [vmem:[%s172 + $0xc0] sm:$0xff] %v677
      %742 = vst [vmem:[%s172 + $0xc8] sm:$0xff] %v678
      %743 = vst [vmem:[%s172 + $0xd0] sm:$0xff] %v679
      %744 = vst [vmem:[%s172 + $0xd8] sm:$0xff] %v680
      %745 = vst [vmem:[%s172 + $0xe0] sm:$0xff] %v681
      %746 = vst [vmem:[%s172 + $0xe8] sm:$0xff] %v682
      %747 = vst [vmem:[%s172 + $0xf0] sm:$0xff] %v683
      %748 = vst [vmem:[%s172 + $0xf8] sm:$0xff] %v684
      %749 = vst [vmem:[%s172 + $0x100] sm:$0xff] %v685
      %750 = vst [vmem:[%s172 + $0x108] sm:$0xff] %v686
      %751 = vst [vmem:[%s172 + $0x110] sm:$0xff] %v687
      %752 = vst [vmem:[%s172 + $0x118] sm:$0xff] %v688
      %753 = vst [vmem:[%s172 + $0x120] sm:$0xff] %v689
      %754 = vst [vmem:[%s172 + $0x128] sm:$0xff] %v690
      %755 = vst [vmem:[%s172 + $0x130] sm:$0xff] %v691
      %756 = vst [vmem:[%s172 + $0x138] sm:$0xff] %v692
      %757 = vst [vmem:[%s172 + $0x140] sm:$0xff] %v693
      %758 = vst [vmem:[%s172 + $0x148] sm:$0xff] %v694
      %759 = vst [vmem:[%s172 + $0x150] sm:$0xff] %v695
      %760 = vst [vmem:[%s172 + $0x158] sm:$0xff] %v696
      %761 = vst [vmem:[%s172 + $0x160] sm:$0xff] %v697
      %762 = vst [vmem:[%s172 + $0x168] sm:$0xff] %v698
      %763 = vst [vmem:[%s172 + $0x170] sm:$0xff] %v699
      %764 = vst [vmem:[%s172 + $0x178] sm:$0xff] %v700
      %765 = vst [vmem:[%s172 + $0x180] sm:$0xff] %v701
      %766 = vst [vmem:[%s172 + $0x188] sm:$0xff] %v702
      %767 = vst [vmem:[%s172 + $0x190] sm:$0xff] %v703
      %768 = vst [vmem:[%s172 + $0x198] sm:$0xff] %v704
      %769 = vst [vmem:[%s172 + $0x1a0] sm:$0xff] %v705
      %770 = vst [vmem:[%s172 + $0x1a8] sm:$0xff] %v706
      %771 = vst [vmem:[%s172 + $0x1b0] sm:$0xff] %v707
      %772 = vst [vmem:[%s172 + $0x1b8] sm:$0xff] %v708
      %773 = vst [vmem:[%s172 + $0x1c0] sm:$0xff] %v709
      %774 = vst [vmem:[%s172 + $0x1c8] sm:$0xff] %v710
      %775 = vst [vmem:[%s172 + $0x1d0] sm:$0xff] %v711
      %776 = vst [vmem:[%s172 + $0x1d8] sm:$0xff] %v712
      %777 = vst [vmem:[%s172 + $0x1e0] sm:$0xff] %v713
      %778 = vst [vmem:[%s172 + $0x1e8] sm:$0xff] %v714
      %779 = vst [vmem:[%s172 + $0x1f0] sm:$0xff] %v715
      %780 = vst [vmem:[%s172 + $0x1f8] sm:$0xff] %v716
      %s781 = smul.u32 64, %s14
      %p782 = scmp.lt.s32.totalorder %s781, 255
      %s783 = scalar_select %p782, %s781, 255
      %s784 = smul.addr %s783, 8
      %s785 = scalar_lea.vmem %s3, %s784
      // Predicated region
      $region33: #{molecular_icvae_forward.7} parent=31 // pred_check
        %p786 = pneg %p100
      $region34: #{molecular_icvae_forward.7} parent=31 // pred_check_branch
        %788 = sbr.rel (%p786) target = $region36
      $region35: #{molecular_icvae_forward.7} parent=31 // pred_region
        %s789 = smul.u32 64, %s14
      $region36: #{molecular_icvae_forward.7} parent=31 // pred_fallthru
        _
    $region32: #{molecular_icvae_forward.7} parent=5 // pred_fallthru
      _
    %p790 = scmp.le.s32.totalorder 2, %s9
    // Predicated region
    $region37: #{molecular_icvae_forward.7} parent=5 // pred_check
      %p791 = pneg %p790
    $region38: #{molecular_icvae_forward.7} parent=5 // pred_check_branch
      %793 = sbr.rel (%p791) target = $region40
    $region39: #{molecular_icvae_forward.7} parent=5 // pred_region
      %s794 = ssub.s32 %s9, 2
      // Predicated region
      $region41: #{molecular_icvae_forward.7} parent=39 // pred_check
        %p795 = pneg %p106
      $region42: #{molecular_icvae_forward.7} parent=39 // pred_check_branch
        %797 = sbr.rel (%p795) target = $region44
      $region43: #{molecular_icvae_forward.7} parent=39 // pred_region
        %s798 = smul.u32 64, %s15
        %p799 = scmp.lt.s32.totalorder %s798, 255
        %s800 = scalar_select %p799, %s798, 255
        %s801 = smul.addr %s800, 8
        %s802 = scalar_lea.vmem %s3, %s801
      $region44: #{molecular_icvae_forward.7} parent=39 // pred_fallthru
        _
    $region40: #{molecular_icvae_forward.7} parent=5 // pred_fallthru
      _
  $region6: #{molecular_icvae_forward.7} parent=0 // loop_footer
    %s13 = sadd.s32 1, %s9
  $region7: #{molecular_icvae_forward.7} parent=0 // loop_footer_branch
    %8 = sbr.rel target = $region3
  $region8: #{molecular_icvae_forward.7} parent=0 // loop_exit
    _

// kernel: molecular_icvae_forward.8
$region0: #{molecular_icvae_forward.8}
  #allocation0 [shape = 'u32[]', space=smem, size = 0x4, offset = 0x4, fixed_abs, tag = 'smem constant byte address 0x4 - core index']
  #allocation1 [shape = 'u32[72,128]{1,0:T(1,128)}', space=vmem, size = 0x9000, scoped, tag = 'internal scratch']
  %s0 = inlined_call_operand.vmem [shape: f32[322,528], index: 0, kind: input, shape index: {}]
  %s1 = inlined_call_operand.vmem [shape: f32[528,128], index: 1, kind: input, shape index: {}]
  %s2 = inlined_call_operand.vmem [shape: f32[1,128], index: 2, kind: input, shape index: {}]
  %s3 = inlined_call_operand.vmem [shape: f32[322,128], index: 3, kind: output, shape index: {}]
  %s4 = sld [smem:[#allocation0]]
  $region22: #{molecular_icvae_forward.8} parent=0
    _
  %s6 = ssub.s32 1, %s4
  %s7 = scalar_select 0, %s6, %s4
  // Predicated region
  $region2: #{molecular_icvae_forward.8} parent=0 // pred_check
    _
  $region3: #{molecular_icvae_forward.8} parent=0 // pred_check_branch
    %9 = sbr.rel (0) target = $region5
  $region4: #{molecular_icvae_forward.8} parent=0 // pred_region
    _
  $region5: #{molecular_icvae_forward.8} parent=0 // pred_fallthru
    _
  // Predicated region
  $region6: #{molecular_icvae_forward.8} parent=0 // pred_check
    _
  $region7: #{molecular_icvae_forward.8} parent=0 // pred_check_branch
    %11 = sbr.rel (0) target = $region9
  $region8: #{molecular_icvae_forward.8} parent=0 // pred_region
    _
  $region9: #{molecular_icvae_forward.8} parent=0 // pred_fallthru
    _
  // Predicated region
  $region10: #{molecular_icvae_forward.8} parent=0 // pred_check
    _
  $region11: #{molecular_icvae_forward.8} parent=0 // pred_check_branch
    %13 = sbr.rel (0) target = $region13
  $region12: #{molecular_icvae_forward.8} parent=0 // pred_region
    _
  $region13: #{molecular_icvae_forward.8} parent=0 // pred_fallthru
    _
  %v14 = vld [vmem:[%s0] sm:$0xff]
  %v15 = vld [vmem:[%s0 + $0x8] sm:$0xff]
  %v16 = vld [vmem:[%s0 + $0x10] sm:$0xff]
  %v17 = vld [vmem:[%s0 + $0x18] sm:$0xff]
  %v18 = vld [vmem:[%s0 + $0x20] sm:$0xff]
  %v19 = vld [vmem:[%s0 + $0x28] sm:$0xff]
  %v20 = vld [vmem:[%s0 + $0x30] sm:$0xff]
  %v21 = vld [vmem:[%s0 + $0x38] sm:$0xff]
  %v22 = vld [vmem:[%s0 + $0x40] sm:$0xff]
  %v23 = vld [vmem:[%s0 + $0x48] sm:$0xff]
  %v24 = vld [vmem:[%s0 + $0x50] sm:$0xff]
  %v25 = vld [vmem:[%s0 + $0x58] sm:$0xff]
  %v26 = vld [vmem:[%s0 + $0x60] sm:$0xff]
  %v27 = vld [vmem:[%s0 + $0x68] sm:$0xff]
  %v28 = vld [vmem:[%s0 + $0x70] sm:$0xff]
  %v29 = vld [vmem:[%s0 + $0x78] sm:$0xff]
  %v30 = vld [vmem:[%s0 + $0x80] sm:$0xff]
  %v31 = vld [vmem:[%s0 + $0x88] sm:$0xff]
  %v32 = vld [vmem:[%s0 + $0x90] sm:$0xff]
  %v33 = vld [vmem:[%s0 + $0x98] sm:$0xff]
  %v34 = vld [vmem:[%s0 + $0xa0] sm:$0xff]
  %v35 = vld [vmem:[%s0 + $0xa8] sm:$0xff]
  %v36 = vld [vmem:[%s0 + $0xb0] sm:$0xff]
  %v37 = vld [vmem:[%s0 + $0xb8] sm:$0xff]
  %v38 = vld [vmem:[%s0 + $0xc0] sm:$0xff]
  %v39 = vld [vmem:[%s0 + $0xc8] sm:$0xff]
  %v40 = vld [vmem:[%s0 + $0xd0] sm:$0xff]
  %v41 = vld [vmem:[%s0 + $0xd8] sm:$0xff]
  %v42 = vld [vmem:[%s0 + $0xe0] sm:$0xff]
  %v43 = vld [vmem:[%s0 + $0xe8] sm:$0xff]
  %v44 = vld [vmem:[%s0 + $0xf0] sm:$0xff]
  %v45 = vld [vmem:[%s0 + $0xf8] sm:$0xff]
  %v46 = vld [vmem:[%s0 + $0x100] sm:$0xff]
  %v47 = vld [vmem:[%s0 + $0x108] sm:$0xff]
  %v48 = vld [vmem:[%s0 + $0x110] sm:$0xff]
  %v49 = vld [vmem:[%s0 + $0x118] sm:$0xff]
  %v50 = vld [vmem:[%s0 + $0x120] sm:$0xff]
  %v51 = vld [vmem:[%s0 + $0x128] sm:$0xff]
  %v52 = vld [vmem:[%s0 + $0x130] sm:$0xff]
  %v53 = vld [vmem:[%s0 + $0x138] sm:$0xff]
  %v54 = vld [vmem:[%s0 + $0x140] sm:$0xff]
  %v55 = vld [vmem:[%s0 + $0x148] sm:$0xff]
  %v56 = vld [vmem:[%s0 + $0x150] sm:$0xff]
  %v57 = vld [vmem:[%s0 + $0x158] sm:$0xff]
  %v58 = vld [vmem:[%s0 + $0x160] sm:$0xff]
  %v59 = vld [vmem:[%s0 + $0x168] sm:$0xff]
  %v60 = vld [vmem:[%s0 + $0x170] sm:$0xff]
  %v61 = vld [vmem:[%s0 + $0x178] sm:$0xff]
  %v62 = vld [vmem:[%s0 + $0x180] sm:$0xff]
  %v63 = vld [vmem:[%s0 + $0x188] sm:$0xff]
  %v64 = vld [vmem:[%s0 + $0x190] sm:$0xff]
  %v65 = vld [vmem:[%s0 + $0x198] sm:$0xff]
  %v66 = vld [vmem:[%s0 + $0x1a0] sm:$0xff]
  %v67 = vld [vmem:[%s0 + $0x1a8] sm:$0xff]
  %v68 = vld [vmem:[%s0 + $0x1b0] sm:$0xff]
  %v69 = vld [vmem:[%s0 + $0x1b8] sm:$0xff]
  %v70 = vld [vmem:[%s0 + $0x1c0] sm:$0xff]
  %v71 = vld [vmem:[%s0 + $0x1c8] sm:$0xff]
  %v72 = vld [vmem:[%s0 + $0x1d0] sm:$0xff]
  %v73 = vld [vmem:[%s0 + $0x1d8] sm:$0xff]
  %v74 = vld [vmem:[%s0 + $0x1e0] sm:$0xff]
  %v75 = vld [vmem:[%s0 + $0x1e8] sm:$0xff]
  %v76 = vld [vmem:[%s0 + $0x1f0] sm:$0xff]
  %v77 = vld [vmem:[%s0 + $0x1f8] sm:$0xff]
  %v78 = vld [vmem:[%s0 + $0x200] sm:$0xff]
  %v79 = vld [vmem:[%s0 + $0x208] sm:$0xff]
  %v80 = vld [vmem:[%s0 + $0x210] sm:$0xff]
  %v81 = vld [vmem:[%s0 + $0x218] sm:$0xff]
  %v82 = vld [vmem:[%s0 + $0x220] sm:$0xff]
  %v83 = vld [vmem:[%s0 + $0x228] sm:$0xff]
  %v84 = vld [vmem:[%s0 + $0x230] sm:$0xff]
  %v85 = vld [vmem:[%s0 + $0x238] sm:$0xff]
  %v86 = vld [vmem:[%s0 + $0x240] sm:$0xff]
  %v87 = vld [vmem:[%s0 + $0x248] sm:$0xff]
  %v88 = vld [vmem:[%s0 + $0x250] sm:$0xff]
  %v89 = vld [vmem:[%s0 + $0x258] sm:$0xff]
  %v90 = vld [vmem:[%s0 + $0x260] sm:$0xff]
  %v91 = vld [vmem:[%s0 + $0x268] sm:$0xff]
  %v92 = vld [vmem:[%s0 + $0x270] sm:$0xff]
  %v93 = vld [vmem:[%s0 + $0x278] sm:$0xff]
  %v94 = vld [vmem:[%s0 + $0x280] sm:$0xff]
  %v95 = vld [vmem:[%s0 + $0x288] sm:$0xff]
  %v96 = vld [vmem:[%s0 + $0x290] sm:$0xff]
  %v97 = vld [vmem:[%s0 + $0x298] sm:$0xff]
  %v98 = vld [vmem:[%s0 + $0x2a0] sm:$0xff]
  %v99 = vld [vmem:[%s0 + $0x2a8] sm:$0xff]
  %v100 = vld [vmem:[%s0 + $0x2b0] sm:$0xff]
  %v101 = vld [vmem:[%s0 + $0x2b8] sm:$0xff]
  %v102 = vld [vmem:[%s0 + $0x2c0] sm:$0xff]
  %v103 = vld [vmem:[%s0 + $0x2c8] sm:$0xff]
  %v104 = vld [vmem:[%s0 + $0x2d0] sm:$0xff]
  %v105 = vld [vmem:[%s0 + $0x2d8] sm:$0xff]
  %v106 = vld [vmem:[%s0 + $0x2e0] sm:$0xff]
  %v107 = vld [vmem:[%s0 + $0x2e8] sm:$0xff]
  %v108 = vld [vmem:[%s0 + $0x2f0] sm:$0xff]
  %v109 = vld [vmem:[%s0 + $0x2f8] sm:$0xff]
  %v110 = vld [vmem:[%s0 + $0x300] sm:$0xff]
  %v111 = vld [vmem:[%s0 + $0x308] sm:$0xff]
  %v112 = vld [vmem:[%s0 + $0x310] sm:$0xff]
  %v113 = vld [vmem:[%s0 + $0x318] sm:$0xff]
  %v114 = vld [vmem:[%s0 + $0x320] sm:$0xff]
  %v115 = vld [vmem:[%s0 + $0x328] sm:$0xff]
  %v116 = vld [vmem:[%s0 + $0x330] sm:$0xff]
  %v117 = vld [vmem:[%s0 + $0x338] sm:$0xff]
  %v118 = vld [vmem:[%s0 + $0x340] sm:$0xff]
  %v119 = vld [vmem:[%s0 + $0x348] sm:$0xff]
  %v120 = vld [vmem:[%s0 + $0x350] sm:$0xff]
  %v121 = vld [vmem:[%s0 + $0x358] sm:$0xff]
  %v122 = vld [vmem:[%s0 + $0x360] sm:$0xff]
  %v123 = vld [vmem:[%s0 + $0x368] sm:$0xff]
  %v124 = vld [vmem:[%s0 + $0x370] sm:$0xff]
  %v125 = vld [vmem:[%s0 + $0x378] sm:$0xff]
  %v126 = vld [vmem:[%s0 + $0x380] sm:$0xff]
  %v127 = vld [vmem:[%s0 + $0x388] sm:$0xff]
  %v128 = vld [vmem:[%s0 + $0x390] sm:$0xff]
  %v129 = vld [vmem:[%s0 + $0x398] sm:$0xff]
  %v130 = vld [vmem:[%s0 + $0x3a0] sm:$0xff]
  %v131 = vld [vmem:[%s0 + $0x3a8] sm:$0xff]
  %v132 = vld [vmem:[%s0 + $0x3b0] sm:$0xff]
  %v133 = vld [vmem:[%s0 + $0x3b8] sm:$0xff]
  %v134 = vld [vmem:[%s0 + $0x3c0] sm:$0xff]
  %v135 = vld [vmem:[%s0 + $0x3c8] sm:$0xff]
  %v136 = vld [vmem:[%s0 + $0x3d0] sm:$0xff]
  %v137 = vld [vmem:[%s0 + $0x3d8] sm:$0xff]
  %v138 = vld [vmem:[%s0 + $0x3e0] sm:$0xff]
  %v139 = vld [vmem:[%s0 + $0x3e8] sm:$0xff]
  %v140 = vld [vmem:[%s0 + $0x3f0] sm:$0xff]
  %v141 = vld [vmem:[%s0 + $0x3f8] sm:$0xff]
  %v142 = vld [vmem:[%s0 + $0x400] sm:$0xff]
  %v143 = vld [vmem:[%s0 + $0x408] sm:$0xff]
  %v144 = vld [vmem:[%s0 + $0x410] sm:$0xff]
  %v145 = vld [vmem:[%s0 + $0x418] sm:$0xff]
  %v146 = vld [vmem:[%s0 + $0x420] sm:$0xff]
  %v147 = vld [vmem:[%s0 + $0x428] sm:$0xff]
  %v148 = vld [vmem:[%s0 + $0x430] sm:$0xff]
  %v149 = vld [vmem:[%s0 + $0x438] sm:$0xff]
  %v150 = vld [vmem:[%s0 + $0x440] sm:$0xff]
  %v151 = vld [vmem:[%s0 + $0x448] sm:$0xff]
  %v152 = vld [vmem:[%s0 + $0x450] sm:$0xff]
  %v153 = vld [vmem:[%s0 + $0x458] sm:$0xff]
  %v154 = vld [vmem:[%s0 + $0x460] sm:$0xff]
  %v155 = vld [vmem:[%s0 + $0x468] sm:$0xff]
  %v156 = vld [vmem:[%s0 + $0x470] sm:$0xff]
  %v157 = vld [vmem:[%s0 + $0x478] sm:$0xff]
  %v158 = vld [vmem:[%s0 + $0x480] sm:$0xff]
  %v159 = vld [vmem:[%s0 + $0x488] sm:$0xff]
  %v160 = vld [vmem:[%s0 + $0x490] sm:$0xff]
  %v161 = vld [vmem:[%s0 + $0x498] sm:$0xff]
  %v162 = vld [vmem:[%s0 + $0x4a0] sm:$0xff]
  %v163 = vld [vmem:[%s0 + $0x4a8] sm:$0xff]
  %v164 = vld [vmem:[%s0 + $0x4b0] sm:$0xff]
  %v165 = vld [vmem:[%s0 + $0x4b8] sm:$0xff]
  %v166 = vld [vmem:[%s0 + $0x4c0] sm:$0xff]
  %v167 = vld [vmem:[%s0 + $0x4c8] sm:$0xff]
  %v168 = vld [vmem:[%s0 + $0x4d0] sm:$0xff]
  %v169 = vld [vmem:[%s0 + $0x4d8] sm:$0xff]
  %v170 = vld [vmem:[%s0 + $0x4e0] sm:$0xff]
  %v171 = vld [vmem:[%s0 + $0x4e8] sm:$0xff]
  %v172 = vld [vmem:[%s0 + $0x4f0] sm:$0xff]
  %v173 = vld [vmem:[%s0 + $0x4f8] sm:$0xff]
  %v174 = vld [vmem:[%s0 + $0x500] sm:$0xff]
  %v175 = vld [vmem:[%s0 + $0x508] sm:$0xff]
  %v176 = vld [vmem:[%s0 + $0x510] sm:$0xff]
  %v177 = vld [vmem:[%s0 + $0x518] sm:$0xff]
  %v178 = vld [vmem:[%s0 + $0x520] sm:$0xff]
  %v179 = vld [vmem:[%s0 + $0x528] sm:$0xff]
  %v180 = vld [vmem:[%s0 + $0x530] sm:$0xff]
  %v181 = vld [vmem:[%s0 + $0x538] sm:$0xff]
  %v182 = vld [vmem:[%s0 + $0x540] sm:$0xff]
  %v183 = vld [vmem:[%s0 + $0x548] sm:$0xff]
  %v184 = vld [vmem:[%s0 + $0x550] sm:$0xff]
  %v185 = vld [vmem:[%s0 + $0x558] sm:$0xff]
  %v186 = vld [vmem:[%s0 + $0x560] sm:$0xff]
  %v187 = vld [vmem:[%s0 + $0x568] sm:$0xff]
  %v188 = vld [vmem:[%s0 + $0x570] sm:$0xff]
  %v189 = vld [vmem:[%s0 + $0x578] sm:$0xff]
  %v190 = vld [vmem:[%s0 + $0x580] sm:$0xff]
  %v191 = vld [vmem:[%s0 + $0x588] sm:$0xff]
  %v192 = vld [vmem:[%s0 + $0x590] sm:$0xff]
  %v193 = vld [vmem:[%s0 + $0x598] sm:$0xff]
  %v194 = vld [vmem:[%s0 + $0x5a0] sm:$0xff]
  %v195 = vld [vmem:[%s0 + $0x5a8] sm:$0xff]
  %v196 = vld [vmem:[%s0 + $0x5b0] sm:$0xff]
  %v197 = vld [vmem:[%s0 + $0x5b8] sm:$0xff]
  %v198 = vld [vmem:[%s0 + $0x5c0] sm:$0xff]
  %v199 = vld [vmem:[%s0 + $0x5c8] sm:$0xff]
  %v200 = vld [vmem:[%s0 + $0x5d0] sm:$0xff]
  %v201 = vld [vmem:[%s0 + $0x5d8] sm:$0xff]
  %v202 = vld [vmem:[%s0 + $0x5e0] sm:$0xff]
  %v203 = vld [vmem:[%s0 + $0x5e8] sm:$0xff]
  %v204 = vld [vmem:[%s0 + $0x5f0] sm:$0xff]
  %v205 = vld [vmem:[%s0 + $0x5f8] sm:$0xff]
  %v206 = vld [vmem:[%s0 + $0x600] sm:$0xff]
  %v207 = vld [vmem:[%s0 + $0x608] sm:$0xff]
  %v208 = vld [vmem:[%s0 + $0x610] sm:$0xff]
  %v209 = vld [vmem:[%s0 + $0x618] sm:$0xff]
  %v210 = vld [vmem:[%s0 + $0x620] sm:$0xff]
  %v211 = vld [vmem:[%s0 + $0x628] sm:$0xff]
  %v212 = vld [vmem:[%s0 + $0x630] sm:$0xff]
  %v213 = vld [vmem:[%s0 + $0x638] sm:$0xff]
  %v214 = vld [vmem:[%s0 + $0x640] sm:$0x3]
  %v215 = vld [vmem:[%s0 + $0x648] sm:$0x3]
  %v216 = vld [vmem:[%s0 + $0x650] sm:$0x3]
  %v217 = vld [vmem:[%s0 + $0x658] sm:$0x3]
  %v218 = vld [vmem:[%s0 + $0x660] sm:$0x3]
  %v219 = vld [vmem:[%s1] sm:$0xff]
  %v220 = vld [vmem:[%s1 + $0x8] sm:$0xff]
  %v221 = vld [vmem:[%s1 + $0x10] sm:$0xff]
  %v222 = vld [vmem:[%s1 + $0x18] sm:$0xff]
  %v223 = vld [vmem:[%s1 + $0x20] sm:$0xff]
  %v224 = vld [vmem:[%s1 + $0x28] sm:$0xff]
  %v225 = vld [vmem:[%s1 + $0x30] sm:$0xff]
  %v226 = vld [vmem:[%s1 + $0x38] sm:$0xff]
  %v227 = vld [vmem:[%s1 + $0x40] sm:$0xff]
  %v228 = vld [vmem:[%s1 + $0x48] sm:$0xff]
  %v229 = vld [vmem:[%s1 + $0x50] sm:$0xff]
  %v230 = vld [vmem:[%s1 + $0x58] sm:$0xff]
  %v231 = vld [vmem:[%s1 + $0x60] sm:$0xff]
  %v232 = vld [vmem:[%s1 + $0x68] sm:$0xff]
  %v233 = vld [vmem:[%s1 + $0x70] sm:$0xff]
  %v234 = vld [vmem:[%s1 + $0x78] sm:$0xff]
  %v235 = vld [vmem:[%s1 + $0x80] sm:$0xff]
  %v236 = vld [vmem:[%s1 + $0x88] sm:$0xff]
  %v237 = vld [vmem:[%s1 + $0x90] sm:$0xff]
  %v238 = vld [vmem:[%s1 + $0x98] sm:$0xff]
  %v239 = vld [vmem:[%s1 + $0xa0] sm:$0xff]
  %v240 = vld [vmem:[%s1 + $0xa8] sm:$0xff]
  %v241 = vld [vmem:[%s1 + $0xb0] sm:$0xff]
  %v242 = vld [vmem:[%s1 + $0xb8] sm:$0xff]
  %v243 = vld [vmem:[%s1 + $0xc0] sm:$0xff]
  %v244 = vld [vmem:[%s1 + $0xc8] sm:$0xff]
  %v245 = vld [vmem:[%s1 + $0xd0] sm:$0xff]
  %v246 = vld [vmem:[%s1 + $0xd8] sm:$0xff]
  %v247 = vld [vmem:[%s1 + $0xe0] sm:$0xff]
  %v248 = vld [vmem:[%s1 + $0xe8] sm:$0xff]
  %v249 = vld [vmem:[%s1 + $0xf0] sm:$0xff]
  %v250 = vld [vmem:[%s1 + $0xf8] sm:$0xff]
  %v251 = vld [vmem:[%s1 + $0x100] sm:$0xff]
  %v252 = vld [vmem:[%s1 + $0x108] sm:$0xff]
  %v253 = vld [vmem:[%s1 + $0x110] sm:$0xff]
  %v254 = vld [vmem:[%s1 + $0x118] sm:$0xff]
  %v255 = vld [vmem:[%s1 + $0x120] sm:$0xff]
  %v256 = vld [vmem:[%s1 + $0x128] sm:$0xff]
  %v257 = vld [vmem:[%s1 + $0x130] sm:$0xff]
  %v258 = vld [vmem:[%s1 + $0x138] sm:$0xff]
  %v259 = vld [vmem:[%s1 + $0x140] sm:$0xff]
  %v260 = vld [vmem:[%s1 + $0x148] sm:$0xff]
  %v261 = vld [vmem:[%s1 + $0x150] sm:$0xff]
  %v262 = vld [vmem:[%s1 + $0x158] sm:$0xff]
  %v263 = vld [vmem:[%s1 + $0x160] sm:$0xff]
  %v264 = vld [vmem:[%s1 + $0x168] sm:$0xff]
  %v265 = vld [vmem:[%s1 + $0x170] sm:$0xff]
  %v266 = vld [vmem:[%s1 + $0x178] sm:$0xff]
  %v267 = vld [vmem:[%s1 + $0x180] sm:$0xff]
  %v268 = vld [vmem:[%s1 + $0x188] sm:$0xff]
  %v269 = vld [vmem:[%s1 + $0x190] sm:$0xff]
  %v270 = vld [vmem:[%s1 + $0x198] sm:$0xff]
  %v271 = vld [vmem:[%s1 + $0x1a0] sm:$0xff]
  %v272 = vld [vmem:[%s1 + $0x1a8] sm:$0xff]
  %v273 = vld [vmem:[%s1 + $0x1b0] sm:$0xff]
  %v274 = vld [vmem:[%s1 + $0x1b8] sm:$0xff]
  %v275 = vld [vmem:[%s1 + $0x1c0] sm:$0xff]
  %v276 = vld [vmem:[%s1 + $0x1c8] sm:$0xff]
  %v277 = vld [vmem:[%s1 + $0x1d0] sm:$0xff]
  %v278 = vld [vmem:[%s1 + $0x1d8] sm:$0xff]
  %v279 = vld [vmem:[%s1 + $0x1e0] sm:$0xff]
  %v280 = vld [vmem:[%s1 + $0x1e8] sm:$0xff]
  %v281 = vld [vmem:[%s1 + $0x1f0] sm:$0xff]
  %v282 = vld [vmem:[%s1 + $0x1f8] sm:$0xff]
  %v283 = vld [vmem:[%s1 + $0x200] sm:$0xff]
  %v284 = vld [vmem:[%s1 + $0x208] sm:$0xff]
  %v285 = vld [vmem:[%s2] sm:$0x1]
  %v287 = vperm.slane %v285, 0
  %vm289 = vcmask 130048
  %v291 = vsel %vm289, %v18, 0
  %v294 = vsel %vm289, %v23, 0
  %v297 = vsel %vm289, %v28, 0
  %v300 = vsel %vm289, %v33, 0
  %v303 = vsel %vm289, %v38, 0
  %v306 = vsel %vm289, %v43, 0
  %v309 = vsel %vm289, %v48, 0
  %v312 = vsel %vm289, %v53, 0
  %v315 = vsel %vm289, %v58, 0
  %v318 = vsel %vm289, %v63, 0
  %v321 = vsel %vm289, %v68, 0
  %v324 = vsel %vm289, %v73, 0
  %v327 = vsel %vm289, %v78, 0
  %v330 = vsel %vm289, %v83, 0
  %v333 = vsel %vm289, %v88, 0
  %v336 = vsel %vm289, %v93, 0
  %v339 = vsel %vm289, %v98, 0
  %v342 = vsel %vm289, %v103, 0
  %v345 = vsel %vm289, %v108, 0
  %v348 = vsel %vm289, %v113, 0
  %v351 = vsel %vm289, %v118, 0
  %v354 = vsel %vm289, %v123, 0
  %v357 = vsel %vm289, %v128, 0
  %v360 = vsel %vm289, %v133, 0
  %v363 = vsel %vm289, %v138, 0
  %v366 = vsel %vm289, %v143, 0
  %v369 = vsel %vm289, %v148, 0
  %v372 = vsel %vm289, %v153, 0
  %v375 = vsel %vm289, %v158, 0
  %v378 = vsel %vm289, %v163, 0
  %v381 = vsel %vm289, %v168, 0
  %v384 = vsel %vm289, %v173, 0
  %v387 = vsel %vm289, %v178, 0
  %v390 = vsel %vm289, %v183, 0
  %v393 = vsel %vm289, %v188, 0
  %v396 = vsel %vm289, %v193, 0
  %v399 = vsel %vm289, %v198, 0
  %v402 = vsel %vm289, %v203, 0
  %v405 = vsel %vm289, %v208, 0
  %v408 = vsel %vm289, %v213, 0
  %v411 = vsel %vm289, %v218, 0
  %413 = vmatpush.msra.mxu0 %v234
  %414 = vmatpush.msra.mxu0 %v233
  %415 = vmatpush.msra.mxu0 %v232
  %416 = vmatpush.msra.mxu0 %v231
  %417 = vmatpush.msra.mxu0 %v230
  %418 = vmatpush.msra.mxu0 %v229
  %419 = vmatpush.msra.mxu0 %v228
  %420 = vmatpush.msra.mxu0 %v227
  %421 = vmatpush.msra.mxu0 %v226
  %422 = vmatpush.msra.mxu0 %v225
  %423 = vmatpush.msra.mxu0 %v224
  %424 = vmatpush.msra.mxu0 %v223
  %425 = vmatpush.msra.mxu0 %v222
  %426 = vmatpush.msra.mxu0 %v221
  %427 = vmatpush.msra.mxu0 %v220
  %428 = vmatpush.msra.mxu0 %v219
  %429 = vmatmul.f32.gmra.mxu0 %v14
  %v430 = vpop.f32.mrf.mxu0
  %v431 = vadd.f32 %v287, %v430
  %432 = vmatmul.f32.gmra.mxu0 %v19
  %v433 = vpop.f32.mrf.mxu0
  %v434 = vadd.f32 %v287, %v433
  %435 = vmatmul.f32.gmra.mxu0 %v24
  %v436 = vpop.f32.mrf.mxu0
  %v437 = vadd.f32 %v287, %v436
  %438 = vmatmul.f32.gmra.mxu0 %v29
  %v439 = vpop.f32.mrf.mxu0
  %v440 = vadd.f32 %v287, %v439
  %441 = vmatmul.f32.gmra.mxu0 %v34
  %v442 = vpop.f32.mrf.mxu0
  %v443 = vadd.f32 %v287, %v442
  %444 = vmatmul.f32.gmra.mxu0 %v39
  %v445 = vpop.f32.mrf.mxu0
  %v446 = vadd.f32 %v287, %v445
  %447 = vmatmul.f32.gmra.mxu0 %v44
  %v448 = vpop.f32.mrf.mxu0
  %v449 = vadd.f32 %v287, %v448
  %450 = vmatmul.f32.gmra.mxu0 %v49
  %v451 = vpop.f32.mrf.mxu0
  %v452 = vadd.f32 %v287, %v451
  %453 = vmatmul.f32.gmra.mxu0 %v54
  %v454 = vpop.f32.mrf.mxu0
  %v455 = vadd.f32 %v287, %v454
  %456 = vmatmul.f32.gmra.mxu0 %v59
  %v457 = vpop.f32.mrf.mxu0
  %v458 = vadd.f32 %v287, %v457
  %459 = vmatmul.f32.gmra.mxu0 %v64
  %v460 = vpop.f32.mrf.mxu0
  %v461 = vadd.f32 %v287, %v460
  %462 = vmatmul.f32.gmra.mxu0 %v69
  %v463 = vpop.f32.mrf.mxu0
  %v464 = vadd.f32 %v287, %v463
  %465 = vmatmul.f32.gmra.mxu0 %v74
  %v466 = vpop.f32.mrf.mxu0
  %v467 = vadd.f32 %v287, %v466
  %468 = vmatmul.f32.gmra.mxu0 %v79
  %v469 = vpop.f32.mrf.mxu0
  %v470 = vadd.f32 %v287, %v469
  %471 = vmatmul.f32.gmra.mxu0 %v84
  %v472 = vpop.f32.mrf.mxu0
  %v473 = vadd.f32 %v287, %v472
  %474 = vmatmul.f32.gmra.mxu0 %v89
  %v475 = vpop.f32.mrf.mxu0
  %v476 = vadd.f32 %v287, %v475
  %477 = vmatmul.f32.gmra.mxu0 %v94
  %v478 = vpop.f32.mrf.mxu0
  %v479 = vadd.f32 %v287, %v478
  %480 = vmatmul.f32.gmra.mxu0 %v99
  %v481 = vpop.f32.mrf.mxu0
  %v482 = vadd.f32 %v287, %v481
  %483 = vmatmul.f32.gmra.mxu0 %v104
  %v484 = vpop.f32.mrf.mxu0
  %v485 = vadd.f32 %v287, %v484
  %486 = vmatmul.f32.gmra.mxu0 %v109
  %v487 = vpop.f32.mrf.mxu0
  %v488 = vadd.f32 %v287, %v487
  %489 = vmatmul.f32.gmra.mxu0 %v114
  %v490 = vpop.f32.mrf.mxu0
  %v491 = vadd.f32 %v287, %v490
  %492 = vmatmul.f32.gmra.mxu0 %v119
  %v493 = vpop.f32.mrf.mxu0
  %v494 = vadd.f32 %v287, %v493
  %495 = vmatmul.f32.gmra.mxu0 %v124
  %v496 = vpop.f32.mrf.mxu0
  %v497 = vadd.f32 %v287, %v496
  %498 = vmatmul.f32.gmra.mxu0 %v129
  %v499 = vpop.f32.mrf.mxu0
  %v500 = vadd.f32 %v287, %v499
  %501 = vmatmul.f32.gmra.mxu0 %v134
  %v502 = vpop.f32.mrf.mxu0
  %v503 = vadd.f32 %v287, %v502
  %504 = vmatmul.f32.gmra.mxu0 %v139
  %v505 = vpop.f32.mrf.mxu0
  %v506 = vadd.f32 %v287, %v505
  %507 = vmatmul.f32.gmra.mxu0 %v144
  %v508 = vpop.f32.mrf.mxu0
  %v509 = vadd.f32 %v287, %v508
  %510 = vmatmul.f32.gmra.mxu0 %v149
  %v511 = vpop.f32.mrf.mxu0
  %v512 = vadd.f32 %v287, %v511
  %513 = vmatmul.f32.gmra.mxu0 %v154
  %v514 = vpop.f32.mrf.mxu0
  %v515 = vadd.f32 %v287, %v514
  %516 = vmatmul.f32.gmra.mxu0 %v159
  %v517 = vpop.f32.mrf.mxu0
  %v518 = vadd.f32 %v287, %v517
  %519 = vmatmul.f32.gmra.mxu0 %v164
  %v520 = vpop.f32.mrf.mxu0
  %v521 = vadd.f32 %v287, %v520
  %522 = vmatmul.f32.gmra.mxu0 %v169
  %v523 = vpop.f32.mrf.mxu0
  %v524 = vadd.f32 %v287, %v523
  %525 = vmatmul.f32.gmra.mxu0 %v174
  %v526 = vpop.f32.mrf.mxu0
  %v527 = vadd.f32 %v287, %v526
  %528 = vmatmul.f32.gmra.mxu0 %v179
  %v529 = vpop.f32.mrf.mxu0
  %v530 = vadd.f32 %v287, %v529
  %531 = vmatmul.f32.gmra.mxu0 %v184
  %v532 = vpop.f32.mrf.mxu0
  %v533 = vadd.f32 %v287, %v532
  %534 = vmatmul.f32.gmra.mxu0 %v189
  %v535 = vpop.f32.mrf.mxu0
  %v536 = vadd.f32 %v287, %v535
  %537 = vmatmul.f32.gmra.mxu0 %v194
  %v538 = vpop.f32.mrf.mxu0
  %v539 = vadd.f32 %v287, %v538
  %540 = vmatmul.f32.gmra.mxu0 %v199
  %v541 = vpop.f32.mrf.mxu0
  %v542 = vadd.f32 %v287, %v541
  %543 = vmatmul.f32.gmra.mxu0 %v204
  %v544 = vpop.f32.mrf.mxu0
  %v545 = vadd.f32 %v287, %v544
  %546 = vmatmul.f32.gmra.mxu0 %v209
  %v547 = vpop.f32.mrf.mxu0
  %v548 = vadd.f32 %v287, %v547
  %549 = vmatmul.f32.gmra.mxu0 %v214
  %v550 = vpop.f32.mrf.mxu0
  %v551 = vadd.f32 %v287, %v550
  %552 = vdwg.mxu0
  %553 = vmatpush.msra.mxu0 %v250
  %554 = vmatpush.msra.mxu0 %v249
  %555 = vmatpush.msra.mxu0 %v248
  %556 = vmatpush.msra.mxu0 %v247
  %557 = vmatpush.msra.mxu0 %v246
  %558 = vmatpush.msra.mxu0 %v245
  %559 = vmatpush.msra.mxu0 %v244
  %560 = vmatpush.msra.mxu0 %v243
  %561 = vmatpush.msra.mxu0 %v242
  %562 = vmatpush.msra.mxu0 %v241
  %563 = vmatpush.msra.mxu0 %v240
  %564 = vmatpush.msra.mxu0 %v239
  %565 = vmatpush.msra.mxu0 %v238
  %566 = vmatpush.msra.mxu0 %v237
  %567 = vmatpush.msra.mxu0 %v236
  %568 = vmatpush.msra.mxu0 %v235
  %569 = vmatmul.f32.gmra.mxu0 %v15
  %v570 = vpop.f32.mrf.mxu0
  %v571 = vadd.f32 %v431, %v570
  %572 = vmatmul.f32.gmra.mxu0 %v20
  %v573 = vpop.f32.mrf.mxu0
  %v574 = vadd.f32 %v434, %v573
  %575 = vmatmul.f32.gmra.mxu0 %v25
  %v576 = vpop.f32.mrf.mxu0
  %v577 = vadd.f32 %v437, %v576
  %578 = vmatmul.f32.gmra.mxu0 %v30
  %v579 = vpop.f32.mrf.mxu0
  %v580 = vadd.f32 %v440, %v579
  %581 = vmatmul.f32.gmra.mxu0 %v35
  %v582 = vpop.f32.mrf.mxu0
  %v583 = vadd.f32 %v443, %v582
  %584 = vmatmul.f32.gmra.mxu0 %v40
  %v585 = vpop.f32.mrf.mxu0
  %v586 = vadd.f32 %v446, %v585
  %587 = vmatmul.f32.gmra.mxu0 %v45
  %v588 = vpop.f32.mrf.mxu0
  %v589 = vadd.f32 %v449, %v588
  %590 = vmatmul.f32.gmra.mxu0 %v50
  %v591 = vpop.f32.mrf.mxu0
  %v592 = vadd.f32 %v452, %v591
  %593 = vmatmul.f32.gmra.mxu0 %v55
  %v594 = vpop.f32.mrf.mxu0
  %v595 = vadd.f32 %v455, %v594
  %596 = vmatmul.f32.gmra.mxu0 %v60
  %v597 = vpop.f32.mrf.mxu0
  %v598 = vadd.f32 %v458, %v597
  %599 = vmatmul.f32.gmra.mxu0 %v65
  %v600 = vpop.f32.mrf.mxu0
  %v601 = vadd.f32 %v461, %v600
  %602 = vmatmul.f32.gmra.mxu0 %v70
  %v603 = vpop.f32.mrf.mxu0
  %v604 = vadd.f32 %v464, %v603
  %605 = vmatmul.f32.gmra.mxu0 %v75
  %v606 = vpop.f32.mrf.mxu0
  %v607 = vadd.f32 %v467, %v606
  %608 = vmatmul.f32.gmra.mxu0 %v80
  %v609 = vpop.f32.mrf.mxu0
  %v610 = vadd.f32 %v470, %v609
  %611 = vmatmul.f32.gmra.mxu0 %v85
  %v612 = vpop.f32.mrf.mxu0
  %v613 = vadd.f32 %v473, %v612
  %614 = vmatmul.f32.gmra.mxu0 %v90
  %v615 = vpop.f32.mrf.mxu0
  %v616 = vadd.f32 %v476, %v615
  %617 = vmatmul.f32.gmra.mxu0 %v95
  %v618 = vpop.f32.mrf.mxu0
  %v619 = vadd.f32 %v479, %v618
  %620 = vmatmul.f32.gmra.mxu0 %v100
  %v621 = vpop.f32.mrf.mxu0
  %v622 = vadd.f32 %v482, %v621
  %623 = vmatmul.f32.gmra.mxu0 %v105
  %v624 = vpop.f32.mrf.mxu0
  %v625 = vadd.f32 %v485, %v624
  %626 = vmatmul.f32.gmra.mxu0 %v110
  %v627 = vpop.f32.mrf.mxu0
  %v628 = vadd.f32 %v488, %v627
  %629 = vmatmul.f32.gmra.mxu0 %v115
  %v630 = vpop.f32.mrf.mxu0
  %v631 = vadd.f32 %v491, %v630
  %632 = vmatmul.f32.gmra.mxu0 %v120
  %v633 = vpop.f32.mrf.mxu0
  %v634 = vadd.f32 %v494, %v633
  %635 = vmatmul.f32.gmra.mxu0 %v125
  %v636 = vpop.f32.mrf.mxu0
  %v637 = vadd.f32 %v497, %v636
  %638 = vmatmul.f32.gmra.mxu0 %v130
  %v639 = vpop.f32.mrf.mxu0
  %v640 = vadd.f32 %v500, %v639
  %641 = vmatmul.f32.gmra.mxu0 %v135
  %v642 = vpop.f32.mrf.mxu0
  %v643 = vadd.f32 %v503, %v642
  %644 = vmatmul.f32.gmra.mxu0 %v140
  %v645 = vpop.f32.mrf.mxu0
  %v646 = vadd.f32 %v506, %v645
  %647 = vmatmul.f32.gmra.mxu0 %v145
  %v648 = vpop.f32.mrf.mxu0
  %v649 = vadd.f32 %v509, %v648
  %650 = vmatmul.f32.gmra.mxu0 %v150
  %v651 = vpop.f32.mrf.mxu0
  %v652 = vadd.f32 %v512, %v651
  %653 = vmatmul.f32.gmra.mxu0 %v155
  %v654 = vpop.f32.mrf.mxu0
  %v655 = vadd.f32 %v515, %v654
  %656 = vmatmul.f32.gmra.mxu0 %v160
  %v657 = vpop.f32.mrf.mxu0
  %v658 = vadd.f32 %v518, %v657
  %659 = vmatmul.f32.gmra.mxu0 %v165
  %v660 = vpop.f32.mrf.mxu0
  %v661 = vadd.f32 %v521, %v660
  %662 = vmatmul.f32.gmra.mxu0 %v170
  %v663 = vpop.f32.mrf.mxu0
  %v664 = vadd.f32 %v524, %v663
  %665 = vmatmul.f32.gmra.mxu0 %v175
  %v666 = vpop.f32.mrf.mxu0
  %v667 = vadd.f32 %v527, %v666
  %668 = vmatmul.f32.gmra.mxu0 %v180
  %v669 = vpop.f32.mrf.mxu0
  %v670 = vadd.f32 %v530, %v669
  %671 = vmatmul.f32.gmra.mxu0 %v185
  %v672 = vpop.f32.mrf.mxu0
  %v673 = vadd.f32 %v533, %v672
  %674 = vmatmul.f32.gmra.mxu0 %v190
  %v675 = vpop.f32.mrf.mxu0
  %v676 = vadd.f32 %v536, %v675
  %677 = vmatmul.f32.gmra.mxu0 %v195
  %v678 = vpop.f32.mrf.mxu0
  %v679 = vadd.f32 %v539, %v678
  %680 = vmatmul.f32.gmra.mxu0 %v200
  %v681 = vpop.f32.mrf.mxu0
  %v682 = vadd.f32 %v542, %v681
  %683 = vmatmul.f32.gmra.mxu0 %v205
  %v684 = vpop.f32.mrf.mxu0
  %v685 = vadd.f32 %v545, %v684
  %686 = vmatmul.f32.gmra.mxu0 %v210
  %v687 = vpop.f32.mrf.mxu0
  %v688 = vadd.f32 %v548, %v687
  %689 = vmatmul.f32.gmra.mxu0 %v215
  %v690 = vpop.f32.mrf.mxu0
  %v691 = vadd.f32 %v551, %v690
  %692 = vdwg.mxu0
  %693 = vmatpush.msra.mxu0 %v266
  %694 = vmatpush.msra.mxu0 %v265
  %695 = vmatpush.msra.mxu0 %v264
  %696 = vmatpush.msra.mxu0 %v263
  %697 = vmatpush.msra.mxu0 %v262
  %698 = vmatpush.msra.mxu0 %v261
  %699 = vmatpush.msra.mxu0 %v260
  %700 = vmatpush.msra.mxu0 %v259
  %701 = vmatpush.msra.mxu0 %v258
  %702 = vmatpush.msra.mxu0 %v257
  %703 = vmatpush.msra.mxu0 %v256
  %704 = vmatpush.msra.mxu0 %v255
  %705 = vmatpush.msra.mxu0 %v254
  %706 = vmatpush.msra.mxu0 %v253
  %707 = vmatpush.msra.mxu0 %v252
  %708 = vmatpush.msra.mxu0 %v251
  %709 = vmatmul.f32.gmra.mxu0 %v16
  %v710 = vpop.f32.mrf.mxu0
  %v711 = vadd.f32 %v571, %v710
  %712 = vmatmul.f32.gmra.mxu0 %v21
  %v713 = vpop.f32.mrf.mxu0
  %v714 = vadd.f32 %v574, %v713
  %715 = vmatmul.f32.gmra.mxu0 %v26
  %v716 = vpop.f32.mrf.mxu0
  %v717 = vadd.f32 %v577, %v716
  %718 = vmatmul.f32.gmra.mxu0 %v31
  %v719 = vpop.f32.mrf.mxu0
  %v720 = vadd.f32 %v580, %v719
  %721 = vmatmul.f32.gmra.mxu0 %v36
  %v722 = vpop.f32.mrf.mxu0
  %v723 = vadd.f32 %v583, %v722
  %724 = vmatmul.f32.gmra.mxu0 %v41
  %v725 = vpop.f32.mrf.mxu0
  %v726 = vadd.f32 %v586, %v725
  %727 = vmatmul.f32.gmra.mxu0 %v46
  %v728 = vpop.f32.mrf.mxu0
  %v729 = vadd.f32 %v589, %v728
  %730 = vmatmul.f32.gmra.mxu0 %v51
  %v731 = vpop.f32.mrf.mxu0
  %v732 = vadd.f32 %v592, %v731
  %733 = vmatmul.f32.gmra.mxu0 %v56
  %v734 = vpop.f32.mrf.mxu0
  %v735 = vadd.f32 %v595, %v734
  %736 = vmatmul.f32.gmra.mxu0 %v61
  %v737 = vpop.f32.mrf.mxu0
  %v738 = vadd.f32 %v598, %v737
  %739 = vmatmul.f32.gmra.mxu0 %v66
  %v740 = vpop.f32.mrf.mxu0
  %v741 = vadd.f32 %v601, %v740
  %742 = vmatmul.f32.gmra.mxu0 %v71
  %v743 = vpop.f32.mrf.mxu0
  %v744 = vadd.f32 %v604, %v743
  %745 = vmatmul.f32.gmra.mxu0 %v76
  %v746 = vpop.f32.mrf.mxu0
  %v747 = vadd.f32 %v607, %v746
  %748 = vmatmul.f32.gmra.mxu0 %v81
  %v749 = vpop.f32.mrf.mxu0
  %v750 = vadd.f32 %v610, %v749
  %751 = vmatmul.f32.gmra.mxu0 %v86
  %v752 = vpop.f32.mrf.mxu0
  %v753 = vadd.f32 %v613, %v752
  %754 = vmatmul.f32.gmra.mxu0 %v91
  %v755 = vpop.f32.mrf.mxu0
  %v756 = vadd.f32 %v616, %v755
  %757 = vmatmul.f32.gmra.mxu0 %v96
  %v758 = vpop.f32.mrf.mxu0
  %v759 = vadd.f32 %v619, %v758
  %760 = vmatmul.f32.gmra.mxu0 %v101
  %v761 = vpop.f32.mrf.mxu0
  %v762 = vadd.f32 %v622, %v761
  %763 = vmatmul.f32.gmra.mxu0 %v106
  %v764 = vpop.f32.mrf.mxu0
  %v765 = vadd.f32 %v625, %v764
  %766 = vmatmul.f32.gmra.mxu0 %v111
  %v767 = vpop.f32.mrf.mxu0
  %v768 = vadd.f32 %v628, %v767
  %769 = vmatmul.f32.gmra.mxu0 %v116
  %v770 = vpop.f32.mrf.mxu0
  %v771 = vadd.f32 %v631, %v770
  %772 = vmatmul.f32.gmra.mxu0 %v121
  %v773 = vpop.f32.mrf.mxu0
  %v774 = vadd.f32 %v634, %v773
  %775 = vmatmul.f32.gmra.mxu0 %v126
  %v776 = vpop.f32.mrf.mxu0
  %v777 = vadd.f32 %v637, %v776
  %778 = vmatmul.f32.gmra.mxu0 %v131
  %v779 = vpop.f32.mrf.mxu0
  %v780 = vadd.f32 %v640, %v779
  %781 = vmatmul.f32.gmra.mxu0 %v136
  %v782 = vpop.f32.mrf.mxu0
  %v783 = vadd.f32 %v643, %v782
  %784 = vmatmul.f32.gmra.mxu0 %v141
  %v785 = vpop.f32.mrf.mxu0
  %v786 = vadd.f32 %v646, %v785
  %787 = vmatmul.f32.gmra.mxu0 %v146
  %v788 = vpop.f32.mrf.mxu0
  %v789 = vadd.f32 %v649, %v788
  %790 = vmatmul.f32.gmra.mxu0 %v151
  %v791 = vpop.f32.mrf.mxu0
  %v792 = vadd.f32 %v652, %v791
  %793 = vmatmul.f32.gmra.mxu0 %v156
  %v794 = vpop.f32.mrf.mxu0
  %v795 = vadd.f32 %v655, %v794
  %796 = vmatmul.f32.gmra.mxu0 %v161
  %v797 = vpop.f32.mrf.mxu0
  %v798 = vadd.f32 %v658, %v797
  %799 = vmatmul.f32.gmra.mxu0 %v166
  %v800 = vpop.f32.mrf.mxu0
  %v801 = vadd.f32 %v661, %v800
  %802 = vmatmul.f32.gmra.mxu0 %v171
  %v803 = vpop.f32.mrf.mxu0
  %v804 = vadd.f32 %v664, %v803
  %805 = vmatmul.f32.gmra.mxu0 %v176
  %v806 = vpop.f32.mrf.mxu0
  %v807 = vadd.f32 %v667, %v806
  %808 = vmatmul.f32.gmra.mxu0 %v181
  %v809 = vpop.f32.mrf.mxu0
  %v810 = vadd.f32 %v670, %v809
  %811 = vmatmul.f32.gmra.mxu0 %v186
  %v812 = vpop.f32.mrf.mxu0
  %v813 = vadd.f32 %v673, %v812
  %814 = vmatmul.f32.gmra.mxu0 %v191
  %v815 = vpop.f32.mrf.mxu0
  %v816 = vadd.f32 %v676, %v815
  %817 = vmatmul.f32.gmra.mxu0 %v196
  %v818 = vpop.f32.mrf.mxu0
  %v819 = vadd.f32 %v679, %v818
  %820 = vmatmul.f32.gmra.mxu0 %v201
  %v821 = vpop.f32.mrf.mxu0
  %v822 = vadd.f32 %v682, %v821
  %823 = vmatmul.f32.gmra.mxu0 %v206
  %v824 = vpop.f32.mrf.mxu0
  %v825 = vadd.f32 %v685, %v824
  %826 = vmatmul.f32.gmra.mxu0 %v211
  %v827 = vpop.f32.mrf.mxu0
  %v828 = vadd.f32 %v688, %v827
  %829 = vmatmul.f32.gmra.mxu0 %v216
  %v830 = vpop.f32.mrf.mxu0
  %v831 = vadd.f32 %v691, %v830
  %832 = vdwg.mxu0
  %833 = vmatpush.msra.mxu0 %v282
  %834 = vmatpush.msra.mxu0 %v281
  %835 = vmatpush.msra.mxu0 %v280
  %836 = vmatpush.msra.mxu0 %v279
  %837 = vmatpush.msra.mxu0 %v278
  %838 = vmatpush.msra.mxu0 %v277
  %839 = vmatpush.msra.mxu0 %v276
  %840 = vmatpush.msra.mxu0 %v275
  %841 = vmatpush.msra.mxu0 %v274
  %842 = vmatpush.msra.mxu0 %v273
  %843 = vmatpush.msra.mxu0 %v272
  %844 = vmatpush.msra.mxu0 %v271
  %845 = vmatpush.msra.mxu0 %v270
  %846 = vmatpush.msra.mxu0 %v269
  %847 = vmatpush.msra.mxu0 %v268
  %848 = vmatpush.msra.mxu0 %v267
  %849 = vmatmul.f32.gmra.mxu0 %v17
  %v850 = vpop.f32.mrf.mxu0
  %v851 = vadd.f32 %v711, %v850
  %852 = vmatmul.f32.gmra.mxu0 %v22
  %v853 = vpop.f32.mrf.mxu0
  %v854 = vadd.f32 %v714, %v853
  %855 = vmatmul.f32.gmra.mxu0 %v27
  %v856 = vpop.f32.mrf.mxu0
  %v857 = vadd.f32 %v717, %v856
  %858 = vmatmul.f32.gmra.mxu0 %v32
  %v859 = vpop.f32.mrf.mxu0
  %v860 = vadd.f32 %v720, %v859
  %861 = vmatmul.f32.gmra.mxu0 %v37
  %v862 = vpop.f32.mrf.mxu0
  %v863 = vadd.f32 %v723, %v862
  %864 = vmatmul.f32.gmra.mxu0 %v42
  %v865 = vpop.f32.mrf.mxu0
  %v866 = vadd.f32 %v726, %v865
  %867 = vmatmul.f32.gmra.mxu0 %v47
  %v868 = vpop.f32.mrf.mxu0
  %v869 = vadd.f32 %v729, %v868
  %870 = vmatmul.f32.gmra.mxu0 %v52
  %v871 = vpop.f32.mrf.mxu0
  %v872 = vadd.f32 %v732, %v871
  %873 = vmatmul.f32.gmra.mxu0 %v57
  %v874 = vpop.f32.mrf.mxu0
  %v875 = vadd.f32 %v735, %v874
  %876 = vmatmul.f32.gmra.mxu0 %v62
  %v877 = vpop.f32.mrf.mxu0
  %v878 = vadd.f32 %v738, %v877
  %879 = vmatmul.f32.gmra.mxu0 %v67
  %v880 = vpop.f32.mrf.mxu0
  %v881 = vadd.f32 %v741, %v880
  %882 = vmatmul.f32.gmra.mxu0 %v72
  %v883 = vpop.f32.mrf.mxu0
  %v884 = vadd.f32 %v744, %v883
  %885 = vmatmul.f32.gmra.mxu0 %v77
  %v886 = vpop.f32.mrf.mxu0
  %v887 = vadd.f32 %v747, %v886
  %888 = vmatmul.f32.gmra.mxu0 %v82
  %v889 = vpop.f32.mrf.mxu0
  %v890 = vadd.f32 %v750, %v889
  %891 = vmatmul.f32.gmra.mxu0 %v87
  %v892 = vpop.f32.mrf.mxu0
  %v893 = vadd.f32 %v753, %v892
  %894 = vmatmul.f32.gmra.mxu0 %v92
  %v895 = vpop.f32.mrf.mxu0
  %v896 = vadd.f32 %v756, %v895
  %897 = vmatmul.f32.gmra.mxu0 %v97
  %v898 = vpop.f32.mrf.mxu0
  %v899 = vadd.f32 %v759, %v898
  %900 = vmatmul.f32.gmra.mxu0 %v102
  %v901 = vpop.f32.mrf.mxu0
  %v902 = vadd.f32 %v762, %v901
  %903 = vmatmul.f32.gmra.mxu0 %v107
  %v904 = vpop.f32.mrf.mxu0
  %v905 = vadd.f32 %v765, %v904
  %906 = vmatmul.f32.gmra.mxu0 %v112
  %v907 = vpop.f32.mrf.mxu0
  %v908 = vadd.f32 %v768, %v907
  %909 = vmatmul.f32.gmra.mxu0 %v117
  %v910 = vpop.f32.mrf.mxu0
  %v911 = vadd.f32 %v771, %v910
  %912 = vmatmul.f32.gmra.mxu0 %v122
  %v913 = vpop.f32.mrf.mxu0
  %v914 = vadd.f32 %v774, %v913
  %915 = vmatmul.f32.gmra.mxu0 %v127
  %v916 = vpop.f32.mrf.mxu0
  %v917 = vadd.f32 %v777, %v916
  %918 = vmatmul.f32.gmra.mxu0 %v132
  %v919 = vpop.f32.mrf.mxu0
  %v920 = vadd.f32 %v780, %v919
  %921 = vmatmul.f32.gmra.mxu0 %v137
  %v922 = vpop.f32.mrf.mxu0
  %v923 = vadd.f32 %v783, %v922
  %924 = vmatmul.f32.gmra.mxu0 %v142
  %v925 = vpop.f32.mrf.mxu0
  %v926 = vadd.f32 %v786, %v925
  %927 = vmatmul.f32.gmra.mxu0 %v147
  %v928 = vpop.f32.mrf.mxu0
  %v929 = vadd.f32 %v789, %v928
  %930 = vmatmul.f32.gmra.mxu0 %v152
  %v931 = vpop.f32.mrf.mxu0
  %v932 = vadd.f32 %v792, %v931
  %933 = vmatmul.f32.gmra.mxu0 %v157
  %v934 = vpop.f32.mrf.mxu0
  %v935 = vadd.f32 %v795, %v934
  %936 = vmatmul.f32.gmra.mxu0 %v162
  %v937 = vpop.f32.mrf.mxu0
  %v938 = vadd.f32 %v798, %v937
  %939 = vmatmul.f32.gmra.mxu0 %v167
  %v940 = vpop.f32.mrf.mxu0
  %v941 = vadd.f32 %v801, %v940
  %942 = vmatmul.f32.gmra.mxu0 %v172
  %v943 = vpop.f32.mrf.mxu0
  %v944 = vadd.f32 %v804, %v943
  %945 = vmatmul.f32.gmra.mxu0 %v177
  %v946 = vpop.f32.mrf.mxu0
  %v947 = vadd.f32 %v807, %v946
  %948 = vmatmul.f32.gmra.mxu0 %v182
  %v949 = vpop.f32.mrf.mxu0
  %v950 = vadd.f32 %v810, %v949
  %951 = vmatmul.f32.gmra.mxu0 %v187
  %v952 = vpop.f32.mrf.mxu0
  %v953 = vadd.f32 %v813, %v952
  %954 = vmatmul.f32.gmra.mxu0 %v192
  %v955 = vpop.f32.mrf.mxu0
  %v956 = vadd.f32 %v816, %v955
  %957 = vmatmul.f32.gmra.mxu0 %v197
  %v958 = vpop.f32.mrf.mxu0
  %v959 = vadd.f32 %v819, %v958
  %960 = vmatmul.f32.gmra.mxu0 %v202
  %v961 = vpop.f32.mrf.mxu0
  %v962 = vadd.f32 %v822, %v961
  %963 = vmatmul.f32.gmra.mxu0 %v207
  %v964 = vpop.f32.mrf.mxu0
  %v965 = vadd.f32 %v825, %v964
  %966 = vmatmul.f32.gmra.mxu0 %v212
  %v967 = vpop.f32.mrf.mxu0
  %v968 = vadd.f32 %v828, %v967
  %969 = vmatmul.f32.gmra.mxu0 %v217
  %v970 = vpop.f32.mrf.mxu0
  %v971 = vadd.f32 %v831, %v970
  %972 = vdwg.mxu0
  %973 = vmatpush.msra.mxu0 0.0
  %974 = vmatpush.msra.mxu0 0.0
  %975 = vmatpush.msra.mxu0 0.0
  %976 = vmatpush.msra.mxu0 0.0
  %977 = vmatpush.msra.mxu0 0.0
  %978 = vmatpush.msra.mxu0 0.0
  %979 = vmatpush.msra.mxu0 0.0
  %980 = vmatpush.msra.mxu0 0.0
  %981 = vmatpush.msra.mxu0 0.0
  %982 = vmatpush.msra.mxu0 0.0
  %983 = vmatpush.msra.mxu0 0.0
  %984 = vmatpush.msra.mxu0 0.0
  %985 = vmatpush.msra.mxu0 0.0
  %986 = vmatpush.msra.mxu0 0.0
  %987 = vmatpush.msra.mxu0 %v284
  %988 = vmatpush.msra.mxu0 %v283
  %989 = vmatmul.f32.gmra.mxu0 %v291
  %v990 = vpop.f32.mrf.mxu0
  %v991 = vadd.f32 %v851, %v990
  %992 = vmatmul.f32.gmra.mxu0 %v294
  %v993 = vpop.f32.mrf.mxu0
  %v994 = vadd.f32 %v854, %v993
  %995 = vmatmul.f32.gmra.mxu0 %v297
  %v996 = vpop.f32.mrf.mxu0
  %v997 = vadd.f32 %v857, %v996
  %998 = vmatmul.f32.gmra.mxu0 %v300
  %v999 = vpop.f32.mrf.mxu0
  %v1000 = vadd.f32 %v860, %v999
  %1001 = vmatmul.f32.gmra.mxu0 %v303
  %v1002 = vpop.f32.mrf.mxu0
  %v1003 = vadd.f32 %v863, %v1002
  %1004 = vmatmul.f32.gmra.mxu0 %v306
  %v1005 = vpop.f32.mrf.mxu0
  %v1006 = vadd.f32 %v866, %v1005
  %1007 = vmatmul.f32.gmra.mxu0 %v309
  %v1008 = vpop.f32.mrf.mxu0
  %v1009 = vadd.f32 %v869, %v1008
  %1010 = vmatmul.f32.gmra.mxu0 %v312
  %v1011 = vpop.f32.mrf.mxu0
  %v1012 = vadd.f32 %v872, %v1011
  %1013 = vmatmul.f32.gmra.mxu0 %v315
  %v1014 = vpop.f32.mrf.mxu0
  %v1015 = vadd.f32 %v875, %v1014
  %1016 = vmatmul.f32.gmra.mxu0 %v318
  %v1017 = vpop.f32.mrf.mxu0
  %v1018 = vadd.f32 %v878, %v1017
  %1019 = vmatmul.f32.gmra.mxu0 %v321
  %v1020 = vpop.f32.mrf.mxu0
  %v1021 = vadd.f32 %v881, %v1020
  %1022 = vmatmul.f32.gmra.mxu0 %v324
  %v1023 = vpop.f32.mrf.mxu0
  %v1024 = vadd.f32 %v884, %v1023
  %1025 = vmatmul.f32.gmra.mxu0 %v327
  %v1026 = vpop.f32.mrf.mxu0
  %v1027 = vadd.f32 %v887, %v1026
  %1028 = vmatmul.f32.gmra.mxu0 %v330
  %v1029 = vpop.f32.mrf.mxu0
  %v1030 = vadd.f32 %v890, %v1029
  %1031 = vmatmul.f32.gmra.mxu0 %v333
  %v1032 = vpop.f32.mrf.mxu0
  %v1033 = vadd.f32 %v893, %v1032
  %1034 = vmatmul.f32.gmra.mxu0 %v336
  %v1035 = vpop.f32.mrf.mxu0
  %v1036 = vadd.f32 %v896, %v1035
  %1037 = vmatmul.f32.gmra.mxu0 %v339
  %v1038 = vpop.f32.mrf.mxu0
  %v1039 = vadd.f32 %v899, %v1038
  %1040 = vmatmul.f32.gmra.mxu0 %v342
  %v1041 = vpop.f32.mrf.mxu0
  %v1042 = vadd.f32 %v902, %v1041
  %1043 = vmatmul.f32.gmra.mxu0 %v345
  %v1044 = vpop.f32.mrf.mxu0
  %v1045 = vadd.f32 %v905, %v1044
  %1046 = vmatmul.f32.gmra.mxu0 %v348
  %v1047 = vpop.f32.mrf.mxu0
  %v1048 = vadd.f32 %v908, %v1047
  %1049 = vmatmul.f32.gmra.mxu0 %v351
  %v1050 = vpop.f32.mrf.mxu0
  %v1051 = vadd.f32 %v911, %v1050
  %1052 = vmatmul.f32.gmra.mxu0 %v354
  %v1053 = vpop.f32.mrf.mxu0
  %v1054 = vadd.f32 %v914, %v1053
  %1055 = vmatmul.f32.gmra.mxu0 %v357
  %v1056 = vpop.f32.mrf.mxu0
  %v1057 = vadd.f32 %v917, %v1056
  %1058 = vmatmul.f32.gmra.mxu0 %v360
  %v1059 = vpop.f32.mrf.mxu0
  %v1060 = vadd.f32 %v920, %v1059
  %1061 = vmatmul.f32.gmra.mxu0 %v363
  %v1062 = vpop.f32.mrf.mxu0
  %v1063 = vadd.f32 %v923, %v1062
  %1064 = vmatmul.f32.gmra.mxu0 %v366
  %v1065 = vpop.f32.mrf.mxu0
  %v1066 = vadd.f32 %v926, %v1065
  %1067 = vmatmul.f32.gmra.mxu0 %v369
  %v1068 = vpop.f32.mrf.mxu0
  %v1069 = vadd.f32 %v929, %v1068
  %1070 = vmatmul.f32.gmra.mxu0 %v372
  %v1071 = vpop.f32.mrf.mxu0
  %v1072 = vadd.f32 %v932, %v1071
  %1073 = vmatmul.f32.gmra.mxu0 %v375
  %v1074 = vpop.f32.mrf.mxu0
  %v1075 = vadd.f32 %v935, %v1074
  %1076 = vmatmul.f32.gmra.mxu0 %v378
  %v1077 = vpop.f32.mrf.mxu0
  %v1078 = vadd.f32 %v938, %v1077
  %1079 = vmatmul.f32.gmra.mxu0 %v381
  %v1080 = vpop.f32.mrf.mxu0
  %v1081 = vadd.f32 %v941, %v1080
  %1082 = vmatmul.f32.gmra.mxu0 %v384
  %v1083 = vpop.f32.mrf.mxu0
  %v1084 = vadd.f32 %v944, %v1083
  %1085 = vmatmul.f32.gmra.mxu0 %v387
  %v1086 = vpop.f32.mrf.mxu0
  %v1087 = vadd.f32 %v947, %v1086
  %1088 = vmatmul.f32.gmra.mxu0 %v390
  %v1089 = vpop.f32.mrf.mxu0
  %v1090 = vadd.f32 %v950, %v1089
  %1091 = vmatmul.f32.gmra.mxu0 %v393
  %v1092 = vpop.f32.mrf.mxu0
  %v1093 = vadd.f32 %v953, %v1092
  %1094 = vmatmul.f32.gmra.mxu0 %v396
  %v1095 = vpop.f32.mrf.mxu0
  %v1096 = vadd.f32 %v956, %v1095
  %1097 = vmatmul.f32.gmra.mxu0 %v399
  %v1098 = vpop.f32.mrf.mxu0
  %v1099 = vadd.f32 %v959, %v1098
  %1100 = vmatmul.f32.gmra.mxu0 %v402
  %v1101 = vpop.f32.mrf.mxu0
  %v1102 = vadd.f32 %v962, %v1101
  %1103 = vmatmul.f32.gmra.mxu0 %v405
  %v1104 = vpop.f32.mrf.mxu0
  %v1105 = vadd.f32 %v965, %v1104
  %1106 = vmatmul.f32.gmra.mxu0 %v408
  %v1107 = vpop.f32.mrf.mxu0
  %v1108 = vadd.f32 %v968, %v1107
  %1109 = vmatmul.f32.gmra.mxu0 %v411
  %v1110 = vpop.f32.mrf.mxu0
  %v1111 = vadd.f32 %v971, %v1110
  %1112 = vdwg.mxu0
  %v1113 = vmax.f32 %v991, 0.0
  %v1114 = vmax.f32 %v994, 0.0
  %v1115 = vmax.f32 %v997, 0.0
  %v1116 = vmax.f32 %v1000, 0.0
  %v1117 = vmax.f32 %v1003, 0.0
  %v1118 = vmax.f32 %v1006, 0.0
  %v1119 = vmax.f32 %v1009, 0.0
  %v1120 = vmax.f32 %v1012, 0.0
  %v1121 = vmax.f32 %v1015, 0.0
  %v1122 = vmax.f32 %v1018, 0.0
  %v1123 = vmax.f32 %v1021, 0.0
  %v1124 = vmax.f32 %v1024, 0.0
  %v1125 = vmax.f32 %v1027, 0.0
  %v1126 = vmax.f32 %v1030, 0.0
  %v1127 = vmax.f32 %v1033, 0.0
  %v1128 = vmax.f32 %v1036, 0.0
  %v1129 = vmax.f32 %v1039, 0.0
  %v1130 = vmax.f32 %v1042, 0.0
  %v1131 = vmax.f32 %v1045, 0.0
  %v1132 = vmax.f32 %v1048, 0.0
  %v1133 = vmax.f32 %v1051, 0.0
  %v1134 = vmax.f32 %v1054, 0.0
  %v1135 = vmax.f32 %v1057, 0.0
  %v1136 = vmax.f32 %v1060, 0.0
  %v1137 = vmax.f32 %v1063, 0.0
  %v1138 = vmax.f32 %v1066, 0.0
  %v1139 = vmax.f32 %v1069, 0.0
  %v1140 = vmax.f32 %v1072, 0.0
  %v1141 = vmax.f32 %v1075, 0.0
  %v1142 = vmax.f32 %v1078, 0.0
  %v1143 = vmax.f32 %v1081, 0.0
  %v1144 = vmax.f32 %v1084, 0.0
  %v1145 = vmax.f32 %v1087, 0.0
  %v1146 = vmax.f32 %v1090, 0.0
  %v1147 = vmax.f32 %v1093, 0.0
  %v1148 = vmax.f32 %v1096, 0.0
  %v1149 = vmax.f32 %v1099, 0.0
  %v1150 = vmax.f32 %v1102, 0.0
  %v1151 = vmax.f32 %v1105, 0.0
  %v1152 = vmax.f32 %v1108, 0.0
  %v1153 = vmax.f32 %v1111, 0.0
  %1154 = vst [vmem:[%s3] sm:$0xff] %v1113
  %1155 = vst [vmem:[%s3 + $0x8] sm:$0xff] %v1114
  %1156 = vst [vmem:[%s3 + $0x10] sm:$0xff] %v1115
  %1157 = vst [vmem:[%s3 + $0x18] sm:$0xff] %v1116
  %1158 = vst [vmem:[%s3 + $0x20] sm:$0xff] %v1117
  %1159 = vst [vmem:[%s3 + $0x28] sm:$0xff] %v1118
  %1160 = vst [vmem:[%s3 + $0x30] sm:$0xff] %v1119
  %1161 = vst [vmem:[%s3 + $0x38] sm:$0xff] %v1120
  %1162 = vst [vmem:[%s3 + $0x40] sm:$0xff] %v1121
  %1163 = vst [vmem:[%s3 + $0x48] sm:$0xff] %v1122
  %1164 = vst [vmem:[%s3 + $0x50] sm:$0xff] %v1123
  %1165 = vst [vmem:[%s3 + $0x58] sm:$0xff] %v1124
  %1166 = vst [vmem:[%s3 + $0x60] sm:$0xff] %v1125
  %1167 = vst [vmem:[%s3 + $0x68] sm:$0xff] %v1126
  %1168 = vst [vmem:[%s3 + $0x70] sm:$0xff] %v1127
  %1169 = vst [vmem:[%s3 + $0x78] sm:$0xff] %v1128
  %1170 = vst [vmem:[%s3 + $0x80] sm:$0xff] %v1129
  %1171 = vst [vmem:[%s3 + $0x88] sm:$0xff] %v1130
  %1172 = vst [vmem:[%s3 + $0x90] sm:$0xff] %v1131
  %1173 = vst [vmem:[%s3 + $0x98] sm:$0xff] %v1132
  %1174 = vst [vmem:[%s3 + $0xa0] sm:$0xff] %v1133
  %1175 = vst [vmem:[%s3 + $0xa8] sm:$0xff] %v1134
  %1176 = vst [vmem:[%s3 + $0xb0] sm:$0xff] %v1135
  %1177 = vst [vmem:[%s3 + $0xb8] sm:$0xff] %v1136
  %1178 = vst [vmem:[%s3 + $0xc0] sm:$0xff] %v1137
  %1179 = vst [vmem:[%s3 + $0xc8] sm:$0xff] %v1138
  %1180 = vst [vmem:[%s3 + $0xd0] sm:$0xff] %v1139
  %1181 = vst [vmem:[%s3 + $0xd8] sm:$0xff] %v1140
  %1182 = vst [vmem:[%s3 + $0xe0] sm:$0xff] %v1141
  %1183 = vst [vmem:[%s3 + $0xe8] sm:$0xff] %v1142
  %1184 = vst [vmem:[%s3 + $0xf0] sm:$0xff] %v1143
  %1185 = vst [vmem:[%s3 + $0xf8] sm:$0xff] %v1144
  %1186 = vst [vmem:[%s3 + $0x100] sm:$0xff] %v1145
  %1187 = vst [vmem:[%s3 + $0x108] sm:$0xff] %v1146
  %1188 = vst [vmem:[%s3 + $0x110] sm:$0xff] %v1147
  %1189 = vst [vmem:[%s3 + $0x118] sm:$0xff] %v1148
  %1190 = vst [vmem:[%s3 + $0x120] sm:$0xff] %v1149
  %1191 = vst [vmem:[%s3 + $0x128] sm:$0xff] %v1150
  %1192 = vst [vmem:[%s3 + $0x130] sm:$0xff] %v1151
  %1193 = vst [vmem:[%s3 + $0x138] sm:$0xff] %v1152
  %1194 = vst [vmem:[%s3 + $0x140] sm:$0x3] %v1153
  // Predicated region
  $region14: #{molecular_icvae_forward.8} parent=0 // pred_check
    _
  $region15: #{molecular_icvae_forward.8} parent=0 // pred_check_branch
    %1196 = sbr.rel (0) target = $region17
  $region16: #{molecular_icvae_forward.8} parent=0 // pred_region
    _
  $region17: #{molecular_icvae_forward.8} parent=0 // pred_fallthru
    _
  // Predicated region
  $region18: #{molecular_icvae_forward.8} parent=0 // pred_check
    _
  $region19: #{molecular_icvae_forward.8} parent=0 // pred_check_branch
    %1198 = sbr.rel (0) target = $region21
  $region20: #{molecular_icvae_forward.8} parent=0 // pred_region
    _
  $region21: #{molecular_icvae_forward.8} parent=0 // pred_fallthru
    _

// kernel: molecular_icvae_forward.9
$region0: #{molecular_icvae_forward.9}
  #allocation0 [shape = 'u32[]', space=smem, size = 0x4, offset = 0x4, fixed_abs, tag = 'smem constant byte address 0x4 - core index']
  #allocation1 [shape = 'u32[72,128]{1,0:T(1,128)}', space=vmem, size = 0x9000, scoped, tag = 'internal scratch']
  %s0 = inlined_call_operand.vmem [shape: f32[42,1056], index: 0, kind: input, shape index: {}]
  %s1 = inlined_call_operand.vmem [shape: f32[1056,128], index: 1, kind: input, shape index: {}]
  %s2 = inlined_call_operand.vmem [shape: f32[1,128], index: 2, kind: input, shape index: {}]
  %s3 = inlined_call_operand.vmem [shape: f32[42,128], index: 3, kind: output, shape index: {}]
  %s4 = sld [smem:[#allocation0]]
  $region22: #{molecular_icvae_forward.9} parent=0
    _
  %s6 = ssub.s32 1, %s4
  %s7 = scalar_select 0, %s6, %s4
  // Predicated region
  $region2: #{molecular_icvae_forward.9} parent=0 // pred_check
    _
  $region3: #{molecular_icvae_forward.9} parent=0 // pred_check_branch
    %9 = sbr.rel (0) target = $region5
  $region4: #{molecular_icvae_forward.9} parent=0 // pred_region
    _
  $region5: #{molecular_icvae_forward.9} parent=0 // pred_fallthru
    _
  // Predicated region
  $region6: #{molecular_icvae_forward.9} parent=0 // pred_check
    _
  $region7: #{molecular_icvae_forward.9} parent=0 // pred_check_branch
    %11 = sbr.rel (0) target = $region9
  $region8: #{molecular_icvae_forward.9} parent=0 // pred_region
    _
  $region9: #{molecular_icvae_forward.9} parent=0 // pred_fallthru
    _
  // Predicated region
  $region10: #{molecular_icvae_forward.9} parent=0 // pred_check
    _
  $region11: #{molecular_icvae_forward.9} parent=0 // pred_check_branch
    %13 = sbr.rel (0) target = $region13
  $region12: #{molecular_icvae_forward.9} parent=0 // pred_region
    _
  $region13: #{molecular_icvae_forward.9} parent=0 // pred_fallthru
    _
  %v14 = vld [vmem:[%s0] sm:$0xff]
  %v15 = vld [vmem:[%s0 + $0x8] sm:$0xff]
  %v16 = vld [vmem:[%s0 + $0x10] sm:$0xff]
  %v17 = vld [vmem:[%s0 + $0x18] sm:$0xff]
  %v18 = vld [vmem:[%s0 + $0x20] sm:$0xff]
  %v19 = vld [vmem:[%s0 + $0x28] sm:$0xff]
  %v20 = vld [vmem:[%s0 + $0x30] sm:$0xff]
  %v21 = vld [vmem:[%s0 + $0x38] sm:$0xff]
  %v22 = vld [vmem:[%s0 + $0x40] sm:$0xff]
  %v23 = vld [vmem:[%s0 + $0x48] sm:$0xff]
  %v24 = vld [vmem:[%s0 + $0x50] sm:$0xff]
  %v25 = vld [vmem:[%s0 + $0x58] sm:$0xff]
  %v26 = vld [vmem:[%s0 + $0x60] sm:$0xff]
  %v27 = vld [vmem:[%s0 + $0x68] sm:$0xff]
  %v28 = vld [vmem:[%s0 + $0x70] sm:$0xff]
  %v29 = vld [vmem:[%s0 + $0x78] sm:$0xff]
  %v30 = vld [vmem:[%s0 + $0x80] sm:$0xff]
  %v31 = vld [vmem:[%s0 + $0x88] sm:$0xff]
  %v32 = vld [vmem:[%s0 + $0x90] sm:$0xff]
  %v33 = vld [vmem:[%s0 + $0x98] sm:$0xff]
  %v34 = vld [vmem:[%s0 + $0xa0] sm:$0xff]
  %v35 = vld [vmem:[%s0 + $0xa8] sm:$0xff]
  %v36 = vld [vmem:[%s0 + $0xb0] sm:$0xff]
  %v37 = vld [vmem:[%s0 + $0xb8] sm:$0xff]
  %v38 = vld [vmem:[%s0 + $0xc0] sm:$0xff]
  %v39 = vld [vmem:[%s0 + $0xc8] sm:$0xff]
  %v40 = vld [vmem:[%s0 + $0xd0] sm:$0xff]
  %v41 = vld [vmem:[%s0 + $0xd8] sm:$0xff]
  %v42 = vld [vmem:[%s0 + $0xe0] sm:$0xff]
  %v43 = vld [vmem:[%s0 + $0xe8] sm:$0xff]
  %v44 = vld [vmem:[%s0 + $0xf0] sm:$0xff]
  %v45 = vld [vmem:[%s0 + $0xf8] sm:$0xff]
  %v46 = vld [vmem:[%s0 + $0x100] sm:$0xff]
  %v47 = vld [vmem:[%s0 + $0x108] sm:$0xff]
  %v48 = vld [vmem:[%s0 + $0x110] sm:$0xff]
  %v49 = vld [vmem:[%s0 + $0x118] sm:$0xff]
  %v50 = vld [vmem:[%s0 + $0x120] sm:$0xff]
  %v51 = vld [vmem:[%s0 + $0x128] sm:$0xff]
  %v52 = vld [vmem:[%s0 + $0x130] sm:$0xff]
  %v53 = vld [vmem:[%s0 + $0x138] sm:$0xff]
  %v54 = vld [vmem:[%s0 + $0x140] sm:$0xff]
  %v55 = vld [vmem:[%s0 + $0x148] sm:$0xff]
  %v56 = vld [vmem:[%s0 + $0x150] sm:$0xff]
  %v57 = vld [vmem:[%s0 + $0x158] sm:$0xff]
  %v58 = vld [vmem:[%s0 + $0x160] sm:$0xff]
  %v59 = vld [vmem:[%s0 + $0x168] sm:$0x3]
  %v60 = vld [vmem:[%s0 + $0x170] sm:$0x3]
  %v61 = vld [vmem:[%s0 + $0x178] sm:$0x3]
  %v62 = vld [vmem:[%s0 + $0x180] sm:$0x3]
  %v63 = vld [vmem:[%s0 + $0x188] sm:$0x3]
  %v64 = vld [vmem:[%s0 + $0x190] sm:$0x3]
  %v65 = vld [vmem:[%s0 + $0x198] sm:$0x3]
  %v66 = vld [vmem:[%s0 + $0x1a0] sm:$0x3]
  %v67 = vld [vmem:[%s0 + $0x1a8] sm:$0x3]
  %v68 = vld [vmem:[%s1] sm:$0xff]
  %v69 = vld [vmem:[%s1 + $0x8] sm:$0xff]
  %v70 = vld [vmem:[%s1 + $0x10] sm:$0xff]
  %v71 = vld [vmem:[%s1 + $0x18] sm:$0xff]
  %v72 = vld [vmem:[%s1 + $0x20] sm:$0xff]
  %v73 = vld [vmem:[%s1 + $0x28] sm:$0xff]
  %v74 = vld [vmem:[%s1 + $0x30] sm:$0xff]
  %v75 = vld [vmem:[%s1 + $0x38] sm:$0xff]
  %v76 = vld [vmem:[%s1 + $0x40] sm:$0xff]
  %v77 = vld [vmem:[%s1 + $0x48] sm:$0xff]
  %v78 = vld [vmem:[%s1 + $0x50] sm:$0xff]
  %v79 = vld [vmem:[%s1 + $0x58] sm:$0xff]
  %v80 = vld [vmem:[%s1 + $0x60] sm:$0xff]
  %v81 = vld [vmem:[%s1 + $0x68] sm:$0xff]
  %v82 = vld [vmem:[%s1 + $0x70] sm:$0xff]
  %v83 = vld [vmem:[%s1 + $0x78] sm:$0xff]
  %v84 = vld [vmem:[%s1 + $0x80] sm:$0xff]
  %v85 = vld [vmem:[%s1 + $0x88] sm:$0xff]
  %v86 = vld [vmem:[%s1 + $0x90] sm:$0xff]
  %v87 = vld [vmem:[%s1 + $0x98] sm:$0xff]
  %v88 = vld [vmem:[%s1 + $0xa0] sm:$0xff]
  %v89 = vld [vmem:[%s1 + $0xa8] sm:$0xff]
  %v90 = vld [vmem:[%s1 + $0xb0] sm:$0xff]
  %v91 = vld [vmem:[%s1 + $0xb8] sm:$0xff]
  %v92 = vld [vmem:[%s1 + $0xc0] sm:$0xff]
  %v93 = vld [vmem:[%s1 + $0xc8] sm:$0xff]
  %v94 = vld [vmem:[%s1 + $0xd0] sm:$0xff]
  %v95 = vld [vmem:[%s1 + $0xd8] sm:$0xff]
  %v96 = vld [vmem:[%s1 + $0xe0] sm:$0xff]
  %v97 = vld [vmem:[%s1 + $0xe8] sm:$0xff]
  %v98 = vld [vmem:[%s1 + $0xf0] sm:$0xff]
  %v99 = vld [vmem:[%s1 + $0xf8] sm:$0xff]
  %v100 = vld [vmem:[%s1 + $0x100] sm:$0xff]
  %v101 = vld [vmem:[%s1 + $0x108] sm:$0xff]
  %v102 = vld [vmem:[%s1 + $0x110] sm:$0xff]
  %v103 = vld [vmem:[%s1 + $0x118] sm:$0xff]
  %v104 = vld [vmem:[%s1 + $0x120] sm:$0xff]
  %v105 = vld [vmem:[%s1 + $0x128] sm:$0xff]
  %v106 = vld [vmem:[%s1 + $0x130] sm:$0xff]
  %v107 = vld [vmem:[%s1 + $0x138] sm:$0xff]
  %v108 = vld [vmem:[%s1 + $0x140] sm:$0xff]
  %v109 = vld [vmem:[%s1 + $0x148] sm:$0xff]
  %v110 = vld [vmem:[%s1 + $0x150] sm:$0xff]
  %v111 = vld [vmem:[%s1 + $0x158] sm:$0xff]
  %v112 = vld [vmem:[%s1 + $0x160] sm:$0xff]
  %v113 = vld [vmem:[%s1 + $0x168] sm:$0xff]
  %v114 = vld [vmem:[%s1 + $0x170] sm:$0xff]
  %v115 = vld [vmem:[%s1 + $0x178] sm:$0xff]
  %v116 = vld [vmem:[%s1 + $0x180] sm:$0xff]
  %v117 = vld [vmem:[%s1 + $0x188] sm:$0xff]
  %v118 = vld [vmem:[%s1 + $0x190] sm:$0xff]
  %v119 = vld [vmem:[%s1 + $0x198] sm:$0xff]
  %v120 = vld [vmem:[%s1 + $0x1a0] sm:$0xff]
  %v121 = vld [vmem:[%s1 + $0x1a8] sm:$0xff]
  %v122 = vld [vmem:[%s1 + $0x1b0] sm:$0xff]
  %v123 = vld [vmem:[%s1 + $0x1b8] sm:$0xff]
  %v124 = vld [vmem:[%s1 + $0x1c0] sm:$0xff]
  %v125 = vld [vmem:[%s1 + $0x1c8] sm:$0xff]
  %v126 = vld [vmem:[%s1 + $0x1d0] sm:$0xff]
  %v127 = vld [vmem:[%s1 + $0x1d8] sm:$0xff]
  %v128 = vld [vmem:[%s1 + $0x1e0] sm:$0xff]
  %v129 = vld [vmem:[%s1 + $0x1e8] sm:$0xff]
  %v130 = vld [vmem:[%s1 + $0x1f0] sm:$0xff]
  %v131 = vld [vmem:[%s1 + $0x1f8] sm:$0xff]
  %v132 = vld [vmem:[%s1 + $0x200] sm:$0xff]
  %v133 = vld [vmem:[%s1 + $0x208] sm:$0xff]
  %v134 = vld [vmem:[%s1 + $0x210] sm:$0xff]
  %v135 = vld [vmem:[%s1 + $0x218] sm:$0xff]
  %v136 = vld [vmem:[%s1 + $0x220] sm:$0xff]
  %v137 = vld [vmem:[%s1 + $0x228] sm:$0xff]
  %v138 = vld [vmem:[%s1 + $0x230] sm:$0xff]
  %v139 = vld [vmem:[%s1 + $0x238] sm:$0xff]
  %v140 = vld [vmem:[%s1 + $0x240] sm:$0xff]
  %v141 = vld [vmem:[%s1 + $0x248] sm:$0xff]
  %v142 = vld [vmem:[%s1 + $0x250] sm:$0xff]
  %v143 = vld [vmem:[%s1 + $0x258] sm:$0xff]
  %v144 = vld [vmem:[%s1 + $0x260] sm:$0xff]
  %v145 = vld [vmem:[%s1 + $0x268] sm:$0xff]
  %v146 = vld [vmem:[%s1 + $0x270] sm:$0xff]
  %v147 = vld [vmem:[%s1 + $0x278] sm:$0xff]
  %v148 = vld [vmem:[%s1 + $0x280] sm:$0xff]
  %v149 = vld [vmem:[%s1 + $0x288] sm:$0xff]
  %v150 = vld [vmem:[%s1 + $0x290] sm:$0xff]
  %v151 = vld [vmem:[%s1 + $0x298] sm:$0xff]
  %v152 = vld [vmem:[%s1 + $0x2a0] sm:$0xff]
  %v153 = vld [vmem:[%s1 + $0x2a8] sm:$0xff]
  %v154 = vld [vmem:[%s1 + $0x2b0] sm:$0xff]
  %v155 = vld [vmem:[%s1 + $0x2b8] sm:$0xff]
  %v156 = vld [vmem:[%s1 + $0x2c0] sm:$0xff]
  %v157 = vld [vmem:[%s1 + $0x2c8] sm:$0xff]
  %v158 = vld [vmem:[%s1 + $0x2d0] sm:$0xff]
  %v159 = vld [vmem:[%s1 + $0x2d8] sm:$0xff]
  %v160 = vld [vmem:[%s1 + $0x2e0] sm:$0xff]
  %v161 = vld [vmem:[%s1 + $0x2e8] sm:$0xff]
  %v162 = vld [vmem:[%s1 + $0x2f0] sm:$0xff]
  %v163 = vld [vmem:[%s1 + $0x2f8] sm:$0xff]
  %v164 = vld [vmem:[%s1 + $0x300] sm:$0xff]
  %v165 = vld [vmem:[%s1 + $0x308] sm:$0xff]
  %v166 = vld [vmem:[%s1 + $0x310] sm:$0xff]
  %v167 = vld [vmem:[%s1 + $0x318] sm:$0xff]
  %v168 = vld [vmem:[%s1 + $0x320] sm:$0xff]
  %v169 = vld [vmem:[%s1 + $0x328] sm:$0xff]
  %v170 = vld [vmem:[%s1 + $0x330] sm:$0xff]
  %v171 = vld [vmem:[%s1 + $0x338] sm:$0xff]
  %v172 = vld [vmem:[%s1 + $0x340] sm:$0xff]
  %v173 = vld [vmem:[%s1 + $0x348] sm:$0xff]
  %v174 = vld [vmem:[%s1 + $0x350] sm:$0xff]
  %v175 = vld [vmem:[%s1 + $0x358] sm:$0xff]
  %v176 = vld [vmem:[%s1 + $0x360] sm:$0xff]
  %v177 = vld [vmem:[%s1 + $0x368] sm:$0xff]
  %v178 = vld [vmem:[%s1 + $0x370] sm:$0xff]
  %v179 = vld [vmem:[%s1 + $0x378] sm:$0xff]
  %v180 = vld [vmem:[%s1 + $0x380] sm:$0xff]
  %v181 = vld [vmem:[%s1 + $0x388] sm:$0xff]
  %v182 = vld [vmem:[%s1 + $0x390] sm:$0xff]
  %v183 = vld [vmem:[%s1 + $0x398] sm:$0xff]
  %v184 = vld [vmem:[%s1 + $0x3a0] sm:$0xff]
  %v185 = vld [vmem:[%s1 + $0x3a8] sm:$0xff]
  %v186 = vld [vmem:[%s1 + $0x3b0] sm:$0xff]
  %v187 = vld [vmem:[%s1 + $0x3b8] sm:$0xff]
  %v188 = vld [vmem:[%s1 + $0x3c0] sm:$0xff]
  %v189 = vld [vmem:[%s1 + $0x3c8] sm:$0xff]
  %v190 = vld [vmem:[%s1 + $0x3d0] sm:$0xff]
  %v191 = vld [vmem:[%s1 + $0x3d8] sm:$0xff]
  %v192 = vld [vmem:[%s1 + $0x3e0] sm:$0xff]
  %v193 = vld [vmem:[%s1 + $0x3e8] sm:$0xff]
  %v194 = vld [vmem:[%s1 + $0x3f0] sm:$0xff]
  %v195 = vld [vmem:[%s1 + $0x3f8] sm:$0xff]
  %v196 = vld [vmem:[%s1 + $0x400] sm:$0xff]
  %v197 = vld [vmem:[%s1 + $0x408] sm:$0xff]
  %v198 = vld [vmem:[%s1 + $0x410] sm:$0xff]
  %v199 = vld [vmem:[%s1 + $0x418] sm:$0xff]
  %v200 = vld [vmem:[%s2] sm:$0x1]
  %v202 = vperm.slane %v200, 0
  %vm204 = vcmask 261120
  %v206 = vsel %vm204, %v22, 0
  %v209 = vsel %vm204, %v31, 0
  %v212 = vsel %vm204, %v40, 0
  %v215 = vsel %vm204, %v49, 0
  %v218 = vsel %vm204, %v58, 0
  %v221 = vsel %vm204, %v67, 0
  %223 = vmatpush.msra.mxu0 %v83
  %224 = vmatpush.msra.mxu0 %v82
  %225 = vmatpush.msra.mxu0 %v81
  %226 = vmatpush.msra.mxu0 %v80
  %227 = vmatpush.msra.mxu0 %v79
  %228 = vmatpush.msra.mxu0 %v78
  %229 = vmatpush.msra.mxu0 %v77
  %230 = vmatpush.msra.mxu0 %v76
  %231 = vmatpush.msra.mxu0 %v75
  %232 = vmatpush.msra.mxu0 %v74
  %233 = vmatpush.msra.mxu0 %v73
  %234 = vmatpush.msra.mxu0 %v72
  %235 = vmatpush.msra.mxu0 %v71
  %236 = vmatpush.msra.mxu0 %v70
  %237 = vmatpush.msra.mxu0 %v69
  %238 = vmatpush.msra.mxu0 %v68
  %239 = vmatmul.f32.gmra.mxu0 %v14
  %v240 = vpop.f32.mrf.mxu0
  %v241 = vadd.f32 %v202, %v240
  %242 = vmatmul.f32.gmra.mxu0 %v23
  %v243 = vpop.f32.mrf.mxu0
  %v244 = vadd.f32 %v202, %v243
  %245 = vmatmul.f32.gmra.mxu0 %v32
  %v246 = vpop.f32.mrf.mxu0
  %v247 = vadd.f32 %v202, %v246
  %248 = vmatmul.f32.gmra.mxu0 %v41
  %v249 = vpop.f32.mrf.mxu0
  %v250 = vadd.f32 %v202, %v249
  %251 = vmatmul.f32.gmra.mxu0 %v50
  %v252 = vpop.f32.mrf.mxu0
  %v253 = vadd.f32 %v202, %v252
  %254 = vmatmul.f32.gmra.mxu0 %v59
  %v255 = vpop.f32.mrf.mxu0
  %v256 = vadd.f32 %v202, %v255
  %257 = vdwg.mxu0
  %258 = vmatpush.msra.mxu0 %v99
  %259 = vmatpush.msra.mxu0 %v98
  %260 = vmatpush.msra.mxu0 %v97
  %261 = vmatpush.msra.mxu0 %v96
  %262 = vmatpush.msra.mxu0 %v95
  %263 = vmatpush.msra.mxu0 %v94
  %264 = vmatpush.msra.mxu0 %v93
  %265 = vmatpush.msra.mxu0 %v92
  %266 = vmatpush.msra.mxu0 %v91
  %267 = vmatpush.msra.mxu0 %v90
  %268 = vmatpush.msra.mxu0 %v89
  %269 = vmatpush.msra.mxu0 %v88
  %270 = vmatpush.msra.mxu0 %v87
  %271 = vmatpush.msra.mxu0 %v86
  %272 = vmatpush.msra.mxu0 %v85
  %273 = vmatpush.msra.mxu0 %v84
  %274 = vmatmul.f32.gmra.mxu0 %v15
  %v275 = vpop.f32.mrf.mxu0
  %v276 = vadd.f32 %v241, %v275
  %277 = vmatmul.f32.gmra.mxu0 %v24
  %v278 = vpop.f32.mrf.mxu0
  %v279 = vadd.f32 %v244, %v278
  %280 = vmatmul.f32.gmra.mxu0 %v33
  %v281 = vpop.f32.mrf.mxu0
  %v282 = vadd.f32 %v247, %v281
  %283 = vmatmul.f32.gmra.mxu0 %v42
  %v284 = vpop.f32.mrf.mxu0
  %v285 = vadd.f32 %v250, %v284
  %286 = vmatmul.f32.gmra.mxu0 %v51
  %v287 = vpop.f32.mrf.mxu0
  %v288 = vadd.f32 %v253, %v287
  %289 = vmatmul.f32.gmra.mxu0 %v60
  %v290 = vpop.f32.mrf.mxu0
  %v291 = vadd.f32 %v256, %v290
  %292 = vdwg.mxu0
  %293 = vmatpush.msra.mxu0 %v115
  %294 = vmatpush.msra.mxu0 %v114
  %295 = vmatpush.msra.mxu0 %v113
  %296 = vmatpush.msra.mxu0 %v112
  %297 = vmatpush.msra.mxu0 %v111
  %298 = vmatpush.msra.mxu0 %v110
  %299 = vmatpush.msra.mxu0 %v109
  %300 = vmatpush.msra.mxu0 %v108
  %301 = vmatpush.msra.mxu0 %v107
  %302 = vmatpush.msra.mxu0 %v106
  %303 = vmatpush.msra.mxu0 %v105
  %304 = vmatpush.msra.mxu0 %v104
  %305 = vmatpush.msra.mxu0 %v103
  %306 = vmatpush.msra.mxu0 %v102
  %307 = vmatpush.msra.mxu0 %v101
  %308 = vmatpush.msra.mxu0 %v100
  %309 = vmatmul.f32.gmra.mxu0 %v16
  %v310 = vpop.f32.mrf.mxu0
  %v311 = vadd.f32 %v276, %v310
  %312 = vmatmul.f32.gmra.mxu0 %v25
  %v313 = vpop.f32.mrf.mxu0
  %v314 = vadd.f32 %v279, %v313
  %315 = vmatmul.f32.gmra.mxu0 %v34
  %v316 = vpop.f32.mrf.mxu0
  %v317 = vadd.f32 %v282, %v316
  %318 = vmatmul.f32.gmra.mxu0 %v43
  %v319 = vpop.f32.mrf.mxu0
  %v320 = vadd.f32 %v285, %v319
  %321 = vmatmul.f32.gmra.mxu0 %v52
  %v322 = vpop.f32.mrf.mxu0
  %v323 = vadd.f32 %v288, %v322
  %324 = vmatmul.f32.gmra.mxu0 %v61
  %v325 = vpop.f32.mrf.mxu0
  %v326 = vadd.f32 %v291, %v325
  %327 = vdwg.mxu0
  %328 = vmatpush.msra.mxu0 %v131
  %329 = vmatpush.msra.mxu0 %v130
  %330 = vmatpush.msra.mxu0 %v129
  %331 = vmatpush.msra.mxu0 %v128
  %332 = vmatpush.msra.mxu0 %v127
  %333 = vmatpush.msra.mxu0 %v126
  %334 = vmatpush.msra.mxu0 %v125
  %335 = vmatpush.msra.mxu0 %v124
  %336 = vmatpush.msra.mxu0 %v123
  %337 = vmatpush.msra.mxu0 %v122
  %338 = vmatpush.msra.mxu0 %v121
  %339 = vmatpush.msra.mxu0 %v120
  %340 = vmatpush.msra.mxu0 %v119
  %341 = vmatpush.msra.mxu0 %v118
  %342 = vmatpush.msra.mxu0 %v117
  %343 = vmatpush.msra.mxu0 %v116
  %344 = vmatmul.f32.gmra.mxu0 %v17
  %v345 = vpop.f32.mrf.mxu0
  %v346 = vadd.f32 %v311, %v345
  %347 = vmatmul.f32.gmra.mxu0 %v26
  %v348 = vpop.f32.mrf.mxu0
  %v349 = vadd.f32 %v314, %v348
  %350 = vmatmul.f32.gmra.mxu0 %v35
  %v351 = vpop.f32.mrf.mxu0
  %v352 = vadd.f32 %v317, %v351
  %353 = vmatmul.f32.gmra.mxu0 %v44
  %v354 = vpop.f32.mrf.mxu0
  %v355 = vadd.f32 %v320, %v354
  %356 = vmatmul.f32.gmra.mxu0 %v53
  %v357 = vpop.f32.mrf.mxu0
  %v358 = vadd.f32 %v323, %v357
  %359 = vmatmul.f32.gmra.mxu0 %v62
  %v360 = vpop.f32.mrf.mxu0
  %v361 = vadd.f32 %v326, %v360
  %362 = vdwg.mxu0
  %363 = vmatpush.msra.mxu0 %v147
  %364 = vmatpush.msra.mxu0 %v146
  %365 = vmatpush.msra.mxu0 %v145
  %366 = vmatpush.msra.mxu0 %v144
  %367 = vmatpush.msra.mxu0 %v143
  %368 = vmatpush.msra.mxu0 %v142
  %369 = vmatpush.msra.mxu0 %v141
  %370 = vmatpush.msra.mxu0 %v140
  %371 = vmatpush.msra.mxu0 %v139
  %372 = vmatpush.msra.mxu0 %v138
  %373 = vmatpush.msra.mxu0 %v137
  %374 = vmatpush.msra.mxu0 %v136
  %375 = vmatpush.msra.mxu0 %v135
  %376 = vmatpush.msra.mxu0 %v134
  %377 = vmatpush.msra.mxu0 %v133
  %378 = vmatpush.msra.mxu0 %v132
  %379 = vmatmul.f32.gmra.mxu0 %v18
  %v380 = vpop.f32.mrf.mxu0
  %v381 = vadd.f32 %v346, %v380
  %382 = vmatmul.f32.gmra.mxu0 %v27
  %v383 = vpop.f32.mrf.mxu0
  %v384 = vadd.f32 %v349, %v383
  %385 = vmatmul.f32.gmra.mxu0 %v36
  %v386 = vpop.f32.mrf.mxu0
  %v387 = vadd.f32 %v352, %v386
  %388 = vmatmul.f32.gmra.mxu0 %v45
  %v389 = vpop.f32.mrf.mxu0
  %v390 = vadd.f32 %v355, %v389
  %391 = vmatmul.f32.gmra.mxu0 %v54
  %v392 = vpop.f32.mrf.mxu0
  %v393 = vadd.f32 %v358, %v392
  %394 = vmatmul.f32.gmra.mxu0 %v63
  %v395 = vpop.f32.mrf.mxu0
  %v396 = vadd.f32 %v361, %v395
  %397 = vdwg.mxu0
  %398 = vmatpush.msra.mxu0 %v163
  %399 = vmatpush.msra.mxu0 %v162
  %400 = vmatpush.msra.mxu0 %v161
  %401 = vmatpush.msra.mxu0 %v160
  %402 = vmatpush.msra.mxu0 %v159
  %403 = vmatpush.msra.mxu0 %v158
  %404 = vmatpush.msra.mxu0 %v157
  %405 = vmatpush.msra.mxu0 %v156
  %406 = vmatpush.msra.mxu0 %v155
  %407 = vmatpush.msra.mxu0 %v154
  %408 = vmatpush.msra.mxu0 %v153
  %409 = vmatpush.msra.mxu0 %v152
  %410 = vmatpush.msra.mxu0 %v151
  %411 = vmatpush.msra.mxu0 %v150
  %412 = vmatpush.msra.mxu0 %v149
  %413 = vmatpush.msra.mxu0 %v148
  %414 = vmatmul.f32.gmra.mxu0 %v19
  %v415 = vpop.f32.mrf.mxu0
  %v416 = vadd.f32 %v381, %v415
  %417 = vmatmul.f32.gmra.mxu0 %v28
  %v418 = vpop.f32.mrf.mxu0
  %v419 = vadd.f32 %v384, %v418
  %420 = vmatmul.f32.gmra.mxu0 %v37
  %v421 = vpop.f32.mrf.mxu0
  %v422 = vadd.f32 %v387, %v421
  %423 = vmatmul.f32.gmra.mxu0 %v46
  %v424 = vpop.f32.mrf.mxu0
  %v425 = vadd.f32 %v390, %v424
  %426 = vmatmul.f32.gmra.mxu0 %v55
  %v427 = vpop.f32.mrf.mxu0
  %v428 = vadd.f32 %v393, %v427
  %429 = vmatmul.f32.gmra.mxu0 %v64
  %v430 = vpop.f32.mrf.mxu0
  %v431 = vadd.f32 %v396, %v430
  %432 = vdwg.mxu0
  %433 = vmatpush.msra.mxu0 %v179
  %434 = vmatpush.msra.mxu0 %v178
  %435 = vmatpush.msra.mxu0 %v177
  %436 = vmatpush.msra.mxu0 %v176
  %437 = vmatpush.msra.mxu0 %v175
  %438 = vmatpush.msra.mxu0 %v174
  %439 = vmatpush.msra.mxu0 %v173
  %440 = vmatpush.msra.mxu0 %v172
  %441 = vmatpush.msra.mxu0 %v171
  %442 = vmatpush.msra.mxu0 %v170
  %443 = vmatpush.msra.mxu0 %v169
  %444 = vmatpush.msra.mxu0 %v168
  %445 = vmatpush.msra.mxu0 %v167
  %446 = vmatpush.msra.mxu0 %v166
  %447 = vmatpush.msra.mxu0 %v165
  %448 = vmatpush.msra.mxu0 %v164
  %449 = vmatmul.f32.gmra.mxu0 %v20
  %v450 = vpop.f32.mrf.mxu0
  %v451 = vadd.f32 %v416, %v450
  %452 = vmatmul.f32.gmra.mxu0 %v29
  %v453 = vpop.f32.mrf.mxu0
  %v454 = vadd.f32 %v419, %v453
  %455 = vmatmul.f32.gmra.mxu0 %v38
  %v456 = vpop.f32.mrf.mxu0
  %v457 = vadd.f32 %v422, %v456
  %458 = vmatmul.f32.gmra.mxu0 %v47
  %v459 = vpop.f32.mrf.mxu0
  %v460 = vadd.f32 %v425, %v459
  %461 = vmatmul.f32.gmra.mxu0 %v56
  %v462 = vpop.f32.mrf.mxu0
  %v463 = vadd.f32 %v428, %v462
  %464 = vmatmul.f32.gmra.mxu0 %v65
  %v465 = vpop.f32.mrf.mxu0
  %v466 = vadd.f32 %v431, %v465
  %467 = vdwg.mxu0
  %468 = vmatpush.msra.mxu0 %v195
  %469 = vmatpush.msra.mxu0 %v194
  %470 = vmatpush.msra.mxu0 %v193
  %471 = vmatpush.msra.mxu0 %v192
  %472 = vmatpush.msra.mxu0 %v191
  %473 = vmatpush.msra.mxu0 %v190
  %474 = vmatpush.msra.mxu0 %v189
  %475 = vmatpush.msra.mxu0 %v188
  %476 = vmatpush.msra.mxu0 %v187
  %477 = vmatpush.msra.mxu0 %v186
  %478 = vmatpush.msra.mxu0 %v185
  %479 = vmatpush.msra.mxu0 %v184
  %480 = vmatpush.msra.mxu0 %v183
  %481 = vmatpush.msra.mxu0 %v182
  %482 = vmatpush.msra.mxu0 %v181
  %483 = vmatpush.msra.mxu0 %v180
  %484 = vmatmul.f32.gmra.mxu0 %v21
  %v485 = vpop.f32.mrf.mxu0
  %v486 = vadd.f32 %v451, %v485
  %487 = vmatmul.f32.gmra.mxu0 %v30
  %v488 = vpop.f32.mrf.mxu0
  %v489 = vadd.f32 %v454, %v488
  %490 = vmatmul.f32.gmra.mxu0 %v39
  %v491 = vpop.f32.mrf.mxu0
  %v492 = vadd.f32 %v457, %v491
  %493 = vmatmul.f32.gmra.mxu0 %v48
  %v494 = vpop.f32.mrf.mxu0
  %v495 = vadd.f32 %v460, %v494
  %496 = vmatmul.f32.gmra.mxu0 %v57
  %v497 = vpop.f32.mrf.mxu0
  %v498 = vadd.f32 %v463, %v497
  %499 = vmatmul.f32.gmra.mxu0 %v66
  %v500 = vpop.f32.mrf.mxu0
  %v501 = vadd.f32 %v466, %v500
  %502 = vdwg.mxu0
  %503 = vmatpush.msra.mxu0 0.0
  %504 = vmatpush.msra.mxu0 0.0
  %505 = vmatpush.msra.mxu0 0.0
  %506 = vmatpush.msra.mxu0 0.0
  %507 = vmatpush.msra.mxu0 0.0
  %508 = vmatpush.msra.mxu0 0.0
  %509 = vmatpush.msra.mxu0 0.0
  %510 = vmatpush.msra.mxu0 0.0
  %511 = vmatpush.msra.mxu0 0.0
  %512 = vmatpush.msra.mxu0 0.0
  %513 = vmatpush.msra.mxu0 0.0
  %514 = vmatpush.msra.mxu0 0.0
  %515 = vmatpush.msra.mxu0 %v199
  %516 = vmatpush.msra.mxu0 %v198
  %517 = vmatpush.msra.mxu0 %v197
  %518 = vmatpush.msra.mxu0 %v196
  %519 = vmatmul.f32.gmra.mxu0 %v206
  %v520 = vpop.f32.mrf.mxu0
  %v521 = vadd.f32 %v486, %v520
  %522 = vmatmul.f32.gmra.mxu0 %v209
  %v523 = vpop.f32.mrf.mxu0
  %v524 = vadd.f32 %v489, %v523
  %525 = vmatmul.f32.gmra.mxu0 %v212
  %v526 = vpop.f32.mrf.mxu0
  %v527 = vadd.f32 %v492, %v526
  %528 = vmatmul.f32.gmra.mxu0 %v215
  %v529 = vpop.f32.mrf.mxu0
  %v530 = vadd.f32 %v495, %v529
  %531 = vmatmul.f32.gmra.mxu0 %v218
  %v532 = vpop.f32.mrf.mxu0
  %v533 = vadd.f32 %v498, %v532
  %534 = vmatmul.f32.gmra.mxu0 %v221
  %v535 = vpop.f32.mrf.mxu0
  %v536 = vadd.f32 %v501, %v535
  %537 = vdwg.mxu0
  %v538 = vmax.f32 %v521, 0.0
  %v539 = vmax.f32 %v524, 0.0
  %v540 = vmax.f32 %v527, 0.0
  %v541 = vmax.f32 %v530, 0.0
  %v542 = vmax.f32 %v533, 0.0
  %v543 = vmax.f32 %v536, 0.0
  %544 = vst [vmem:[%s3] sm:$0xff] %v538
  %545 = vst [vmem:[%s3 + $0x8] sm:$0xff] %v539
  %546 = vst [vmem:[%s3 + $0x10] sm:$0xff] %v540
  %547 = vst [vmem:[%s3 + $0x18] sm:$0xff] %v541
  %548 = vst [vmem:[%s3 + $0x20] sm:$0xff] %v542
  %549 = vst [vmem:[%s3 + $0x28] sm:$0x3] %v543
  // Predicated region
  $region14: #{molecular_icvae_forward.9} parent=0 // pred_check
    _
  $region15: #{molecular_icvae_forward.9} parent=0 // pred_check_branch
    %551 = sbr.rel (0) target = $region17
  $region16: #{molecular_icvae_forward.9} parent=0 // pred_region
    _
  $region17: #{molecular_icvae_forward.9} parent=0 // pred_fallthru
    _
  // Predicated region
  $region18: #{molecular_icvae_forward.9} parent=0 // pred_check
    _
  $region19: #{molecular_icvae_forward.9} parent=0 // pred_check_branch
    %553 = sbr.rel (0) target = $region21
  $region20: #{molecular_icvae_forward.9} parent=0 // pred_region
    _
  $region21: #{molecular_icvae_forward.9} parent=0 // pred_fallthru
    _

// kernel: molecular_icvae_forward.10
$region0: #{molecular_icvae_forward.10}
  #allocation0 [shape = 'u32[]', space=smem, size = 0x4, offset = 0x4, fixed_abs, tag = 'smem constant byte address 0x4 - core index']
  #allocation1 [shape = 'u32[72,128]{1,0:T(1,128)}', space=vmem, size = 0x9000, scoped, tag = 'internal scratch']
  %s0 = inlined_call_operand.vmem [shape: f32[2,1344], index: 0, kind: input, shape index: {}]
  %s1 = inlined_call_operand.vmem [shape: f32[2,128], index: 1, kind: input, shape index: {}]
  %s2 = inlined_call_operand.vmem [shape: f32[2,1], index: 2, kind: input, shape index: {}]
  %s3 = inlined_call_operand.vmem [shape: f32[1344,256], index: 3, kind: input, shape index: {}]
  %s4 = inlined_call_operand.vmem [shape: f32[1,256], index: 4, kind: input, shape index: {}]
  %s5 = inlined_call_operand.vmem [shape: f32[256,128], index: 5, kind: input, shape index: {}]
  %s6 = inlined_call_operand.vmem [shape: f32[1,128], index: 6, kind: input, shape index: {}]
  %s7 = inlined_call_operand.vmem [shape: f32[256,128], index: 7, kind: input, shape index: {}]
  %s8 = inlined_call_operand.vmem [shape: f32[1,128], index: 8, kind: input, shape index: {}]
  %s9 = inlined_call_operand.vmem [shape: f32[128,256], index: 9, kind: input, shape index: {}]
  %s10 = inlined_call_operand.vmem [shape: f32[1,256], index: 10, kind: input, shape index: {}]
  %s11 = inlined_call_operand.vmem [shape: f32[1,256], index: 11, kind: input, shape index: {}]
  %s12 = inlined_call_operand.vmem [shape: f32[256,1408], index: 12, kind: input, shape index: {}]
  %s13 = inlined_call_operand.vmem [shape: f32[1,1408], index: 13, kind: input, shape index: {}]
  %s14 = inlined_call_operand.hbm [shape: f32[2,128], index: 14, kind: output, shape index: {0}]
  %s15 = inlined_call_operand.hbm [shape: f32[2,128], index: 15, kind: output, shape index: {1}]
  %s16 = inlined_call_operand.hbm [shape: f32[2,128], index: 16, kind: output, shape index: {2}]
  %s17 = inlined_call_operand.vmem [shape: f32[2,1408], index: 17, kind: output, shape index: {3}]
  %18 = xla_tuple %s14, %s15, %s16, %s17
  %s19 = sld [smem:[#allocation0]]
  $region90: #{molecular_icvae_forward.10} parent=0
    _
  %s21 = ssub.s32 1, %s19
  %s22 = scalar_select 0, %s21, %s19
  $region1: #{molecular_icvae_forward.10} parent=0
    #allocation2 [shape = 'u8[1024]{0}', space=vmem, size = 0x400, scoped, tag = 'output window, operand 0, single buffered']
    #allocation3 [shape = 's32[1]{0}', space=sflag, size = 0x4, scoped, tag = 'scoped memory for molecular_icvae_forward.10']
    #allocation4 [shape = 'u8[1024]{0}', space=vmem, size = 0x400, scoped, tag = 'output window, operand 1, single buffered']
    #allocation5 [shape = 's32[1]{0}', space=sflag, size = 0x4, scoped, tag = 'scoped memory for molecular_icvae_forward.10']
    #allocation6 [shape = 'u8[1024]{0}', space=vmem, size = 0x400, scoped, tag = 'output window, operand 2, single buffered']
    %23 = vsyncpa [#allocation3], 0
    %24 = vsyncpa [#allocation5], 0
    // Predicated region
    $region2: #{molecular_icvae_forward.10} parent=1 // pred_check
      _
    $region3: #{molecular_icvae_forward.10} parent=1 // pred_check_branch
      %26 = sbr.rel (0) target = $region5
    $region4: #{molecular_icvae_forward.10} parent=1 // pred_region
      _
    $region5: #{molecular_icvae_forward.10} parent=1 // pred_fallthru
      _
    // Predicated region
    $region6: #{molecular_icvae_forward.10} parent=1 // pred_check
      _
    $region7: #{molecular_icvae_forward.10} parent=1 // pred_check_branch
      %28 = sbr.rel (0) target = $region9
    $region8: #{molecular_icvae_forward.10} parent=1 // pred_region
      _
    $region9: #{molecular_icvae_forward.10} parent=1 // pred_fallthru
      _
    // Predicated region
    $region10: #{molecular_icvae_forward.10} parent=1 // pred_check
      _
    $region11: #{molecular_icvae_forward.10} parent=1 // pred_check_branch
      %30 = sbr.rel (0) target = $region13
    $region12: #{molecular_icvae_forward.10} parent=1 // pred_region
      _
    $region13: #{molecular_icvae_forward.10} parent=1 // pred_fallthru
      _
    // Predicated region
    $region14: #{molecular_icvae_forward.10} parent=1 // pred_check
      _
    $region15: #{molecular_icvae_forward.10} parent=1 // pred_check_branch
      %32 = sbr.rel (0) target = $region17
    $region16: #{molecular_icvae_forward.10} parent=1 // pred_region
      _
    $region17: #{molecular_icvae_forward.10} parent=1 // pred_fallthru
      _
    // Predicated region
    $region18: #{molecular_icvae_forward.10} parent=1 // pred_check
      _
    $region19: #{molecular_icvae_forward.10} parent=1 // pred_check_branch
      %34 = sbr.rel (0) target = $region21
    $region20: #{molecular_icvae_forward.10} parent=1 // pred_region
      _
    $region21: #{molecular_icvae_forward.10} parent=1 // pred_fallthru
      _
    // Predicated region
    $region22: #{molecular_icvae_forward.10} parent=1 // pred_check
      _
    $region23: #{molecular_icvae_forward.10} parent=1 // pred_check_branch
      %36 = sbr.rel (0) target = $region25
    $region24: #{molecular_icvae_forward.10} parent=1 // pred_region
      _
    $region25: #{molecular_icvae_forward.10} parent=1 // pred_fallthru
      _
    // Predicated region
    $region26: #{molecular_icvae_forward.10} parent=1 // pred_check
      _
    $region27: #{molecular_icvae_forward.10} parent=1 // pred_check_branch
      %38 = sbr.rel (0) target = $region29
    $region28: #{molecular_icvae_forward.10} parent=1 // pred_region
      _
    $region29: #{molecular_icvae_forward.10} parent=1 // pred_fallthru
      _
    // Predicated region
    $region30: #{molecular_icvae_forward.10} parent=1 // pred_check
      _
    $region31: #{molecular_icvae_forward.10} parent=1 // pred_check_branch
      %40 = sbr.rel (0) target = $region33
    $region32: #{molecular_icvae_forward.10} parent=1 // pred_region
      _
    $region33: #{molecular_icvae_forward.10} parent=1 // pred_fallthru
      _
    // Predicated region
    $region34: #{molecular_icvae_forward.10} parent=1 // pred_check
      _
    $region35: #{molecular_icvae_forward.10} parent=1 // pred_check_branch
      %42 = sbr.rel (0) target = $region37
    $region36: #{molecular_icvae_forward.10} parent=1 // pred_region
      _
    $region37: #{molecular_icvae_forward.10} parent=1 // pred_fallthru
      _
    // Predicated region
    $region38: #{molecular_icvae_forward.10} parent=1 // pred_check
      _
    $region39: #{molecular_icvae_forward.10} parent=1 // pred_check_branch
      %44 = sbr.rel (0) target = $region41
    $region40: #{molecular_icvae_forward.10} parent=1 // pred_region
      _
    $region41: #{molecular_icvae_forward.10} parent=1 // pred_fallthru
      _
    // Predicated region
    $region42: #{molecular_icvae_forward.10} parent=1 // pred_check
      _
    $region43: #{molecular_icvae_forward.10} parent=1 // pred_check_branch
      %46 = sbr.rel (0) target = $region45
    $region44: #{molecular_icvae_forward.10} parent=1 // pred_region
      _
    $region45: #{molecular_icvae_forward.10} parent=1 // pred_fallthru
      _
    // Predicated region
    $region46: #{molecular_icvae_forward.10} parent=1 // pred_check
      _
    $region47: #{molecular_icvae_forward.10} parent=1 // pred_check_branch
      %48 = sbr.rel (0) target = $region49
    $region48: #{molecular_icvae_forward.10} parent=1 // pred_region
      _
    $region49: #{molecular_icvae_forward.10} parent=1 // pred_fallthru
      _
    // Predicated region
    $region50: #{molecular_icvae_forward.10} parent=1 // pred_check
      _
    $region51: #{molecular_icvae_forward.10} parent=1 // pred_check_branch
      %50 = sbr.rel (0) target = $region53
    $region52: #{molecular_icvae_forward.10} parent=1 // pred_region
      _
    $region53: #{molecular_icvae_forward.10} parent=1 // pred_fallthru
      _
    // Predicated region
    $region54: #{molecular_icvae_forward.10} parent=1 // pred_check
      _
    $region55: #{molecular_icvae_forward.10} parent=1 // pred_check_branch
      %52 = sbr.rel (0) target = $region57
    $region56: #{molecular_icvae_forward.10} parent=1 // pred_region
      _
    $region57: #{molecular_icvae_forward.10} parent=1 // pred_fallthru
      _
    %v53 = vld [vmem:[%s0] sm:$0xff]
    %v54 = vld [vmem:[%s0 + $0x8] sm:$0xff]
    %v55 = vld [vmem:[%s0 + $0x10] sm:$0x3f]
    %v56 = vld [vmem:[%s3] sm:$0xff]
    %v57 = vld [vmem:[%s3 + $0x8] sm:$0xff]
    %v58 = vld [vmem:[%s3 + $0x10] sm:$0xff]
    %v59 = vld [vmem:[%s3 + $0x18] sm:$0xff]
    %v60 = vld [vmem:[%s3 + $0x20] sm:$0xff]
    %v61 = vld [vmem:[%s3 + $0x28] sm:$0xff]
    %v62 = vld [vmem:[%s3 + $0x30] sm:$0xff]
    %v63 = vld [vmem:[%s3 + $0x38] sm:$0xff]
    %v64 = vld [vmem:[%s3 + $0x40] sm:$0xff]
    %v65 = vld [vmem:[%s3 + $0x48] sm:$0xff]
    %v66 = vld [vmem:[%s3 + $0x50] sm:$0xff]
    %v67 = vld [vmem:[%s3 + $0x58] sm:$0xff]
    %v68 = vld [vmem:[%s3 + $0x60] sm:$0xff]
    %v69 = vld [vmem:[%s3 + $0x68] sm:$0xff]
    %v70 = vld [vmem:[%s3 + $0x70] sm:$0xff]
    %v71 = vld [vmem:[%s3 + $0x78] sm:$0xff]
    %v72 = vld [vmem:[%s3 + $0x80] sm:$0xff]
    %v73 = vld [vmem:[%s3 + $0x88] sm:$0xff]
    %v74 = vld [vmem:[%s3 + $0x90] sm:$0xff]
    %v75 = vld [vmem:[%s3 + $0x98] sm:$0xff]
    %v76 = vld [vmem:[%s3 + $0xa0] sm:$0xff]
    %v77 = vld [vmem:[%s3 + $0xa8] sm:$0xff]
    %v78 = vld [vmem:[%s3 + $0xb0] sm:$0xff]
    %v79 = vld [vmem:[%s3 + $0xb8] sm:$0xff]
    %v80 = vld [vmem:[%s3 + $0xc0] sm:$0xff]
    %v81 = vld [vmem:[%s3 + $0xc8] sm:$0xff]
    %v82 = vld [vmem:[%s3 + $0xd0] sm:$0xff]
    %v83 = vld [vmem:[%s3 + $0xd8] sm:$0xff]
    %v84 = vld [vmem:[%s3 + $0xe0] sm:$0xff]
    %v85 = vld [vmem:[%s3 + $0xe8] sm:$0xff]
    %v86 = vld [vmem:[%s3 + $0xf0] sm:$0xff]
    %v87 = vld [vmem:[%s3 + $0xf8] sm:$0xff]
    %v88 = vld [vmem:[%s3 + $0x100] sm:$0xff]
    %v89 = vld [vmem:[%s3 + $0x108] sm:$0xff]
    %v90 = vld [vmem:[%s3 + $0x110] sm:$0xff]
    %v91 = vld [vmem:[%s3 + $0x118] sm:$0xff]
    %v92 = vld [vmem:[%s3 + $0x120] sm:$0xff]
    %v93 = vld [vmem:[%s3 + $0x128] sm:$0xff]
    %v94 = vld [vmem:[%s3 + $0x130] sm:$0xff]
    %v95 = vld [vmem:[%s3 + $0x138] sm:$0xff]
    %v96 = vld [vmem:[%s3 + $0x140] sm:$0xff]
    %v97 = vld [vmem:[%s3 + $0x148] sm:$0xff]
    %v98 = vld [vmem:[%s3 + $0x150] sm:$0xff]
    %v99 = vld [vmem:[%s3 + $0x158] sm:$0xff]
    %v100 = vld [vmem:[%s3 + $0x160] sm:$0xff]
    %v101 = vld [vmem:[%s3 + $0x168] sm:$0xff]
    %v102 = vld [vmem:[%s3 + $0x170] sm:$0xff]
    %v103 = vld [vmem:[%s3 + $0x178] sm:$0xff]
    %v104 = vld [vmem:[%s3 + $0x180] sm:$0xff]
    %v105 = vld [vmem:[%s3 + $0x188] sm:$0xff]
    %v106 = vld [vmem:[%s3 + $0x190] sm:$0xff]
    %v107 = vld [vmem:[%s3 + $0x198] sm:$0xff]
    %v108 = vld [vmem:[%s3 + $0x1a0] sm:$0xff]
    %v109 = vld [vmem:[%s3 + $0x1a8] sm:$0xff]
    %v110 = vld [vmem:[%s3 + $0x1b0] sm:$0xff]
    %v111 = vld [vmem:[%s3 + $0x1b8] sm:$0xff]
    %v112 = vld [vmem:[%s3 + $0x1c0] sm:$0xff]
    %v113 = vld [vmem:[%s3 + $0x1c8] sm:$0xff]
    %v114 = vld [vmem:[%s3 + $0x1d0] sm:$0xff]
    %v115 = vld [vmem:[%s3 + $0x1d8] sm:$0xff]
    %v116 = vld [vmem:[%s3 + $0x1e0] sm:$0xff]
    %v117 = vld [vmem:[%s3 + $0x1e8] sm:$0xff]
    %v118 = vld [vmem:[%s3 + $0x1f0] sm:$0xff]
    %v119 = vld [vmem:[%s3 + $0x1f8] sm:$0xff]
    %v120 = vld [vmem:[%s3 + $0x200] sm:$0xff]
    %v121 = vld [vmem:[%s3 + $0x208] sm:$0xff]
    %v122 = vld [vmem:[%s3 + $0x210] sm:$0xff]
    %v123 = vld [vmem:[%s3 + $0x218] sm:$0xff]
    %v124 = vld [vmem:[%s3 + $0x220] sm:$0xff]
    %v125 = vld [vmem:[%s3 + $0x228] sm:$0xff]
    %v126 = vld [vmem:[%s3 + $0x230] sm:$0xff]
    %v127 = vld [vmem:[%s3 + $0x238] sm:$0xff]
    %v128 = vld [vmem:[%s3 + $0x240] sm:$0xff]
    %v129 = vld [vmem:[%s3 + $0x248] sm:$0xff]
    %v130 = vld [vmem:[%s3 + $0x250] sm:$0xff]
    %v131 = vld [vmem:[%s3 + $0x258] sm:$0xff]
    %v132 = vld [vmem:[%s3 + $0x260] sm:$0xff]
    %v133 = vld [vmem:[%s3 + $0x268] sm:$0xff]
    %v134 = vld [vmem:[%s3 + $0x270] sm:$0xff]
    %v135 = vld [vmem:[%s3 + $0x278] sm:$0xff]
    %v136 = vld [vmem:[%s3 + $0x280] sm:$0xff]
    %v137 = vld [vmem:[%s3 + $0x288] sm:$0xff]
    %v138 = vld [vmem:[%s3 + $0x290] sm:$0xff]
    %v139 = vld [vmem:[%s3 + $0x298] sm:$0xff]
    %v140 = vld [vmem:[%s3 + $0x2a0] sm:$0xff]
    %v141 = vld [vmem:[%s3 + $0x2a8] sm:$0xff]
    %v142 = vld [vmem:[%s3 + $0x2b0] sm:$0xff]
    %v143 = vld [vmem:[%s3 + $0x2b8] sm:$0xff]
    %v144 = vld [vmem:[%s3 + $0x2c0] sm:$0xff]
    %v145 = vld [vmem:[%s3 + $0x2c8] sm:$0xff]
    %v146 = vld [vmem:[%s3 + $0x2d0] sm:$0xff]
    %v147 = vld [vmem:[%s3 + $0x2d8] sm:$0xff]
    %v148 = vld [vmem:[%s3 + $0x2e0] sm:$0xff]
    %v149 = vld [vmem:[%s3 + $0x2e8] sm:$0xff]
    %v150 = vld [vmem:[%s3 + $0x2f0] sm:$0xff]
    %v151 = vld [vmem:[%s3 + $0x2f8] sm:$0xff]
    %v152 = vld [vmem:[%s3 + $0x300] sm:$0xff]
    %v153 = vld [vmem:[%s3 + $0x308] sm:$0xff]
    %v154 = vld [vmem:[%s3 + $0x310] sm:$0xff]
    %v155 = vld [vmem:[%s3 + $0x318] sm:$0xff]
    %v156 = vld [vmem:[%s3 + $0x320] sm:$0xff]
    %v157 = vld [vmem:[%s3 + $0x328] sm:$0xff]
    %v158 = vld [vmem:[%s3 + $0x330] sm:$0xff]
    %v159 = vld [vmem:[%s3 + $0x338] sm:$0xff]
    %v160 = vld [vmem:[%s3 + $0x340] sm:$0xff]
    %v161 = vld [vmem:[%s3 + $0x348] sm:$0xff]
    %v162 = vld [vmem:[%s3 + $0x350] sm:$0xff]
    %v163 = vld [vmem:[%s3 + $0x358] sm:$0xff]
    %v164 = vld [vmem:[%s3 + $0x360] sm:$0xff]
    %v165 = vld [vmem:[%s3 + $0x368] sm:$0xff]
    %v166 = vld [vmem:[%s3 + $0x370] sm:$0xff]
    %v167 = vld [vmem:[%s3 + $0x378] sm:$0xff]
    %v168 = vld [vmem:[%s3 + $0x380] sm:$0xff]
    %v169 = vld [vmem:[%s3 + $0x388] sm:$0xff]
    %v170 = vld [vmem:[%s3 + $0x390] sm:$0xff]
    %v171 = vld [vmem:[%s3 + $0x398] sm:$0xff]
    %v172 = vld [vmem:[%s3 + $0x3a0] sm:$0xff]
    %v173 = vld [vmem:[%s3 + $0x3a8] sm:$0xff]
    %v174 = vld [vmem:[%s3 + $0x3b0] sm:$0xff]
    %v175 = vld [vmem:[%s3 + $0x3b8] sm:$0xff]
    %v176 = vld [vmem:[%s3 + $0x3c0] sm:$0xff]
    %v177 = vld [vmem:[%s3 + $0x3c8] sm:$0xff]
    %v178 = vld [vmem:[%s3 + $0x3d0] sm:$0xff]
    %v179 = vld [vmem:[%s3 + $0x3d8] sm:$0xff]
    %v180 = vld [vmem:[%s3 + $0x3e0] sm:$0xff]
    %v181 = vld [vmem:[%s3 + $0x3e8] sm:$0xff]
    %v182 = vld [vmem:[%s3 + $0x3f0] sm:$0xff]
    %v183 = vld [vmem:[%s3 + $0x3f8] sm:$0xff]
    %v184 = vld [vmem:[%s3 + $0x400] sm:$0xff]
    %v185 = vld [vmem:[%s3 + $0x408] sm:$0xff]
    %v186 = vld [vmem:[%s3 + $0x410] sm:$0xff]
    %v187 = vld [vmem:[%s3 + $0x418] sm:$0xff]
    %v188 = vld [vmem:[%s3 + $0x420] sm:$0xff]
    %v189 = vld [vmem:[%s3 + $0x428] sm:$0xff]
    %v190 = vld [vmem:[%s3 + $0x430] sm:$0xff]
    %v191 = vld [vmem:[%s3 + $0x438] sm:$0xff]
    %v192 = vld [vmem:[%s3 + $0x440] sm:$0xff]
    %v193 = vld [vmem:[%s3 + $0x448] sm:$0xff]
    %v194 = vld [vmem:[%s3 + $0x450] sm:$0xff]
    %v195 = vld [vmem:[%s3 + $0x458] sm:$0xff]
    %v196 = vld [vmem:[%s3 + $0x460] sm:$0xff]
    %v197 = vld [vmem:[%s3 + $0x468] sm:$0xff]
    %v198 = vld [vmem:[%s3 + $0x470] sm:$0xff]
    %v199 = vld [vmem:[%s3 + $0x478] sm:$0xff]
    %v200 = vld [vmem:[%s3 + $0x480] sm:$0xff]
    %v201 = vld [vmem:[%s3 + $0x488] sm:$0xff]
    %v202 = vld [vmem:[%s3 + $0x490] sm:$0xff]
    %v203 = vld [vmem:[%s3 + $0x498] sm:$0xff]
    %v204 = vld [vmem:[%s3 + $0x4a0] sm:$0xff]
    %v205 = vld [vmem:[%s3 + $0x4a8] sm:$0xff]
    %v206 = vld [vmem:[%s3 + $0x4b0] sm:$0xff]
    %v207 = vld [vmem:[%s3 + $0x4b8] sm:$0xff]
    %v208 = vld [vmem:[%s3 + $0x4c0] sm:$0xff]
    %v209 = vld [vmem:[%s3 + $0x4c8] sm:$0xff]
    %v210 = vld [vmem:[%s3 + $0x4d0] sm:$0xff]
    %v211 = vld [vmem:[%s3 + $0x4d8] sm:$0xff]
    %v212 = vld [vmem:[%s3 + $0x4e0] sm:$0xff]
    %v213 = vld [vmem:[%s3 + $0x4e8] sm:$0xff]
    %v214 = vld [vmem:[%s3 + $0x4f0] sm:$0xff]
    %v215 = vld [vmem:[%s3 + $0x4f8] sm:$0xff]
    %v216 = vld [vmem:[%s3 + $0x500] sm:$0xff]
    %v217 = vld [vmem:[%s3 + $0x508] sm:$0xff]
    %v218 = vld [vmem:[%s3 + $0x510] sm:$0xff]
    %v219 = vld [vmem:[%s3 + $0x518] sm:$0xff]
    %v220 = vld [vmem:[%s3 + $0x520] sm:$0xff]
    %v221 = vld [vmem:[%s3 + $0x528] sm:$0xff]
    %v222 = vld [vmem:[%s3 + $0x530] sm:$0xff]
    %v223 = vld [vmem:[%s3 + $0x538] sm:$0xff]
    %v224 = vld [vmem:[%s3 + $0x540] sm:$0xff]
    %v225 = vld [vmem:[%s3 + $0x548] sm:$0xff]
    %v226 = vld [vmem:[%s3 + $0x550] sm:$0xff]
    %v227 = vld [vmem:[%s3 + $0x558] sm:$0xff]
    %v228 = vld [vmem:[%s3 + $0x560] sm:$0xff]
    %v229 = vld [vmem:[%s3 + $0x568] sm:$0xff]
    %v230 = vld [vmem:[%s3 + $0x570] sm:$0xff]
    %v231 = vld [vmem:[%s3 + $0x578] sm:$0xff]
    %v232 = vld [vmem:[%s3 + $0x580] sm:$0xff]
    %v233 = vld [vmem:[%s3 + $0x588] sm:$0xff]
    %v234 = vld [vmem:[%s3 + $0x590] sm:$0xff]
    %v235 = vld [vmem:[%s3 + $0x598] sm:$0xff]
    %v236 = vld [vmem:[%s3 + $0x5a0] sm:$0xff]
    %v237 = vld [vmem:[%s3 + $0x5a8] sm:$0xff]
    %v238 = vld [vmem:[%s3 + $0x5b0] sm:$0xff]
    %v239 = vld [vmem:[%s3 + $0x5b8] sm:$0xff]
    %v240 = vld [vmem:[%s3 + $0x5c0] sm:$0xff]
    %v241 = vld [vmem:[%s3 + $0x5c8] sm:$0xff]
    %v242 = vld [vmem:[%s3 + $0x5d0] sm:$0xff]
    %v243 = vld [vmem:[%s3 + $0x5d8] sm:$0xff]
    %v244 = vld [vmem:[%s3 + $0x5e0] sm:$0xff]
    %v245 = vld [vmem:[%s3 + $0x5e8] sm:$0xff]
    %v246 = vld [vmem:[%s3 + $0x5f0] sm:$0xff]
    %v247 = vld [vmem:[%s3 + $0x5f8] sm:$0xff]
    %v248 = vld [vmem:[%s3 + $0x600] sm:$0xff]
    %v249 = vld [vmem:[%s3 + $0x608] sm:$0xff]
    %v250 = vld [vmem:[%s3 + $0x610] sm:$0xff]
    %v251 = vld [vmem:[%s3 + $0x618] sm:$0xff]
    %v252 = vld [vmem:[%s3 + $0x620] sm:$0xff]
    %v253 = vld [vmem:[%s3 + $0x628] sm:$0xff]
    %v254 = vld [vmem:[%s3 + $0x630] sm:$0xff]
    %v255 = vld [vmem:[%s3 + $0x638] sm:$0xff]
    %v256 = vld [vmem:[%s3 + $0x640] sm:$0xff]
    %v257 = vld [vmem:[%s3 + $0x648] sm:$0xff]
    %v258 = vld [vmem:[%s3 + $0x650] sm:$0xff]
    %v259 = vld [vmem:[%s3 + $0x658] sm:$0xff]
    %v260 = vld [vmem:[%s3 + $0x660] sm:$0xff]
    %v261 = vld [vmem:[%s3 + $0x668] sm:$0xff]
    %v262 = vld [vmem:[%s3 + $0x670] sm:$0xff]
    %v263 = vld [vmem:[%s3 + $0x678] sm:$0xff]
    %v264 = vld [vmem:[%s3 + $0x680] sm:$0xff]
    %v265 = vld [vmem:[%s3 + $0x688] sm:$0xff]
    %v266 = vld [vmem:[%s3 + $0x690] sm:$0xff]
    %v267 = vld [vmem:[%s3 + $0x698] sm:$0xff]
    %v268 = vld [vmem:[%s3 + $0x6a0] sm:$0xff]
    %v269 = vld [vmem:[%s3 + $0x6a8] sm:$0xff]
    %v270 = vld [vmem:[%s3 + $0x6b0] sm:$0xff]
    %v271 = vld [vmem:[%s3 + $0x6b8] sm:$0xff]
    %v272 = vld [vmem:[%s3 + $0x6c0] sm:$0xff]
    %v273 = vld [vmem:[%s3 + $0x6c8] sm:$0xff]
    %v274 = vld [vmem:[%s3 + $0x6d0] sm:$0xff]
    %v275 = vld [vmem:[%s3 + $0x6d8] sm:$0xff]
    %v276 = vld [vmem:[%s3 + $0x6e0] sm:$0xff]
    %v277 = vld [vmem:[%s3 + $0x6e8] sm:$0xff]
    %v278 = vld [vmem:[%s3 + $0x6f0] sm:$0xff]
    %v279 = vld [vmem:[%s3 + $0x6f8] sm:$0xff]
    %v280 = vld [vmem:[%s3 + $0x700] sm:$0xff]
    %v281 = vld [vmem:[%s3 + $0x708] sm:$0xff]
    %v282 = vld [vmem:[%s3 + $0x710] sm:$0xff]
    %v283 = vld [vmem:[%s3 + $0x718] sm:$0xff]
    %v284 = vld [vmem:[%s3 + $0x720] sm:$0xff]
    %v285 = vld [vmem:[%s3 + $0x728] sm:$0xff]
    %v286 = vld [vmem:[%s3 + $0x730] sm:$0xff]
    %v287 = vld [vmem:[%s3 + $0x738] sm:$0xff]
    %v288 = vld [vmem:[%s3 + $0x740] sm:$0xff]
    %v289 = vld [vmem:[%s3 + $0x748] sm:$0xff]
    %v290 = vld [vmem:[%s3 + $0x750] sm:$0xff]
    %v291 = vld [vmem:[%s3 + $0x758] sm:$0xff]
    %v292 = vld [vmem:[%s3 + $0x760] sm:$0xff]
    %v293 = vld [vmem:[%s3 + $0x768] sm:$0xff]
    %v294 = vld [vmem:[%s3 + $0x770] sm:$0xff]
    %v295 = vld [vmem:[%s3 + $0x778] sm:$0xff]
    %v296 = vld [vmem:[%s3 + $0x780] sm:$0xff]
    %v297 = vld [vmem:[%s3 + $0x788] sm:$0xff]
    %v298 = vld [vmem:[%s3 + $0x790] sm:$0xff]
    %v299 = vld [vmem:[%s3 + $0x798] sm:$0xff]
    %v300 = vld [vmem:[%s3 + $0x7a0] sm:$0xff]
    %v301 = vld [vmem:[%s3 + $0x7a8] sm:$0xff]
    %v302 = vld [vmem:[%s3 + $0x7b0] sm:$0xff]
    %v303 = vld [vmem:[%s3 + $0x7b8] sm:$0xff]
    %v304 = vld [vmem:[%s3 + $0x7c0] sm:$0xff]
    %v305 = vld [vmem:[%s3 + $0x7c8] sm:$0xff]
    %v306 = vld [vmem:[%s3 + $0x7d0] sm:$0xff]
    %v307 = vld [vmem:[%s3 + $0x7d8] sm:$0xff]
    %v308 = vld [vmem:[%s3 + $0x7e0] sm:$0xff]
    %v309 = vld [vmem:[%s3 + $0x7e8] sm:$0xff]
    %v310 = vld [vmem:[%s3 + $0x7f0] sm:$0xff]
    %v311 = vld [vmem:[%s3 + $0x7f8] sm:$0xff]
    %v312 = vld [vmem:[%s3 + $0x800] sm:$0xff]
    %v313 = vld [vmem:[%s3 + $0x808] sm:$0xff]
    %v314 = vld [vmem:[%s3 + $0x810] sm:$0xff]
    %v315 = vld [vmem:[%s3 + $0x818] sm:$0xff]
    %v316 = vld [vmem:[%s3 + $0x820] sm:$0xff]
    %v317 = vld [vmem:[%s3 + $0x828] sm:$0xff]
    %v318 = vld [vmem:[%s3 + $0x830] sm:$0xff]
    %v319 = vld [vmem:[%s3 + $0x838] sm:$0xff]
    %v320 = vld [vmem:[%s3 + $0x840] sm:$0xff]
    %v321 = vld [vmem:[%s3 + $0x848] sm:$0xff]
    %v322 = vld [vmem:[%s3 + $0x850] sm:$0xff]
    %v323 = vld [vmem:[%s3 + $0x858] sm:$0xff]
    %v324 = vld [vmem:[%s3 + $0x860] sm:$0xff]
    %v325 = vld [vmem:[%s3 + $0x868] sm:$0xff]
    %v326 = vld [vmem:[%s3 + $0x870] sm:$0xff]
    %v327 = vld [vmem:[%s3 + $0x878] sm:$0xff]
    %v328 = vld [vmem:[%s3 + $0x880] sm:$0xff]
    %v329 = vld [vmem:[%s3 + $0x888] sm:$0xff]
    %v330 = vld [vmem:[%s3 + $0x890] sm:$0xff]
    %v331 = vld [vmem:[%s3 + $0x898] sm:$0xff]
    %v332 = vld [vmem:[%s3 + $0x8a0] sm:$0xff]
    %v333 = vld [vmem:[%s3 + $0x8a8] sm:$0xff]
    %v334 = vld [vmem:[%s3 + $0x8b0] sm:$0xff]
    %v335 = vld [vmem:[%s3 + $0x8b8] sm:$0xff]
    %v336 = vld [vmem:[%s3 + $0x8c0] sm:$0xff]
    %v337 = vld [vmem:[%s3 + $0x8c8] sm:$0xff]
    %v338 = vld [vmem:[%s3 + $0x8d0] sm:$0xff]
    %v339 = vld [vmem:[%s3 + $0x8d8] sm:$0xff]
    %v340 = vld [vmem:[%s3 + $0x8e0] sm:$0xff]
    %v341 = vld [vmem:[%s3 + $0x8e8] sm:$0xff]
    %v342 = vld [vmem:[%s3 + $0x8f0] sm:$0xff]
    %v343 = vld [vmem:[%s3 + $0x8f8] sm:$0xff]
    %v344 = vld [vmem:[%s3 + $0x900] sm:$0xff]
    %v345 = vld [vmem:[%s3 + $0x908] sm:$0xff]
    %v346 = vld [vmem:[%s3 + $0x910] sm:$0xff]
    %v347 = vld [vmem:[%s3 + $0x918] sm:$0xff]
    %v348 = vld [vmem:[%s3 + $0x920] sm:$0xff]
    %v349 = vld [vmem:[%s3 + $0x928] sm:$0xff]
    %v350 = vld [vmem:[%s3 + $0x930] sm:$0xff]
    %v351 = vld [vmem:[%s3 + $0x938] sm:$0xff]
    %v352 = vld [vmem:[%s3 + $0x940] sm:$0xff]
    %v353 = vld [vmem:[%s3 + $0x948] sm:$0xff]
    %v354 = vld [vmem:[%s3 + $0x950] sm:$0xff]
    %v355 = vld [vmem:[%s3 + $0x958] sm:$0xff]
    %v356 = vld [vmem:[%s3 + $0x960] sm:$0xff]
    %v357 = vld [vmem:[%s3 + $0x968] sm:$0xff]
    %v358 = vld [vmem:[%s3 + $0x970] sm:$0xff]
    %v359 = vld [vmem:[%s3 + $0x978] sm:$0xff]
    %v360 = vld [vmem:[%s3 + $0x980] sm:$0xff]
    %v361 = vld [vmem:[%s3 + $0x988] sm:$0xff]
    %v362 = vld [vmem:[%s3 + $0x990] sm:$0xff]
    %v363 = vld [vmem:[%s3 + $0x998] sm:$0xff]
    %v364 = vld [vmem:[%s3 + $0x9a0] sm:$0xff]
    %v365 = vld [vmem:[%s3 + $0x9a8] sm:$0xff]
    %v366 = vld [vmem:[%s3 + $0x9b0] sm:$0xff]
    %v367 = vld [vmem:[%s3 + $0x9b8] sm:$0xff]
    %v368 = vld [vmem:[%s3 + $0x9c0] sm:$0xff]
    %v369 = vld [vmem:[%s3 + $0x9c8] sm:$0xff]
    %v370 = vld [vmem:[%s3 + $0x9d0] sm:$0xff]
    %v371 = vld [vmem:[%s3 + $0x9d8] sm:$0xff]
    %v372 = vld [vmem:[%s3 + $0x9e0] sm:$0xff]
    %v373 = vld [vmem:[%s3 + $0x9e8] sm:$0xff]
    %v374 = vld [vmem:[%s3 + $0x9f0] sm:$0xff]
    %v375 = vld [vmem:[%s3 + $0x9f8] sm:$0xff]
    %v376 = vld [vmem:[%s3 + $0xa00] sm:$0xff]
    %v377 = vld [vmem:[%s3 + $0xa08] sm:$0xff]
    %v378 = vld [vmem:[%s3 + $0xa10] sm:$0xff]
    %v379 = vld [vmem:[%s3 + $0xa18] sm:$0xff]
    %v380 = vld [vmem:[%s3 + $0xa20] sm:$0xff]
    %v381 = vld [vmem:[%s3 + $0xa28] sm:$0xff]
    %v382 = vld [vmem:[%s3 + $0xa30] sm:$0xff]
    %v383 = vld [vmem:[%s3 + $0xa38] sm:$0xff]
    %v384 = vld [vmem:[%s3 + $0xa40] sm:$0xff]
    %v385 = vld [vmem:[%s3 + $0xa48] sm:$0xff]
    %v386 = vld [vmem:[%s3 + $0xa50] sm:$0xff]
    %v387 = vld [vmem:[%s3 + $0xa58] sm:$0xff]
    %v388 = vld [vmem:[%s3 + $0xa60] sm:$0xff]
    %v389 = vld [vmem:[%s3 + $0xa68] sm:$0xff]
    %v390 = vld [vmem:[%s3 + $0xa70] sm:$0xff]
    %v391 = vld [vmem:[%s3 + $0xa78] sm:$0xff]
    %v392 = vld [vmem:[%s4] sm:$0x3]
    %v394 = vperm.slane %v392, 0
    %v395 = vperm.slane %v392, 1
    %401 = vst [vmem:[#allocation1] ss:$4 sm:$0xff] %v53
    %s402 = scalar_lea.vmem [#allocation1], 32
    %403 = vst [vmem:[%s402] ss:$4 sm:$0xff] %v54
    %v404 = vld.sshfl [vmem:[#allocation1] sm:$0xff pattern:$0x73625140]
    %v405 = vld.sshfl [vmem:[#allocation1 + $0x8] sm:$0xff pattern:$0x73625140]
    %v406 = vld.sshfl [vmem:[#allocation1 + $0x10] sm:$0xff pattern:$0x73625140]
    %v407 = vld.sshfl [vmem:[#allocation1 + $0x18] sm:$0xff pattern:$0x73625140]
    %v408 = vld.sshfl [vmem:[#allocation1 + $0x20] sm:$0xff pattern:$0x73625140]
    %v409 = vld.sshfl [vmem:[#allocation1 + $0x28] sm:$0xff pattern:$0x73625140]
    %v410 = vld.sshfl [vmem:[#allocation1 + $0x30] sm:$0xff pattern:$0x73625140]
    %v411 = vld.sshfl [vmem:[#allocation1 + $0x38] sm:$0xff pattern:$0x73625140]
    %412 = vst [vmem:[#allocation1] ss:$4 sm:$0xff] %v55
    %v413 = vld.sshfl [vmem:[#allocation1] sm:$0xff pattern:$0x73625140]
    %v414 = vld.sshfl [vmem:[#allocation1 + $0x8] sm:$0xff pattern:$0x73625140]
    %v415 = vld.sshfl [vmem:[#allocation1 + $0x10] sm:$0xff pattern:$0x73625140]
    %vm426 = vcmask 523264
    %v427 = vsel %vm426, %v415, 0
    %429 = vmatpush.msra.mxu0 %v86
    %430 = vmatpush.msra.mxu0 %v84
    %431 = vmatpush.msra.mxu0 %v82
    %432 = vmatpush.msra.mxu0 %v80
    %433 = vmatpush.msra.mxu0 %v78
    %434 = vmatpush.msra.mxu0 %v76
    %435 = vmatpush.msra.mxu0 %v74
    %436 = vmatpush.msra.mxu0 %v72
    %437 = vmatpush.msra.mxu0 %v70
    %438 = vmatpush.msra.mxu0 %v68
    %439 = vmatpush.msra.mxu0 %v66
    %440 = vmatpush.msra.mxu0 %v64
    %441 = vmatpush.msra.mxu0 %v62
    %442 = vmatpush.msra.mxu0 %v60
    %443 = vmatpush.msra.mxu0 %v58
    %444 = vmatpush.msra.mxu0 %v56
    %445 = vmatmul.f32.gmra.mxu0 %v404
    %v446 = vpop.f32.mrf.mxu0
    %v447 = vadd.f32 %v394, %v446
    %448 = vdwg.mxu0
    %449 = vmatpush.msra.mxu0 %v118
    %450 = vmatpush.msra.mxu0 %v116
    %451 = vmatpush.msra.mxu0 %v114
    %452 = vmatpush.msra.mxu0 %v112
    %453 = vmatpush.msra.mxu0 %v110
    %454 = vmatpush.msra.mxu0 %v108
    %455 = vmatpush.msra.mxu0 %v106
    %456 = vmatpush.msra.mxu0 %v104
    %457 = vmatpush.msra.mxu0 %v102
    %458 = vmatpush.msra.mxu0 %v100
    %459 = vmatpush.msra.mxu0 %v98
    %460 = vmatpush.msra.mxu0 %v96
    %461 = vmatpush.msra.mxu0 %v94
    %462 = vmatpush.msra.mxu0 %v92
    %463 = vmatpush.msra.mxu0 %v90
    %464 = vmatpush.msra.mxu0 %v88
    %465 = vmatmul.f32.gmra.mxu0 %v405
    %v466 = vpop.f32.mrf.mxu0
    %v467 = vadd.f32 %v447, %v466
    %468 = vdwg.mxu0
    %469 = vmatpush.msra.mxu0 %v150
    %470 = vmatpush.msra.mxu0 %v148
    %471 = vmatpush.msra.mxu0 %v146
    %472 = vmatpush.msra.mxu0 %v144
    %473 = vmatpush.msra.mxu0 %v142
    %474 = vmatpush.msra.mxu0 %v140
    %475 = vmatpush.msra.mxu0 %v138
    %476 = vmatpush.msra.mxu0 %v136
    %477 = vmatpush.msra.mxu0 %v134
    %478 = vmatpush.msra.mxu0 %v132
    %479 = vmatpush.msra.mxu0 %v130
    %480 = vmatpush.msra.mxu0 %v128
    %481 = vmatpush.msra.mxu0 %v126
    %482 = vmatpush.msra.mxu0 %v124
    %483 = vmatpush.msra.mxu0 %v122
    %484 = vmatpush.msra.mxu0 %v120
    %485 = vmatmul.f32.gmra.mxu0 %v406
    %v486 = vpop.f32.mrf.mxu0
    %v487 = vadd.f32 %v467, %v486
    %488 = vdwg.mxu0
    %489 = vmatpush.msra.mxu0 %v182
    %490 = vmatpush.msra.mxu0 %v180
    %491 = vmatpush.msra.mxu0 %v178
    %492 = vmatpush.msra.mxu0 %v176
    %493 = vmatpush.msra.mxu0 %v174
    %494 = vmatpush.msra.mxu0 %v172
    %495 = vmatpush.msra.mxu0 %v170
    %496 = vmatpush.msra.mxu0 %v168
    %497 = vmatpush.msra.mxu0 %v166
    %498 = vmatpush.msra.mxu0 %v164
    %499 = vmatpush.msra.mxu0 %v162
    %500 = vmatpush.msra.mxu0 %v160
    %501 = vmatpush.msra.mxu0 %v158
    %502 = vmatpush.msra.mxu0 %v156
    %503 = vmatpush.msra.mxu0 %v154
    %504 = vmatpush.msra.mxu0 %v152
    %505 = vmatmul.f32.gmra.mxu0 %v407
    %v506 = vpop.f32.mrf.mxu0
    %v507 = vadd.f32 %v487, %v506
    %508 = vdwg.mxu0
    %509 = vmatpush.msra.mxu0 %v214
    %510 = vmatpush.msra.mxu0 %v212
    %511 = vmatpush.msra.mxu0 %v210
    %512 = vmatpush.msra.mxu0 %v208
    %513 = vmatpush.msra.mxu0 %v206
    %514 = vmatpush.msra.mxu0 %v204
    %515 = vmatpush.msra.mxu0 %v202
    %516 = vmatpush.msra.mxu0 %v200
    %517 = vmatpush.msra.mxu0 %v198
    %518 = vmatpush.msra.mxu0 %v196
    %519 = vmatpush.msra.mxu0 %v194
    %520 = vmatpush.msra.mxu0 %v192
    %521 = vmatpush.msra.mxu0 %v190
    %522 = vmatpush.msra.mxu0 %v188
    %523 = vmatpush.msra.mxu0 %v186
    %524 = vmatpush.msra.mxu0 %v184
    %525 = vmatmul.f32.gmra.mxu0 %v408
    %v526 = vpop.f32.mrf.mxu0
    %v527 = vadd.f32 %v507, %v526
    %528 = vdwg.mxu0
    %529 = vmatpush.msra.mxu0 %v246
    %530 = vmatpush.msra.mxu0 %v244
    %531 = vmatpush.msra.mxu0 %v242
    %532 = vmatpush.msra.mxu0 %v240
    %533 = vmatpush.msra.mxu0 %v238
    %534 = vmatpush.msra.mxu0 %v236
    %535 = vmatpush.msra.mxu0 %v234
    %536 = vmatpush.msra.mxu0 %v232
    %537 = vmatpush.msra.mxu0 %v230
    %538 = vmatpush.msra.mxu0 %v228
    %539 = vmatpush.msra.mxu0 %v226
    %540 = vmatpush.msra.mxu0 %v224
    %541 = vmatpush.msra.mxu0 %v222
    %542 = vmatpush.msra.mxu0 %v220
    %543 = vmatpush.msra.mxu0 %v218
    %544 = vmatpush.msra.mxu0 %v216
    %545 = vmatmul.f32.gmra.mxu0 %v409
    %v546 = vpop.f32.mrf.mxu0
    %v547 = vadd.f32 %v527, %v546
    %548 = vdwg.mxu0
    %549 = vmatpush.msra.mxu0 %v278
    %550 = vmatpush.msra.mxu0 %v276
    %551 = vmatpush.msra.mxu0 %v274
    %552 = vmatpush.msra.mxu0 %v272
    %553 = vmatpush.msra.mxu0 %v270
    %554 = vmatpush.msra.mxu0 %v268
    %555 = vmatpush.msra.mxu0 %v266
    %556 = vmatpush.msra.mxu0 %v264
    %557 = vmatpush.msra.mxu0 %v262
    %558 = vmatpush.msra.mxu0 %v260
    %559 = vmatpush.msra.mxu0 %v258
    %560 = vmatpush.msra.mxu0 %v256
    %561 = vmatpush.msra.mxu0 %v254
    %562 = vmatpush.msra.mxu0 %v252
    %563 = vmatpush.msra.mxu0 %v250
    %564 = vmatpush.msra.mxu0 %v248
    %565 = vmatmul.f32.gmra.mxu0 %v410
    %v566 = vpop.f32.mrf.mxu0
    %v567 = vadd.f32 %v547, %v566
    %568 = vdwg.mxu0
    %569 = vmatpush.msra.mxu0 %v310
    %570 = vmatpush.msra.mxu0 %v308
    %571 = vmatpush.msra.mxu0 %v306
    %572 = vmatpush.msra.mxu0 %v304
    %573 = vmatpush.msra.mxu0 %v302
    %574 = vmatpush.msra.mxu0 %v300
    %575 = vmatpush.msra.mxu0 %v298
    %576 = vmatpush.msra.mxu0 %v296
    %577 = vmatpush.msra.mxu0 %v294
    %578 = vmatpush.msra.mxu0 %v292
    %579 = vmatpush.msra.mxu0 %v290
    %580 = vmatpush.msra.mxu0 %v288
    %581 = vmatpush.msra.mxu0 %v286
    %582 = vmatpush.msra.mxu0 %v284
    %583 = vmatpush.msra.mxu0 %v282
    %584 = vmatpush.msra.mxu0 %v280
    %585 = vmatmul.f32.gmra.mxu0 %v411
    %v586 = vpop.f32.mrf.mxu0
    %v587 = vadd.f32 %v567, %v586
    %588 = vdwg.mxu0
    %589 = vmatpush.msra.mxu0 %v342
    %590 = vmatpush.msra.mxu0 %v340
    %591 = vmatpush.msra.mxu0 %v338
    %592 = vmatpush.msra.mxu0 %v336
    %593 = vmatpush.msra.mxu0 %v334
    %594 = vmatpush.msra.mxu0 %v332
    %595 = vmatpush.msra.mxu0 %v330
    %596 = vmatpush.msra.mxu0 %v328
    %597 = vmatpush.msra.mxu0 %v326
    %598 = vmatpush.msra.mxu0 %v324
    %599 = vmatpush.msra.mxu0 %v322
    %600 = vmatpush.msra.mxu0 %v320
    %601 = vmatpush.msra.mxu0 %v318
    %602 = vmatpush.msra.mxu0 %v316
    %603 = vmatpush.msra.mxu0 %v314
    %604 = vmatpush.msra.mxu0 %v312
    %605 = vmatmul.f32.gmra.mxu0 %v413
    %v606 = vpop.f32.mrf.mxu0
    %v607 = vadd.f32 %v587, %v606
    %608 = vdwg.mxu0
    %609 = vmatpush.msra.mxu0 %v374
    %610 = vmatpush.msra.mxu0 %v372
    %611 = vmatpush.msra.mxu0 %v370
    %612 = vmatpush.msra.mxu0 %v368
    %613 = vmatpush.msra.mxu0 %v366
    %614 = vmatpush.msra.mxu0 %v364
    %615 = vmatpush.msra.mxu0 %v362
    %616 = vmatpush.msra.mxu0 %v360
    %617 = vmatpush.msra.mxu0 %v358
    %618 = vmatpush.msra.mxu0 %v356
    %619 = vmatpush.msra.mxu0 %v354
    %620 = vmatpush.msra.mxu0 %v352
    %621 = vmatpush.msra.mxu0 %v350
    %622 = vmatpush.msra.mxu0 %v348
    %623 = vmatpush.msra.mxu0 %v346
    %624 = vmatpush.msra.mxu0 %v344
    %625 = vmatmul.f32.gmra.mxu0 %v414
    %v626 = vpop.f32.mrf.mxu0
    %v627 = vadd.f32 %v607, %v626
    %628 = vdwg.mxu0
    %629 = vmatpush.msra.mxu0 0.0
    %630 = vmatpush.msra.mxu0 0.0
    %631 = vmatpush.msra.mxu0 0.0
    %632 = vmatpush.msra.mxu0 0.0
    %633 = vmatpush.msra.mxu0 0.0
    %634 = vmatpush.msra.mxu0 0.0
    %635 = vmatpush.msra.mxu0 0.0
    %636 = vmatpush.msra.mxu0 0.0
    %637 = vmatpush.msra.mxu0 %v390
    %638 = vmatpush.msra.mxu0 %v388
    %639 = vmatpush.msra.mxu0 %v386
    %640 = vmatpush.msra.mxu0 %v384
    %641 = vmatpush.msra.mxu0 %v382
    %642 = vmatpush.msra.mxu0 %v380
    %643 = vmatpush.msra.mxu0 %v378
    %644 = vmatpush.msra.mxu0 %v376
    %645 = vmatmul.f32.gmra.mxu0 %v427
    %v646 = vpop.f32.mrf.mxu0
    %v647 = vadd.f32 %v627, %v646
    %648 = vdwg.mxu0
    %649 = vmatpush.msra.mxu0 %v87
    %650 = vmatpush.msra.mxu0 %v85
    %651 = vmatpush.msra.mxu0 %v83
    %652 = vmatpush.msra.mxu0 %v81
    %653 = vmatpush.msra.mxu0 %v79
    %654 = vmatpush.msra.mxu0 %v77
    %655 = vmatpush.msra.mxu0 %v75
    %656 = vmatpush.msra.mxu0 %v73
    %657 = vmatpush.msra.mxu0 %v71
    %658 = vmatpush.msra.mxu0 %v69
    %659 = vmatpush.msra.mxu0 %v67
    %660 = vmatpush.msra.mxu0 %v65
    %661 = vmatpush.msra.mxu0 %v63
    %662 = vmatpush.msra.mxu0 %v61
    %663 = vmatpush.msra.mxu0 %v59
    %664 = vmatpush.msra.mxu0 %v57
    %665 = vmatmul.f32.gmra.mxu0 %v404
    %v666 = vpop.f32.mrf.mxu0
    %v667 = vadd.f32 %v395, %v666
    %668 = vdwg.mxu0
    %669 = vmatpush.msra.mxu0 %v119
    %670 = vmatpush.msra.mxu0 %v117
    %671 = vmatpush.msra.mxu0 %v115
    %672 = vmatpush.msra.mxu0 %v113
    %673 = vmatpush.msra.mxu0 %v111
    %674 = vmatpush.msra.mxu0 %v109
    %675 = vmatpush.msra.mxu0 %v107
    %676 = vmatpush.msra.mxu0 %v105
    %677 = vmatpush.msra.mxu0 %v103
    %678 = vmatpush.msra.mxu0 %v101
    %679 = vmatpush.msra.mxu0 %v99
    %680 = vmatpush.msra.mxu0 %v97
    %681 = vmatpush.msra.mxu0 %v95
    %682 = vmatpush.msra.mxu0 %v93
    %683 = vmatpush.msra.mxu0 %v91
    %684 = vmatpush.msra.mxu0 %v89
    %685 = vmatmul.f32.gmra.mxu0 %v405
    %v686 = vpop.f32.mrf.mxu0
    %v687 = vadd.f32 %v667, %v686
    %688 = vdwg.mxu0
    %689 = vmatpush.msra.mxu0 %v151
    %690 = vmatpush.msra.mxu0 %v149
    %691 = vmatpush.msra.mxu0 %v147
    %692 = vmatpush.msra.mxu0 %v145
    %693 = vmatpush.msra.mxu0 %v143
    %694 = vmatpush.msra.mxu0 %v141
    %695 = vmatpush.msra.mxu0 %v139
    %696 = vmatpush.msra.mxu0 %v137
    %697 = vmatpush.msra.mxu0 %v135
    %698 = vmatpush.msra.mxu0 %v133
    %699 = vmatpush.msra.mxu0 %v131
    %700 = vmatpush.msra.mxu0 %v129
    %701 = vmatpush.msra.mxu0 %v127
    %702 = vmatpush.msra.mxu0 %v125
    %703 = vmatpush.msra.mxu0 %v123
    %704 = vmatpush.msra.mxu0 %v121
    %705 = vmatmul.f32.gmra.mxu0 %v406
    %v706 = vpop.f32.mrf.mxu0
    %v707 = vadd.f32 %v687, %v706
    %708 = vdwg.mxu0
    %709 = vmatpush.msra.mxu0 %v183
    %710 = vmatpush.msra.mxu0 %v181
    %711 = vmatpush.msra.mxu0 %v179
    %712 = vmatpush.msra.mxu0 %v177
    %713 = vmatpush.msra.mxu0 %v175
    %714 = vmatpush.msra.mxu0 %v173
    %715 = vmatpush.msra.mxu0 %v171
    %716 = vmatpush.msra.mxu0 %v169
    %717 = vmatpush.msra.mxu0 %v167
    %718 = vmatpush.msra.mxu0 %v165
    %719 = vmatpush.msra.mxu0 %v163
    %720 = vmatpush.msra.mxu0 %v161
    %721 = vmatpush.msra.mxu0 %v159
    %722 = vmatpush.msra.mxu0 %v157
    %723 = vmatpush.msra.mxu0 %v155
    %724 = vmatpush.msra.mxu0 %v153
    %725 = vmatmul.f32.gmra.mxu0 %v407
    %v726 = vpop.f32.mrf.mxu0
    %v727 = vadd.f32 %v707, %v726
    %728 = vdwg.mxu0
    %729 = vmatpush.msra.mxu0 %v215
    %730 = vmatpush.msra.mxu0 %v213
    %731 = vmatpush.msra.mxu0 %v211
    %732 = vmatpush.msra.mxu0 %v209
    %733 = vmatpush.msra.mxu0 %v207
    %734 = vmatpush.msra.mxu0 %v205
    %735 = vmatpush.msra.mxu0 %v203
    %736 = vmatpush.msra.mxu0 %v201
    %737 = vmatpush.msra.mxu0 %v199
    %738 = vmatpush.msra.mxu0 %v197
    %739 = vmatpush.msra.mxu0 %v195
    %740 = vmatpush.msra.mxu0 %v193
    %741 = vmatpush.msra.mxu0 %v191
    %742 = vmatpush.msra.mxu0 %v189
    %743 = vmatpush.msra.mxu0 %v187
    %744 = vmatpush.msra.mxu0 %v185
    %745 = vmatmul.f32.gmra.mxu0 %v408
    %v746 = vpop.f32.mrf.mxu0
    %v747 = vadd.f32 %v727, %v746
    %748 = vdwg.mxu0
    %749 = vmatpush.msra.mxu0 %v247
    %750 = vmatpush.msra.mxu0 %v245
    %751 = vmatpush.msra.mxu0 %v243
    %752 = vmatpush.msra.mxu0 %v241
    %753 = vmatpush.msra.mxu0 %v239
    %754 = vmatpush.msra.mxu0 %v237
    %755 = vmatpush.msra.mxu0 %v235
    %756 = vmatpush.msra.mxu0 %v233
    %757 = vmatpush.msra.mxu0 %v231
    %758 = vmatpush.msra.mxu0 %v229
    %759 = vmatpush.msra.mxu0 %v227
    %760 = vmatpush.msra.mxu0 %v225
    %761 = vmatpush.msra.mxu0 %v223
    %762 = vmatpush.msra.mxu0 %v221
    %763 = vmatpush.msra.mxu0 %v219
    %764 = vmatpush.msra.mxu0 %v217
    %765 = vmatmul.f32.gmra.mxu0 %v409
    %v766 = vpop.f32.mrf.mxu0
    %v767 = vadd.f32 %v747, %v766
    %768 = vdwg.mxu0
    %769 = vmatpush.msra.mxu0 %v279
    %770 = vmatpush.msra.mxu0 %v277
    %771 = vmatpush.msra.mxu0 %v275
    %772 = vmatpush.msra.mxu0 %v273
    %773 = vmatpush.msra.mxu0 %v271
    %774 = vmatpush.msra.mxu0 %v269
    %775 = vmatpush.msra.mxu0 %v267
    %776 = vmatpush.msra.mxu0 %v265
    %777 = vmatpush.msra.mxu0 %v263
    %778 = vmatpush.msra.mxu0 %v261
    %779 = vmatpush.msra.mxu0 %v259
    %780 = vmatpush.msra.mxu0 %v257
    %781 = vmatpush.msra.mxu0 %v255
    %782 = vmatpush.msra.mxu0 %v253
    %783 = vmatpush.msra.mxu0 %v251
    %784 = vmatpush.msra.mxu0 %v249
    %785 = vmatmul.f32.gmra.mxu0 %v410
    %v786 = vpop.f32.mrf.mxu0
    %v787 = vadd.f32 %v767, %v786
    %788 = vdwg.mxu0
    %789 = vmatpush.msra.mxu0 %v311
    %790 = vmatpush.msra.mxu0 %v309
    %791 = vmatpush.msra.mxu0 %v307
    %792 = vmatpush.msra.mxu0 %v305
    %793 = vmatpush.msra.mxu0 %v303
    %794 = vmatpush.msra.mxu0 %v301
    %795 = vmatpush.msra.mxu0 %v299
    %796 = vmatpush.msra.mxu0 %v297
    %797 = vmatpush.msra.mxu0 %v295
    %798 = vmatpush.msra.mxu0 %v293
    %799 = vmatpush.msra.mxu0 %v291
    %800 = vmatpush.msra.mxu0 %v289
    %801 = vmatpush.msra.mxu0 %v287
    %802 = vmatpush.msra.mxu0 %v285
    %803 = vmatpush.msra.mxu0 %v283
    %804 = vmatpush.msra.mxu0 %v281
    %805 = vmatmul.f32.gmra.mxu0 %v411
    %v806 = vpop.f32.mrf.mxu0
    %v807 = vadd.f32 %v787, %v806
    %808 = vdwg.mxu0
    %809 = vmatpush.msra.mxu0 %v343
    %810 = vmatpush.msra.mxu0 %v341
    %811 = vmatpush.msra.mxu0 %v339
    %812 = vmatpush.msra.mxu0 %v337
    %813 = vmatpush.msra.mxu0 %v335
    %814 = vmatpush.msra.mxu0 %v333
    %815 = vmatpush.msra.mxu0 %v331
    %816 = vmatpush.msra.mxu0 %v329
    %817 = vmatpush.msra.mxu0 %v327
    %818 = vmatpush.msra.mxu0 %v325
    %819 = vmatpush.msra.mxu0 %v323
    %820 = vmatpush.msra.mxu0 %v321
    %821 = vmatpush.msra.mxu0 %v319
    %822 = vmatpush.msra.mxu0 %v317
    %823 = vmatpush.msra.mxu0 %v315
    %824 = vmatpush.msra.mxu0 %v313
    %825 = vmatmul.f32.gmra.mxu0 %v413
    %v826 = vpop.f32.mrf.mxu0
    %v827 = vadd.f32 %v807, %v826
    %828 = vdwg.mxu0
    %829 = vmatpush.msra.mxu0 %v375
    %830 = vmatpush.msra.mxu0 %v373
    %831 = vmatpush.msra.mxu0 %v371
    %832 = vmatpush.msra.mxu0 %v369
    %833 = vmatpush.msra.mxu0 %v367
    %834 = vmatpush.msra.mxu0 %v365
    %835 = vmatpush.msra.mxu0 %v363
    %836 = vmatpush.msra.mxu0 %v361
    %837 = vmatpush.msra.mxu0 %v359
    %838 = vmatpush.msra.mxu0 %v357
    %839 = vmatpush.msra.mxu0 %v355
    %840 = vmatpush.msra.mxu0 %v353
    %841 = vmatpush.msra.mxu0 %v351
    %842 = vmatpush.msra.mxu0 %v349
    %843 = vmatpush.msra.mxu0 %v347
    %844 = vmatpush.msra.mxu0 %v345
    %845 = vmatmul.f32.gmra.mxu0 %v414
    %v846 = vpop.f32.mrf.mxu0
    %v847 = vadd.f32 %v827, %v846
    %848 = vdwg.mxu0
    %849 = vmatpush.msra.mxu0 0.0
    %850 = vmatpush.msra.mxu0 0.0
    %851 = vmatpush.msra.mxu0 0.0
    %852 = vmatpush.msra.mxu0 0.0
    %853 = vmatpush.msra.mxu0 0.0
    %854 = vmatpush.msra.mxu0 0.0
    %855 = vmatpush.msra.mxu0 0.0
    %856 = vmatpush.msra.mxu0 0.0
    %857 = vmatpush.msra.mxu0 %v391
    %858 = vmatpush.msra.mxu0 %v389
    %859 = vmatpush.msra.mxu0 %v387
    %860 = vmatpush.msra.mxu0 %v385
    %861 = vmatpush.msra.mxu0 %v383
    %862 = vmatpush.msra.mxu0 %v381
    %863 = vmatpush.msra.mxu0 %v379
    %864 = vmatpush.msra.mxu0 %v377
    %865 = vmatmul.f32.gmra.mxu0 %v427
    %v866 = vpop.f32.mrf.mxu0
    %v867 = vadd.f32 %v847, %v866
    %868 = vdwg.mxu0
    %vm869 = vcmp.gt.f32.partialorder %v647, 0.0
    %vm870 = vcmp.gt.f32.partialorder %v867, 0.0
    %v871 = vmul.f32 %v647, 1.442695
    %v872 = vpow.pop %v871
    %v873 = vmul.f32 %v867, 1.442695
    %v874 = vpow.pop %v873
    %v875 = vsub.f32 %v872, 1.0
    %v876 = vsub.f32 %v874, 1.0
    %v877 = vmul.f32 %v875, 1.6732632
    %v878 = vmul.f32 %v876, 1.6732632
    %v879 = vsel %vm869, %v647, %v877
    %v880 = vsel %vm870, %v867, %v878
    %v881 = vmul.f32 %v879, 1.050701
    %v882 = vmul.f32 %v880, 1.050701
    %v883 = vld [vmem:[%s5] sm:$0xff]
    %v884 = vld [vmem:[%s5 + $0x8] sm:$0xff]
    %v885 = vld [vmem:[%s5 + $0x10] sm:$0xff]
    %v886 = vld [vmem:[%s5 + $0x18] sm:$0xff]
    %v887 = vld [vmem:[%s5 + $0x20] sm:$0xff]
    %v888 = vld [vmem:[%s5 + $0x28] sm:$0xff]
    %v889 = vld [vmem:[%s5 + $0x30] sm:$0xff]
    %v890 = vld [vmem:[%s5 + $0x38] sm:$0xff]
    %v891 = vld [vmem:[%s5 + $0x40] sm:$0xff]
    %v892 = vld [vmem:[%s5 + $0x48] sm:$0xff]
    %v893 = vld [vmem:[%s5 + $0x50] sm:$0xff]
    %v894 = vld [vmem:[%s5 + $0x58] sm:$0xff]
    %v895 = vld [vmem:[%s5 + $0x60] sm:$0xff]
    %v896 = vld [vmem:[%s5 + $0x68] sm:$0xff]
    %v897 = vld [vmem:[%s5 + $0x70] sm:$0xff]
    %v898 = vld [vmem:[%s5 + $0x78] sm:$0xff]
    %v899 = vld [vmem:[%s5 + $0x80] sm:$0xff]
    %v900 = vld [vmem:[%s5 + $0x88] sm:$0xff]
    %v901 = vld [vmem:[%s5 + $0x90] sm:$0xff]
    %v902 = vld [vmem:[%s5 + $0x98] sm:$0xff]
    %v903 = vld [vmem:[%s5 + $0xa0] sm:$0xff]
    %v904 = vld [vmem:[%s5 + $0xa8] sm:$0xff]
    %v905 = vld [vmem:[%s5 + $0xb0] sm:$0xff]
    %v906 = vld [vmem:[%s5 + $0xb8] sm:$0xff]
    %v907 = vld [vmem:[%s5 + $0xc0] sm:$0xff]
    %v908 = vld [vmem:[%s5 + $0xc8] sm:$0xff]
    %v909 = vld [vmem:[%s5 + $0xd0] sm:$0xff]
    %v910 = vld [vmem:[%s5 + $0xd8] sm:$0xff]
    %v911 = vld [vmem:[%s5 + $0xe0] sm:$0xff]
    %v912 = vld [vmem:[%s5 + $0xe8] sm:$0xff]
    %v913 = vld [vmem:[%s5 + $0xf0] sm:$0xff]
    %v914 = vld [vmem:[%s5 + $0xf8] sm:$0xff]
    %v915 = vld [vmem:[%s6] sm:$0x1]
    %v917 = vperm.slane %v915, 0
    %919 = vmatpush.msra.mxu0 %v898
    %920 = vmatpush.msra.mxu0 %v897
    %921 = vmatpush.msra.mxu0 %v896
    %922 = vmatpush.msra.mxu0 %v895
    %923 = vmatpush.msra.mxu0 %v894
    %924 = vmatpush.msra.mxu0 %v893
    %925 = vmatpush.msra.mxu0 %v892
    %926 = vmatpush.msra.mxu0 %v891
    %927 = vmatpush.msra.mxu0 %v890
    %928 = vmatpush.msra.mxu0 %v889
    %929 = vmatpush.msra.mxu0 %v888
    %930 = vmatpush.msra.mxu0 %v887
    %931 = vmatpush.msra.mxu0 %v886
    %932 = vmatpush.msra.mxu0 %v885
    %933 = vmatpush.msra.mxu0 %v884
    %934 = vmatpush.msra.mxu0 %v883
    %935 = vmatmul.f32.gmra.mxu0 %v881
    %v936 = vpop.f32.mrf.mxu0
    %v937 = vadd.f32 %v917, %v936
    %938 = vdwg.mxu0
    %939 = vmatpush.msra.mxu0 %v914
    %940 = vmatpush.msra.mxu0 %v913
    %941 = vmatpush.msra.mxu0 %v912
    %942 = vmatpush.msra.mxu0 %v911
    %943 = vmatpush.msra.mxu0 %v910
    %944 = vmatpush.msra.mxu0 %v909
    %945 = vmatpush.msra.mxu0 %v908
    %946 = vmatpush.msra.mxu0 %v907
    %947 = vmatpush.msra.mxu0 %v906
    %948 = vmatpush.msra.mxu0 %v905
    %949 = vmatpush.msra.mxu0 %v904
    %950 = vmatpush.msra.mxu0 %v903
    %951 = vmatpush.msra.mxu0 %v902
    %952 = vmatpush.msra.mxu0 %v901
    %953 = vmatpush.msra.mxu0 %v900
    %954 = vmatpush.msra.mxu0 %v899
    %955 = vmatmul.f32.gmra.mxu0 %v882
    %v956 = vpop.f32.mrf.mxu0
    %v957 = vadd.f32 %v937, %v956
    %958 = vdwg.mxu0
    %v959 = vld [vmem:[%s7] sm:$0xff]
    %v960 = vld [vmem:[%s7 + $0x8] sm:$0xff]
    %v961 = vld [vmem:[%s7 + $0x10] sm:$0xff]
    %v962 = vld [vmem:[%s7 + $0x18] sm:$0xff]
    %v963 = vld [vmem:[%s7 + $0x20] sm:$0xff]
    %v964 = vld [vmem:[%s7 + $0x28] sm:$0xff]
    %v965 = vld [vmem:[%s7 + $0x30] sm:$0xff]
    %v966 = vld [vmem:[%s7 + $0x38] sm:$0xff]
    %v967 = vld [vmem:[%s7 + $0x40] sm:$0xff]
    %v968 = vld [vmem:[%s7 + $0x48] sm:$0xff]
    %v969 = vld [vmem:[%s7 + $0x50] sm:$0xff]
    %v970 = vld [vmem:[%s7 + $0x58] sm:$0xff]
    %v971 = vld [vmem:[%s7 + $0x60] sm:$0xff]
    %v972 = vld [vmem:[%s7 + $0x68] sm:$0xff]
    %v973 = vld [vmem:[%s7 + $0x70] sm:$0xff]
    %v974 = vld [vmem:[%s7 + $0x78] sm:$0xff]
    %v975 = vld [vmem:[%s7 + $0x80] sm:$0xff]
    %v976 = vld [vmem:[%s7 + $0x88] sm:$0xff]
    %v977 = vld [vmem:[%s7 + $0x90] sm:$0xff]
    %v978 = vld [vmem:[%s7 + $0x98] sm:$0xff]
    %v979 = vld [vmem:[%s7 + $0xa0] sm:$0xff]
    %v980 = vld [vmem:[%s7 + $0xa8] sm:$0xff]
    %v981 = vld [vmem:[%s7 + $0xb0] sm:$0xff]
    %v982 = vld [vmem:[%s7 + $0xb8] sm:$0xff]
    %v983 = vld [vmem:[%s7 + $0xc0] sm:$0xff]
    %v984 = vld [vmem:[%s7 + $0xc8] sm:$0xff]
    %v985 = vld [vmem:[%s7 + $0xd0] sm:$0xff]
    %v986 = vld [vmem:[%s7 + $0xd8] sm:$0xff]
    %v987 = vld [vmem:[%s7 + $0xe0] sm:$0xff]
    %v988 = vld [vmem:[%s7 + $0xe8] sm:$0xff]
    %v989 = vld [vmem:[%s7 + $0xf0] sm:$0xff]
    %v990 = vld [vmem:[%s7 + $0xf8] sm:$0xff]
    %v991 = vld [vmem:[%s8] sm:$0x1]
    %v993 = vperm.slane %v991, 0
    %995 = vmatpush.msra.mxu0 %v974
    %996 = vmatpush.msra.mxu0 %v973
    %997 = vmatpush.msra.mxu0 %v972
    %998 = vmatpush.msra.mxu0 %v971
    %999 = vmatpush.msra.mxu0 %v970
    %1000 = vmatpush.msra.mxu0 %v969
    %1001 = vmatpush.msra.mxu0 %v968
    %1002 = vmatpush.msra.mxu0 %v967
    %1003 = vmatpush.msra.mxu0 %v966
    %1004 = vmatpush.msra.mxu0 %v965
    %1005 = vmatpush.msra.mxu0 %v964
    %1006 = vmatpush.msra.mxu0 %v963
    %1007 = vmatpush.msra.mxu0 %v962
    %1008 = vmatpush.msra.mxu0 %v961
    %1009 = vmatpush.msra.mxu0 %v960
    %1010 = vmatpush.msra.mxu0 %v959
    %1011 = vmatmul.f32.gmra.mxu0 %v881
    %v1012 = vpop.f32.mrf.mxu0
    %v1013 = vadd.f32 %v993, %v1012
    %1014 = vdwg.mxu0
    %1015 = vmatpush.msra.mxu0 %v990
    %1016 = vmatpush.msra.mxu0 %v989
    %1017 = vmatpush.msra.mxu0 %v988
    %1018 = vmatpush.msra.mxu0 %v987
    %1019 = vmatpush.msra.mxu0 %v986
    %1020 = vmatpush.msra.mxu0 %v985
    %1021 = vmatpush.msra.mxu0 %v984
    %1022 = vmatpush.msra.mxu0 %v983
    %1023 = vmatpush.msra.mxu0 %v982
    %1024 = vmatpush.msra.mxu0 %v981
    %1025 = vmatpush.msra.mxu0 %v980
    %1026 = vmatpush.msra.mxu0 %v979
    %1027 = vmatpush.msra.mxu0 %v978
    %1028 = vmatpush.msra.mxu0 %v977
    %1029 = vmatpush.msra.mxu0 %v976
    %1030 = vmatpush.msra.mxu0 %v975
    %1031 = vmatmul.f32.gmra.mxu0 %v882
    %v1032 = vpop.f32.mrf.mxu0
    %v1033 = vadd.f32 %v1013, %v1032
    %1034 = vdwg.mxu0
    %v1035 = vmul.f32 %v1033, 0.5
    %v1036 = vmul.f32 %v1035, 1.442695
    %v1037 = vpow.pop %v1036
    %v1038 = vld [vmem:[%s1] sm:$0x3]
    %v1039 = vmul.f32 %v1037, %v1038
    %v1040 = vadd.f32 %v1039, %v957
    %v1041 = vld [vmem:[%s9] sm:$0xff]
    %v1042 = vld [vmem:[%s9 + $0x8] sm:$0xff]
    %v1043 = vld [vmem:[%s9 + $0x10] sm:$0xff]
    %v1044 = vld [vmem:[%s9 + $0x18] sm:$0xff]
    %v1045 = vld [vmem:[%s9 + $0x20] sm:$0xff]
    %v1046 = vld [vmem:[%s9 + $0x28] sm:$0xff]
    %v1047 = vld [vmem:[%s9 + $0x30] sm:$0xff]
    %v1048 = vld [vmem:[%s9 + $0x38] sm:$0xff]
    %v1049 = vld [vmem:[%s9 + $0x40] sm:$0xff]
    %v1050 = vld [vmem:[%s9 + $0x48] sm:$0xff]
    %v1051 = vld [vmem:[%s9 + $0x50] sm:$0xff]
    %v1052 = vld [vmem:[%s9 + $0x58] sm:$0xff]
    %v1053 = vld [vmem:[%s9 + $0x60] sm:$0xff]
    %v1054 = vld [vmem:[%s9 + $0x68] sm:$0xff]
    %v1055 = vld [vmem:[%s9 + $0x70] sm:$0xff]
    %v1056 = vld [vmem:[%s9 + $0x78] sm:$0xff]
    %v1057 = vld [vmem:[%s9 + $0x80] sm:$0xff]
    %v1058 = vld [vmem:[%s9 + $0x88] sm:$0xff]
    %v1059 = vld [vmem:[%s9 + $0x90] sm:$0xff]
    %v1060 = vld [vmem:[%s9 + $0x98] sm:$0xff]
    %v1061 = vld [vmem:[%s9 + $0xa0] sm:$0xff]
    %v1062 = vld [vmem:[%s9 + $0xa8] sm:$0xff]
    %v1063 = vld [vmem:[%s9 + $0xb0] sm:$0xff]
    %v1064 = vld [vmem:[%s9 + $0xb8] sm:$0xff]
    %v1065 = vld [vmem:[%s9 + $0xc0] sm:$0xff]
    %v1066 = vld [vmem:[%s9 + $0xc8] sm:$0xff]
    %v1067 = vld [vmem:[%s9 + $0xd0] sm:$0xff]
    %v1068 = vld [vmem:[%s9 + $0xd8] sm:$0xff]
    %v1069 = vld [vmem:[%s9 + $0xe0] sm:$0xff]
    %v1070 = vld [vmem:[%s9 + $0xe8] sm:$0xff]
    %v1071 = vld [vmem:[%s9 + $0xf0] sm:$0xff]
    %v1072 = vld [vmem:[%s9 + $0xf8] sm:$0xff]
    %v1073 = vld [vmem:[%s2] sm:$0x3]
    %v1074 = vld [vmem:[%s10] sm:$0x3]
    %1076 = vset.pattern.permute.xlu0 0
    %1077 = vperm.xlu0 %1076, %v1073
    %v1078 = vpop.permute.xlu0 %1077
    %v1081 = vperm.slane %v1074, 0
    %v1082 = vperm.slane %v1074, 1
    %v1085 = vmul.f32 %v1078, %v1081
    %v1086 = vmul.f32 %v1078, %v1082
    %1087 = vmatpush.msra.mxu0 %v1071
    %1088 = vmatpush.msra.mxu0 %v1069
    %1089 = vmatpush.msra.mxu0 %v1067
    %1090 = vmatpush.msra.mxu0 %v1065
    %1091 = vmatpush.msra.mxu0 %v1063
    %1092 = vmatpush.msra.mxu0 %v1061
    %1093 = vmatpush.msra.mxu0 %v1059
    %1094 = vmatpush.msra.mxu0 %v1057
    %1095 = vmatpush.msra.mxu0 %v1055
    %1096 = vmatpush.msra.mxu0 %v1053
    %1097 = vmatpush.msra.mxu0 %v1051
    %1098 = vmatpush.msra.mxu0 %v1049
    %1099 = vmatpush.msra.mxu0 %v1047
    %1100 = vmatpush.msra.mxu0 %v1045
    %1101 = vmatpush.msra.mxu0 %v1043
    %1102 = vmatpush.msra.mxu0 %v1041
    %1103 = vmatmul.f32.gmra.mxu0 %v1040
    %v1104 = vpop.f32.mrf.mxu0
    %v1105 = vadd.f32 %v1085, %v1104
    %1106 = vdwg.mxu0
    %1107 = vmatpush.msra.mxu0 %v1072
    %1108 = vmatpush.msra.mxu0 %v1070
    %1109 = vmatpush.msra.mxu0 %v1068
    %1110 = vmatpush.msra.mxu0 %v1066
    %1111 = vmatpush.msra.mxu0 %v1064
    %1112 = vmatpush.msra.mxu0 %v1062
    %1113 = vmatpush.msra.mxu0 %v1060
    %1114 = vmatpush.msra.mxu0 %v1058
    %1115 = vmatpush.msra.mxu0 %v1056
    %1116 = vmatpush.msra.mxu0 %v1054
    %1117 = vmatpush.msra.mxu0 %v1052
    %1118 = vmatpush.msra.mxu0 %v1050
    %1119 = vmatpush.msra.mxu0 %v1048
    %1120 = vmatpush.msra.mxu0 %v1046
    %1121 = vmatpush.msra.mxu0 %v1044
    %1122 = vmatpush.msra.mxu0 %v1042
    %1123 = vmatmul.f32.gmra.mxu0 %v1040
    %v1124 = vpop.f32.mrf.mxu0
    %v1125 = vadd.f32 %v1086, %v1124
    %1126 = vdwg.mxu0
    %v1127 = vld [vmem:[%s11] sm:$0x3]
    %v1129 = vperm.slane %v1127, 0
    %v1130 = vperm.slane %v1127, 1
    %v1133 = vadd.f32 %v1105, %v1129
    %v1134 = vadd.f32 %v1125, %v1130
    %vm1135 = vcmp.gt.f32.partialorder %v1133, 0.0
    %vm1136 = vcmp.gt.f32.partialorder %v1134, 0.0
    %v1137 = vmul.f32 %v1133, 1.442695
    %v1138 = vpow.pop %v1137
    %v1139 = vmul.f32 %v1134, 1.442695
    %v1140 = vpow.pop %v1139
    %v1141 = vsub.f32 %v1138, 1.0
    %v1142 = vsub.f32 %v1140, 1.0
    %v1143 = vmul.f32 %v1141, 1.6732632
    %v1144 = vmul.f32 %v1142, 1.6732632
    %v1145 = vsel %vm1135, %v1133, %v1143
    %v1146 = vsel %vm1136, %v1134, %v1144
    %v1147 = vmul.f32 %v1145, 1.050701
    %v1148 = vmul.f32 %v1146, 1.050701
    %v1149 = vld [vmem:[%s12] sm:$0xff]
    %v1150 = vld [vmem:[%s12 + $0x8] sm:$0xff]
    %v1151 = vld [vmem:[%s12 + $0x10] sm:$0xff]
    %v1152 = vld [vmem:[%s12 + $0x18] sm:$0xff]
    %v1153 = vld [vmem:[%s12 + $0x20] sm:$0xff]
    %v1154 = vld [vmem:[%s12 + $0x28] sm:$0xff]
    %v1155 = vld [vmem:[%s12 + $0x30] sm:$0xff]
    %v1156 = vld [vmem:[%s12 + $0x38] sm:$0xff]
    %v1157 = vld [vmem:[%s12 + $0x40] sm:$0xff]
    %v1158 = vld [vmem:[%s12 + $0x48] sm:$0xff]
    %v1159 = vld [vmem:[%s12 + $0x50] sm:$0xff]
    %v1160 = vld [vmem:[%s12 + $0x58] sm:$0xff]
    %v1161 = vld [vmem:[%s12 + $0x60] sm:$0xff]
    %v1162 = vld [vmem:[%s12 + $0x68] sm:$0xff]
    %v1163 = vld [vmem:[%s12 + $0x70] sm:$0xff]
    %v1164 = vld [vmem:[%s12 + $0x78] sm:$0xff]
    %v1165 = vld [vmem:[%s12 + $0x80] sm:$0xff]
    %v1166 = vld [vmem:[%s12 + $0x88] sm:$0xff]
    %v1167 = vld [vmem:[%s12 + $0x90] sm:$0xff]
    %v1168 = vld [vmem:[%s12 + $0x98] sm:$0xff]
    %v1169 = vld [vmem:[%s12 + $0xa0] sm:$0xff]
    %v1170 = vld [vmem:[%s12 + $0xa8] sm:$0xff]
    %v1171 = vld [vmem:[%s12 + $0xb0] sm:$0xff]
    %v1172 = vld [vmem:[%s12 + $0xb8] sm:$0xff]
    %v1173 = vld [vmem:[%s12 + $0xc0] sm:$0xff]
    %v1174 = vld [vmem:[%s12 + $0xc8] sm:$0xff]
    %v1175 = vld [vmem:[%s12 + $0xd0] sm:$0xff]
    %v1176 = vld [vmem:[%s12 + $0xd8] sm:$0xff]
    %v1177 = vld [vmem:[%s12 + $0xe0] sm:$0xff]
    %v1178 = vld [vmem:[%s12 + $0xe8] sm:$0xff]
    %v1179 = vld [vmem:[%s12 + $0xf0] sm:$0xff]
    %v1180 = vld [vmem:[%s12 + $0xf8] sm:$0xff]
    %v1181 = vld [vmem:[%s12 + $0x100] sm:$0xff]
    %v1182 = vld [vmem:[%s12 + $0x108] sm:$0xff]
    %v1183 = vld [vmem:[%s12 + $0x110] sm:$0xff]
    %v1184 = vld [vmem:[%s12 + $0x118] sm:$0xff]
    %v1185 = vld [vmem:[%s12 + $0x120] sm:$0xff]
    %v1186 = vld [vmem:[%s12 + $0x128] sm:$0xff]
    %v1187 = vld [vmem:[%s12 + $0x130] sm:$0xff]
    %v1188 = vld [vmem:[%s12 + $0x138] sm:$0xff]
    %v1189 = vld [vmem:[%s12 + $0x140] sm:$0xff]
    %v1190 = vld [vmem:[%s12 + $0x148] sm:$0xff]
    %v1191 = vld [vmem:[%s12 + $0x150] sm:$0xff]
    %v1192 = vld [vmem:[%s12 + $0x158] sm:$0xff]
    %v1193 = vld [vmem:[%s12 + $0x160] sm:$0xff]
    %v1194 = vld [vmem:[%s12 + $0x168] sm:$0xff]
    %v1195 = vld [vmem:[%s12 + $0x170] sm:$0xff]
    %v1196 = vld [vmem:[%s12 + $0x178] sm:$0xff]
    %v1197 = vld [vmem:[%s12 + $0x180] sm:$0xff]
    %v1198 = vld [vmem:[%s12 + $0x188] sm:$0xff]
    %v1199 = vld [vmem:[%s12 + $0x190] sm:$0xff]
    %v1200 = vld [vmem:[%s12 + $0x198] sm:$0xff]
    %v1201 = vld [vmem:[%s12 + $0x1a0] sm:$0xff]
    %v1202 = vld [vmem:[%s12 + $0x1a8] sm:$0xff]
    %v1203 = vld [vmem:[%s12 + $0x1b0] sm:$0xff]
    %v1204 = vld [vmem:[%s12 + $0x1b8] sm:$0xff]
    %v1205 = vld [vmem:[%s12 + $0x1c0] sm:$0xff]
    %v1206 = vld [vmem:[%s12 + $0x1c8] sm:$0xff]
    %v1207 = vld [vmem:[%s12 + $0x1d0] sm:$0xff]
    %v1208 = vld [vmem:[%s12 + $0x1d8] sm:$0xff]
    %v1209 = vld [vmem:[%s12 + $0x1e0] sm:$0xff]
    %v1210 = vld [vmem:[%s12 + $0x1e8] sm:$0xff]
    %v1211 = vld [vmem:[%s12 + $0x1f0] sm:$0xff]
    %v1212 = vld [vmem:[%s12 + $0x1f8] sm:$0xff]
    %v1213 = vld [vmem:[%s12 + $0x200] sm:$0xff]
    %v1214 = vld [vmem:[%s12 + $0x208] sm:$0xff]
    %v1215 = vld [vmem:[%s12 + $0x210] sm:$0xff]
    %v1216 = vld [vmem:[%s12 + $0x218] sm:$0xff]
    %v1217 = vld [vmem:[%s12 + $0x220] sm:$0xff]
    %v1218 = vld [vmem:[%s12 + $0x228] sm:$0xff]
    %v1219 = vld [vmem:[%s12 + $0x230] sm:$0xff]
    %v1220 = vld [vmem:[%s12 + $0x238] sm:$0xff]
    %v1221 = vld [vmem:[%s12 + $0x240] sm:$0xff]
    %v1222 = vld [vmem:[%s12 + $0x248] sm:$0xff]
    %v1223 = vld [vmem:[%s12 + $0x250] sm:$0xff]
    %v1224 = vld [vmem:[%s12 + $0x258] sm:$0xff]
    %v1225 = vld [vmem:[%s12 + $0x260] sm:$0xff]
    %v1226 = vld [vmem:[%s12 + $0x268] sm:$0xff]
    %v1227 = vld [vmem:[%s12 + $0x270] sm:$0xff]
    %v1228 = vld [vmem:[%s12 + $0x278] sm:$0xff]
    %v1229 = vld [vmem:[%s12 + $0x280] sm:$0xff]
    %v1230 = vld [vmem:[%s12 + $0x288] sm:$0xff]
    %v1231 = vld [vmem:[%s12 + $0x290] sm:$0xff]
    %v1232 = vld [vmem:[%s12 + $0x298] sm:$0xff]
    %v1233 = vld [vmem:[%s12 + $0x2a0] sm:$0xff]
    %v1234 = vld [vmem:[%s12 + $0x2a8] sm:$0xff]
    %v1235 = vld [vmem:[%s12 + $0x2b0] sm:$0xff]
    %v1236 = vld [vmem:[%s12 + $0x2b8] sm:$0xff]
    %v1237 = vld [vmem:[%s12 + $0x2c0] sm:$0xff]
    %v1238 = vld [vmem:[%s12 + $0x2c8] sm:$0xff]
    %v1239 = vld [vmem:[%s12 + $0x2d0] sm:$0xff]
    %v1240 = vld [vmem:[%s12 + $0x2d8] sm:$0xff]
    %v1241 = vld [vmem:[%s12 + $0x2e0] sm:$0xff]
    %v1242 = vld [vmem:[%s12 + $0x2e8] sm:$0xff]
    %v1243 = vld [vmem:[%s12 + $0x2f0] sm:$0xff]
    %v1244 = vld [vmem:[%s12 + $0x2f8] sm:$0xff]
    %v1245 = vld [vmem:[%s12 + $0x300] sm:$0xff]
    %v1246 = vld [vmem:[%s12 + $0x308] sm:$0xff]
    %v1247 = vld [vmem:[%s12 + $0x310] sm:$0xff]
    %v1248 = vld [vmem:[%s12 + $0x318] sm:$0xff]
    %v1249 = vld [vmem:[%s12 + $0x320] sm:$0xff]
    %v1250 = vld [vmem:[%s12 + $0x328] sm:$0xff]
    %v1251 = vld [vmem:[%s12 + $0x330] sm:$0xff]
    %v1252 = vld [vmem:[%s12 + $0x338] sm:$0xff]
    %v1253 = vld [vmem:[%s12 + $0x340] sm:$0xff]
    %v1254 = vld [vmem:[%s12 + $0x348] sm:$0xff]
    %v1255 = vld [vmem:[%s12 + $0x350] sm:$0xff]
    %v1256 = vld [vmem:[%s12 + $0x358] sm:$0xff]
    %v1257 = vld [vmem:[%s12 + $0x360] sm:$0xff]
    %v1258 = vld [vmem:[%s12 + $0x368] sm:$0xff]
    %v1259 = vld [vmem:[%s12 + $0x370] sm:$0xff]
    %v1260 = vld [vmem:[%s12 + $0x378] sm:$0xff]
    %v1261 = vld [vmem:[%s12 + $0x380] sm:$0xff]
    %v1262 = vld [vmem:[%s12 + $0x388] sm:$0xff]
    %v1263 = vld [vmem:[%s12 + $0x390] sm:$0xff]
    %v1264 = vld [vmem:[%s12 + $0x398] sm:$0xff]
    %v1265 = vld [vmem:[%s12 + $0x3a0] sm:$0xff]
    %v1266 = vld [vmem:[%s12 + $0x3a8] sm:$0xff]
    %v1267 = vld [vmem:[%s12 + $0x3b0] sm:$0xff]
    %v1268 = vld [vmem:[%s12 + $0x3b8] sm:$0xff]
    %v1269 = vld [vmem:[%s12 + $0x3c0] sm:$0xff]
    %v1270 = vld [vmem:[%s12 + $0x3c8] sm:$0xff]
    %v1271 = vld [vmem:[%s12 + $0x3d0] sm:$0xff]
    %v1272 = vld [vmem:[%s12 + $0x3d8] sm:$0xff]
    %v1273 = vld [vmem:[%s12 + $0x3e0] sm:$0xff]
    %v1274 = vld [vmem:[%s12 + $0x3e8] sm:$0xff]
    %v1275 = vld [vmem:[%s12 + $0x3f0] sm:$0xff]
    %v1276 = vld [vmem:[%s12 + $0x3f8] sm:$0xff]
    %v1277 = vld [vmem:[%s12 + $0x400] sm:$0xff]
    %v1278 = vld [vmem:[%s12 + $0x408] sm:$0xff]
    %v1279 = vld [vmem:[%s12 + $0x410] sm:$0xff]
    %v1280 = vld [vmem:[%s12 + $0x418] sm:$0xff]
    %v1281 = vld [vmem:[%s12 + $0x420] sm:$0xff]
    %v1282 = vld [vmem:[%s12 + $0x428] sm:$0xff]
    %v1283 = vld [vmem:[%s12 + $0x430] sm:$0xff]
    %v1284 = vld [vmem:[%s12 + $0x438] sm:$0xff]
    %v1285 = vld [vmem:[%s12 + $0x440] sm:$0xff]
    %v1286 = vld [vmem:[%s12 + $0x448] sm:$0xff]
    %v1287 = vld [vmem:[%s12 + $0x450] sm:$0xff]
    %v1288 = vld [vmem:[%s12 + $0x458] sm:$0xff]
    %v1289 = vld [vmem:[%s12 + $0x460] sm:$0xff]
    %v1290 = vld [vmem:[%s12 + $0x468] sm:$0xff]
    %v1291 = vld [vmem:[%s12 + $0x470] sm:$0xff]
    %v1292 = vld [vmem:[%s12 + $0x478] sm:$0xff]
    %v1293 = vld [vmem:[%s12 + $0x480] sm:$0xff]
    %v1294 = vld [vmem:[%s12 + $0x488] sm:$0xff]
    %v1295 = vld [vmem:[%s12 + $0x490] sm:$0xff]
    %v1296 = vld [vmem:[%s12 + $0x498] sm:$0xff]
    %v1297 = vld [vmem:[%s12 + $0x4a0] sm:$0xff]
    %v1298 = vld [vmem:[%s12 + $0x4a8] sm:$0xff]
    %v1299 = vld [vmem:[%s12 + $0x4b0] sm:$0xff]
    %v1300 = vld [vmem:[%s12 + $0x4b8] sm:$0xff]
    %v1301 = vld [vmem:[%s12 + $0x4c0] sm:$0xff]
    %v1302 = vld [vmem:[%s12 + $0x4c8] sm:$0xff]
    %v1303 = vld [vmem:[%s12 + $0x4d0] sm:$0xff]
    %v1304 = vld [vmem:[%s12 + $0x4d8] sm:$0xff]
    %v1305 = vld [vmem:[%s12 + $0x4e0] sm:$0xff]
    %v1306 = vld [vmem:[%s12 + $0x4e8] sm:$0xff]
    %v1307 = vld [vmem:[%s12 + $0x4f0] sm:$0xff]
    %v1308 = vld [vmem:[%s12 + $0x4f8] sm:$0xff]
    %v1309 = vld [vmem:[%s12 + $0x500] sm:$0xff]
    %v1310 = vld [vmem:[%s12 + $0x508] sm:$0xff]
    %v1311 = vld [vmem:[%s12 + $0x510] sm:$0xff]
    %v1312 = vld [vmem:[%s12 + $0x518] sm:$0xff]
    %v1313 = vld [vmem:[%s12 + $0x520] sm:$0xff]
    %v1314 = vld [vmem:[%s12 + $0x528] sm:$0xff]
    %v1315 = vld [vmem:[%s12 + $0x530] sm:$0xff]
    %v1316 = vld [vmem:[%s12 + $0x538] sm:$0xff]
    %v1317 = vld [vmem:[%s12 + $0x540] sm:$0xff]
    %v1318 = vld [vmem:[%s12 + $0x548] sm:$0xff]
    %v1319 = vld [vmem:[%s12 + $0x550] sm:$0xff]
    %v1320 = vld [vmem:[%s12 + $0x558] sm:$0xff]
    %v1321 = vld [vmem:[%s12 + $0x560] sm:$0xff]
    %v1322 = vld [vmem:[%s12 + $0x568] sm:$0xff]
    %v1323 = vld [vmem:[%s12 + $0x570] sm:$0xff]
    %v1324 = vld [vmem:[%s12 + $0x578] sm:$0xff]
    %v1325 = vld [vmem:[%s12 + $0x580] sm:$0xff]
    %v1326 = vld [vmem:[%s12 + $0x588] sm:$0xff]
    %v1327 = vld [vmem:[%s12 + $0x590] sm:$0xff]
    %v1328 = vld [vmem:[%s12 + $0x598] sm:$0xff]
    %v1329 = vld [vmem:[%s12 + $0x5a0] sm:$0xff]
    %v1330 = vld [vmem:[%s12 + $0x5a8] sm:$0xff]
    %v1331 = vld [vmem:[%s12 + $0x5b0] sm:$0xff]
    %v1332 = vld [vmem:[%s12 + $0x5b8] sm:$0xff]
    %v1333 = vld [vmem:[%s12 + $0x5c0] sm:$0xff]
    %v1334 = vld [vmem:[%s12 + $0x5c8] sm:$0xff]
    %v1335 = vld [vmem:[%s12 + $0x5d0] sm:$0xff]
    %v1336 = vld [vmem:[%s12 + $0x5d8] sm:$0xff]
    %v1337 = vld [vmem:[%s12 + $0x5e0] sm:$0xff]
    %v1338 = vld [vmem:[%s12 + $0x5e8] sm:$0xff]
    %v1339 = vld [vmem:[%s12 + $0x5f0] sm:$0xff]
    %v1340 = vld [vmem:[%s12 + $0x5f8] sm:$0xff]
    %v1341 = vld [vmem:[%s12 + $0x600] sm:$0xff]
    %v1342 = vld [vmem:[%s12 + $0x608] sm:$0xff]
    %v1343 = vld [vmem:[%s12 + $0x610] sm:$0xff]
    %v1344 = vld [vmem:[%s12 + $0x618] sm:$0xff]
    %v1345 = vld [vmem:[%s12 + $0x620] sm:$0xff]
    %v1346 = vld [vmem:[%s12 + $0x628] sm:$0xff]
    %v1347 = vld [vmem:[%s12 + $0x630] sm:$0xff]
    %v1348 = vld [vmem:[%s12 + $0x638] sm:$0xff]
    %v1349 = vld [vmem:[%s12 + $0x640] sm:$0xff]
    %v1350 = vld [vmem:[%s12 + $0x648] sm:$0xff]
    %v1351 = vld [vmem:[%s12 + $0x650] sm:$0xff]
    %v1352 = vld [vmem:[%s12 + $0x658] sm:$0xff]
    %v1353 = vld [vmem:[%s12 + $0x660] sm:$0xff]
    %v1354 = vld [vmem:[%s12 + $0x668] sm:$0xff]
    %v1355 = vld [vmem:[%s12 + $0x670] sm:$0xff]
    %v1356 = vld [vmem:[%s12 + $0x678] sm:$0xff]
    %v1357 = vld [vmem:[%s12 + $0x680] sm:$0xff]
    %v1358 = vld [vmem:[%s12 + $0x688] sm:$0xff]
    %v1359 = vld [vmem:[%s12 + $0x690] sm:$0xff]
    %v1360 = vld [vmem:[%s12 + $0x698] sm:$0xff]
    %v1361 = vld [vmem:[%s12 + $0x6a0] sm:$0xff]
    %v1362 = vld [vmem:[%s12 + $0x6a8] sm:$0xff]
    %v1363 = vld [vmem:[%s12 + $0x6b0] sm:$0xff]
    %v1364 = vld [vmem:[%s12 + $0x6b8] sm:$0xff]
    %v1365 = vld [vmem:[%s12 + $0x6c0] sm:$0xff]
    %v1366 = vld [vmem:[%s12 + $0x6c8] sm:$0xff]
    %v1367 = vld [vmem:[%s12 + $0x6d0] sm:$0xff]
    %v1368 = vld [vmem:[%s12 + $0x6d8] sm:$0xff]
    %v1369 = vld [vmem:[%s12 + $0x6e0] sm:$0xff]
    %v1370 = vld [vmem:[%s12 + $0x6e8] sm:$0xff]
    %v1371 = vld [vmem:[%s12 + $0x6f0] sm:$0xff]
    %v1372 = vld [vmem:[%s12 + $0x6f8] sm:$0xff]
    %v1373 = vld [vmem:[%s12 + $0x700] sm:$0xff]
    %v1374 = vld [vmem:[%s12 + $0x708] sm:$0xff]
    %v1375 = vld [vmem:[%s12 + $0x710] sm:$0xff]
    %v1376 = vld [vmem:[%s12 + $0x718] sm:$0xff]
    %v1377 = vld [vmem:[%s12 + $0x720] sm:$0xff]
    %v1378 = vld [vmem:[%s12 + $0x728] sm:$0xff]
    %v1379 = vld [vmem:[%s12 + $0x730] sm:$0xff]
    %v1380 = vld [vmem:[%s12 + $0x738] sm:$0xff]
    %v1381 = vld [vmem:[%s12 + $0x740] sm:$0xff]
    %v1382 = vld [vmem:[%s12 + $0x748] sm:$0xff]
    %v1383 = vld [vmem:[%s12 + $0x750] sm:$0xff]
    %v1384 = vld [vmem:[%s12 + $0x758] sm:$0xff]
    %v1385 = vld [vmem:[%s12 + $0x760] sm:$0xff]
    %v1386 = vld [vmem:[%s12 + $0x768] sm:$0xff]
    %v1387 = vld [vmem:[%s12 + $0x770] sm:$0xff]
    %v1388 = vld [vmem:[%s12 + $0x778] sm:$0xff]
    %v1389 = vld [vmem:[%s12 + $0x780] sm:$0xff]
    %v1390 = vld [vmem:[%s12 + $0x788] sm:$0xff]
    %v1391 = vld [vmem:[%s12 + $0x790] sm:$0xff]
    %v1392 = vld [vmem:[%s12 + $0x798] sm:$0xff]
    %v1393 = vld [vmem:[%s12 + $0x7a0] sm:$0xff]
    %v1394 = vld [vmem:[%s12 + $0x7a8] sm:$0xff]
    %v1395 = vld [vmem:[%s12 + $0x7b0] sm:$0xff]
    %v1396 = vld [vmem:[%s12 + $0x7b8] sm:$0xff]
    %v1397 = vld [vmem:[%s12 + $0x7c0] sm:$0xff]
    %v1398 = vld [vmem:[%s12 + $0x7c8] sm:$0xff]
    %v1399 = vld [vmem:[%s12 + $0x7d0] sm:$0xff]
    %v1400 = vld [vmem:[%s12 + $0x7d8] sm:$0xff]
    %v1401 = vld [vmem:[%s12 + $0x7e0] sm:$0xff]
    %v1402 = vld [vmem:[%s12 + $0x7e8] sm:$0xff]
    %v1403 = vld [vmem:[%s12 + $0x7f0] sm:$0xff]
    %v1404 = vld [vmem:[%s12 + $0x7f8] sm:$0xff]
    %v1405 = vld [vmem:[%s12 + $0x800] sm:$0xff]
    %v1406 = vld [vmem:[%s12 + $0x808] sm:$0xff]
    %v1407 = vld [vmem:[%s12 + $0x810] sm:$0xff]
    %v1408 = vld [vmem:[%s12 + $0x818] sm:$0xff]
    %v1409 = vld [vmem:[%s12 + $0x820] sm:$0xff]
    %v1410 = vld [vmem:[%s12 + $0x828] sm:$0xff]
    %v1411 = vld [vmem:[%s12 + $0x830] sm:$0xff]
    %v1412 = vld [vmem:[%s12 + $0x838] sm:$0xff]
    %v1413 = vld [vmem:[%s12 + $0x840] sm:$0xff]
    %v1414 = vld [vmem:[%s12 + $0x848] sm:$0xff]
    %v1415 = vld [vmem:[%s12 + $0x850] sm:$0xff]
    %v1416 = vld [vmem:[%s12 + $0x858] sm:$0xff]
    %v1417 = vld [vmem:[%s12 + $0x860] sm:$0xff]
    %v1418 = vld [vmem:[%s12 + $0x868] sm:$0xff]
    %v1419 = vld [vmem:[%s12 + $0x870] sm:$0xff]
    %v1420 = vld [vmem:[%s12 + $0x878] sm:$0xff]
    %v1421 = vld [vmem:[%s12 + $0x880] sm:$0xff]
    %v1422 = vld [vmem:[%s12 + $0x888] sm:$0xff]
    %v1423 = vld [vmem:[%s12 + $0x890] sm:$0xff]
    %v1424 = vld [vmem:[%s12 + $0x898] sm:$0xff]
    %v1425 = vld [vmem:[%s12 + $0x8a0] sm:$0xff]
    %v1426 = vld [vmem:[%s12 + $0x8a8] sm:$0xff]
    %v1427 = vld [vmem:[%s12 + $0x8b0] sm:$0xff]
    %v1428 = vld [vmem:[%s12 + $0x8b8] sm:$0xff]
    %v1429 = vld [vmem:[%s12 + $0x8c0] sm:$0xff]
    %v1430 = vld [vmem:[%s12 + $0x8c8] sm:$0xff]
    %v1431 = vld [vmem:[%s12 + $0x8d0] sm:$0xff]
    %v1432 = vld [vmem:[%s12 + $0x8d8] sm:$0xff]
    %v1433 = vld [vmem:[%s12 + $0x8e0] sm:$0xff]
    %v1434 = vld [vmem:[%s12 + $0x8e8] sm:$0xff]
    %v1435 = vld [vmem:[%s12 + $0x8f0] sm:$0xff]
    %v1436 = vld [vmem:[%s12 + $0x8f8] sm:$0xff]
    %v1437 = vld [vmem:[%s12 + $0x900] sm:$0xff]
    %v1438 = vld [vmem:[%s12 + $0x908] sm:$0xff]
    %v1439 = vld [vmem:[%s12 + $0x910] sm:$0xff]
    %v1440 = vld [vmem:[%s12 + $0x918] sm:$0xff]
    %v1441 = vld [vmem:[%s12 + $0x920] sm:$0xff]
    %v1442 = vld [vmem:[%s12 + $0x928] sm:$0xff]
    %v1443 = vld [vmem:[%s12 + $0x930] sm:$0xff]
    %v1444 = vld [vmem:[%s12 + $0x938] sm:$0xff]
    %v1445 = vld [vmem:[%s12 + $0x940] sm:$0xff]
    %v1446 = vld [vmem:[%s12 + $0x948] sm:$0xff]
    %v1447 = vld [vmem:[%s12 + $0x950] sm:$0xff]
    %v1448 = vld [vmem:[%s12 + $0x958] sm:$0xff]
    %v1449 = vld [vmem:[%s12 + $0x960] sm:$0xff]
    %v1450 = vld [vmem:[%s12 + $0x968] sm:$0xff]
    %v1451 = vld [vmem:[%s12 + $0x970] sm:$0xff]
    %v1452 = vld [vmem:[%s12 + $0x978] sm:$0xff]
    %v1453 = vld [vmem:[%s12 + $0x980] sm:$0xff]
    %v1454 = vld [vmem:[%s12 + $0x988] sm:$0xff]
    %v1455 = vld [vmem:[%s12 + $0x990] sm:$0xff]
    %v1456 = vld [vmem:[%s12 + $0x998] sm:$0xff]
    %v1457 = vld [vmem:[%s12 + $0x9a0] sm:$0xff]
    %v1458 = vld [vmem:[%s12 + $0x9a8] sm:$0xff]
    %v1459 = vld [vmem:[%s12 + $0x9b0] sm:$0xff]
    %v1460 = vld [vmem:[%s12 + $0x9b8] sm:$0xff]
    %v1461 = vld [vmem:[%s12 + $0x9c0] sm:$0xff]
    %v1462 = vld [vmem:[%s12 + $0x9c8] sm:$0xff]
    %v1463 = vld [vmem:[%s12 + $0x9d0] sm:$0xff]
    %v1464 = vld [vmem:[%s12 + $0x9d8] sm:$0xff]
    %v1465 = vld [vmem:[%s12 + $0x9e0] sm:$0xff]
    %v1466 = vld [vmem:[%s12 + $0x9e8] sm:$0xff]
    %v1467 = vld [vmem:[%s12 + $0x9f0] sm:$0xff]
    %v1468 = vld [vmem:[%s12 + $0x9f8] sm:$0xff]
    %v1469 = vld [vmem:[%s12 + $0xa00] sm:$0xff]
    %v1470 = vld [vmem:[%s12 + $0xa08] sm:$0xff]
    %v1471 = vld [vmem:[%s12 + $0xa10] sm:$0xff]
    %v1472 = vld [vmem:[%s12 + $0xa18] sm:$0xff]
    %v1473 = vld [vmem:[%s12 + $0xa20] sm:$0xff]
    %v1474 = vld [vmem:[%s12 + $0xa28] sm:$0xff]
    %v1475 = vld [vmem:[%s12 + $0xa30] sm:$0xff]
    %v1476 = vld [vmem:[%s12 + $0xa38] sm:$0xff]
    %v1477 = vld [vmem:[%s12 + $0xa40] sm:$0xff]
    %v1478 = vld [vmem:[%s12 + $0xa48] sm:$0xff]
    %v1479 = vld [vmem:[%s12 + $0xa50] sm:$0xff]
    %v1480 = vld [vmem:[%s12 + $0xa58] sm:$0xff]
    %v1481 = vld [vmem:[%s12 + $0xa60] sm:$0xff]
    %v1482 = vld [vmem:[%s12 + $0xa68] sm:$0xff]
    %v1483 = vld [vmem:[%s12 + $0xa70] sm:$0xff]
    %v1484 = vld [vmem:[%s12 + $0xa78] sm:$0xff]
    %v1485 = vld [vmem:[%s12 + $0xa80] sm:$0xff]
    %v1486 = vld [vmem:[%s12 + $0xa88] sm:$0xff]
    %v1487 = vld [vmem:[%s12 + $0xa90] sm:$0xff]
    %v1488 = vld [vmem:[%s12 + $0xa98] sm:$0xff]
    %v1489 = vld [vmem:[%s12 + $0xaa0] sm:$0xff]
    %v1490 = vld [vmem:[%s12 + $0xaa8] sm:$0xff]
    %v1491 = vld [vmem:[%s12 + $0xab0] sm:$0xff]
    %v1492 = vld [vmem:[%s12 + $0xab8] sm:$0xff]
    %v1493 = vld [vmem:[%s12 + $0xac0] sm:$0xff]
    %v1494 = vld [vmem:[%s12 + $0xac8] sm:$0xff]
    %v1495 = vld [vmem:[%s12 + $0xad0] sm:$0xff]
    %v1496 = vld [vmem:[%s12 + $0xad8] sm:$0xff]
    %v1497 = vld [vmem:[%s12 + $0xae0] sm:$0xff]
    %v1498 = vld [vmem:[%s12 + $0xae8] sm:$0xff]
    %v1499 = vld [vmem:[%s12 + $0xaf0] sm:$0xff]
    %v1500 = vld [vmem:[%s12 + $0xaf8] sm:$0xff]
    %v1501 = vld [vmem:[%s13] sm:$0xff]
    %v1502 = vld [vmem:[%s13 + $0x8] sm:$0x7]
    %v1505 = vperm.slane %v1501, 0
    %v1506 = vperm.slane %v1501, 1
    %v1507 = vperm.slane %v1501, 2
    %v1508 = vperm.slane %v1501, 3
    %v1509 = vperm.slane %v1501, 4
    %v1510 = vperm.slane %v1501, 5
    %v1511 = vperm.slane %v1501, 6
    %v1512 = vperm.slane %v1501, 7
    %v1513 = vperm.slane %v1502, 0
    %v1514 = vperm.slane %v1502, 1
    %v1515 = vperm.slane %v1502, 2
    %1527 = vmatpush.msra.mxu0 %v1314
    %1528 = vmatpush.msra.mxu0 %v1303
    %1529 = vmatpush.msra.mxu0 %v1292
    %1530 = vmatpush.msra.mxu0 %v1281
    %1531 = vmatpush.msra.mxu0 %v1270
    %1532 = vmatpush.msra.mxu0 %v1259
    %1533 = vmatpush.msra.mxu0 %v1248
    %1534 = vmatpush.msra.mxu0 %v1237
    %1535 = vmatpush.msra.mxu0 %v1226
    %1536 = vmatpush.msra.mxu0 %v1215
    %1537 = vmatpush.msra.mxu0 %v1204
    %1538 = vmatpush.msra.mxu0 %v1193
    %1539 = vmatpush.msra.mxu0 %v1182
    %1540 = vmatpush.msra.mxu0 %v1171
    %1541 = vmatpush.msra.mxu0 %v1160
    %1542 = vmatpush.msra.mxu0 %v1149
    %1543 = vmatmul.f32.gmra.mxu0 %v1147
    %v1544 = vpop.f32.mrf.mxu0
    %v1545 = vadd.f32 %v1505, %v1544
    %1546 = vdwg.mxu0
    %1547 = vmatpush.msra.mxu0 %v1490
    %1548 = vmatpush.msra.mxu0 %v1479
    %1549 = vmatpush.msra.mxu0 %v1468
    %1550 = vmatpush.msra.mxu0 %v1457
    %1551 = vmatpush.msra.mxu0 %v1446
    %1552 = vmatpush.msra.mxu0 %v1435
    %1553 = vmatpush.msra.mxu0 %v1424
    %1554 = vmatpush.msra.mxu0 %v1413
    %1555 = vmatpush.msra.mxu0 %v1402
    %1556 = vmatpush.msra.mxu0 %v1391
    %1557 = vmatpush.msra.mxu0 %v1380
    %1558 = vmatpush.msra.mxu0 %v1369
    %1559 = vmatpush.msra.mxu0 %v1358
    %1560 = vmatpush.msra.mxu0 %v1347
    %1561 = vmatpush.msra.mxu0 %v1336
    %1562 = vmatpush.msra.mxu0 %v1325
    %1563 = vmatmul.f32.gmra.mxu0 %v1148
    %v1564 = vpop.f32.mrf.mxu0
    %v1565 = vadd.f32 %v1545, %v1564
    %1566 = vdwg.mxu0
    %1567 = vmatpush.msra.mxu0 %v1315
    %1568 = vmatpush.msra.mxu0 %v1304
    %1569 = vmatpush.msra.mxu0 %v1293
    %1570 = vmatpush.msra.mxu0 %v1282
    %1571 = vmatpush.msra.mxu0 %v1271
    %1572 = vmatpush.msra.mxu0 %v1260
    %1573 = vmatpush.msra.mxu0 %v1249
    %1574 = vmatpush.msra.mxu0 %v1238
    %1575 = vmatpush.msra.mxu0 %v1227
    %1576 = vmatpush.msra.mxu0 %v1216
    %1577 = vmatpush.msra.mxu0 %v1205
    %1578 = vmatpush.msra.mxu0 %v1194
    %1579 = vmatpush.msra.mxu0 %v1183
    %1580 = vmatpush.msra.mxu0 %v1172
    %1581 = vmatpush.msra.mxu0 %v1161
    %1582 = vmatpush.msra.mxu0 %v1150
    %1583 = vmatmul.f32.gmra.mxu0 %v1147
    %v1584 = vpop.f32.mrf.mxu0
    %v1585 = vadd.f32 %v1506, %v1584
    %1586 = vdwg.mxu0
    %1587 = vmatpush.msra.mxu0 %v1491
    %1588 = vmatpush.msra.mxu0 %v1480
    %1589 = vmatpush.msra.mxu0 %v1469
    %1590 = vmatpush.msra.mxu0 %v1458
    %1591 = vmatpush.msra.mxu0 %v1447
    %1592 = vmatpush.msra.mxu0 %v1436
    %1593 = vmatpush.msra.mxu0 %v1425
    %1594 = vmatpush.msra.mxu0 %v1414
    %1595 = vmatpush.msra.mxu0 %v1403
    %1596 = vmatpush.msra.mxu0 %v1392
    %1597 = vmatpush.msra.mxu0 %v1381
    %1598 = vmatpush.msra.mxu0 %v1370
    %1599 = vmatpush.msra.mxu0 %v1359
    %1600 = vmatpush.msra.mxu0 %v1348
    %1601 = vmatpush.msra.mxu0 %v1337
    %1602 = vmatpush.msra.mxu0 %v1326
    %1603 = vmatmul.f32.gmra.mxu0 %v1148
    %v1604 = vpop.f32.mrf.mxu0
    %v1605 = vadd.f32 %v1585, %v1604
    %1606 = vdwg.mxu0
    %1607 = vmatpush.msra.mxu0 %v1316
    %1608 = vmatpush.msra.mxu0 %v1305
    %1609 = vmatpush.msra.mxu0 %v1294
    %1610 = vmatpush.msra.mxu0 %v1283
    %1611 = vmatpush.msra.mxu0 %v1272
    %1612 = vmatpush.msra.mxu0 %v1261
    %1613 = vmatpush.msra.mxu0 %v1250
    %1614 = vmatpush.msra.mxu0 %v1239
    %1615 = vmatpush.msra.mxu0 %v1228
    %1616 = vmatpush.msra.mxu0 %v1217
    %1617 = vmatpush.msra.mxu0 %v1206
    %1618 = vmatpush.msra.mxu0 %v1195
    %1619 = vmatpush.msra.mxu0 %v1184
    %1620 = vmatpush.msra.mxu0 %v1173
    %1621 = vmatpush.msra.mxu0 %v1162
    %1622 = vmatpush.msra.mxu0 %v1151
    %1623 = vmatmul.f32.gmra.mxu0 %v1147
    %v1624 = vpop.f32.mrf.mxu0
    %v1625 = vadd.f32 %v1507, %v1624
    %1626 = vdwg.mxu0
    %1627 = vmatpush.msra.mxu0 %v1492
    %1628 = vmatpush.msra.mxu0 %v1481
    %1629 = vmatpush.msra.mxu0 %v1470
    %1630 = vmatpush.msra.mxu0 %v1459
    %1631 = vmatpush.msra.mxu0 %v1448
    %1632 = vmatpush.msra.mxu0 %v1437
    %1633 = vmatpush.msra.mxu0 %v1426
    %1634 = vmatpush.msra.mxu0 %v1415
    %1635 = vmatpush.msra.mxu0 %v1404
    %1636 = vmatpush.msra.mxu0 %v1393
    %1637 = vmatpush.msra.mxu0 %v1382
    %1638 = vmatpush.msra.mxu0 %v1371
    %1639 = vmatpush.msra.mxu0 %v1360
    %1640 = vmatpush.msra.mxu0 %v1349
    %1641 = vmatpush.msra.mxu0 %v1338
    %1642 = vmatpush.msra.mxu0 %v1327
    %1643 = vmatmul.f32.gmra.mxu0 %v1148
    %v1644 = vpop.f32.mrf.mxu0
    %v1645 = vadd.f32 %v1625, %v1644
    %1646 = vdwg.mxu0
    %1647 = vmatpush.msra.mxu0 %v1317
    %1648 = vmatpush.msra.mxu0 %v1306
    %1649 = vmatpush.msra.mxu0 %v1295
    %1650 = vmatpush.msra.mxu0 %v1284
    %1651 = vmatpush.msra.mxu0 %v1273
    %1652 = vmatpush.msra.mxu0 %v1262
    %1653 = vmatpush.msra.mxu0 %v1251
    %1654 = vmatpush.msra.mxu0 %v1240
    %1655 = vmatpush.msra.mxu0 %v1229
    %1656 = vmatpush.msra.mxu0 %v1218
    %1657 = vmatpush.msra.mxu0 %v1207
    %1658 = vmatpush.msra.mxu0 %v1196
    %1659 = vmatpush.msra.mxu0 %v1185
    %1660 = vmatpush.msra.mxu0 %v1174
    %1661 = vmatpush.msra.mxu0 %v1163
    %1662 = vmatpush.msra.mxu0 %v1152
    %1663 = vmatmul.f32.gmra.mxu0 %v1147
    %v1664 = vpop.f32.mrf.mxu0
    %v1665 = vadd.f32 %v1508, %v1664
    %1666 = vdwg.mxu0
    %1667 = vmatpush.msra.mxu0 %v1493
    %1668 = vmatpush.msra.mxu0 %v1482
    %1669 = vmatpush.msra.mxu0 %v1471
    %1670 = vmatpush.msra.mxu0 %v1460
    %1671 = vmatpush.msra.mxu0 %v1449
    %1672 = vmatpush.msra.mxu0 %v1438
    %1673 = vmatpush.msra.mxu0 %v1427
    %1674 = vmatpush.msra.mxu0 %v1416
    %1675 = vmatpush.msra.mxu0 %v1405
    %1676 = vmatpush.msra.mxu0 %v1394
    %1677 = vmatpush.msra.mxu0 %v1383
    %1678 = vmatpush.msra.mxu0 %v1372
    %1679 = vmatpush.msra.mxu0 %v1361
    %1680 = vmatpush.msra.mxu0 %v1350
    %1681 = vmatpush.msra.mxu0 %v1339
    %1682 = vmatpush.msra.mxu0 %v1328
    %1683 = vmatmul.f32.gmra.mxu0 %v1148
    %v1684 = vpop.f32.mrf.mxu0
    %v1685 = vadd.f32 %v1665, %v1684
    %1686 = vdwg.mxu0
    %1687 = vmatpush.msra.mxu0 %v1318
    %1688 = vmatpush.msra.mxu0 %v1307
    %1689 = vmatpush.msra.mxu0 %v1296
    %1690 = vmatpush.msra.mxu0 %v1285
    %1691 = vmatpush.msra.mxu0 %v1274
    %1692 = vmatpush.msra.mxu0 %v1263
    %1693 = vmatpush.msra.mxu0 %v1252
    %1694 = vmatpush.msra.mxu0 %v1241
    %1695 = vmatpush.msra.mxu0 %v1230
    %1696 = vmatpush.msra.mxu0 %v1219
    %1697 = vmatpush.msra.mxu0 %v1208
    %1698 = vmatpush.msra.mxu0 %v1197
    %1699 = vmatpush.msra.mxu0 %v1186
    %1700 = vmatpush.msra.mxu0 %v1175
    %1701 = vmatpush.msra.mxu0 %v1164
    %1702 = vmatpush.msra.mxu0 %v1153
    %1703 = vmatmul.f32.gmra.mxu0 %v1147
    %v1704 = vpop.f32.mrf.mxu0
    %v1705 = vadd.f32 %v1509, %v1704
    %1706 = vdwg.mxu0
    %1707 = vmatpush.msra.mxu0 %v1494
    %1708 = vmatpush.msra.mxu0 %v1483
    %1709 = vmatpush.msra.mxu0 %v1472
    %1710 = vmatpush.msra.mxu0 %v1461
    %1711 = vmatpush.msra.mxu0 %v1450
    %1712 = vmatpush.msra.mxu0 %v1439
    %1713 = vmatpush.msra.mxu0 %v1428
    %1714 = vmatpush.msra.mxu0 %v1417
    %1715 = vmatpush.msra.mxu0 %v1406
    %1716 = vmatpush.msra.mxu0 %v1395
    %1717 = vmatpush.msra.mxu0 %v1384
    %1718 = vmatpush.msra.mxu0 %v1373
    %1719 = vmatpush.msra.mxu0 %v1362
    %1720 = vmatpush.msra.mxu0 %v1351
    %1721 = vmatpush.msra.mxu0 %v1340
    %1722 = vmatpush.msra.mxu0 %v1329
    %1723 = vmatmul.f32.gmra.mxu0 %v1148
    %v1724 = vpop.f32.mrf.mxu0
    %v1725 = vadd.f32 %v1705, %v1724
    %1726 = vdwg.mxu0
    %1727 = vmatpush.msra.mxu0 %v1319
    %1728 = vmatpush.msra.mxu0 %v1308
    %1729 = vmatpush.msra.mxu0 %v1297
    %1730 = vmatpush.msra.mxu0 %v1286
    %1731 = vmatpush.msra.mxu0 %v1275
    %1732 = vmatpush.msra.mxu0 %v1264
    %1733 = vmatpush.msra.mxu0 %v1253
    %1734 = vmatpush.msra.mxu0 %v1242
    %1735 = vmatpush.msra.mxu0 %v1231
    %1736 = vmatpush.msra.mxu0 %v1220
    %1737 = vmatpush.msra.mxu0 %v1209
    %1738 = vmatpush.msra.mxu0 %v1198
    %1739 = vmatpush.msra.mxu0 %v1187
    %1740 = vmatpush.msra.mxu0 %v1176
    %1741 = vmatpush.msra.mxu0 %v1165
    %1742 = vmatpush.msra.mxu0 %v1154
    %1743 = vmatmul.f32.gmra.mxu0 %v1147
    %v1744 = vpop.f32.mrf.mxu0
    %v1745 = vadd.f32 %v1510, %v1744
    %1746 = vdwg.mxu0
    %1747 = vmatpush.msra.mxu0 %v1495
    %1748 = vmatpush.msra.mxu0 %v1484
    %1749 = vmatpush.msra.mxu0 %v1473
    %1750 = vmatpush.msra.mxu0 %v1462
    %1751 = vmatpush.msra.mxu0 %v1451
    %1752 = vmatpush.msra.mxu0 %v1440
    %1753 = vmatpush.msra.mxu0 %v1429
    %1754 = vmatpush.msra.mxu0 %v1418
    %1755 = vmatpush.msra.mxu0 %v1407
    %1756 = vmatpush.msra.mxu0 %v1396
    %1757 = vmatpush.msra.mxu0 %v1385
    %1758 = vmatpush.msra.mxu0 %v1374
    %1759 = vmatpush.msra.mxu0 %v1363
    %1760 = vmatpush.msra.mxu0 %v1352
    %1761 = vmatpush.msra.mxu0 %v1341
    %1762 = vmatpush.msra.mxu0 %v1330
    %1763 = vmatmul.f32.gmra.mxu0 %v1148
    %v1764 = vpop.f32.mrf.mxu0
    %v1765 = vadd.f32 %v1745, %v1764
    %1766 = vdwg.mxu0
    %1767 = vmatpush.msra.mxu0 %v1320
    %1768 = vmatpush.msra.mxu0 %v1309
    %1769 = vmatpush.msra.mxu0 %v1298
    %1770 = vmatpush.msra.mxu0 %v1287
    %1771 = vmatpush.msra.mxu0 %v1276
    %1772 = vmatpush.msra.mxu0 %v1265
    %1773 = vmatpush.msra.mxu0 %v1254
    %1774 = vmatpush.msra.mxu0 %v1243
    %1775 = vmatpush.msra.mxu0 %v1232
    %1776 = vmatpush.msra.mxu0 %v1221
    %1777 = vmatpush.msra.mxu0 %v1210
    %1778 = vmatpush.msra.mxu0 %v1199
    %1779 = vmatpush.msra.mxu0 %v1188
    %1780 = vmatpush.msra.mxu0 %v1177
    %1781 = vmatpush.msra.mxu0 %v1166
    %1782 = vmatpush.msra.mxu0 %v1155
    %1783 = vmatmul.f32.gmra.mxu0 %v1147
    %v1784 = vpop.f32.mrf.mxu0
    %v1785 = vadd.f32 %v1511, %v1784
    %1786 = vdwg.mxu0
    %1787 = vmatpush.msra.mxu0 %v1496
    %1788 = vmatpush.msra.mxu0 %v1485
    %1789 = vmatpush.msra.mxu0 %v1474
    %1790 = vmatpush.msra.mxu0 %v1463
    %1791 = vmatpush.msra.mxu0 %v1452
    %1792 = vmatpush.msra.mxu0 %v1441
    %1793 = vmatpush.msra.mxu0 %v1430
    %1794 = vmatpush.msra.mxu0 %v1419
    %1795 = vmatpush.msra.mxu0 %v1408
    %1796 = vmatpush.msra.mxu0 %v1397
    %1797 = vmatpush.msra.mxu0 %v1386
    %1798 = vmatpush.msra.mxu0 %v1375
    %1799 = vmatpush.msra.mxu0 %v1364
    %1800 = vmatpush.msra.mxu0 %v1353
    %1801 = vmatpush.msra.mxu0 %v1342
    %1802 = vmatpush.msra.mxu0 %v1331
    %1803 = vmatmul.f32.gmra.mxu0 %v1148
    %v1804 = vpop.f32.mrf.mxu0
    %v1805 = vadd.f32 %v1785, %v1804
    %1806 = vdwg.mxu0
    %1807 = vmatpush.msra.mxu0 %v1321
    %1808 = vmatpush.msra.mxu0 %v1310
    %1809 = vmatpush.msra.mxu0 %v1299
    %1810 = vmatpush.msra.mxu0 %v1288
    %1811 = vmatpush.msra.mxu0 %v1277
    %1812 = vmatpush.msra.mxu0 %v1266
    %1813 = vmatpush.msra.mxu0 %v1255
    %1814 = vmatpush.msra.mxu0 %v1244
    %1815 = vmatpush.msra.mxu0 %v1233
    %1816 = vmatpush.msra.mxu0 %v1222
    %1817 = vmatpush.msra.mxu0 %v1211
    %1818 = vmatpush.msra.mxu0 %v1200
    %1819 = vmatpush.msra.mxu0 %v1189
    %1820 = vmatpush.msra.mxu0 %v1178
    %1821 = vmatpush.msra.mxu0 %v1167
    %1822 = vmatpush.msra.mxu0 %v1156
    %1823 = vmatmul.f32.gmra.mxu0 %v1147
    %v1824 = vpop.f32.mrf.mxu0
    %v1825 = vadd.f32 %v1512, %v1824
    %1826 = vdwg.mxu0
    %1827 = vmatpush.msra.mxu0 %v1497
    %1828 = vmatpush.msra.mxu0 %v1486
    %1829 = vmatpush.msra.mxu0 %v1475
    %1830 = vmatpush.msra.mxu0 %v1464
    %1831 = vmatpush.msra.mxu0 %v1453
    %1832 = vmatpush.msra.mxu0 %v1442
    %1833 = vmatpush.msra.mxu0 %v1431
    %1834 = vmatpush.msra.mxu0 %v1420
    %1835 = vmatpush.msra.mxu0 %v1409
    %1836 = vmatpush.msra.mxu0 %v1398
    %1837 = vmatpush.msra.mxu0 %v1387
    %1838 = vmatpush.msra.mxu0 %v1376
    %1839 = vmatpush.msra.mxu0 %v1365
    %1840 = vmatpush.msra.mxu0 %v1354
    %1841 = vmatpush.msra.mxu0 %v1343
    %1842 = vmatpush.msra.mxu0 %v1332
    %1843 = vmatmul.f32.gmra.mxu0 %v1148
    %v1844 = vpop.f32.mrf.mxu0
    %v1845 = vadd.f32 %v1825, %v1844
    %1846 = vdwg.mxu0
    %1847 = vmatpush.msra.mxu0 %v1322
    %1848 = vmatpush.msra.mxu0 %v1311
    %1849 = vmatpush.msra.mxu0 %v1300
    %1850 = vmatpush.msra.mxu0 %v1289
    %1851 = vmatpush.msra.mxu0 %v1278
    %1852 = vmatpush.msra.mxu0 %v1267
    %1853 = vmatpush.msra.mxu0 %v1256
    %1854 = vmatpush.msra.mxu0 %v1245
    %1855 = vmatpush.msra.mxu0 %v1234
    %1856 = vmatpush.msra.mxu0 %v1223
    %1857 = vmatpush.msra.mxu0 %v1212
    %1858 = vmatpush.msra.mxu0 %v1201
    %1859 = vmatpush.msra.mxu0 %v1190
    %1860 = vmatpush.msra.mxu0 %v1179
    %1861 = vmatpush.msra.mxu0 %v1168
    %1862 = vmatpush.msra.mxu0 %v1157
    %1863 = vmatmul.f32.gmra.mxu0 %v1147
    %v1864 = vpop.f32.mrf.mxu0
    %v1865 = vadd.f32 %v1513, %v1864
    %1866 = vdwg.mxu0
    %1867 = vmatpush.msra.mxu0 %v1498
    %1868 = vmatpush.msra.mxu0 %v1487
    %1869 = vmatpush.msra.mxu0 %v1476
    %1870 = vmatpush.msra.mxu0 %v1465
    %1871 = vmatpush.msra.mxu0 %v1454
    %1872 = vmatpush.msra.mxu0 %v1443
    %1873 = vmatpush.msra.mxu0 %v1432
    %1874 = vmatpush.msra.mxu0 %v1421
    %1875 = vmatpush.msra.mxu0 %v1410
    %1876 = vmatpush.msra.mxu0 %v1399
    %1877 = vmatpush.msra.mxu0 %v1388
    %1878 = vmatpush.msra.mxu0 %v1377
    %1879 = vmatpush.msra.mxu0 %v1366
    %1880 = vmatpush.msra.mxu0 %v1355
    %1881 = vmatpush.msra.mxu0 %v1344
    %1882 = vmatpush.msra.mxu0 %v1333
    %1883 = vmatmul.f32.gmra.mxu0 %v1148
    %v1884 = vpop.f32.mrf.mxu0
    %v1885 = vadd.f32 %v1865, %v1884
    %1886 = vdwg.mxu0
    %1887 = vmatpush.msra.mxu0 %v1323
    %1888 = vmatpush.msra.mxu0 %v1312
    %1889 = vmatpush.msra.mxu0 %v1301
    %1890 = vmatpush.msra.mxu0 %v1290
    %1891 = vmatpush.msra.mxu0 %v1279
    %1892 = vmatpush.msra.mxu0 %v1268
    %1893 = vmatpush.msra.mxu0 %v1257
    %1894 = vmatpush.msra.mxu0 %v1246
    %1895 = vmatpush.msra.mxu0 %v1235
    %1896 = vmatpush.msra.mxu0 %v1224
    %1897 = vmatpush.msra.mxu0 %v1213
    %1898 = vmatpush.msra.mxu0 %v1202
    %1899 = vmatpush.msra.mxu0 %v1191
    %1900 = vmatpush.msra.mxu0 %v1180
    %1901 = vmatpush.msra.mxu0 %v1169
    %1902 = vmatpush.msra.mxu0 %v1158
    %1903 = vmatmul.f32.gmra.mxu0 %v1147
    %v1904 = vpop.f32.mrf.mxu0
    %v1905 = vadd.f32 %v1514, %v1904
    %1906 = vdwg.mxu0
    %1907 = vmatpush.msra.mxu0 %v1499
    %1908 = vmatpush.msra.mxu0 %v1488
    %1909 = vmatpush.msra.mxu0 %v1477
    %1910 = vmatpush.msra.mxu0 %v1466
    %1911 = vmatpush.msra.mxu0 %v1455
    %1912 = vmatpush.msra.mxu0 %v1444
    %1913 = vmatpush.msra.mxu0 %v1433
    %1914 = vmatpush.msra.mxu0 %v1422
    %1915 = vmatpush.msra.mxu0 %v1411
    %1916 = vmatpush.msra.mxu0 %v1400
    %1917 = vmatpush.msra.mxu0 %v1389
    %1918 = vmatpush.msra.mxu0 %v1378
    %1919 = vmatpush.msra.mxu0 %v1367
    %1920 = vmatpush.msra.mxu0 %v1356
    %1921 = vmatpush.msra.mxu0 %v1345
    %1922 = vmatpush.msra.mxu0 %v1334
    %1923 = vmatmul.f32.gmra.mxu0 %v1148
    %v1924 = vpop.f32.mrf.mxu0
    %v1925 = vadd.f32 %v1905, %v1924
    %1926 = vdwg.mxu0
    %1927 = vmatpush.msra.mxu0 %v1324
    %1928 = vmatpush.msra.mxu0 %v1313
    %1929 = vmatpush.msra.mxu0 %v1302
    %1930 = vmatpush.msra.mxu0 %v1291
    %1931 = vmatpush.msra.mxu0 %v1280
    %1932 = vmatpush.msra.mxu0 %v1269
    %1933 = vmatpush.msra.mxu0 %v1258
    %1934 = vmatpush.msra.mxu0 %v1247
    %1935 = vmatpush.msra.mxu0 %v1236
    %1936 = vmatpush.msra.mxu0 %v1225
    %1937 = vmatpush.msra.mxu0 %v1214
    %1938 = vmatpush.msra.mxu0 %v1203
    %1939 = vmatpush.msra.mxu0 %v1192
    %1940 = vmatpush.msra.mxu0 %v1181
    %1941 = vmatpush.msra.mxu0 %v1170
    %1942 = vmatpush.msra.mxu0 %v1159
    %1943 = vmatmul.f32.gmra.mxu0 %v1147
    %v1944 = vpop.f32.mrf.mxu0
    %v1945 = vadd.f32 %v1515, %v1944
    %1946 = vdwg.mxu0
    %1947 = vmatpush.msra.mxu0 %v1500
    %1948 = vmatpush.msra.mxu0 %v1489
    %1949 = vmatpush.msra.mxu0 %v1478
    %1950 = vmatpush.msra.mxu0 %v1467
    %1951 = vmatpush.msra.mxu0 %v1456
    %1952 = vmatpush.msra.mxu0 %v1445
    %1953 = vmatpush.msra.mxu0 %v1434
    %1954 = vmatpush.msra.mxu0 %v1423
    %1955 = vmatpush.msra.mxu0 %v1412
    %1956 = vmatpush.msra.mxu0 %v1401
    %1957 = vmatpush.msra.mxu0 %v1390
    %1958 = vmatpush.msra.mxu0 %v1379
    %1959 = vmatpush.msra.mxu0 %v1368
    %1960 = vmatpush.msra.mxu0 %v1357
    %1961 = vmatpush.msra.mxu0 %v1346
    %1962 = vmatpush.msra.mxu0 %v1335
    %1963 = vmatmul.f32.gmra.mxu0 %v1148
    %v1964 = vpop.f32.mrf.mxu0
    %v1965 = vadd.f32 %v1945, %v1964
    %1966 = vdwg.mxu0
    %vm1967 = vcmp.gt.f32.partialorder %v1565, 0.0
    %vm1968 = vcmp.gt.f32.partialorder %v1605, 0.0
    %vm1969 = vcmp.gt.f32.partialorder %v1645, 0.0
    %vm1970 = vcmp.gt.f32.partialorder %v1685, 0.0
    %vm1971 = vcmp.gt.f32.partialorder %v1725, 0.0
    %vm1972 = vcmp.gt.f32.partialorder %v1765, 0.0
    %vm1973 = vcmp.gt.f32.partialorder %v1805, 0.0
    %vm1974 = vcmp.gt.f32.partialorder %v1845, 0.0
    %vm1975 = vcmp.gt.f32.partialorder %v1885, 0.0
    %vm1976 = vcmp.gt.f32.partialorder %v1925, 0.0
    %vm1977 = vcmp.gt.f32.partialorder %v1965, 0.0
    %v1978 = vmul.f32 %v1565, 1.442695
    %v1979 = vpow.pop %v1978
    %v1980 = vmul.f32 %v1605, 1.442695
    %v1981 = vpow.pop %v1980
    %v1982 = vmul.f32 %v1645, 1.442695
    %v1983 = vpow.pop %v1982
    %v1984 = vmul.f32 %v1685, 1.442695
    %v1985 = vpow.pop %v1984
    %v1986 = vmul.f32 %v1725, 1.442695
    %v1987 = vpow.pop %v1986
    %v1988 = vmul.f32 %v1765, 1.442695
    %v1989 = vpow.pop %v1988
    %v1990 = vmul.f32 %v1805, 1.442695
    %v1991 = vpow.pop %v1990
    %v1992 = vmul.f32 %v1845, 1.442695
    %v1993 = vpow.pop %v1992
    %v1994 = vmul.f32 %v1885, 1.442695
    %v1995 = vpow.pop %v1994
    %v1996 = vmul.f32 %v1925, 1.442695
    %v1997 = vpow.pop %v1996
    %v1998 = vmul.f32 %v1965, 1.442695
    %v1999 = vpow.pop %v1998
    %v2000 = vsub.f32 %v1979, 1.0
    %v2001 = vsub.f32 %v1981, 1.0
    %v2002 = vsub.f32 %v1983, 1.0
    %v2003 = vsub.f32 %v1985, 1.0
    %v2004 = vsub.f32 %v1987, 1.0
    %v2005 = vsub.f32 %v1989, 1.0
    %v2006 = vsub.f32 %v1991, 1.0
    %v2007 = vsub.f32 %v1993, 1.0
    %v2008 = vsub.f32 %v1995, 1.0
    %v2009 = vsub.f32 %v1997, 1.0
    %v2010 = vsub.f32 %v1999, 1.0
    %v2011 = vmul.f32 %v2000, 1.6732632
    %v2012 = vmul.f32 %v2001, 1.6732632
    %v2013 = vmul.f32 %v2002, 1.6732632
    %v2014 = vmul.f32 %v2003, 1.6732632
    %v2015 = vmul.f32 %v2004, 1.6732632
    %v2016 = vmul.f32 %v2005, 1.6732632
    %v2017 = vmul.f32 %v2006, 1.6732632
    %v2018 = vmul.f32 %v2007, 1.6732632
    %v2019 = vmul.f32 %v2008, 1.6732632
    %v2020 = vmul.f32 %v2009, 1.6732632
    %v2021 = vmul.f32 %v2010, 1.6732632
    %v2022 = vsel %vm1967, %v1565, %v2011
    %v2023 = vsel %vm1968, %v1605, %v2012
    %v2024 = vsel %vm1969, %v1645, %v2013
    %v2025 = vsel %vm1970, %v1685, %v2014
    %v2026 = vsel %vm1971, %v1725, %v2015
    %v2027 = vsel %vm1972, %v1765, %v2016
    %v2028 = vsel %vm1973, %v1805, %v2017
    %v2029 = vsel %vm1974, %v1845, %v2018
    %v2030 = vsel %vm1975, %v1885, %v2019
    %v2031 = vsel %vm1976, %v1925, %v2020
    %v2032 = vsel %vm1977, %v1965, %v2021
    %v2033 = vmul.f32 %v2022, 1.050701
    %v2034 = vmul.f32 %v2023, 1.050701
    %v2035 = vmul.f32 %v2024, 1.050701
    %v2036 = vmul.f32 %v2025, 1.050701
    %v2037 = vmul.f32 %v2026, 1.050701
    %v2038 = vmul.f32 %v2027, 1.050701
    %v2039 = vmul.f32 %v2028, 1.050701
    %v2040 = vmul.f32 %v2029, 1.050701
    %v2041 = vmul.f32 %v2030, 1.050701
    %v2042 = vmul.f32 %v2031, 1.050701
    %v2043 = vmul.f32 %v2032, 1.050701
    %2044 = vst [vmem:[#allocation2] sm:$0x3] %v957
    %2045 = vst [vmem:[#allocation4] sm:$0x3] %v1033
    %2046 = vst [vmem:[#allocation6] sm:$0x3] %v1040
    %v2058 = vrot.slane %v2034, 6
    %v2059 = vrot.slane %v2035, 4
    %v2060 = vrot.slane %v2036, 2
    %v2061 = vrot.slane %v2038, 6
    %v2062 = vrot.slane %v2039, 4
    %v2063 = vrot.slane %v2040, 2
    %v2064 = vrot.slane %v2042, 6
    %v2065 = vrot.slane %v2043, 4
    %vm2066 = vcmask 1041408
    %v2067 = vsel %vm2066, %v2033, %v2058
    %vm2068 = vcmask 1045508
    %v2069 = vsel %vm2068, %v2059, %v2060
    %vm2070 = vcmask 1043456
    %v2071 = vsel %vm2070, %v2067, %v2069
    %v2072 = vsel %vm2066, %v2037, %v2061
    %v2073 = vsel %vm2068, %v2062, %v2063
    %v2074 = vsel %vm2070, %v2072, %v2073
    %v2075 = vsel %vm2066, %v2041, %v2064
    %v2076 = vsel %vm2070, %v2075, %v2065
    %2080 = vst [vmem:[%s17] sm:$0xff] %v2071
    %2081 = vst [vmem:[%s17 + $0x8] sm:$0xff] %v2074
    %2082 = vst [vmem:[%s17 + $0x10] sm:$0x3f] %v2076
    // Predicated region
    $region58: #{molecular_icvae_forward.10} parent=1 // pred_check
      _
    $region59: #{molecular_icvae_forward.10} parent=1 // pred_check_branch
      %2084 = sbr.rel (0) target = $region61
    $region60: #{molecular_icvae_forward.10} parent=1 // pred_region
      %2086 = vsyncadd [#allocation3], 0
      %s2088 = sshll.u32 [#allocation2], 4
      %s2089 = int_to_ptr.vmem [resolvable:$true] %s2088
      %s2090 = sshll.u32 %s14, 4
      %s2091 = int_to_ptr.hbm [resolvable:$true] %s2090
      %2093 = dma.vmem_to_hbm [thread:$0]  %s2089, 32, %s2091, [#allocation3]
    $region61: #{molecular_icvae_forward.10} parent=1 // pred_fallthru
      _
    // Predicated region
    $region62: #{molecular_icvae_forward.10} parent=1 // pred_check
      _
    $region63: #{molecular_icvae_forward.10} parent=1 // pred_check_branch
      %2095 = sbr.rel (0) target = $region65
    $region64: #{molecular_icvae_forward.10} parent=1 // pred_region
      %2097 = vsyncadd [#allocation5], 0
      %s2099 = sshll.u32 [#allocation4], 4
      %s2100 = int_to_ptr.vmem [resolvable:$true] %s2099
      %s2101 = sshll.u32 %s15, 4
      %s2102 = int_to_ptr.hbm [resolvable:$true] %s2101
      %2104 = dma.vmem_to_hbm [thread:$0]  %s2100, 32, %s2102, [#allocation5]
    $region65: #{molecular_icvae_forward.10} parent=1 // pred_fallthru
      _
    // Predicated region
    $region66: #{molecular_icvae_forward.10} parent=1 // pred_check
      _
    $region67: #{molecular_icvae_forward.10} parent=1 // pred_check_branch
      %2106 = sbr.rel (0) target = $region69
    $region68: #{molecular_icvae_forward.10} parent=1 // pred_region
      %2108 = vsyncadd [#allocation5], 0
      %s2110 = sshll.u32 [#allocation6], 4
      %s2111 = int_to_ptr.vmem [resolvable:$true] %s2110
      %s2112 = sshll.u32 %s16, 4
      %s2113 = int_to_ptr.hbm [resolvable:$true] %s2112
      %2115 = dma.vmem_to_hbm [thread:$0]  %s2111, 32, %s2113, [#allocation5]
    $region69: #{molecular_icvae_forward.10} parent=1 // pred_fallthru
      _
    // Predicated region
    $region70: #{molecular_icvae_forward.10} parent=1 // pred_check
      _
    $region71: #{molecular_icvae_forward.10} parent=1 // pred_check_branch
      %2117 = sbr.rel (0) target = $region73
    $region72: #{molecular_icvae_forward.10} parent=1 // pred_region
      _
    $region73: #{molecular_icvae_forward.10} parent=1 // pred_fallthru
      _
    // Predicated region
    $region74: #{molecular_icvae_forward.10} parent=1 // pred_check
      _
    $region75: #{molecular_icvae_forward.10} parent=1 // pred_check_branch
      %2119 = sbr.rel (0) target = $region77
    $region76: #{molecular_icvae_forward.10} parent=1 // pred_region
      %2121 = dma.done [#allocation3], 32
    $region77: #{molecular_icvae_forward.10} parent=1 // pred_fallthru
      _
    // Predicated region
    $region78: #{molecular_icvae_forward.10} parent=1 // pred_check
      _
    $region79: #{molecular_icvae_forward.10} parent=1 // pred_check_branch
      %2123 = sbr.rel (0) target = $region81
    $region80: #{molecular_icvae_forward.10} parent=1 // pred_region
      %2125 = dma.done [#allocation5], 32
    $region81: #{molecular_icvae_forward.10} parent=1 // pred_fallthru
      _
    // Predicated region
    $region82: #{molecular_icvae_forward.10} parent=1 // pred_check
      _
    $region83: #{molecular_icvae_forward.10} parent=1 // pred_check_branch
      %2127 = sbr.rel (0) target = $region85
    $region84: #{molecular_icvae_forward.10} parent=1 // pred_region
      %2129 = dma.done [#allocation5], 32
    $region85: #{molecular_icvae_forward.10} parent=1 // pred_fallthru
      _
    // Predicated region
    $region86: #{molecular_icvae_forward.10} parent=1 // pred_check
      _
    $region87: #{molecular_icvae_forward.10} parent=1 // pred_check_branch
      %2131 = sbr.rel (0) target = $region89
    $region88: #{molecular_icvae_forward.10} parent=1 // pred_region
      _
    $region89: #{molecular_icvae_forward.10} parent=1 // pred_fallthru
      _
    %2132 = vsyncpa [#allocation3], 1
    %2133 = vsyncpa [#allocation5], 1

// kernel: molecular_icvae_forward.11
$region0: #{molecular_icvae_forward.11}
  #allocation0 [shape = 'u32[]', space=smem, size = 0x4, offset = 0x4, fixed_abs, tag = 'smem constant byte address 0x4 - core index']
  #allocation1 [shape = 'u32[72,128]{1,0:T(1,128)}', space=vmem, size = 0x9000, scoped, tag = 'internal scratch']
  %s0 = inlined_call_operand.vmem [shape: f32[96,768], index: 0, kind: input, shape index: {}]
  %s1 = inlined_call_operand.vmem [shape: f32[768,128], index: 1, kind: input, shape index: {}]
  %s2 = inlined_call_operand.vmem [shape: f32[1,128], index: 2, kind: input, shape index: {}]
  %s3 = inlined_call_operand.vmem [shape: f32[96,128], index: 3, kind: output, shape index: {}]
  %s4 = sld [smem:[#allocation0]]
  $region22: #{molecular_icvae_forward.11} parent=0
    _
  %s6 = ssub.s32 1, %s4
  %s7 = scalar_select 0, %s6, %s4
  // Predicated region
  $region2: #{molecular_icvae_forward.11} parent=0 // pred_check
    _
  $region3: #{molecular_icvae_forward.11} parent=0 // pred_check_branch
    %9 = sbr.rel (0) target = $region5
  $region4: #{molecular_icvae_forward.11} parent=0 // pred_region
    _
  $region5: #{molecular_icvae_forward.11} parent=0 // pred_fallthru
    _
  // Predicated region
  $region6: #{molecular_icvae_forward.11} parent=0 // pred_check
    _
  $region7: #{molecular_icvae_forward.11} parent=0 // pred_check_branch
    %11 = sbr.rel (0) target = $region9
  $region8: #{molecular_icvae_forward.11} parent=0 // pred_region
    _
  $region9: #{molecular_icvae_forward.11} parent=0 // pred_fallthru
    _
  // Predicated region
  $region10: #{molecular_icvae_forward.11} parent=0 // pred_check
    _
  $region11: #{molecular_icvae_forward.11} parent=0 // pred_check_branch
    %13 = sbr.rel (0) target = $region13
  $region12: #{molecular_icvae_forward.11} parent=0 // pred_region
    _
  $region13: #{molecular_icvae_forward.11} parent=0 // pred_fallthru
    _
  %v14 = vld [vmem:[%s0] sm:$0xff]
  %v15 = vld [vmem:[%s0 + $0x8] sm:$0xff]
  %v16 = vld [vmem:[%s0 + $0x10] sm:$0xff]
  %v17 = vld [vmem:[%s0 + $0x18] sm:$0xff]
  %v18 = vld [vmem:[%s0 + $0x20] sm:$0xff]
  %v19 = vld [vmem:[%s0 + $0x28] sm:$0xff]
  %v20 = vld [vmem:[%s0 + $0x30] sm:$0xff]
  %v21 = vld [vmem:[%s0 + $0x38] sm:$0xff]
  %v22 = vld [vmem:[%s0 + $0x40] sm:$0xff]
  %v23 = vld [vmem:[%s0 + $0x48] sm:$0xff]
  %v24 = vld [vmem:[%s0 + $0x50] sm:$0xff]
  %v25 = vld [vmem:[%s0 + $0x58] sm:$0xff]
  %v26 = vld [vmem:[%s0 + $0x60] sm:$0xff]
  %v27 = vld [vmem:[%s0 + $0x68] sm:$0xff]
  %v28 = vld [vmem:[%s0 + $0x70] sm:$0xff]
  %v29 = vld [vmem:[%s0 + $0x78] sm:$0xff]
  %v30 = vld [vmem:[%s0 + $0x80] sm:$0xff]
  %v31 = vld [vmem:[%s0 + $0x88] sm:$0xff]
  %v32 = vld [vmem:[%s0 + $0x90] sm:$0xff]
  %v33 = vld [vmem:[%s0 + $0x98] sm:$0xff]
  %v34 = vld [vmem:[%s0 + $0xa0] sm:$0xff]
  %v35 = vld [vmem:[%s0 + $0xa8] sm:$0xff]
  %v36 = vld [vmem:[%s0 + $0xb0] sm:$0xff]
  %v37 = vld [vmem:[%s0 + $0xb8] sm:$0xff]
  %v38 = vld [vmem:[%s0 + $0xc0] sm:$0xff]
  %v39 = vld [vmem:[%s0 + $0xc8] sm:$0xff]
  %v40 = vld [vmem:[%s0 + $0xd0] sm:$0xff]
  %v41 = vld [vmem:[%s0 + $0xd8] sm:$0xff]
  %v42 = vld [vmem:[%s0 + $0xe0] sm:$0xff]
  %v43 = vld [vmem:[%s0 + $0xe8] sm:$0xff]
  %v44 = vld [vmem:[%s0 + $0xf0] sm:$0xff]
  %v45 = vld [vmem:[%s0 + $0xf8] sm:$0xff]
  %v46 = vld [vmem:[%s0 + $0x100] sm:$0xff]
  %v47 = vld [vmem:[%s0 + $0x108] sm:$0xff]
  %v48 = vld [vmem:[%s0 + $0x110] sm:$0xff]
  %v49 = vld [vmem:[%s0 + $0x118] sm:$0xff]
  %v50 = vld [vmem:[%s0 + $0x120] sm:$0xff]
  %v51 = vld [vmem:[%s0 + $0x128] sm:$0xff]
  %v52 = vld [vmem:[%s0 + $0x130] sm:$0xff]
  %v53 = vld [vmem:[%s0 + $0x138] sm:$0xff]
  %v54 = vld [vmem:[%s0 + $0x140] sm:$0xff]
  %v55 = vld [vmem:[%s0 + $0x148] sm:$0xff]
  %v56 = vld [vmem:[%s0 + $0x150] sm:$0xff]
  %v57 = vld [vmem:[%s0 + $0x158] sm:$0xff]
  %v58 = vld [vmem:[%s0 + $0x160] sm:$0xff]
  %v59 = vld [vmem:[%s0 + $0x168] sm:$0xff]
  %v60 = vld [vmem:[%s0 + $0x170] sm:$0xff]
  %v61 = vld [vmem:[%s0 + $0x178] sm:$0xff]
  %v62 = vld [vmem:[%s0 + $0x180] sm:$0xff]
  %v63 = vld [vmem:[%s0 + $0x188] sm:$0xff]
  %v64 = vld [vmem:[%s0 + $0x190] sm:$0xff]
  %v65 = vld [vmem:[%s0 + $0x198] sm:$0xff]
  %v66 = vld [vmem:[%s0 + $0x1a0] sm:$0xff]
  %v67 = vld [vmem:[%s0 + $0x1a8] sm:$0xff]
  %v68 = vld [vmem:[%s0 + $0x1b0] sm:$0xff]
  %v69 = vld [vmem:[%s0 + $0x1b8] sm:$0xff]
  %v70 = vld [vmem:[%s0 + $0x1c0] sm:$0xff]
  %v71 = vld [vmem:[%s0 + $0x1c8] sm:$0xff]
  %v72 = vld [vmem:[%s0 + $0x1d0] sm:$0xff]
  %v73 = vld [vmem:[%s0 + $0x1d8] sm:$0xff]
  %v74 = vld [vmem:[%s0 + $0x1e0] sm:$0xff]
  %v75 = vld [vmem:[%s0 + $0x1e8] sm:$0xff]
  %v76 = vld [vmem:[%s0 + $0x1f0] sm:$0xff]
  %v77 = vld [vmem:[%s0 + $0x1f8] sm:$0xff]
  %v78 = vld [vmem:[%s0 + $0x200] sm:$0xff]
  %v79 = vld [vmem:[%s0 + $0x208] sm:$0xff]
  %v80 = vld [vmem:[%s0 + $0x210] sm:$0xff]
  %v81 = vld [vmem:[%s0 + $0x218] sm:$0xff]
  %v82 = vld [vmem:[%s0 + $0x220] sm:$0xff]
  %v83 = vld [vmem:[%s0 + $0x228] sm:$0xff]
  %v84 = vld [vmem:[%s0 + $0x230] sm:$0xff]
  %v85 = vld [vmem:[%s0 + $0x238] sm:$0xff]
  %v86 = vld [vmem:[%s1] sm:$0xff]
  %v87 = vld [vmem:[%s1 + $0x8] sm:$0xff]
  %v88 = vld [vmem:[%s1 + $0x10] sm:$0xff]
  %v89 = vld [vmem:[%s1 + $0x18] sm:$0xff]
  %v90 = vld [vmem:[%s1 + $0x20] sm:$0xff]
  %v91 = vld [vmem:[%s1 + $0x28] sm:$0xff]
  %v92 = vld [vmem:[%s1 + $0x30] sm:$0xff]
  %v93 = vld [vmem:[%s1 + $0x38] sm:$0xff]
  %v94 = vld [vmem:[%s1 + $0x40] sm:$0xff]
  %v95 = vld [vmem:[%s1 + $0x48] sm:$0xff]
  %v96 = vld [vmem:[%s1 + $0x50] sm:$0xff]
  %v97 = vld [vmem:[%s1 + $0x58] sm:$0xff]
  %v98 = vld [vmem:[%s1 + $0x60] sm:$0xff]
  %v99 = vld [vmem:[%s1 + $0x68] sm:$0xff]
  %v100 = vld [vmem:[%s1 + $0x70] sm:$0xff]
  %v101 = vld [vmem:[%s1 + $0x78] sm:$0xff]
  %v102 = vld [vmem:[%s1 + $0x80] sm:$0xff]
  %v103 = vld [vmem:[%s1 + $0x88] sm:$0xff]
  %v104 = vld [vmem:[%s1 + $0x90] sm:$0xff]
  %v105 = vld [vmem:[%s1 + $0x98] sm:$0xff]
  %v106 = vld [vmem:[%s1 + $0xa0] sm:$0xff]
  %v107 = vld [vmem:[%s1 + $0xa8] sm:$0xff]
  %v108 = vld [vmem:[%s1 + $0xb0] sm:$0xff]
  %v109 = vld [vmem:[%s1 + $0xb8] sm:$0xff]
  %v110 = vld [vmem:[%s1 + $0xc0] sm:$0xff]
  %v111 = vld [vmem:[%s1 + $0xc8] sm:$0xff]
  %v112 = vld [vmem:[%s1 + $0xd0] sm:$0xff]
  %v113 = vld [vmem:[%s1 + $0xd8] sm:$0xff]
  %v114 = vld [vmem:[%s1 + $0xe0] sm:$0xff]
  %v115 = vld [vmem:[%s1 + $0xe8] sm:$0xff]
  %v116 = vld [vmem:[%s1 + $0xf0] sm:$0xff]
  %v117 = vld [vmem:[%s1 + $0xf8] sm:$0xff]
  %v118 = vld [vmem:[%s1 + $0x100] sm:$0xff]
  %v119 = vld [vmem:[%s1 + $0x108] sm:$0xff]
  %v120 = vld [vmem:[%s1 + $0x110] sm:$0xff]
  %v121 = vld [vmem:[%s1 + $0x118] sm:$0xff]
  %v122 = vld [vmem:[%s1 + $0x120] sm:$0xff]
  %v123 = vld [vmem:[%s1 + $0x128] sm:$0xff]
  %v124 = vld [vmem:[%s1 + $0x130] sm:$0xff]
  %v125 = vld [vmem:[%s1 + $0x138] sm:$0xff]
  %v126 = vld [vmem:[%s1 + $0x140] sm:$0xff]
  %v127 = vld [vmem:[%s1 + $0x148] sm:$0xff]
  %v128 = vld [vmem:[%s1 + $0x150] sm:$0xff]
  %v129 = vld [vmem:[%s1 + $0x158] sm:$0xff]
  %v130 = vld [vmem:[%s1 + $0x160] sm:$0xff]
  %v131 = vld [vmem:[%s1 + $0x168] sm:$0xff]
  %v132 = vld [vmem:[%s1 + $0x170] sm:$0xff]
  %v133 = vld [vmem:[%s1 + $0x178] sm:$0xff]
  %v134 = vld [vmem:[%s1 + $0x180] sm:$0xff]
  %v135 = vld [vmem:[%s1 + $0x188] sm:$0xff]
  %v136 = vld [vmem:[%s1 + $0x190] sm:$0xff]
  %v137 = vld [vmem:[%s1 + $0x198] sm:$0xff]
  %v138 = vld [vmem:[%s1 + $0x1a0] sm:$0xff]
  %v139 = vld [vmem:[%s1 + $0x1a8] sm:$0xff]
  %v140 = vld [vmem:[%s1 + $0x1b0] sm:$0xff]
  %v141 = vld [vmem:[%s1 + $0x1b8] sm:$0xff]
  %v142 = vld [vmem:[%s1 + $0x1c0] sm:$0xff]
  %v143 = vld [vmem:[%s1 + $0x1c8] sm:$0xff]
  %v144 = vld [vmem:[%s1 + $0x1d0] sm:$0xff]
  %v145 = vld [vmem:[%s1 + $0x1d8] sm:$0xff]
  %v146 = vld [vmem:[%s1 + $0x1e0] sm:$0xff]
  %v147 = vld [vmem:[%s1 + $0x1e8] sm:$0xff]
  %v148 = vld [vmem:[%s1 + $0x1f0] sm:$0xff]
  %v149 = vld [vmem:[%s1 + $0x1f8] sm:$0xff]
  %v150 = vld [vmem:[%s1 + $0x200] sm:$0xff]
  %v151 = vld [vmem:[%s1 + $0x208] sm:$0xff]
  %v152 = vld [vmem:[%s1 + $0x210] sm:$0xff]
  %v153 = vld [vmem:[%s1 + $0x218] sm:$0xff]
  %v154 = vld [vmem:[%s1 + $0x220] sm:$0xff]
  %v155 = vld [vmem:[%s1 + $0x228] sm:$0xff]
  %v156 = vld [vmem:[%s1 + $0x230] sm:$0xff]
  %v157 = vld [vmem:[%s1 + $0x238] sm:$0xff]
  %v158 = vld [vmem:[%s1 + $0x240] sm:$0xff]
  %v159 = vld [vmem:[%s1 + $0x248] sm:$0xff]
  %v160 = vld [vmem:[%s1 + $0x250] sm:$0xff]
  %v161 = vld [vmem:[%s1 + $0x258] sm:$0xff]
  %v162 = vld [vmem:[%s1 + $0x260] sm:$0xff]
  %v163 = vld [vmem:[%s1 + $0x268] sm:$0xff]
  %v164 = vld [vmem:[%s1 + $0x270] sm:$0xff]
  %v165 = vld [vmem:[%s1 + $0x278] sm:$0xff]
  %v166 = vld [vmem:[%s1 + $0x280] sm:$0xff]
  %v167 = vld [vmem:[%s1 + $0x288] sm:$0xff]
  %v168 = vld [vmem:[%s1 + $0x290] sm:$0xff]
  %v169 = vld [vmem:[%s1 + $0x298] sm:$0xff]
  %v170 = vld [vmem:[%s1 + $0x2a0] sm:$0xff]
  %v171 = vld [vmem:[%s1 + $0x2a8] sm:$0xff]
  %v172 = vld [vmem:[%s1 + $0x2b0] sm:$0xff]
  %v173 = vld [vmem:[%s1 + $0x2b8] sm:$0xff]
  %v174 = vld [vmem:[%s1 + $0x2c0] sm:$0xff]
  %v175 = vld [vmem:[%s1 + $0x2c8] sm:$0xff]
  %v176 = vld [vmem:[%s1 + $0x2d0] sm:$0xff]
  %v177 = vld [vmem:[%s1 + $0x2d8] sm:$0xff]
  %v178 = vld [vmem:[%s1 + $0x2e0] sm:$0xff]
  %v179 = vld [vmem:[%s1 + $0x2e8] sm:$0xff]
  %v180 = vld [vmem:[%s1 + $0x2f0] sm:$0xff]
  %v181 = vld [vmem:[%s1 + $0x2f8] sm:$0xff]
  %v182 = vld [vmem:[%s2] sm:$0x1]
  %v184 = vperm.slane %v182, 0
  %186 = vmatpush.msra.mxu0 %v101
  %187 = vmatpush.msra.mxu0 %v100
  %188 = vmatpush.msra.mxu0 %v99
  %189 = vmatpush.msra.mxu0 %v98
  %190 = vmatpush.msra.mxu0 %v97
  %191 = vmatpush.msra.mxu0 %v96
  %192 = vmatpush.msra.mxu0 %v95
  %193 = vmatpush.msra.mxu0 %v94
  %194 = vmatpush.msra.mxu0 %v93
  %195 = vmatpush.msra.mxu0 %v92
  %196 = vmatpush.msra.mxu0 %v91
  %197 = vmatpush.msra.mxu0 %v90
  %198 = vmatpush.msra.mxu0 %v89
  %199 = vmatpush.msra.mxu0 %v88
  %200 = vmatpush.msra.mxu0 %v87
  %201 = vmatpush.msra.mxu0 %v86
  %202 = vmatmul.f32.gmra.mxu0 %v14
  %v203 = vpop.f32.mrf.mxu0
  %v204 = vadd.f32 %v184, %v203
  %205 = vmatmul.f32.gmra.mxu0 %v20
  %v206 = vpop.f32.mrf.mxu0
  %v207 = vadd.f32 %v184, %v206
  %208 = vmatmul.f32.gmra.mxu0 %v26
  %v209 = vpop.f32.mrf.mxu0
  %v210 = vadd.f32 %v184, %v209
  %211 = vmatmul.f32.gmra.mxu0 %v32
  %v212 = vpop.f32.mrf.mxu0
  %v213 = vadd.f32 %v184, %v212
  %214 = vmatmul.f32.gmra.mxu0 %v38
  %v215 = vpop.f32.mrf.mxu0
  %v216 = vadd.f32 %v184, %v215
  %217 = vmatmul.f32.gmra.mxu0 %v44
  %v218 = vpop.f32.mrf.mxu0
  %v219 = vadd.f32 %v184, %v218
  %220 = vmatmul.f32.gmra.mxu0 %v50
  %v221 = vpop.f32.mrf.mxu0
  %v222 = vadd.f32 %v184, %v221
  %223 = vmatmul.f32.gmra.mxu0 %v56
  %v224 = vpop.f32.mrf.mxu0
  %v225 = vadd.f32 %v184, %v224
  %226 = vmatmul.f32.gmra.mxu0 %v62
  %v227 = vpop.f32.mrf.mxu0
  %v228 = vadd.f32 %v184, %v227
  %229 = vmatmul.f32.gmra.mxu0 %v68
  %v230 = vpop.f32.mrf.mxu0
  %v231 = vadd.f32 %v184, %v230
  %232 = vmatmul.f32.gmra.mxu0 %v74
  %v233 = vpop.f32.mrf.mxu0
  %v234 = vadd.f32 %v184, %v233
  %235 = vmatmul.f32.gmra.mxu0 %v80
  %v236 = vpop.f32.mrf.mxu0
  %v237 = vadd.f32 %v184, %v236
  %238 = vdwg.mxu0
  %239 = vmatpush.msra.mxu0 %v117
  %240 = vmatpush.msra.mxu0 %v116
  %241 = vmatpush.msra.mxu0 %v115
  %242 = vmatpush.msra.mxu0 %v114
  %243 = vmatpush.msra.mxu0 %v113
  %244 = vmatpush.msra.mxu0 %v112
  %245 = vmatpush.msra.mxu0 %v111
  %246 = vmatpush.msra.mxu0 %v110
  %247 = vmatpush.msra.mxu0 %v109
  %248 = vmatpush.msra.mxu0 %v108
  %249 = vmatpush.msra.mxu0 %v107
  %250 = vmatpush.msra.mxu0 %v106
  %251 = vmatpush.msra.mxu0 %v105
  %252 = vmatpush.msra.mxu0 %v104
  %253 = vmatpush.msra.mxu0 %v103
  %254 = vmatpush.msra.mxu0 %v102
  %255 = vmatmul.f32.gmra.mxu0 %v15
  %v256 = vpop.f32.mrf.mxu0
  %v257 = vadd.f32 %v204, %v256
  %258 = vmatmul.f32.gmra.mxu0 %v21
  %v259 = vpop.f32.mrf.mxu0
  %v260 = vadd.f32 %v207, %v259
  %261 = vmatmul.f32.gmra.mxu0 %v27
  %v262 = vpop.f32.mrf.mxu0
  %v263 = vadd.f32 %v210, %v262
  %264 = vmatmul.f32.gmra.mxu0 %v33
  %v265 = vpop.f32.mrf.mxu0
  %v266 = vadd.f32 %v213, %v265
  %267 = vmatmul.f32.gmra.mxu0 %v39
  %v268 = vpop.f32.mrf.mxu0
  %v269 = vadd.f32 %v216, %v268
  %270 = vmatmul.f32.gmra.mxu0 %v45
  %v271 = vpop.f32.mrf.mxu0
  %v272 = vadd.f32 %v219, %v271
  %273 = vmatmul.f32.gmra.mxu0 %v51
  %v274 = vpop.f32.mrf.mxu0
  %v275 = vadd.f32 %v222, %v274
  %276 = vmatmul.f32.gmra.mxu0 %v57
  %v277 = vpop.f32.mrf.mxu0
  %v278 = vadd.f32 %v225, %v277
  %279 = vmatmul.f32.gmra.mxu0 %v63
  %v280 = vpop.f32.mrf.mxu0
  %v281 = vadd.f32 %v228, %v280
  %282 = vmatmul.f32.gmra.mxu0 %v69
  %v283 = vpop.f32.mrf.mxu0
  %v284 = vadd.f32 %v231, %v283
  %285 = vmatmul.f32.gmra.mxu0 %v75
  %v286 = vpop.f32.mrf.mxu0
  %v287 = vadd.f32 %v234, %v286
  %288 = vmatmul.f32.gmra.mxu0 %v81
  %v289 = vpop.f32.mrf.mxu0
  %v290 = vadd.f32 %v237, %v289
  %291 = vdwg.mxu0
  %292 = vmatpush.msra.mxu0 %v133
  %293 = vmatpush.msra.mxu0 %v132
  %294 = vmatpush.msra.mxu0 %v131
  %295 = vmatpush.msra.mxu0 %v130
  %296 = vmatpush.msra.mxu0 %v129
  %297 = vmatpush.msra.mxu0 %v128
  %298 = vmatpush.msra.mxu0 %v127
  %299 = vmatpush.msra.mxu0 %v126
  %300 = vmatpush.msra.mxu0 %v125
  %301 = vmatpush.msra.mxu0 %v124
  %302 = vmatpush.msra.mxu0 %v123
  %303 = vmatpush.msra.mxu0 %v122
  %304 = vmatpush.msra.mxu0 %v121
  %305 = vmatpush.msra.mxu0 %v120
  %306 = vmatpush.msra.mxu0 %v119
  %307 = vmatpush.msra.mxu0 %v118
  %308 = vmatmul.f32.gmra.mxu0 %v16
  %v309 = vpop.f32.mrf.mxu0
  %v310 = vadd.f32 %v257, %v309
  %311 = vmatmul.f32.gmra.mxu0 %v22
  %v312 = vpop.f32.mrf.mxu0
  %v313 = vadd.f32 %v260, %v312
  %314 = vmatmul.f32.gmra.mxu0 %v28
  %v315 = vpop.f32.mrf.mxu0
  %v316 = vadd.f32 %v263, %v315
  %317 = vmatmul.f32.gmra.mxu0 %v34
  %v318 = vpop.f32.mrf.mxu0
  %v319 = vadd.f32 %v266, %v318
  %320 = vmatmul.f32.gmra.mxu0 %v40
  %v321 = vpop.f32.mrf.mxu0
  %v322 = vadd.f32 %v269, %v321
  %323 = vmatmul.f32.gmra.mxu0 %v46
  %v324 = vpop.f32.mrf.mxu0
  %v325 = vadd.f32 %v272, %v324
  %326 = vmatmul.f32.gmra.mxu0 %v52
  %v327 = vpop.f32.mrf.mxu0
  %v328 = vadd.f32 %v275, %v327
  %329 = vmatmul.f32.gmra.mxu0 %v58
  %v330 = vpop.f32.mrf.mxu0
  %v331 = vadd.f32 %v278, %v330
  %332 = vmatmul.f32.gmra.mxu0 %v64
  %v333 = vpop.f32.mrf.mxu0
  %v334 = vadd.f32 %v281, %v333
  %335 = vmatmul.f32.gmra.mxu0 %v70
  %v336 = vpop.f32.mrf.mxu0
  %v337 = vadd.f32 %v284, %v336
  %338 = vmatmul.f32.gmra.mxu0 %v76
  %v339 = vpop.f32.mrf.mxu0
  %v340 = vadd.f32 %v287, %v339
  %341 = vmatmul.f32.gmra.mxu0 %v82
  %v342 = vpop.f32.mrf.mxu0
  %v343 = vadd.f32 %v290, %v342
  %344 = vdwg.mxu0
  %345 = vmatpush.msra.mxu0 %v149
  %346 = vmatpush.msra.mxu0 %v148
  %347 = vmatpush.msra.mxu0 %v147
  %348 = vmatpush.msra.mxu0 %v146
  %349 = vmatpush.msra.mxu0 %v145
  %350 = vmatpush.msra.mxu0 %v144
  %351 = vmatpush.msra.mxu0 %v143
  %352 = vmatpush.msra.mxu0 %v142
  %353 = vmatpush.msra.mxu0 %v141
  %354 = vmatpush.msra.mxu0 %v140
  %355 = vmatpush.msra.mxu0 %v139
  %356 = vmatpush.msra.mxu0 %v138
  %357 = vmatpush.msra.mxu0 %v137
  %358 = vmatpush.msra.mxu0 %v136
  %359 = vmatpush.msra.mxu0 %v135
  %360 = vmatpush.msra.mxu0 %v134
  %361 = vmatmul.f32.gmra.mxu0 %v17
  %v362 = vpop.f32.mrf.mxu0
  %v363 = vadd.f32 %v310, %v362
  %364 = vmatmul.f32.gmra.mxu0 %v23
  %v365 = vpop.f32.mrf.mxu0
  %v366 = vadd.f32 %v313, %v365
  %367 = vmatmul.f32.gmra.mxu0 %v29
  %v368 = vpop.f32.mrf.mxu0
  %v369 = vadd.f32 %v316, %v368
  %370 = vmatmul.f32.gmra.mxu0 %v35
  %v371 = vpop.f32.mrf.mxu0
  %v372 = vadd.f32 %v319, %v371
  %373 = vmatmul.f32.gmra.mxu0 %v41
  %v374 = vpop.f32.mrf.mxu0
  %v375 = vadd.f32 %v322, %v374
  %376 = vmatmul.f32.gmra.mxu0 %v47
  %v377 = vpop.f32.mrf.mxu0
  %v378 = vadd.f32 %v325, %v377
  %379 = vmatmul.f32.gmra.mxu0 %v53
  %v380 = vpop.f32.mrf.mxu0
  %v381 = vadd.f32 %v328, %v380
  %382 = vmatmul.f32.gmra.mxu0 %v59
  %v383 = vpop.f32.mrf.mxu0
  %v384 = vadd.f32 %v331, %v383
  %385 = vmatmul.f32.gmra.mxu0 %v65
  %v386 = vpop.f32.mrf.mxu0
  %v387 = vadd.f32 %v334, %v386
  %388 = vmatmul.f32.gmra.mxu0 %v71
  %v389 = vpop.f32.mrf.mxu0
  %v390 = vadd.f32 %v337, %v389
  %391 = vmatmul.f32.gmra.mxu0 %v77
  %v392 = vpop.f32.mrf.mxu0
  %v393 = vadd.f32 %v340, %v392
  %394 = vmatmul.f32.gmra.mxu0 %v83
  %v395 = vpop.f32.mrf.mxu0
  %v396 = vadd.f32 %v343, %v395
  %397 = vdwg.mxu0
  %398 = vmatpush.msra.mxu0 %v165
  %399 = vmatpush.msra.mxu0 %v164
  %400 = vmatpush.msra.mxu0 %v163
  %401 = vmatpush.msra.mxu0 %v162
  %402 = vmatpush.msra.mxu0 %v161
  %403 = vmatpush.msra.mxu0 %v160
  %404 = vmatpush.msra.mxu0 %v159
  %405 = vmatpush.msra.mxu0 %v158
  %406 = vmatpush.msra.mxu0 %v157
  %407 = vmatpush.msra.mxu0 %v156
  %408 = vmatpush.msra.mxu0 %v155
  %409 = vmatpush.msra.mxu0 %v154
  %410 = vmatpush.msra.mxu0 %v153
  %411 = vmatpush.msra.mxu0 %v152
  %412 = vmatpush.msra.mxu0 %v151
  %413 = vmatpush.msra.mxu0 %v150
  %414 = vmatmul.f32.gmra.mxu0 %v18
  %v415 = vpop.f32.mrf.mxu0
  %v416 = vadd.f32 %v363, %v415
  %417 = vmatmul.f32.gmra.mxu0 %v24
  %v418 = vpop.f32.mrf.mxu0
  %v419 = vadd.f32 %v366, %v418
  %420 = vmatmul.f32.gmra.mxu0 %v30
  %v421 = vpop.f32.mrf.mxu0
  %v422 = vadd.f32 %v369, %v421
  %423 = vmatmul.f32.gmra.mxu0 %v36
  %v424 = vpop.f32.mrf.mxu0
  %v425 = vadd.f32 %v372, %v424
  %426 = vmatmul.f32.gmra.mxu0 %v42
  %v427 = vpop.f32.mrf.mxu0
  %v428 = vadd.f32 %v375, %v427
  %429 = vmatmul.f32.gmra.mxu0 %v48
  %v430 = vpop.f32.mrf.mxu0
  %v431 = vadd.f32 %v378, %v430
  %432 = vmatmul.f32.gmra.mxu0 %v54
  %v433 = vpop.f32.mrf.mxu0
  %v434 = vadd.f32 %v381, %v433
  %435 = vmatmul.f32.gmra.mxu0 %v60
  %v436 = vpop.f32.mrf.mxu0
  %v437 = vadd.f32 %v384, %v436
  %438 = vmatmul.f32.gmra.mxu0 %v66
  %v439 = vpop.f32.mrf.mxu0
  %v440 = vadd.f32 %v387, %v439
  %441 = vmatmul.f32.gmra.mxu0 %v72
  %v442 = vpop.f32.mrf.mxu0
  %v443 = vadd.f32 %v390, %v442
  %444 = vmatmul.f32.gmra.mxu0 %v78
  %v445 = vpop.f32.mrf.mxu0
  %v446 = vadd.f32 %v393, %v445
  %447 = vmatmul.f32.gmra.mxu0 %v84
  %v448 = vpop.f32.mrf.mxu0
  %v449 = vadd.f32 %v396, %v448
  %450 = vdwg.mxu0
  %451 = vmatpush.msra.mxu0 %v181
  %452 = vmatpush.msra.mxu0 %v180
  %453 = vmatpush.msra.mxu0 %v179
  %454 = vmatpush.msra.mxu0 %v178
  %455 = vmatpush.msra.mxu0 %v177
  %456 = vmatpush.msra.mxu0 %v176
  %457 = vmatpush.msra.mxu0 %v175
  %458 = vmatpush.msra.mxu0 %v174
  %459 = vmatpush.msra.mxu0 %v173
  %460 = vmatpush.msra.mxu0 %v172
  %461 = vmatpush.msra.mxu0 %v171
  %462 = vmatpush.msra.mxu0 %v170
  %463 = vmatpush.msra.mxu0 %v169
  %464 = vmatpush.msra.mxu0 %v168
  %465 = vmatpush.msra.mxu0 %v167
  %466 = vmatpush.msra.mxu0 %v166
  %467 = vmatmul.f32.gmra.mxu0 %v19
  %v468 = vpop.f32.mrf.mxu0
  %v469 = vadd.f32 %v416, %v468
  %470 = vmatmul.f32.gmra.mxu0 %v25
  %v471 = vpop.f32.mrf.mxu0
  %v472 = vadd.f32 %v419, %v471
  %473 = vmatmul.f32.gmra.mxu0 %v31
  %v474 = vpop.f32.mrf.mxu0
  %v475 = vadd.f32 %v422, %v474
  %476 = vmatmul.f32.gmra.mxu0 %v37
  %v477 = vpop.f32.mrf.mxu0
  %v478 = vadd.f32 %v425, %v477
  %479 = vmatmul.f32.gmra.mxu0 %v43
  %v480 = vpop.f32.mrf.mxu0
  %v481 = vadd.f32 %v428, %v480
  %482 = vmatmul.f32.gmra.mxu0 %v49
  %v483 = vpop.f32.mrf.mxu0
  %v484 = vadd.f32 %v431, %v483
  %485 = vmatmul.f32.gmra.mxu0 %v55
  %v486 = vpop.f32.mrf.mxu0
  %v487 = vadd.f32 %v434, %v486
  %488 = vmatmul.f32.gmra.mxu0 %v61
  %v489 = vpop.f32.mrf.mxu0
  %v490 = vadd.f32 %v437, %v489
  %491 = vmatmul.f32.gmra.mxu0 %v67
  %v492 = vpop.f32.mrf.mxu0
  %v493 = vadd.f32 %v440, %v492
  %494 = vmatmul.f32.gmra.mxu0 %v73
  %v495 = vpop.f32.mrf.mxu0
  %v496 = vadd.f32 %v443, %v495
  %497 = vmatmul.f32.gmra.mxu0 %v79
  %v498 = vpop.f32.mrf.mxu0
  %v499 = vadd.f32 %v446, %v498
  %500 = vmatmul.f32.gmra.mxu0 %v85
  %v501 = vpop.f32.mrf.mxu0
  %v502 = vadd.f32 %v449, %v501
  %503 = vdwg.mxu0
  %v504 = vmax.f32 %v469, 0.0
  %v505 = vmax.f32 %v472, 0.0
  %v506 = vmax.f32 %v475, 0.0
  %v507 = vmax.f32 %v478, 0.0
  %v508 = vmax.f32 %v481, 0.0
  %v509 = vmax.f32 %v484, 0.0
  %v510 = vmax.f32 %v487, 0.0
  %v511 = vmax.f32 %v490, 0.0
  %v512 = vmax.f32 %v493, 0.0
  %v513 = vmax.f32 %v496, 0.0
  %v514 = vmax.f32 %v499, 0.0
  %v515 = vmax.f32 %v502, 0.0
  %516 = vst [vmem:[%s3] sm:$0xff] %v504
  %517 = vst [vmem:[%s3 + $0x8] sm:$0xff] %v505
  %518 = vst [vmem:[%s3 + $0x10] sm:$0xff] %v506
  %519 = vst [vmem:[%s3 + $0x18] sm:$0xff] %v507
  %520 = vst [vmem:[%s3 + $0x20] sm:$0xff] %v508
  %521 = vst [vmem:[%s3 + $0x28] sm:$0xff] %v509
  %522 = vst [vmem:[%s3 + $0x30] sm:$0xff] %v510
  %523 = vst [vmem:[%s3 + $0x38] sm:$0xff] %v511
  %524 = vst [vmem:[%s3 + $0x40] sm:$0xff] %v512
  %525 = vst [vmem:[%s3 + $0x48] sm:$0xff] %v513
  %526 = vst [vmem:[%s3 + $0x50] sm:$0xff] %v514
  %527 = vst [vmem:[%s3 + $0x58] sm:$0xff] %v515
  // Predicated region
  $region14: #{molecular_icvae_forward.11} parent=0 // pred_check
    _
  $region15: #{molecular_icvae_forward.11} parent=0 // pred_check_branch
    %529 = sbr.rel (0) target = $region17
  $region16: #{molecular_icvae_forward.11} parent=0 // pred_region
    _
  $region17: #{molecular_icvae_forward.11} parent=0 // pred_fallthru
    _
  // Predicated region
  $region18: #{molecular_icvae_forward.11} parent=0 // pred_check
    _
  $region19: #{molecular_icvae_forward.11} parent=0 // pred_check_branch
    %531 = sbr.rel (0) target = $region21
  $region20: #{molecular_icvae_forward.11} parent=0 // pred_region
    _
  $region21: #{molecular_icvae_forward.11} parent=0 // pred_fallthru
    _

// kernel: molecular_icvae_forward.12
$region0: #{molecular_icvae_forward.12}
  #allocation0 [shape = 'u32[]', space=smem, size = 0x4, offset = 0x4, fixed_abs, tag = 'smem constant byte address 0x4 - core index']
  #allocation1 [shape = 'u32[72,128]{1,0:T(1,128)}', space=vmem, size = 0x9000, scoped, tag = 'internal scratch']
  %s0 = inlined_call_operand.vmem [shape: f32[448,384], index: 0, kind: input, shape index: {}]
  %s1 = inlined_call_operand.vmem [shape: f32[384,128], index: 1, kind: input, shape index: {}]
  %s2 = inlined_call_operand.vmem [shape: f32[1,128], index: 2, kind: input, shape index: {}]
  %s3 = inlined_call_operand.vmem [shape: f32[448,128], index: 3, kind: output, shape index: {}]
  %s4 = sld [smem:[#allocation0]]
  $region22: #{molecular_icvae_forward.12} parent=0
    _
  %s6 = ssub.s32 1, %s4
  %s7 = scalar_select 0, %s6, %s4
  // Predicated region
  $region2: #{molecular_icvae_forward.12} parent=0 // pred_check
    _
  $region3: #{molecular_icvae_forward.12} parent=0 // pred_check_branch
    %9 = sbr.rel (0) target = $region5
  $region4: #{molecular_icvae_forward.12} parent=0 // pred_region
    _
  $region5: #{molecular_icvae_forward.12} parent=0 // pred_fallthru
    _
  // Predicated region
  $region6: #{molecular_icvae_forward.12} parent=0 // pred_check
    _
  $region7: #{molecular_icvae_forward.12} parent=0 // pred_check_branch
    %11 = sbr.rel (0) target = $region9
  $region8: #{molecular_icvae_forward.12} parent=0 // pred_region
    _
  $region9: #{molecular_icvae_forward.12} parent=0 // pred_fallthru
    _
  // Predicated region
  $region10: #{molecular_icvae_forward.12} parent=0 // pred_check
    _
  $region11: #{molecular_icvae_forward.12} parent=0 // pred_check_branch
    %13 = sbr.rel (0) target = $region13
  $region12: #{molecular_icvae_forward.12} parent=0 // pred_region
    _
  $region13: #{molecular_icvae_forward.12} parent=0 // pred_fallthru
    _
  %v14 = vld [vmem:[%s0] sm:$0xff]
  %v15 = vld [vmem:[%s0 + $0x8] sm:$0xff]
  %v16 = vld [vmem:[%s0 + $0x10] sm:$0xff]
  %v17 = vld [vmem:[%s0 + $0x18] sm:$0xff]
  %v18 = vld [vmem:[%s0 + $0x20] sm:$0xff]
  %v19 = vld [vmem:[%s0 + $0x28] sm:$0xff]
  %v20 = vld [vmem:[%s0 + $0x30] sm:$0xff]
  %v21 = vld [vmem:[%s0 + $0x38] sm:$0xff]
  %v22 = vld [vmem:[%s0 + $0x40] sm:$0xff]
  %v23 = vld [vmem:[%s0 + $0x48] sm:$0xff]
  %v24 = vld [vmem:[%s0 + $0x50] sm:$0xff]
  %v25 = vld [vmem:[%s0 + $0x58] sm:$0xff]
  %v26 = vld [vmem:[%s0 + $0x60] sm:$0xff]
  %v27 = vld [vmem:[%s0 + $0x68] sm:$0xff]
  %v28 = vld [vmem:[%s0 + $0x70] sm:$0xff]
  %v29 = vld [vmem:[%s0 + $0x78] sm:$0xff]
  %v30 = vld [vmem:[%s0 + $0x80] sm:$0xff]
  %v31 = vld [vmem:[%s0 + $0x88] sm:$0xff]
  %v32 = vld [vmem:[%s0 + $0x90] sm:$0xff]
  %v33 = vld [vmem:[%s0 + $0x98] sm:$0xff]
  %v34 = vld [vmem:[%s0 + $0xa0] sm:$0xff]
  %v35 = vld [vmem:[%s0 + $0xa8] sm:$0xff]
  %v36 = vld [vmem:[%s0 + $0xb0] sm:$0xff]
  %v37 = vld [vmem:[%s0 + $0xb8] sm:$0xff]
  %v38 = vld [vmem:[%s0 + $0xc0] sm:$0xff]
  %v39 = vld [vmem:[%s0 + $0xc8] sm:$0xff]
  %v40 = vld [vmem:[%s0 + $0xd0] sm:$0xff]
  %v41 = vld [vmem:[%s0 + $0xd8] sm:$0xff]
  %v42 = vld [vmem:[%s0 + $0xe0] sm:$0xff]
  %v43 = vld [vmem:[%s0 + $0xe8] sm:$0xff]
  %v44 = vld [vmem:[%s0 + $0xf0] sm:$0xff]
  %v45 = vld [vmem:[%s0 + $0xf8] sm:$0xff]
  %v46 = vld [vmem:[%s0 + $0x100] sm:$0xff]
  %v47 = vld [vmem:[%s0 + $0x108] sm:$0xff]
  %v48 = vld [vmem:[%s0 + $0x110] sm:$0xff]
  %v49 = vld [vmem:[%s0 + $0x118] sm:$0xff]
  %v50 = vld [vmem:[%s0 + $0x120] sm:$0xff]
  %v51 = vld [vmem:[%s0 + $0x128] sm:$0xff]
  %v52 = vld [vmem:[%s0 + $0x130] sm:$0xff]
  %v53 = vld [vmem:[%s0 + $0x138] sm:$0xff]
  %v54 = vld [vmem:[%s0 + $0x140] sm:$0xff]
  %v55 = vld [vmem:[%s0 + $0x148] sm:$0xff]
  %v56 = vld [vmem:[%s0 + $0x150] sm:$0xff]
  %v57 = vld [vmem:[%s0 + $0x158] sm:$0xff]
  %v58 = vld [vmem:[%s0 + $0x160] sm:$0xff]
  %v59 = vld [vmem:[%s0 + $0x168] sm:$0xff]
  %v60 = vld [vmem:[%s0 + $0x170] sm:$0xff]
  %v61 = vld [vmem:[%s0 + $0x178] sm:$0xff]
  %v62 = vld [vmem:[%s0 + $0x180] sm:$0xff]
  %v63 = vld [vmem:[%s0 + $0x188] sm:$0xff]
  %v64 = vld [vmem:[%s0 + $0x190] sm:$0xff]
  %v65 = vld [vmem:[%s0 + $0x198] sm:$0xff]
  %v66 = vld [vmem:[%s0 + $0x1a0] sm:$0xff]
  %v67 = vld [vmem:[%s0 + $0x1a8] sm:$0xff]
  %v68 = vld [vmem:[%s0 + $0x1b0] sm:$0xff]
  %v69 = vld [vmem:[%s0 + $0x1b8] sm:$0xff]
  %v70 = vld [vmem:[%s0 + $0x1c0] sm:$0xff]
  %v71 = vld [vmem:[%s0 + $0x1c8] sm:$0xff]
  %v72 = vld [vmem:[%s0 + $0x1d0] sm:$0xff]
  %v73 = vld [vmem:[%s0 + $0x1d8] sm:$0xff]
  %v74 = vld [vmem:[%s0 + $0x1e0] sm:$0xff]
  %v75 = vld [vmem:[%s0 + $0x1e8] sm:$0xff]
  %v76 = vld [vmem:[%s0 + $0x1f0] sm:$0xff]
  %v77 = vld [vmem:[%s0 + $0x1f8] sm:$0xff]
  %v78 = vld [vmem:[%s0 + $0x200] sm:$0xff]
  %v79 = vld [vmem:[%s0 + $0x208] sm:$0xff]
  %v80 = vld [vmem:[%s0 + $0x210] sm:$0xff]
  %v81 = vld [vmem:[%s0 + $0x218] sm:$0xff]
  %v82 = vld [vmem:[%s0 + $0x220] sm:$0xff]
  %v83 = vld [vmem:[%s0 + $0x228] sm:$0xff]
  %v84 = vld [vmem:[%s0 + $0x230] sm:$0xff]
  %v85 = vld [vmem:[%s0 + $0x238] sm:$0xff]
  %v86 = vld [vmem:[%s0 + $0x240] sm:$0xff]
  %v87 = vld [vmem:[%s0 + $0x248] sm:$0xff]
  %v88 = vld [vmem:[%s0 + $0x250] sm:$0xff]
  %v89 = vld [vmem:[%s0 + $0x258] sm:$0xff]
  %v90 = vld [vmem:[%s0 + $0x260] sm:$0xff]
  %v91 = vld [vmem:[%s0 + $0x268] sm:$0xff]
  %v92 = vld [vmem:[%s0 + $0x270] sm:$0xff]
  %v93 = vld [vmem:[%s0 + $0x278] sm:$0xff]
  %v94 = vld [vmem:[%s0 + $0x280] sm:$0xff]
  %v95 = vld [vmem:[%s0 + $0x288] sm:$0xff]
  %v96 = vld [vmem:[%s0 + $0x290] sm:$0xff]
  %v97 = vld [vmem:[%s0 + $0x298] sm:$0xff]
  %v98 = vld [vmem:[%s0 + $0x2a0] sm:$0xff]
  %v99 = vld [vmem:[%s0 + $0x2a8] sm:$0xff]
  %v100 = vld [vmem:[%s0 + $0x2b0] sm:$0xff]
  %v101 = vld [vmem:[%s0 + $0x2b8] sm:$0xff]
  %v102 = vld [vmem:[%s0 + $0x2c0] sm:$0xff]
  %v103 = vld [vmem:[%s0 + $0x2c8] sm:$0xff]
  %v104 = vld [vmem:[%s0 + $0x2d0] sm:$0xff]
  %v105 = vld [vmem:[%s0 + $0x2d8] sm:$0xff]
  %v106 = vld [vmem:[%s0 + $0x2e0] sm:$0xff]
  %v107 = vld [vmem:[%s0 + $0x2e8] sm:$0xff]
  %v108 = vld [vmem:[%s0 + $0x2f0] sm:$0xff]
  %v109 = vld [vmem:[%s0 + $0x2f8] sm:$0xff]
  %v110 = vld [vmem:[%s0 + $0x300] sm:$0xff]
  %v111 = vld [vmem:[%s0 + $0x308] sm:$0xff]
  %v112 = vld [vmem:[%s0 + $0x310] sm:$0xff]
  %v113 = vld [vmem:[%s0 + $0x318] sm:$0xff]
  %v114 = vld [vmem:[%s0 + $0x320] sm:$0xff]
  %v115 = vld [vmem:[%s0 + $0x328] sm:$0xff]
  %v116 = vld [vmem:[%s0 + $0x330] sm:$0xff]
  %v117 = vld [vmem:[%s0 + $0x338] sm:$0xff]
  %v118 = vld [vmem:[%s0 + $0x340] sm:$0xff]
  %v119 = vld [vmem:[%s0 + $0x348] sm:$0xff]
  %v120 = vld [vmem:[%s0 + $0x350] sm:$0xff]
  %v121 = vld [vmem:[%s0 + $0x358] sm:$0xff]
  %v122 = vld [vmem:[%s0 + $0x360] sm:$0xff]
  %v123 = vld [vmem:[%s0 + $0x368] sm:$0xff]
  %v124 = vld [vmem:[%s0 + $0x370] sm:$0xff]
  %v125 = vld [vmem:[%s0 + $0x378] sm:$0xff]
  %v126 = vld [vmem:[%s0 + $0x380] sm:$0xff]
  %v127 = vld [vmem:[%s0 + $0x388] sm:$0xff]
  %v128 = vld [vmem:[%s0 + $0x390] sm:$0xff]
  %v129 = vld [vmem:[%s0 + $0x398] sm:$0xff]
  %v130 = vld [vmem:[%s0 + $0x3a0] sm:$0xff]
  %v131 = vld [vmem:[%s0 + $0x3a8] sm:$0xff]
  %v132 = vld [vmem:[%s0 + $0x3b0] sm:$0xff]
  %v133 = vld [vmem:[%s0 + $0x3b8] sm:$0xff]
  %v134 = vld [vmem:[%s0 + $0x3c0] sm:$0xff]
  %v135 = vld [vmem:[%s0 + $0x3c8] sm:$0xff]
  %v136 = vld [vmem:[%s0 + $0x3d0] sm:$0xff]
  %v137 = vld [vmem:[%s0 + $0x3d8] sm:$0xff]
  %v138 = vld [vmem:[%s0 + $0x3e0] sm:$0xff]
  %v139 = vld [vmem:[%s0 + $0x3e8] sm:$0xff]
  %v140 = vld [vmem:[%s0 + $0x3f0] sm:$0xff]
  %v141 = vld [vmem:[%s0 + $0x3f8] sm:$0xff]
  %v142 = vld [vmem:[%s0 + $0x400] sm:$0xff]
  %v143 = vld [vmem:[%s0 + $0x408] sm:$0xff]
  %v144 = vld [vmem:[%s0 + $0x410] sm:$0xff]
  %v145 = vld [vmem:[%s0 + $0x418] sm:$0xff]
  %v146 = vld [vmem:[%s0 + $0x420] sm:$0xff]
  %v147 = vld [vmem:[%s0 + $0x428] sm:$0xff]
  %v148 = vld [vmem:[%s0 + $0x430] sm:$0xff]
  %v149 = vld [vmem:[%s0 + $0x438] sm:$0xff]
  %v150 = vld [vmem:[%s0 + $0x440] sm:$0xff]
  %v151 = vld [vmem:[%s0 + $0x448] sm:$0xff]
  %v152 = vld [vmem:[%s0 + $0x450] sm:$0xff]
  %v153 = vld [vmem:[%s0 + $0x458] sm:$0xff]
  %v154 = vld [vmem:[%s0 + $0x460] sm:$0xff]
  %v155 = vld [vmem:[%s0 + $0x468] sm:$0xff]
  %v156 = vld [vmem:[%s0 + $0x470] sm:$0xff]
  %v157 = vld [vmem:[%s0 + $0x478] sm:$0xff]
  %v158 = vld [vmem:[%s0 + $0x480] sm:$0xff]
  %v159 = vld [vmem:[%s0 + $0x488] sm:$0xff]
  %v160 = vld [vmem:[%s0 + $0x490] sm:$0xff]
  %v161 = vld [vmem:[%s0 + $0x498] sm:$0xff]
  %v162 = vld [vmem:[%s0 + $0x4a0] sm:$0xff]
  %v163 = vld [vmem:[%s0 + $0x4a8] sm:$0xff]
  %v164 = vld [vmem:[%s0 + $0x4b0] sm:$0xff]
  %v165 = vld [vmem:[%s0 + $0x4b8] sm:$0xff]
  %v166 = vld [vmem:[%s0 + $0x4c0] sm:$0xff]
  %v167 = vld [vmem:[%s0 + $0x4c8] sm:$0xff]
  %v168 = vld [vmem:[%s0 + $0x4d0] sm:$0xff]
  %v169 = vld [vmem:[%s0 + $0x4d8] sm:$0xff]
  %v170 = vld [vmem:[%s0 + $0x4e0] sm:$0xff]
  %v171 = vld [vmem:[%s0 + $0x4e8] sm:$0xff]
  %v172 = vld [vmem:[%s0 + $0x4f0] sm:$0xff]
  %v173 = vld [vmem:[%s0 + $0x4f8] sm:$0xff]
  %v174 = vld [vmem:[%s0 + $0x500] sm:$0xff]
  %v175 = vld [vmem:[%s0 + $0x508] sm:$0xff]
  %v176 = vld [vmem:[%s0 + $0x510] sm:$0xff]
  %v177 = vld [vmem:[%s0 + $0x518] sm:$0xff]
  %v178 = vld [vmem:[%s0 + $0x520] sm:$0xff]
  %v179 = vld [vmem:[%s0 + $0x528] sm:$0xff]
  %v180 = vld [vmem:[%s0 + $0x530] sm:$0xff]
  %v181 = vld [vmem:[%s0 + $0x538] sm:$0xff]
  %v182 = vld [vmem:[%s1] sm:$0xff]
  %v183 = vld [vmem:[%s1 + $0x8] sm:$0xff]
  %v184 = vld [vmem:[%s1 + $0x10] sm:$0xff]
  %v185 = vld [vmem:[%s1 + $0x18] sm:$0xff]
  %v186 = vld [vmem:[%s1 + $0x20] sm:$0xff]
  %v187 = vld [vmem:[%s1 + $0x28] sm:$0xff]
  %v188 = vld [vmem:[%s1 + $0x30] sm:$0xff]
  %v189 = vld [vmem:[%s1 + $0x38] sm:$0xff]
  %v190 = vld [vmem:[%s1 + $0x40] sm:$0xff]
  %v191 = vld [vmem:[%s1 + $0x48] sm:$0xff]
  %v192 = vld [vmem:[%s1 + $0x50] sm:$0xff]
  %v193 = vld [vmem:[%s1 + $0x58] sm:$0xff]
  %v194 = vld [vmem:[%s1 + $0x60] sm:$0xff]
  %v195 = vld [vmem:[%s1 + $0x68] sm:$0xff]
  %v196 = vld [vmem:[%s1 + $0x70] sm:$0xff]
  %v197 = vld [vmem:[%s1 + $0x78] sm:$0xff]
  %v198 = vld [vmem:[%s1 + $0x80] sm:$0xff]
  %v199 = vld [vmem:[%s1 + $0x88] sm:$0xff]
  %v200 = vld [vmem:[%s1 + $0x90] sm:$0xff]
  %v201 = vld [vmem:[%s1 + $0x98] sm:$0xff]
  %v202 = vld [vmem:[%s1 + $0xa0] sm:$0xff]
  %v203 = vld [vmem:[%s1 + $0xa8] sm:$0xff]
  %v204 = vld [vmem:[%s1 + $0xb0] sm:$0xff]
  %v205 = vld [vmem:[%s1 + $0xb8] sm:$0xff]
  %v206 = vld [vmem:[%s1 + $0xc0] sm:$0xff]
  %v207 = vld [vmem:[%s1 + $0xc8] sm:$0xff]
  %v208 = vld [vmem:[%s1 + $0xd0] sm:$0xff]
  %v209 = vld [vmem:[%s1 + $0xd8] sm:$0xff]
  %v210 = vld [vmem:[%s1 + $0xe0] sm:$0xff]
  %v211 = vld [vmem:[%s1 + $0xe8] sm:$0xff]
  %v212 = vld [vmem:[%s1 + $0xf0] sm:$0xff]
  %v213 = vld [vmem:[%s1 + $0xf8] sm:$0xff]
  %v214 = vld [vmem:[%s1 + $0x100] sm:$0xff]
  %v215 = vld [vmem:[%s1 + $0x108] sm:$0xff]
  %v216 = vld [vmem:[%s1 + $0x110] sm:$0xff]
  %v217 = vld [vmem:[%s1 + $0x118] sm:$0xff]
  %v218 = vld [vmem:[%s1 + $0x120] sm:$0xff]
  %v219 = vld [vmem:[%s1 + $0x128] sm:$0xff]
  %v220 = vld [vmem:[%s1 + $0x130] sm:$0xff]
  %v221 = vld [vmem:[%s1 + $0x138] sm:$0xff]
  %v222 = vld [vmem:[%s1 + $0x140] sm:$0xff]
  %v223 = vld [vmem:[%s1 + $0x148] sm:$0xff]
  %v224 = vld [vmem:[%s1 + $0x150] sm:$0xff]
  %v225 = vld [vmem:[%s1 + $0x158] sm:$0xff]
  %v226 = vld [vmem:[%s1 + $0x160] sm:$0xff]
  %v227 = vld [vmem:[%s1 + $0x168] sm:$0xff]
  %v228 = vld [vmem:[%s1 + $0x170] sm:$0xff]
  %v229 = vld [vmem:[%s1 + $0x178] sm:$0xff]
  %v230 = vld [vmem:[%s2] sm:$0x1]
  %v232 = vperm.slane %v230, 0
  %234 = vmatpush.msra.mxu0 %v197
  %235 = vmatpush.msra.mxu0 %v196
  %236 = vmatpush.msra.mxu0 %v195
  %237 = vmatpush.msra.mxu0 %v194
  %238 = vmatpush.msra.mxu0 %v193
  %239 = vmatpush.msra.mxu0 %v192
  %240 = vmatpush.msra.mxu0 %v191
  %241 = vmatpush.msra.mxu0 %v190
  %242 = vmatpush.msra.mxu0 %v189
  %243 = vmatpush.msra.mxu0 %v188
  %244 = vmatpush.msra.mxu0 %v187
  %245 = vmatpush.msra.mxu0 %v186
  %246 = vmatpush.msra.mxu0 %v185
  %247 = vmatpush.msra.mxu0 %v184
  %248 = vmatpush.msra.mxu0 %v183
  %249 = vmatpush.msra.mxu0 %v182
  %250 = vmatmul.f32.gmra.mxu0 %v14
  %v251 = vpop.f32.mrf.mxu0
  %v252 = vadd.f32 %v232, %v251
  %253 = vmatmul.f32.gmra.mxu0 %v17
  %v254 = vpop.f32.mrf.mxu0
  %v255 = vadd.f32 %v232, %v254
  %256 = vmatmul.f32.gmra.mxu0 %v20
  %v257 = vpop.f32.mrf.mxu0
  %v258 = vadd.f32 %v232, %v257
  %259 = vmatmul.f32.gmra.mxu0 %v23
  %v260 = vpop.f32.mrf.mxu0
  %v261 = vadd.f32 %v232, %v260
  %262 = vmatmul.f32.gmra.mxu0 %v26
  %v263 = vpop.f32.mrf.mxu0
  %v264 = vadd.f32 %v232, %v263
  %265 = vmatmul.f32.gmra.mxu0 %v29
  %v266 = vpop.f32.mrf.mxu0
  %v267 = vadd.f32 %v232, %v266
  %268 = vmatmul.f32.gmra.mxu0 %v32
  %v269 = vpop.f32.mrf.mxu0
  %v270 = vadd.f32 %v232, %v269
  %271 = vmatmul.f32.gmra.mxu0 %v35
  %v272 = vpop.f32.mrf.mxu0
  %v273 = vadd.f32 %v232, %v272
  %274 = vmatmul.f32.gmra.mxu0 %v38
  %v275 = vpop.f32.mrf.mxu0
  %v276 = vadd.f32 %v232, %v275
  %277 = vmatmul.f32.gmra.mxu0 %v41
  %v278 = vpop.f32.mrf.mxu0
  %v279 = vadd.f32 %v232, %v278
  %280 = vmatmul.f32.gmra.mxu0 %v44
  %v281 = vpop.f32.mrf.mxu0
  %v282 = vadd.f32 %v232, %v281
  %283 = vmatmul.f32.gmra.mxu0 %v47
  %v284 = vpop.f32.mrf.mxu0
  %v285 = vadd.f32 %v232, %v284
  %286 = vmatmul.f32.gmra.mxu0 %v50
  %v287 = vpop.f32.mrf.mxu0
  %v288 = vadd.f32 %v232, %v287
  %289 = vmatmul.f32.gmra.mxu0 %v53
  %v290 = vpop.f32.mrf.mxu0
  %v291 = vadd.f32 %v232, %v290
  %292 = vmatmul.f32.gmra.mxu0 %v56
  %v293 = vpop.f32.mrf.mxu0
  %v294 = vadd.f32 %v232, %v293
  %295 = vmatmul.f32.gmra.mxu0 %v59
  %v296 = vpop.f32.mrf.mxu0
  %v297 = vadd.f32 %v232, %v296
  %298 = vmatmul.f32.gmra.mxu0 %v62
  %v299 = vpop.f32.mrf.mxu0
  %v300 = vadd.f32 %v232, %v299
  %301 = vmatmul.f32.gmra.mxu0 %v65
  %v302 = vpop.f32.mrf.mxu0
  %v303 = vadd.f32 %v232, %v302
  %304 = vmatmul.f32.gmra.mxu0 %v68
  %v305 = vpop.f32.mrf.mxu0
  %v306 = vadd.f32 %v232, %v305
  %307 = vmatmul.f32.gmra.mxu0 %v71
  %v308 = vpop.f32.mrf.mxu0
  %v309 = vadd.f32 %v232, %v308
  %310 = vmatmul.f32.gmra.mxu0 %v74
  %v311 = vpop.f32.mrf.mxu0
  %v312 = vadd.f32 %v232, %v311
  %313 = vmatmul.f32.gmra.mxu0 %v77
  %v314 = vpop.f32.mrf.mxu0
  %v315 = vadd.f32 %v232, %v314
  %316 = vmatmul.f32.gmra.mxu0 %v80
  %v317 = vpop.f32.mrf.mxu0
  %v318 = vadd.f32 %v232, %v317
  %319 = vmatmul.f32.gmra.mxu0 %v83
  %v320 = vpop.f32.mrf.mxu0
  %v321 = vadd.f32 %v232, %v320
  %322 = vmatmul.f32.gmra.mxu0 %v86
  %v323 = vpop.f32.mrf.mxu0
  %v324 = vadd.f32 %v232, %v323
  %325 = vmatmul.f32.gmra.mxu0 %v89
  %v326 = vpop.f32.mrf.mxu0
  %v327 = vadd.f32 %v232, %v326
  %328 = vmatmul.f32.gmra.mxu0 %v92
  %v329 = vpop.f32.mrf.mxu0
  %v330 = vadd.f32 %v232, %v329
  %331 = vmatmul.f32.gmra.mxu0 %v95
  %v332 = vpop.f32.mrf.mxu0
  %v333 = vadd.f32 %v232, %v332
  %334 = vmatmul.f32.gmra.mxu0 %v98
  %v335 = vpop.f32.mrf.mxu0
  %v336 = vadd.f32 %v232, %v335
  %337 = vmatmul.f32.gmra.mxu0 %v101
  %v338 = vpop.f32.mrf.mxu0
  %v339 = vadd.f32 %v232, %v338
  %340 = vmatmul.f32.gmra.mxu0 %v104
  %v341 = vpop.f32.mrf.mxu0
  %v342 = vadd.f32 %v232, %v341
  %343 = vmatmul.f32.gmra.mxu0 %v107
  %v344 = vpop.f32.mrf.mxu0
  %v345 = vadd.f32 %v232, %v344
  %346 = vmatmul.f32.gmra.mxu0 %v110
  %v347 = vpop.f32.mrf.mxu0
  %v348 = vadd.f32 %v232, %v347
  %349 = vmatmul.f32.gmra.mxu0 %v113
  %v350 = vpop.f32.mrf.mxu0
  %v351 = vadd.f32 %v232, %v350
  %352 = vmatmul.f32.gmra.mxu0 %v116
  %v353 = vpop.f32.mrf.mxu0
  %v354 = vadd.f32 %v232, %v353
  %355 = vmatmul.f32.gmra.mxu0 %v119
  %v356 = vpop.f32.mrf.mxu0
  %v357 = vadd.f32 %v232, %v356
  %358 = vmatmul.f32.gmra.mxu0 %v122
  %v359 = vpop.f32.mrf.mxu0
  %v360 = vadd.f32 %v232, %v359
  %361 = vmatmul.f32.gmra.mxu0 %v125
  %v362 = vpop.f32.mrf.mxu0
  %v363 = vadd.f32 %v232, %v362
  %364 = vmatmul.f32.gmra.mxu0 %v128
  %v365 = vpop.f32.mrf.mxu0
  %v366 = vadd.f32 %v232, %v365
  %367 = vmatmul.f32.gmra.mxu0 %v131
  %v368 = vpop.f32.mrf.mxu0
  %v369 = vadd.f32 %v232, %v368
  %370 = vmatmul.f32.gmra.mxu0 %v134
  %v371 = vpop.f32.mrf.mxu0
  %v372 = vadd.f32 %v232, %v371
  %373 = vmatmul.f32.gmra.mxu0 %v137
  %v374 = vpop.f32.mrf.mxu0
  %v375 = vadd.f32 %v232, %v374
  %376 = vmatmul.f32.gmra.mxu0 %v140
  %v377 = vpop.f32.mrf.mxu0
  %v378 = vadd.f32 %v232, %v377
  %379 = vmatmul.f32.gmra.mxu0 %v143
  %v380 = vpop.f32.mrf.mxu0
  %v381 = vadd.f32 %v232, %v380
  %382 = vmatmul.f32.gmra.mxu0 %v146
  %v383 = vpop.f32.mrf.mxu0
  %v384 = vadd.f32 %v232, %v383
  %385 = vmatmul.f32.gmra.mxu0 %v149
  %v386 = vpop.f32.mrf.mxu0
  %v387 = vadd.f32 %v232, %v386
  %388 = vmatmul.f32.gmra.mxu0 %v152
  %v389 = vpop.f32.mrf.mxu0
  %v390 = vadd.f32 %v232, %v389
  %391 = vmatmul.f32.gmra.mxu0 %v155
  %v392 = vpop.f32.mrf.mxu0
  %v393 = vadd.f32 %v232, %v392
  %394 = vmatmul.f32.gmra.mxu0 %v158
  %v395 = vpop.f32.mrf.mxu0
  %v396 = vadd.f32 %v232, %v395
  %397 = vmatmul.f32.gmra.mxu0 %v161
  %v398 = vpop.f32.mrf.mxu0
  %v399 = vadd.f32 %v232, %v398
  %400 = vmatmul.f32.gmra.mxu0 %v164
  %v401 = vpop.f32.mrf.mxu0
  %v402 = vadd.f32 %v232, %v401
  %403 = vmatmul.f32.gmra.mxu0 %v167
  %v404 = vpop.f32.mrf.mxu0
  %v405 = vadd.f32 %v232, %v404
  %406 = vmatmul.f32.gmra.mxu0 %v170
  %v407 = vpop.f32.mrf.mxu0
  %v408 = vadd.f32 %v232, %v407
  %409 = vmatmul.f32.gmra.mxu0 %v173
  %v410 = vpop.f32.mrf.mxu0
  %v411 = vadd.f32 %v232, %v410
  %412 = vmatmul.f32.gmra.mxu0 %v176
  %v413 = vpop.f32.mrf.mxu0
  %v414 = vadd.f32 %v232, %v413
  %415 = vmatmul.f32.gmra.mxu0 %v179
  %v416 = vpop.f32.mrf.mxu0
  %v417 = vadd.f32 %v232, %v416
  %418 = vdwg.mxu0
  %419 = vmatpush.msra.mxu0 %v213
  %420 = vmatpush.msra.mxu0 %v212
  %421 = vmatpush.msra.mxu0 %v211
  %422 = vmatpush.msra.mxu0 %v210
  %423 = vmatpush.msra.mxu0 %v209
  %424 = vmatpush.msra.mxu0 %v208
  %425 = vmatpush.msra.mxu0 %v207
  %426 = vmatpush.msra.mxu0 %v206
  %427 = vmatpush.msra.mxu0 %v205
  %428 = vmatpush.msra.mxu0 %v204
  %429 = vmatpush.msra.mxu0 %v203
  %430 = vmatpush.msra.mxu0 %v202
  %431 = vmatpush.msra.mxu0 %v201
  %432 = vmatpush.msra.mxu0 %v200
  %433 = vmatpush.msra.mxu0 %v199
  %434 = vmatpush.msra.mxu0 %v198
  %435 = vmatmul.f32.gmra.mxu0 %v15
  %v436 = vpop.f32.mrf.mxu0
  %v437 = vadd.f32 %v252, %v436
  %438 = vmatmul.f32.gmra.mxu0 %v18
  %v439 = vpop.f32.mrf.mxu0
  %v440 = vadd.f32 %v255, %v439
  %441 = vmatmul.f32.gmra.mxu0 %v21
  %v442 = vpop.f32.mrf.mxu0
  %v443 = vadd.f32 %v258, %v442
  %444 = vmatmul.f32.gmra.mxu0 %v24
  %v445 = vpop.f32.mrf.mxu0
  %v446 = vadd.f32 %v261, %v445
  %447 = vmatmul.f32.gmra.mxu0 %v27
  %v448 = vpop.f32.mrf.mxu0
  %v449 = vadd.f32 %v264, %v448
  %450 = vmatmul.f32.gmra.mxu0 %v30
  %v451 = vpop.f32.mrf.mxu0
  %v452 = vadd.f32 %v267, %v451
  %453 = vmatmul.f32.gmra.mxu0 %v33
  %v454 = vpop.f32.mrf.mxu0
  %v455 = vadd.f32 %v270, %v454
  %456 = vmatmul.f32.gmra.mxu0 %v36
  %v457 = vpop.f32.mrf.mxu0
  %v458 = vadd.f32 %v273, %v457
  %459 = vmatmul.f32.gmra.mxu0 %v39
  %v460 = vpop.f32.mrf.mxu0
  %v461 = vadd.f32 %v276, %v460
  %462 = vmatmul.f32.gmra.mxu0 %v42
  %v463 = vpop.f32.mrf.mxu0
  %v464 = vadd.f32 %v279, %v463
  %465 = vmatmul.f32.gmra.mxu0 %v45
  %v466 = vpop.f32.mrf.mxu0
  %v467 = vadd.f32 %v282, %v466
  %468 = vmatmul.f32.gmra.mxu0 %v48
  %v469 = vpop.f32.mrf.mxu0
  %v470 = vadd.f32 %v285, %v469
  %471 = vmatmul.f32.gmra.mxu0 %v51
  %v472 = vpop.f32.mrf.mxu0
  %v473 = vadd.f32 %v288, %v472
  %474 = vmatmul.f32.gmra.mxu0 %v54
  %v475 = vpop.f32.mrf.mxu0
  %v476 = vadd.f32 %v291, %v475
  %477 = vmatmul.f32.gmra.mxu0 %v57
  %v478 = vpop.f32.mrf.mxu0
  %v479 = vadd.f32 %v294, %v478
  %480 = vmatmul.f32.gmra.mxu0 %v60
  %v481 = vpop.f32.mrf.mxu0
  %v482 = vadd.f32 %v297, %v481
  %483 = vmatmul.f32.gmra.mxu0 %v63
  %v484 = vpop.f32.mrf.mxu0
  %v485 = vadd.f32 %v300, %v484
  %486 = vmatmul.f32.gmra.mxu0 %v66
  %v487 = vpop.f32.mrf.mxu0
  %v488 = vadd.f32 %v303, %v487
  %489 = vmatmul.f32.gmra.mxu0 %v69
  %v490 = vpop.f32.mrf.mxu0
  %v491 = vadd.f32 %v306, %v490
  %492 = vmatmul.f32.gmra.mxu0 %v72
  %v493 = vpop.f32.mrf.mxu0
  %v494 = vadd.f32 %v309, %v493
  %495 = vmatmul.f32.gmra.mxu0 %v75
  %v496 = vpop.f32.mrf.mxu0
  %v497 = vadd.f32 %v312, %v496
  %498 = vmatmul.f32.gmra.mxu0 %v78
  %v499 = vpop.f32.mrf.mxu0
  %v500 = vadd.f32 %v315, %v499
  %501 = vmatmul.f32.gmra.mxu0 %v81
  %v502 = vpop.f32.mrf.mxu0
  %v503 = vadd.f32 %v318, %v502
  %504 = vmatmul.f32.gmra.mxu0 %v84
  %v505 = vpop.f32.mrf.mxu0
  %v506 = vadd.f32 %v321, %v505
  %507 = vmatmul.f32.gmra.mxu0 %v87
  %v508 = vpop.f32.mrf.mxu0
  %v509 = vadd.f32 %v324, %v508
  %510 = vmatmul.f32.gmra.mxu0 %v90
  %v511 = vpop.f32.mrf.mxu0
  %v512 = vadd.f32 %v327, %v511
  %513 = vmatmul.f32.gmra.mxu0 %v93
  %v514 = vpop.f32.mrf.mxu0
  %v515 = vadd.f32 %v330, %v514
  %516 = vmatmul.f32.gmra.mxu0 %v96
  %v517 = vpop.f32.mrf.mxu0
  %v518 = vadd.f32 %v333, %v517
  %519 = vmatmul.f32.gmra.mxu0 %v99
  %v520 = vpop.f32.mrf.mxu0
  %v521 = vadd.f32 %v336, %v520
  %522 = vmatmul.f32.gmra.mxu0 %v102
  %v523 = vpop.f32.mrf.mxu0
  %v524 = vadd.f32 %v339, %v523
  %525 = vmatmul.f32.gmra.mxu0 %v105
  %v526 = vpop.f32.mrf.mxu0
  %v527 = vadd.f32 %v342, %v526
  %528 = vmatmul.f32.gmra.mxu0 %v108
  %v529 = vpop.f32.mrf.mxu0
  %v530 = vadd.f32 %v345, %v529
  %531 = vmatmul.f32.gmra.mxu0 %v111
  %v532 = vpop.f32.mrf.mxu0
  %v533 = vadd.f32 %v348, %v532
  %534 = vmatmul.f32.gmra.mxu0 %v114
  %v535 = vpop.f32.mrf.mxu0
  %v536 = vadd.f32 %v351, %v535
  %537 = vmatmul.f32.gmra.mxu0 %v117
  %v538 = vpop.f32.mrf.mxu0
  %v539 = vadd.f32 %v354, %v538
  %540 = vmatmul.f32.gmra.mxu0 %v120
  %v541 = vpop.f32.mrf.mxu0
  %v542 = vadd.f32 %v357, %v541
  %543 = vmatmul.f32.gmra.mxu0 %v123
  %v544 = vpop.f32.mrf.mxu0
  %v545 = vadd.f32 %v360, %v544
  %546 = vmatmul.f32.gmra.mxu0 %v126
  %v547 = vpop.f32.mrf.mxu0
  %v548 = vadd.f32 %v363, %v547
  %549 = vmatmul.f32.gmra.mxu0 %v129
  %v550 = vpop.f32.mrf.mxu0
  %v551 = vadd.f32 %v366, %v550
  %552 = vmatmul.f32.gmra.mxu0 %v132
  %v553 = vpop.f32.mrf.mxu0
  %v554 = vadd.f32 %v369, %v553
  %555 = vmatmul.f32.gmra.mxu0 %v135
  %v556 = vpop.f32.mrf.mxu0
  %v557 = vadd.f32 %v372, %v556
  %558 = vmatmul.f32.gmra.mxu0 %v138
  %v559 = vpop.f32.mrf.mxu0
  %v560 = vadd.f32 %v375, %v559
  %561 = vmatmul.f32.gmra.mxu0 %v141
  %v562 = vpop.f32.mrf.mxu0
  %v563 = vadd.f32 %v378, %v562
  %564 = vmatmul.f32.gmra.mxu0 %v144
  %v565 = vpop.f32.mrf.mxu0
  %v566 = vadd.f32 %v381, %v565
  %567 = vmatmul.f32.gmra.mxu0 %v147
  %v568 = vpop.f32.mrf.mxu0
  %v569 = vadd.f32 %v384, %v568
  %570 = vmatmul.f32.gmra.mxu0 %v150
  %v571 = vpop.f32.mrf.mxu0
  %v572 = vadd.f32 %v387, %v571
  %573 = vmatmul.f32.gmra.mxu0 %v153
  %v574 = vpop.f32.mrf.mxu0
  %v575 = vadd.f32 %v390, %v574
  %576 = vmatmul.f32.gmra.mxu0 %v156
  %v577 = vpop.f32.mrf.mxu0
  %v578 = vadd.f32 %v393, %v577
  %579 = vmatmul.f32.gmra.mxu0 %v159
  %v580 = vpop.f32.mrf.mxu0
  %v581 = vadd.f32 %v396, %v580
  %582 = vmatmul.f32.gmra.mxu0 %v162
  %v583 = vpop.f32.mrf.mxu0
  %v584 = vadd.f32 %v399, %v583
  %585 = vmatmul.f32.gmra.mxu0 %v165
  %v586 = vpop.f32.mrf.mxu0
  %v587 = vadd.f32 %v402, %v586
  %588 = vmatmul.f32.gmra.mxu0 %v168
  %v589 = vpop.f32.mrf.mxu0
  %v590 = vadd.f32 %v405, %v589
  %591 = vmatmul.f32.gmra.mxu0 %v171
  %v592 = vpop.f32.mrf.mxu0
  %v593 = vadd.f32 %v408, %v592
  %594 = vmatmul.f32.gmra.mxu0 %v174
  %v595 = vpop.f32.mrf.mxu0
  %v596 = vadd.f32 %v411, %v595
  %597 = vmatmul.f32.gmra.mxu0 %v177
  %v598 = vpop.f32.mrf.mxu0
  %v599 = vadd.f32 %v414, %v598
  %600 = vmatmul.f32.gmra.mxu0 %v180
  %v601 = vpop.f32.mrf.mxu0
  %v602 = vadd.f32 %v417, %v601
  %603 = vdwg.mxu0
  %604 = vmatpush.msra.mxu0 %v229
  %605 = vmatpush.msra.mxu0 %v228
  %606 = vmatpush.msra.mxu0 %v227
  %607 = vmatpush.msra.mxu0 %v226
  %608 = vmatpush.msra.mxu0 %v225
  %609 = vmatpush.msra.mxu0 %v224
  %610 = vmatpush.msra.mxu0 %v223
  %611 = vmatpush.msra.mxu0 %v222
  %612 = vmatpush.msra.mxu0 %v221
  %613 = vmatpush.msra.mxu0 %v220
  %614 = vmatpush.msra.mxu0 %v219
  %615 = vmatpush.msra.mxu0 %v218
  %616 = vmatpush.msra.mxu0 %v217
  %617 = vmatpush.msra.mxu0 %v216
  %618 = vmatpush.msra.mxu0 %v215
  %619 = vmatpush.msra.mxu0 %v214
  %620 = vmatmul.f32.gmra.mxu0 %v16
  %v621 = vpop.f32.mrf.mxu0
  %v622 = vadd.f32 %v437, %v621
  %623 = vmatmul.f32.gmra.mxu0 %v19
  %v624 = vpop.f32.mrf.mxu0
  %v625 = vadd.f32 %v440, %v624
  %626 = vmatmul.f32.gmra.mxu0 %v22
  %v627 = vpop.f32.mrf.mxu0
  %v628 = vadd.f32 %v443, %v627
  %629 = vmatmul.f32.gmra.mxu0 %v25
  %v630 = vpop.f32.mrf.mxu0
  %v631 = vadd.f32 %v446, %v630
  %632 = vmatmul.f32.gmra.mxu0 %v28
  %v633 = vpop.f32.mrf.mxu0
  %v634 = vadd.f32 %v449, %v633
  %635 = vmatmul.f32.gmra.mxu0 %v31
  %v636 = vpop.f32.mrf.mxu0
  %v637 = vadd.f32 %v452, %v636
  %638 = vmatmul.f32.gmra.mxu0 %v34
  %v639 = vpop.f32.mrf.mxu0
  %v640 = vadd.f32 %v455, %v639
  %641 = vmatmul.f32.gmra.mxu0 %v37
  %v642 = vpop.f32.mrf.mxu0
  %v643 = vadd.f32 %v458, %v642
  %644 = vmatmul.f32.gmra.mxu0 %v40
  %v645 = vpop.f32.mrf.mxu0
  %v646 = vadd.f32 %v461, %v645
  %647 = vmatmul.f32.gmra.mxu0 %v43
  %v648 = vpop.f32.mrf.mxu0
  %v649 = vadd.f32 %v464, %v648
  %650 = vmatmul.f32.gmra.mxu0 %v46
  %v651 = vpop.f32.mrf.mxu0
  %v652 = vadd.f32 %v467, %v651
  %653 = vmatmul.f32.gmra.mxu0 %v49
  %v654 = vpop.f32.mrf.mxu0
  %v655 = vadd.f32 %v470, %v654
  %656 = vmatmul.f32.gmra.mxu0 %v52
  %v657 = vpop.f32.mrf.mxu0
  %v658 = vadd.f32 %v473, %v657
  %659 = vmatmul.f32.gmra.mxu0 %v55
  %v660 = vpop.f32.mrf.mxu0
  %v661 = vadd.f32 %v476, %v660
  %662 = vmatmul.f32.gmra.mxu0 %v58
  %v663 = vpop.f32.mrf.mxu0
  %v664 = vadd.f32 %v479, %v663
  %665 = vmatmul.f32.gmra.mxu0 %v61
  %v666 = vpop.f32.mrf.mxu0
  %v667 = vadd.f32 %v482, %v666
  %668 = vmatmul.f32.gmra.mxu0 %v64
  %v669 = vpop.f32.mrf.mxu0
  %v670 = vadd.f32 %v485, %v669
  %671 = vmatmul.f32.gmra.mxu0 %v67
  %v672 = vpop.f32.mrf.mxu0
  %v673 = vadd.f32 %v488, %v672
  %674 = vmatmul.f32.gmra.mxu0 %v70
  %v675 = vpop.f32.mrf.mxu0
  %v676 = vadd.f32 %v491, %v675
  %677 = vmatmul.f32.gmra.mxu0 %v73
  %v678 = vpop.f32.mrf.mxu0
  %v679 = vadd.f32 %v494, %v678
  %680 = vmatmul.f32.gmra.mxu0 %v76
  %v681 = vpop.f32.mrf.mxu0
  %v682 = vadd.f32 %v497, %v681
  %683 = vmatmul.f32.gmra.mxu0 %v79
  %v684 = vpop.f32.mrf.mxu0
  %v685 = vadd.f32 %v500, %v684
  %686 = vmatmul.f32.gmra.mxu0 %v82
  %v687 = vpop.f32.mrf.mxu0
  %v688 = vadd.f32 %v503, %v687
  %689 = vmatmul.f32.gmra.mxu0 %v85
  %v690 = vpop.f32.mrf.mxu0
  %v691 = vadd.f32 %v506, %v690
  %692 = vmatmul.f32.gmra.mxu0 %v88
  %v693 = vpop.f32.mrf.mxu0
  %v694 = vadd.f32 %v509, %v693
  %695 = vmatmul.f32.gmra.mxu0 %v91
  %v696 = vpop.f32.mrf.mxu0
  %v697 = vadd.f32 %v512, %v696
  %698 = vmatmul.f32.gmra.mxu0 %v94
  %v699 = vpop.f32.mrf.mxu0
  %v700 = vadd.f32 %v515, %v699
  %701 = vmatmul.f32.gmra.mxu0 %v97
  %v702 = vpop.f32.mrf.mxu0
  %v703 = vadd.f32 %v518, %v702
  %704 = vmatmul.f32.gmra.mxu0 %v100
  %v705 = vpop.f32.mrf.mxu0
  %v706 = vadd.f32 %v521, %v705
  %707 = vmatmul.f32.gmra.mxu0 %v103
  %v708 = vpop.f32.mrf.mxu0
  %v709 = vadd.f32 %v524, %v708
  %710 = vmatmul.f32.gmra.mxu0 %v106
  %v711 = vpop.f32.mrf.mxu0
  %v712 = vadd.f32 %v527, %v711
  %713 = vmatmul.f32.gmra.mxu0 %v109
  %v714 = vpop.f32.mrf.mxu0
  %v715 = vadd.f32 %v530, %v714
  %716 = vmatmul.f32.gmra.mxu0 %v112
  %v717 = vpop.f32.mrf.mxu0
  %v718 = vadd.f32 %v533, %v717
  %719 = vmatmul.f32.gmra.mxu0 %v115
  %v720 = vpop.f32.mrf.mxu0
  %v721 = vadd.f32 %v536, %v720
  %722 = vmatmul.f32.gmra.mxu0 %v118
  %v723 = vpop.f32.mrf.mxu0
  %v724 = vadd.f32 %v539, %v723
  %725 = vmatmul.f32.gmra.mxu0 %v121
  %v726 = vpop.f32.mrf.mxu0
  %v727 = vadd.f32 %v542, %v726
  %728 = vmatmul.f32.gmra.mxu0 %v124
  %v729 = vpop.f32.mrf.mxu0
  %v730 = vadd.f32 %v545, %v729
  %731 = vmatmul.f32.gmra.mxu0 %v127
  %v732 = vpop.f32.mrf.mxu0
  %v733 = vadd.f32 %v548, %v732
  %734 = vmatmul.f32.gmra.mxu0 %v130
  %v735 = vpop.f32.mrf.mxu0
  %v736 = vadd.f32 %v551, %v735
  %737 = vmatmul.f32.gmra.mxu0 %v133
  %v738 = vpop.f32.mrf.mxu0
  %v739 = vadd.f32 %v554, %v738
  %740 = vmatmul.f32.gmra.mxu0 %v136
  %v741 = vpop.f32.mrf.mxu0
  %v742 = vadd.f32 %v557, %v741
  %743 = vmatmul.f32.gmra.mxu0 %v139
  %v744 = vpop.f32.mrf.mxu0
  %v745 = vadd.f32 %v560, %v744
  %746 = vmatmul.f32.gmra.mxu0 %v142
  %v747 = vpop.f32.mrf.mxu0
  %v748 = vadd.f32 %v563, %v747
  %749 = vmatmul.f32.gmra.mxu0 %v145
  %v750 = vpop.f32.mrf.mxu0
  %v751 = vadd.f32 %v566, %v750
  %752 = vmatmul.f32.gmra.mxu0 %v148
  %v753 = vpop.f32.mrf.mxu0
  %v754 = vadd.f32 %v569, %v753
  %755 = vmatmul.f32.gmra.mxu0 %v151
  %v756 = vpop.f32.mrf.mxu0
  %v757 = vadd.f32 %v572, %v756
  %758 = vmatmul.f32.gmra.mxu0 %v154
  %v759 = vpop.f32.mrf.mxu0
  %v760 = vadd.f32 %v575, %v759
  %761 = vmatmul.f32.gmra.mxu0 %v157
  %v762 = vpop.f32.mrf.mxu0
  %v763 = vadd.f32 %v578, %v762
  %764 = vmatmul.f32.gmra.mxu0 %v160
  %v765 = vpop.f32.mrf.mxu0
  %v766 = vadd.f32 %v581, %v765
  %767 = vmatmul.f32.gmra.mxu0 %v163
  %v768 = vpop.f32.mrf.mxu0
  %v769 = vadd.f32 %v584, %v768
  %770 = vmatmul.f32.gmra.mxu0 %v166
  %v771 = vpop.f32.mrf.mxu0
  %v772 = vadd.f32 %v587, %v771
  %773 = vmatmul.f32.gmra.mxu0 %v169
  %v774 = vpop.f32.mrf.mxu0
  %v775 = vadd.f32 %v590, %v774
  %776 = vmatmul.f32.gmra.mxu0 %v172
  %v777 = vpop.f32.mrf.mxu0
  %v778 = vadd.f32 %v593, %v777
  %779 = vmatmul.f32.gmra.mxu0 %v175
  %v780 = vpop.f32.mrf.mxu0
  %v781 = vadd.f32 %v596, %v780
  %782 = vmatmul.f32.gmra.mxu0 %v178
  %v783 = vpop.f32.mrf.mxu0
  %v784 = vadd.f32 %v599, %v783
  %785 = vmatmul.f32.gmra.mxu0 %v181
  %v786 = vpop.f32.mrf.mxu0
  %v787 = vadd.f32 %v602, %v786
  %788 = vdwg.mxu0
  %v789 = vmax.f32 %v622, 0.0
  %v790 = vmax.f32 %v625, 0.0
  %v791 = vmax.f32 %v628, 0.0
  %v792 = vmax.f32 %v631, 0.0
  %v793 = vmax.f32 %v634, 0.0
  %v794 = vmax.f32 %v637, 0.0
  %v795 = vmax.f32 %v640, 0.0
  %v796 = vmax.f32 %v643, 0.0
  %v797 = vmax.f32 %v646, 0.0
  %v798 = vmax.f32 %v649, 0.0
  %v799 = vmax.f32 %v652, 0.0
  %v800 = vmax.f32 %v655, 0.0
  %v801 = vmax.f32 %v658, 0.0
  %v802 = vmax.f32 %v661, 0.0
  %v803 = vmax.f32 %v664, 0.0
  %v804 = vmax.f32 %v667, 0.0
  %v805 = vmax.f32 %v670, 0.0
  %v806 = vmax.f32 %v673, 0.0
  %v807 = vmax.f32 %v676, 0.0
  %v808 = vmax.f32 %v679, 0.0
  %v809 = vmax.f32 %v682, 0.0
  %v810 = vmax.f32 %v685, 0.0
  %v811 = vmax.f32 %v688, 0.0
  %v812 = vmax.f32 %v691, 0.0
  %v813 = vmax.f32 %v694, 0.0
  %v814 = vmax.f32 %v697, 0.0
  %v815 = vmax.f32 %v700, 0.0
  %v816 = vmax.f32 %v703, 0.0
  %v817 = vmax.f32 %v706, 0.0
  %v818 = vmax.f32 %v709, 0.0
  %v819 = vmax.f32 %v712, 0.0
  %v820 = vmax.f32 %v715, 0.0
  %v821 = vmax.f32 %v718, 0.0
  %v822 = vmax.f32 %v721, 0.0
  %v823 = vmax.f32 %v724, 0.0
  %v824 = vmax.f32 %v727, 0.0
  %v825 = vmax.f32 %v730, 0.0
  %v826 = vmax.f32 %v733, 0.0
  %v827 = vmax.f32 %v736, 0.0
  %v828 = vmax.f32 %v739, 0.0
  %v829 = vmax.f32 %v742, 0.0
  %v830 = vmax.f32 %v745, 0.0
  %v831 = vmax.f32 %v748, 0.0
  %v832 = vmax.f32 %v751, 0.0
  %v833 = vmax.f32 %v754, 0.0
  %v834 = vmax.f32 %v757, 0.0
  %v835 = vmax.f32 %v760, 0.0
  %v836 = vmax.f32 %v763, 0.0
  %v837 = vmax.f32 %v766, 0.0
  %v838 = vmax.f32 %v769, 0.0
  %v839 = vmax.f32 %v772, 0.0
  %v840 = vmax.f32 %v775, 0.0
  %v841 = vmax.f32 %v778, 0.0
  %v842 = vmax.f32 %v781, 0.0
  %v843 = vmax.f32 %v784, 0.0
  %v844 = vmax.f32 %v787, 0.0
  %845 = vst [vmem:[%s3] sm:$0xff] %v789
  %846 = vst [vmem:[%s3 + $0x8] sm:$0xff] %v790
  %847 = vst [vmem:[%s3 + $0x10] sm:$0xff] %v791
  %848 = vst [vmem:[%s3 + $0x18] sm:$0xff] %v792
  %849 = vst [vmem:[%s3 + $0x20] sm:$0xff] %v793
  %850 = vst [vmem:[%s3 + $0x28] sm:$0xff] %v794
  %851 = vst [vmem:[%s3 + $0x30] sm:$0xff] %v795
  %852 = vst [vmem:[%s3 + $0x38] sm:$0xff] %v796
  %853 = vst [vmem:[%s3 + $0x40] sm:$0xff] %v797
  %854 = vst [vmem:[%s3 + $0x48] sm:$0xff] %v798
  %855 = vst [vmem:[%s3 + $0x50] sm:$0xff] %v799
  %856 = vst [vmem:[%s3 + $0x58] sm:$0xff] %v800
  %857 = vst [vmem:[%s3 + $0x60] sm:$0xff] %v801
  %858 = vst [vmem:[%s3 + $0x68] sm:$0xff] %v802
  %859 = vst [vmem:[%s3 + $0x70] sm:$0xff] %v803
  %860 = vst [vmem:[%s3 + $0x78] sm:$0xff] %v804
  %861 = vst [vmem:[%s3 + $0x80] sm:$0xff] %v805
  %862 = vst [vmem:[%s3 + $0x88] sm:$0xff] %v806
  %863 = vst [vmem:[%s3 + $0x90] sm:$0xff] %v807
  %864 = vst [vmem:[%s3 + $0x98] sm:$0xff] %v808
  %865 = vst [vmem:[%s3 + $0xa0] sm:$0xff] %v809
  %866 = vst [vmem:[%s3 + $0xa8] sm:$0xff] %v810
  %867 = vst [vmem:[%s3 + $0xb0] sm:$0xff] %v811
  %868 = vst [vmem:[%s3 + $0xb8] sm:$0xff] %v812
  %869 = vst [vmem:[%s3 + $0xc0] sm:$0xff] %v813
  %870 = vst [vmem:[%s3 + $0xc8] sm:$0xff] %v814
  %871 = vst [vmem:[%s3 + $0xd0] sm:$0xff] %v815
  %872 = vst [vmem:[%s3 + $0xd8] sm:$0xff] %v816
  %873 = vst [vmem:[%s3 + $0xe0] sm:$0xff] %v817
  %874 = vst [vmem:[%s3 + $0xe8] sm:$0xff] %v818
  %875 = vst [vmem:[%s3 + $0xf0] sm:$0xff] %v819
  %876 = vst [vmem:[%s3 + $0xf8] sm:$0xff] %v820
  %877 = vst [vmem:[%s3 + $0x100] sm:$0xff] %v821
  %878 = vst [vmem:[%s3 + $0x108] sm:$0xff] %v822
  %879 = vst [vmem:[%s3 + $0x110] sm:$0xff] %v823
  %880 = vst [vmem:[%s3 + $0x118] sm:$0xff] %v824
  %881 = vst [vmem:[%s3 + $0x120] sm:$0xff] %v825
  %882 = vst [vmem:[%s3 + $0x128] sm:$0xff] %v826
  %883 = vst [vmem:[%s3 + $0x130] sm:$0xff] %v827
  %884 = vst [vmem:[%s3 + $0x138] sm:$0xff] %v828
  %885 = vst [vmem:[%s3 + $0x140] sm:$0xff] %v829
  %886 = vst [vmem:[%s3 + $0x148] sm:$0xff] %v830
  %887 = vst [vmem:[%s3 + $0x150] sm:$0xff] %v831
  %888 = vst [vmem:[%s3 + $0x158] sm:$0xff] %v832
  %889 = vst [vmem:[%s3 + $0x160] sm:$0xff] %v833
  %890 = vst [vmem:[%s3 + $0x168] sm:$0xff] %v834
  %891 = vst [vmem:[%s3 + $0x170] sm:$0xff] %v835
  %892 = vst [vmem:[%s3 + $0x178] sm:$0xff] %v836
  %893 = vst [vmem:[%s3 + $0x180] sm:$0xff] %v837
  %894 = vst [vmem:[%s3 + $0x188] sm:$0xff] %v838
  %895 = vst [vmem:[%s3 + $0x190] sm:$0xff] %v839
  %896 = vst [vmem:[%s3 + $0x198] sm:$0xff] %v840
  %897 = vst [vmem:[%s3 + $0x1a0] sm:$0xff] %v841
  %898 = vst [vmem:[%s3 + $0x1a8] sm:$0xff] %v842
  %899 = vst [vmem:[%s3 + $0x1b0] sm:$0xff] %v843
  %900 = vst [vmem:[%s3 + $0x1b8] sm:$0xff] %v844
  // Predicated region
  $region14: #{molecular_icvae_forward.12} parent=0 // pred_check
    _
  $region15: #{molecular_icvae_forward.12} parent=0 // pred_check_branch
    %902 = sbr.rel (0) target = $region17
  $region16: #{molecular_icvae_forward.12} parent=0 // pred_region
    _
  $region17: #{molecular_icvae_forward.12} parent=0 // pred_fallthru
    _
  // Predicated region
  $region18: #{molecular_icvae_forward.12} parent=0 // pred_check
    _
  $region19: #{molecular_icvae_forward.12} parent=0 // pred_check_branch
    %904 = sbr.rel (0) target = $region21
  $region20: #{molecular_icvae_forward.12} parent=0 // pred_region
    _
  $region21: #{molecular_icvae_forward.12} parent=0 // pred_fallthru
    _

// kernel: molecular_icvae_forward.13
$region0: #{molecular_icvae_forward.13}
  #allocation0 [shape = 'u32[]', space=smem, size = 0x4, offset = 0x4, fixed_abs, tag = 'smem constant byte address 0x4 - core index']
  #allocation1 [shape = 'u32[72,128]{1,0:T(1,128)}', space=vmem, size = 0x9000, scoped, tag = 'internal scratch']
  %s0 = inlined_call_operand.vmem [shape: f32[2,1020,192], index: 0, kind: input, shape index: {}]
  %s1 = inlined_call_operand.vmem [shape: f32[192,128], index: 1, kind: input, shape index: {}]
  %s2 = inlined_call_operand.vmem [shape: f32[1,128], index: 2, kind: input, shape index: {}]
  %s3 = inlined_call_operand.vmem [shape: f32[1020,128], index: 3, kind: input, shape index: {}]
  %s4 = inlined_call_operand.vmem [shape: f32[2,1020,128], index: 4, kind: output, shape index: {}]
  %s5 = sld [smem:[#allocation0]]
  $region49: #{molecular_icvae_forward.13} parent=0
    _
  %s7 = ssub.s32 1, %s5
  %s8 = scalar_select 0, %s7, %s5
  loop: start=0, step=1, limit=4
  $region2: #{molecular_icvae_forward.13} parent=0 // loop_pre_header
    _
  $region3: #{molecular_icvae_forward.13} parent=0 // loop_header
    %s10 = sphi 0, %s14
    %p11 = scmp.ge.s32.totalorder %s10, 4
    %s20 = sphi 0, %s22
    %s23 = sphi 0, %s20
    %s24 = sphi 0, %s23
    %s40 = sphi 0, %s24
    %s44 = sphi 0, %s44
    %s46 = sphi 0, %s44
    %s47 = sphi 0, %s46
    %s61 = sphi 0, %s47
    %s65 = sphi 0, %s65
    %s67 = sphi 0, %s65
    %s68 = sphi 0, %s67
    %s82 = sphi 0, %s68
    %s86 = sphi 0, %s86
    %s88 = sphi 0, %s86
    %s89 = sphi 0, %s88
    %s103 = sphi 0, %s89
    %s109 = sphi 0, %s111
    %s112 = sphi 0, %s109
    %s113 = sphi 0, %s112
    %s129 = sphi 0, %s113
  $region4: #{molecular_icvae_forward.13} parent=0 // loop_header_branch
    %13 = sbr.rel (%p11) target = $region8
  $region5: #{molecular_icvae_forward.13} parent=0 // loop_body
    %s15 = ssub.s32 %s10, 1
    %s16 = ssub.s32 %s10, 2
    %s17 = sadd.s32 %s10, 1
    %s18 = ssub.s32 %s10, %s17
    %p19 = scmp.eq.s32.totalorder %s18, 0
    %s21 = sadd.s32 %s20, 1
    %s22 = scalar_select %p19, %s20, %s21
    %p25 = pneg %p19
    %p26 = scmp.eq.s32.totalorder %s10, 1
    %p27 = por %p25, %p26
    %p28 = scmp.ne.s32.totalorder %s20, %s23
    %p29 = scmp.eq.s32.totalorder %s10, 0
    %p30 = por %p28, %p29
    %p31 = scmp.ne.s32.totalorder %s20, %s23
    %p32 = scmp.eq.s32.totalorder %s15, 1
    %p33 = por %p31, %p32
    %p34 = scmp.ne.s32.totalorder %s23, %s24
    %p35 = scmp.eq.s32.totalorder %s15, 0
    %p36 = por %p34, %p35
    %p37 = scmp.ne.s32.totalorder %s23, %s24
    %p38 = scmp.eq.s32.totalorder %s16, 1
    %p39 = por %p37, %p38
    %p41 = scmp.ne.s32.totalorder %s24, %s40
    %p42 = scmp.eq.s32.totalorder %s16, 0
    %p43 = por %p41, %p42
    %s45 = sadd.s32 %s44, 1
    %p48 = scmp.eq.s32.totalorder %s10, 1
    %p49 = scmp.ne.s32.totalorder %s44, %s46
    %p50 = scmp.eq.s32.totalorder %s10, 0
    %p51 = por %p49, %p50
    %p52 = scmp.ne.s32.totalorder %s44, %s46
    %p53 = scmp.eq.s32.totalorder %s15, 1
    %p54 = por %p52, %p53
    %p55 = scmp.ne.s32.totalorder %s46, %s47
    %p56 = scmp.eq.s32.totalorder %s15, 0
    %p57 = por %p55, %p56
    %p58 = scmp.ne.s32.totalorder %s46, %s47
    %p59 = scmp.eq.s32.totalorder %s16, 1
    %p60 = por %p58, %p59
    %p62 = scmp.ne.s32.totalorder %s47, %s61
    %p63 = scmp.eq.s32.totalorder %s16, 0
    %p64 = por %p62, %p63
    %s66 = sadd.s32 %s65, 1
    %p69 = scmp.eq.s32.totalorder %s10, 1
    %p70 = scmp.ne.s32.totalorder %s65, %s67
    %p71 = scmp.eq.s32.totalorder %s10, 0
    %p72 = por %p70, %p71
    %p73 = scmp.ne.s32.totalorder %s65, %s67
    %p74 = scmp.eq.s32.totalorder %s15, 1
    %p75 = por %p73, %p74
    %p76 = scmp.ne.s32.totalorder %s67, %s68
    %p77 = scmp.eq.s32.totalorder %s15, 0
    %p78 = por %p76, %p77
    %p79 = scmp.ne.s32.totalorder %s67, %s68
    %p80 = scmp.eq.s32.totalorder %s16, 1
    %p81 = por %p79, %p80
    %p83 = scmp.ne.s32.totalorder %s68, %s82
    %p84 = scmp.eq.s32.totalorder %s16, 0
    %p85 = por %p83, %p84
    %s87 = sadd.s32 %s86, 1
    %p90 = scmp.eq.s32.totalorder %s10, 1
    %p91 = scmp.ne.s32.totalorder %s86, %s88
    %p92 = scmp.eq.s32.totalorder %s10, 0
    %p93 = por %p91, %p92
    %p94 = scmp.ne.s32.totalorder %s86, %s88
    %p95 = scmp.eq.s32.totalorder %s15, 1
    %p96 = por %p94, %p95
    %p97 = scmp.ne.s32.totalorder %s88, %s89
    %p98 = scmp.eq.s32.totalorder %s15, 0
    %p99 = por %p97, %p98
    %p100 = scmp.ne.s32.totalorder %s88, %s89
    %p101 = scmp.eq.s32.totalorder %s16, 1
    %p102 = por %p100, %p101
    %p104 = scmp.ne.s32.totalorder %s89, %s103
    %p105 = scmp.eq.s32.totalorder %s16, 0
    %p106 = por %p104, %p105
    %s107 = ssub.s32 %s10, %s17
    %p108 = scmp.eq.s32.totalorder %s107, 0
    %s110 = sadd.s32 %s109, 1
    %s111 = scalar_select %p108, %s109, %s110
    %p114 = pneg %p108
    %p115 = scmp.eq.s32.totalorder %s10, 1
    %p116 = por %p114, %p115
    %p117 = scmp.ne.s32.totalorder %s109, %s112
    %p118 = scmp.eq.s32.totalorder %s10, 0
    %p119 = por %p117, %p118
    %p120 = scmp.ne.s32.totalorder %s109, %s112
    %p121 = scmp.eq.s32.totalorder %s15, 1
    %p122 = por %p120, %p121
    %p123 = scmp.ne.s32.totalorder %s112, %s113
    %p124 = scmp.eq.s32.totalorder %s15, 0
    %p125 = por %p123, %p124
    %p126 = scmp.ne.s32.totalorder %s112, %s113
    %p127 = scmp.eq.s32.totalorder %s16, 1
    %p128 = por %p126, %p127
    %p130 = scmp.ne.s32.totalorder %s113, %s129
    %p131 = scmp.eq.s32.totalorder %s16, 0
    %p132 = por %p130, %p131
    %p133 = scmp.le.s32.totalorder 1, %s10
    %p134 = scmp.lt.s32.totalorder %s10, 3
    %p135 = pnand %p133, %p134
    %p136 = pneg %p135
    // Predicated region
    $region9: #{molecular_icvae_forward.13} parent=5 // pred_check
      _
    $region10: #{molecular_icvae_forward.13} parent=5 // pred_check_branch
      %138 = sbr.rel (%p135) target = $region12
    $region11: #{molecular_icvae_forward.13} parent=5 // pred_region
      %s139 = ssub.s32 %s10, 1
      // Predicated region
      $region13: #{molecular_icvae_forward.13} parent=11 // pred_check
        %p140 = pneg %p57
      $region14: #{molecular_icvae_forward.13} parent=11 // pred_check_branch
        %142 = sbr.rel (%p140) target = $region16
      $region15: #{molecular_icvae_forward.13} parent=11 // pred_region
        _
      $region16: #{molecular_icvae_forward.13} parent=11 // pred_fallthru
        _
      // Predicated region
      $region17: #{molecular_icvae_forward.13} parent=11 // pred_check
        %p143 = pneg %p78
      $region18: #{molecular_icvae_forward.13} parent=11 // pred_check_branch
        %145 = sbr.rel (%p143) target = $region20
      $region19: #{molecular_icvae_forward.13} parent=11 // pred_region
        _
      $region20: #{molecular_icvae_forward.13} parent=11 // pred_fallthru
        _
      // Predicated region
      $region21: #{molecular_icvae_forward.13} parent=11 // pred_check
        %p146 = pneg %p99
      $region22: #{molecular_icvae_forward.13} parent=11 // pred_check_branch
        %148 = sbr.rel (%p146) target = $region24
      $region23: #{molecular_icvae_forward.13} parent=11 // pred_region
        _
      $region24: #{molecular_icvae_forward.13} parent=11 // pred_fallthru
        _
    $region12: #{molecular_icvae_forward.13} parent=5 // pred_fallthru
      _
    %p149 = scmp.lt.s32.totalorder %s10, 2
    // Predicated region
    $region25: #{molecular_icvae_forward.13} parent=5 // pred_check
      %p150 = pneg %p149
    $region26: #{molecular_icvae_forward.13} parent=5 // pred_check_branch
      %152 = sbr.rel (%p150) target = $region28
    $region27: #{molecular_icvae_forward.13} parent=5 // pred_region
      // Predicated region
      $region29: #{molecular_icvae_forward.13} parent=27 // pred_check
        %p153 = pneg %p30
      $region30: #{molecular_icvae_forward.13} parent=27 // pred_check_branch
        %155 = sbr.rel (%p153) target = $region32
      $region31: #{molecular_icvae_forward.13} parent=27 // pred_region
        %p156 = scmp.lt.s32.totalorder %s10, 1
        %s157 = scalar_select %p156, %s10, 1
        %s158 = smul.addr %s157, 256
        %s159 = smul.addr %s158, 8
        %s160 = scalar_lea.vmem %s0, %s159
      $region32: #{molecular_icvae_forward.13} parent=27 // pred_fallthru
        _
    $region28: #{molecular_icvae_forward.13} parent=5 // pred_fallthru
      _
    %p161 = scmp.le.s32.totalorder 1, %s10
    %p162 = scmp.lt.s32.totalorder %s10, 3
    %p163 = pnand %p161, %p162
    %p164 = pneg %p163
    // Predicated region
    $region33: #{molecular_icvae_forward.13} parent=5 // pred_check
      _
    $region34: #{molecular_icvae_forward.13} parent=5 // pred_check_branch
      %166 = sbr.rel (%p163) target = $region36
    $region35: #{molecular_icvae_forward.13} parent=5 // pred_region
      %s167 = ssub.s32 %s10, 1
      %p168 = scmp.lt.s32.totalorder %s15, 1
      %s169 = scalar_select %p168, %s15, 1
      %s170 = smul.addr %s169, 256
      %s171 = smul.addr %s170, 8
      %s172 = scalar_lea.vmem %s0, %s171
      %p173 = pneg %p36
      %p174 = pneg %p33
      %p175 = pneg %p57
      %p176 = pneg %p54
      %p177 = pneg %p78
      %p178 = pneg %p75
      %p179 = pneg %p99
      %p180 = pneg %p96
      %p181 = pneg %p125
      %p182 = pneg %p122
      %p183 = scmp.lt.s32.totalorder %s15, 1
      %s184 = scalar_select %p183, %s15, 1
      %s185 = smul.addr %s184, 128
      %s186 = smul.addr %s185, 8
      %s187 = scalar_lea.vmem %s4, %s186
      %p188 = scmp.lt.s32.totalorder %s15, 1
      %s189 = scalar_select %p188, %s15, 1
      %s190 = smul.addr %s189, 256
      %s191 = smul.addr %s190, 8
      %s192 = scalar_lea.vmem %s0, %s191
      %p193 = scmp.lt.s32.totalorder %s15, 1
      %s194 = scalar_select %p193, %s15, 1
      %s195 = smul.addr %s194, 128
      %s196 = smul.addr %s195, 8
      %s197 = scalar_lea.vmem %s4, %s196
      %v198 = vld [vmem:[%s192] sm:$0xff]
      %v199 = vld [vmem:[%s192 + $0x8] sm:$0xff]
      %v200 = vld [vmem:[%s192 + $0x10] sm:$0xff]
      %v201 = vld [vmem:[%s192 + $0x18] sm:$0xff]
      %v202 = vld [vmem:[%s192 + $0x20] sm:$0xff]
      %v203 = vld [vmem:[%s192 + $0x28] sm:$0xff]
      %v204 = vld [vmem:[%s192 + $0x30] sm:$0xff]
      %v205 = vld [vmem:[%s192 + $0x38] sm:$0xff]
      %v206 = vld [vmem:[%s192 + $0x40] sm:$0xff]
      %v207 = vld [vmem:[%s192 + $0x48] sm:$0xff]
      %v208 = vld [vmem:[%s192 + $0x50] sm:$0xff]
      %v209 = vld [vmem:[%s192 + $0x58] sm:$0xff]
      %v210 = vld [vmem:[%s192 + $0x60] sm:$0xff]
      %v211 = vld [vmem:[%s192 + $0x68] sm:$0xff]
      %v212 = vld [vmem:[%s192 + $0x70] sm:$0xff]
      %v213 = vld [vmem:[%s192 + $0x78] sm:$0xff]
      %v214 = vld [vmem:[%s192 + $0x80] sm:$0xff]
      %v215 = vld [vmem:[%s192 + $0x88] sm:$0xff]
      %v216 = vld [vmem:[%s192 + $0x90] sm:$0xff]
      %v217 = vld [vmem:[%s192 + $0x98] sm:$0xff]
      %v218 = vld [vmem:[%s192 + $0xa0] sm:$0xff]
      %v219 = vld [vmem:[%s192 + $0xa8] sm:$0xff]
      %v220 = vld [vmem:[%s192 + $0xb0] sm:$0xff]
      %v221 = vld [vmem:[%s192 + $0xb8] sm:$0xff]
      %v222 = vld [vmem:[%s192 + $0xc0] sm:$0xff]
      %v223 = vld [vmem:[%s192 + $0xc8] sm:$0xff]
      %v224 = vld [vmem:[%s192 + $0xd0] sm:$0xff]
      %v225 = vld [vmem:[%s192 + $0xd8] sm:$0xff]
      %v226 = vld [vmem:[%s192 + $0xe0] sm:$0xff]
      %v227 = vld [vmem:[%s192 + $0xe8] sm:$0xff]
      %v228 = vld [vmem:[%s192 + $0xf0] sm:$0xff]
      %v229 = vld [vmem:[%s192 + $0xf8] sm:$0xff]
      %v230 = vld [vmem:[%s192 + $0x100] sm:$0xff]
      %v231 = vld [vmem:[%s192 + $0x108] sm:$0xff]
      %v232 = vld [vmem:[%s192 + $0x110] sm:$0xff]
      %v233 = vld [vmem:[%s192 + $0x118] sm:$0xff]
      %v234 = vld [vmem:[%s192 + $0x120] sm:$0xff]
      %v235 = vld [vmem:[%s192 + $0x128] sm:$0xff]
      %v236 = vld [vmem:[%s192 + $0x130] sm:$0xff]
      %v237 = vld [vmem:[%s192 + $0x138] sm:$0xff]
      %v238 = vld [vmem:[%s192 + $0x140] sm:$0xff]
      %v239 = vld [vmem:[%s192 + $0x148] sm:$0xff]
      %v240 = vld [vmem:[%s192 + $0x150] sm:$0xff]
      %v241 = vld [vmem:[%s192 + $0x158] sm:$0xff]
      %v242 = vld [vmem:[%s192 + $0x160] sm:$0xff]
      %v243 = vld [vmem:[%s192 + $0x168] sm:$0xff]
      %v244 = vld [vmem:[%s192 + $0x170] sm:$0xff]
      %v245 = vld [vmem:[%s192 + $0x178] sm:$0xff]
      %v246 = vld [vmem:[%s192 + $0x180] sm:$0xff]
      %v247 = vld [vmem:[%s192 + $0x188] sm:$0xff]
      %v248 = vld [vmem:[%s192 + $0x190] sm:$0xff]
      %v249 = vld [vmem:[%s192 + $0x198] sm:$0xff]
      %v250 = vld [vmem:[%s192 + $0x1a0] sm:$0xff]
      %v251 = vld [vmem:[%s192 + $0x1a8] sm:$0xff]
      %v252 = vld [vmem:[%s192 + $0x1b0] sm:$0xff]
      %v253 = vld [vmem:[%s192 + $0x1b8] sm:$0xff]
      %v254 = vld [vmem:[%s192 + $0x1c0] sm:$0xff]
      %v255 = vld [vmem:[%s192 + $0x1c8] sm:$0xff]
      %v256 = vld [vmem:[%s192 + $0x1d0] sm:$0xff]
      %v257 = vld [vmem:[%s192 + $0x1d8] sm:$0xff]
      %v258 = vld [vmem:[%s192 + $0x1e0] sm:$0xff]
      %v259 = vld [vmem:[%s192 + $0x1e8] sm:$0xff]
      %v260 = vld [vmem:[%s192 + $0x1f0] sm:$0xff]
      %v261 = vld [vmem:[%s192 + $0x1f8] sm:$0xff]
      %v262 = vld [vmem:[%s192 + $0x200] sm:$0xff]
      %v263 = vld [vmem:[%s192 + $0x208] sm:$0xff]
      %v264 = vld [vmem:[%s192 + $0x210] sm:$0xff]
      %v265 = vld [vmem:[%s192 + $0x218] sm:$0xff]
      %v266 = vld [vmem:[%s192 + $0x220] sm:$0xff]
      %v267 = vld [vmem:[%s192 + $0x228] sm:$0xff]
      %v268 = vld [vmem:[%s192 + $0x230] sm:$0xff]
      %v269 = vld [vmem:[%s192 + $0x238] sm:$0xff]
      %v270 = vld [vmem:[%s192 + $0x240] sm:$0xff]
      %v271 = vld [vmem:[%s192 + $0x248] sm:$0xff]
      %v272 = vld [vmem:[%s192 + $0x250] sm:$0xff]
      %v273 = vld [vmem:[%s192 + $0x258] sm:$0xff]
      %v274 = vld [vmem:[%s192 + $0x260] sm:$0xff]
      %v275 = vld [vmem:[%s192 + $0x268] sm:$0xff]
      %v276 = vld [vmem:[%s192 + $0x270] sm:$0xff]
      %v277 = vld [vmem:[%s192 + $0x278] sm:$0xff]
      %v278 = vld [vmem:[%s192 + $0x280] sm:$0xff]
      %v279 = vld [vmem:[%s192 + $0x288] sm:$0xff]
      %v280 = vld [vmem:[%s192 + $0x290] sm:$0xff]
      %v281 = vld [vmem:[%s192 + $0x298] sm:$0xff]
      %v282 = vld [vmem:[%s192 + $0x2a0] sm:$0xff]
      %v283 = vld [vmem:[%s192 + $0x2a8] sm:$0xff]
      %v284 = vld [vmem:[%s192 + $0x2b0] sm:$0xff]
      %v285 = vld [vmem:[%s192 + $0x2b8] sm:$0xff]
      %v286 = vld [vmem:[%s192 + $0x2c0] sm:$0xff]
      %v287 = vld [vmem:[%s192 + $0x2c8] sm:$0xff]
      %v288 = vld [vmem:[%s192 + $0x2d0] sm:$0xff]
      %v289 = vld [vmem:[%s192 + $0x2d8] sm:$0xff]
      %v290 = vld [vmem:[%s192 + $0x2e0] sm:$0xff]
      %v291 = vld [vmem:[%s192 + $0x2e8] sm:$0xff]
      %v292 = vld [vmem:[%s192 + $0x2f0] sm:$0xff]
      %v293 = vld [vmem:[%s192 + $0x2f8] sm:$0xff]
      %v294 = vld [vmem:[%s192 + $0x300] sm:$0xff]
      %v295 = vld [vmem:[%s192 + $0x308] sm:$0xff]
      %v296 = vld [vmem:[%s192 + $0x310] sm:$0xff]
      %v297 = vld [vmem:[%s192 + $0x318] sm:$0xff]
      %v298 = vld [vmem:[%s192 + $0x320] sm:$0xff]
      %v299 = vld [vmem:[%s192 + $0x328] sm:$0xff]
      %v300 = vld [vmem:[%s192 + $0x330] sm:$0xff]
      %v301 = vld [vmem:[%s192 + $0x338] sm:$0xff]
      %v302 = vld [vmem:[%s192 + $0x340] sm:$0xff]
      %v303 = vld [vmem:[%s192 + $0x348] sm:$0xff]
      %v304 = vld [vmem:[%s192 + $0x350] sm:$0xff]
      %v305 = vld [vmem:[%s192 + $0x358] sm:$0xff]
      %v306 = vld [vmem:[%s192 + $0x360] sm:$0xff]
      %v307 = vld [vmem:[%s192 + $0x368] sm:$0xff]
      %v308 = vld [vmem:[%s192 + $0x370] sm:$0xff]
      %v309 = vld [vmem:[%s192 + $0x378] sm:$0xff]
      %v310 = vld [vmem:[%s192 + $0x380] sm:$0xff]
      %v311 = vld [vmem:[%s192 + $0x388] sm:$0xff]
      %v312 = vld [vmem:[%s192 + $0x390] sm:$0xff]
      %v313 = vld [vmem:[%s192 + $0x398] sm:$0xff]
      %v314 = vld [vmem:[%s192 + $0x3a0] sm:$0xff]
      %v315 = vld [vmem:[%s192 + $0x3a8] sm:$0xff]
      %v316 = vld [vmem:[%s192 + $0x3b0] sm:$0xff]
      %v317 = vld [vmem:[%s192 + $0x3b8] sm:$0xff]
      %v318 = vld [vmem:[%s192 + $0x3c0] sm:$0xff]
      %v319 = vld [vmem:[%s192 + $0x3c8] sm:$0xff]
      %v320 = vld [vmem:[%s192 + $0x3d0] sm:$0xff]
      %v321 = vld [vmem:[%s192 + $0x3d8] sm:$0xff]
      %v322 = vld [vmem:[%s192 + $0x3e0] sm:$0xff]
      %v323 = vld [vmem:[%s192 + $0x3e8] sm:$0xff]
      %v324 = vld [vmem:[%s192 + $0x3f0] sm:$0xff]
      %v325 = vld [vmem:[%s192 + $0x3f8] sm:$0xff]
      %v326 = vld [vmem:[%s192 + $0x400] sm:$0xff]
      %v327 = vld [vmem:[%s192 + $0x408] sm:$0xff]
      %v328 = vld [vmem:[%s192 + $0x410] sm:$0xff]
      %v329 = vld [vmem:[%s192 + $0x418] sm:$0xff]
      %v330 = vld [vmem:[%s192 + $0x420] sm:$0xff]
      %v331 = vld [vmem:[%s192 + $0x428] sm:$0xff]
      %v332 = vld [vmem:[%s192 + $0x430] sm:$0xff]
      %v333 = vld [vmem:[%s192 + $0x438] sm:$0xff]
      %v334 = vld [vmem:[%s192 + $0x440] sm:$0xff]
      %v335 = vld [vmem:[%s192 + $0x448] sm:$0xff]
      %v336 = vld [vmem:[%s192 + $0x450] sm:$0xff]
      %v337 = vld [vmem:[%s192 + $0x458] sm:$0xff]
      %v338 = vld [vmem:[%s192 + $0x460] sm:$0xff]
      %v339 = vld [vmem:[%s192 + $0x468] sm:$0xff]
      %v340 = vld [vmem:[%s192 + $0x470] sm:$0xff]
      %v341 = vld [vmem:[%s192 + $0x478] sm:$0xff]
      %v342 = vld [vmem:[%s192 + $0x480] sm:$0xff]
      %v343 = vld [vmem:[%s192 + $0x488] sm:$0xff]
      %v344 = vld [vmem:[%s192 + $0x490] sm:$0xff]
      %v345 = vld [vmem:[%s192 + $0x498] sm:$0xff]
      %v346 = vld [vmem:[%s192 + $0x4a0] sm:$0xff]
      %v347 = vld [vmem:[%s192 + $0x4a8] sm:$0xff]
      %v348 = vld [vmem:[%s192 + $0x4b0] sm:$0xff]
      %v349 = vld [vmem:[%s192 + $0x4b8] sm:$0xff]
      %v350 = vld [vmem:[%s192 + $0x4c0] sm:$0xff]
      %v351 = vld [vmem:[%s192 + $0x4c8] sm:$0xff]
      %v352 = vld [vmem:[%s192 + $0x4d0] sm:$0xff]
      %v353 = vld [vmem:[%s192 + $0x4d8] sm:$0xff]
      %v354 = vld [vmem:[%s192 + $0x4e0] sm:$0xff]
      %v355 = vld [vmem:[%s192 + $0x4e8] sm:$0xff]
      %v356 = vld [vmem:[%s192 + $0x4f0] sm:$0xff]
      %v357 = vld [vmem:[%s192 + $0x4f8] sm:$0xff]
      %v358 = vld [vmem:[%s192 + $0x500] sm:$0xff]
      %v359 = vld [vmem:[%s192 + $0x508] sm:$0xff]
      %v360 = vld [vmem:[%s192 + $0x510] sm:$0xff]
      %v361 = vld [vmem:[%s192 + $0x518] sm:$0xff]
      %v362 = vld [vmem:[%s192 + $0x520] sm:$0xff]
      %v363 = vld [vmem:[%s192 + $0x528] sm:$0xff]
      %v364 = vld [vmem:[%s192 + $0x530] sm:$0xff]
      %v365 = vld [vmem:[%s192 + $0x538] sm:$0xff]
      %v366 = vld [vmem:[%s192 + $0x540] sm:$0xff]
      %v367 = vld [vmem:[%s192 + $0x548] sm:$0xff]
      %v368 = vld [vmem:[%s192 + $0x550] sm:$0xff]
      %v369 = vld [vmem:[%s192 + $0x558] sm:$0xff]
      %v370 = vld [vmem:[%s192 + $0x560] sm:$0xff]
      %v371 = vld [vmem:[%s192 + $0x568] sm:$0xff]
      %v372 = vld [vmem:[%s192 + $0x570] sm:$0xff]
      %v373 = vld [vmem:[%s192 + $0x578] sm:$0xff]
      %v374 = vld [vmem:[%s192 + $0x580] sm:$0xff]
      %v375 = vld [vmem:[%s192 + $0x588] sm:$0xff]
      %v376 = vld [vmem:[%s192 + $0x590] sm:$0xff]
      %v377 = vld [vmem:[%s192 + $0x598] sm:$0xff]
      %v378 = vld [vmem:[%s192 + $0x5a0] sm:$0xff]
      %v379 = vld [vmem:[%s192 + $0x5a8] sm:$0xff]
      %v380 = vld [vmem:[%s192 + $0x5b0] sm:$0xff]
      %v381 = vld [vmem:[%s192 + $0x5b8] sm:$0xff]
      %v382 = vld [vmem:[%s192 + $0x5c0] sm:$0xff]
      %v383 = vld [vmem:[%s192 + $0x5c8] sm:$0xff]
      %v384 = vld [vmem:[%s192 + $0x5d0] sm:$0xff]
      %v385 = vld [vmem:[%s192 + $0x5d8] sm:$0xff]
      %v386 = vld [vmem:[%s192 + $0x5e0] sm:$0xff]
      %v387 = vld [vmem:[%s192 + $0x5e8] sm:$0xff]
      %v388 = vld [vmem:[%s192 + $0x5f0] sm:$0xff]
      %v389 = vld [vmem:[%s192 + $0x5f8] sm:$0xff]
      %v390 = vld [vmem:[%s192 + $0x600] sm:$0xff]
      %v391 = vld [vmem:[%s192 + $0x608] sm:$0xff]
      %v392 = vld [vmem:[%s192 + $0x610] sm:$0xff]
      %v393 = vld [vmem:[%s192 + $0x618] sm:$0xff]
      %v394 = vld [vmem:[%s192 + $0x620] sm:$0xff]
      %v395 = vld [vmem:[%s192 + $0x628] sm:$0xff]
      %v396 = vld [vmem:[%s192 + $0x630] sm:$0xff]
      %v397 = vld [vmem:[%s192 + $0x638] sm:$0xff]
      %v398 = vld [vmem:[%s192 + $0x640] sm:$0xff]
      %v399 = vld [vmem:[%s192 + $0x648] sm:$0xff]
      %v400 = vld [vmem:[%s192 + $0x650] sm:$0xff]
      %v401 = vld [vmem:[%s192 + $0x658] sm:$0xff]
      %v402 = vld [vmem:[%s192 + $0x660] sm:$0xff]
      %v403 = vld [vmem:[%s192 + $0x668] sm:$0xff]
      %v404 = vld [vmem:[%s192 + $0x670] sm:$0xff]
      %v405 = vld [vmem:[%s192 + $0x678] sm:$0xff]
      %v406 = vld [vmem:[%s192 + $0x680] sm:$0xff]
      %v407 = vld [vmem:[%s192 + $0x688] sm:$0xff]
      %v408 = vld [vmem:[%s192 + $0x690] sm:$0xff]
      %v409 = vld [vmem:[%s192 + $0x698] sm:$0xff]
      %v410 = vld [vmem:[%s192 + $0x6a0] sm:$0xff]
      %v411 = vld [vmem:[%s192 + $0x6a8] sm:$0xff]
      %v412 = vld [vmem:[%s192 + $0x6b0] sm:$0xff]
      %v413 = vld [vmem:[%s192 + $0x6b8] sm:$0xff]
      %v414 = vld [vmem:[%s192 + $0x6c0] sm:$0xff]
      %v415 = vld [vmem:[%s192 + $0x6c8] sm:$0xff]
      %v416 = vld [vmem:[%s192 + $0x6d0] sm:$0xff]
      %v417 = vld [vmem:[%s192 + $0x6d8] sm:$0xff]
      %v418 = vld [vmem:[%s192 + $0x6e0] sm:$0xff]
      %v419 = vld [vmem:[%s192 + $0x6e8] sm:$0xff]
      %v420 = vld [vmem:[%s192 + $0x6f0] sm:$0xff]
      %v421 = vld [vmem:[%s192 + $0x6f8] sm:$0xff]
      %v422 = vld [vmem:[%s192 + $0x700] sm:$0xff]
      %v423 = vld [vmem:[%s192 + $0x708] sm:$0xff]
      %v424 = vld [vmem:[%s192 + $0x710] sm:$0xff]
      %v425 = vld [vmem:[%s192 + $0x718] sm:$0xff]
      %v426 = vld [vmem:[%s192 + $0x720] sm:$0xff]
      %v427 = vld [vmem:[%s192 + $0x728] sm:$0xff]
      %v428 = vld [vmem:[%s192 + $0x730] sm:$0xff]
      %v429 = vld [vmem:[%s192 + $0x738] sm:$0xff]
      %v430 = vld [vmem:[%s192 + $0x740] sm:$0xff]
      %v431 = vld [vmem:[%s192 + $0x748] sm:$0xff]
      %v432 = vld [vmem:[%s192 + $0x750] sm:$0xff]
      %v433 = vld [vmem:[%s192 + $0x758] sm:$0xff]
      %v434 = vld [vmem:[%s192 + $0x760] sm:$0xff]
      %v435 = vld [vmem:[%s192 + $0x768] sm:$0xff]
      %v436 = vld [vmem:[%s192 + $0x770] sm:$0xff]
      %v437 = vld [vmem:[%s192 + $0x778] sm:$0xff]
      %v438 = vld [vmem:[%s192 + $0x780] sm:$0xff]
      %v439 = vld [vmem:[%s192 + $0x788] sm:$0xff]
      %v440 = vld [vmem:[%s192 + $0x790] sm:$0xff]
      %v441 = vld [vmem:[%s192 + $0x798] sm:$0xff]
      %v442 = vld [vmem:[%s192 + $0x7a0] sm:$0xff]
      %v443 = vld [vmem:[%s192 + $0x7a8] sm:$0xff]
      %v444 = vld [vmem:[%s192 + $0x7b0] sm:$0xff]
      %v445 = vld [vmem:[%s192 + $0x7b8] sm:$0xff]
      %v446 = vld [vmem:[%s192 + $0x7c0] sm:$0xff]
      %v447 = vld [vmem:[%s192 + $0x7c8] sm:$0xff]
      %v448 = vld [vmem:[%s192 + $0x7d0] sm:$0xff]
      %v449 = vld [vmem:[%s192 + $0x7d8] sm:$0xff]
      %v450 = vld [vmem:[%s192 + $0x7e0] sm:$0xff]
      %v451 = vld [vmem:[%s192 + $0x7e8] sm:$0xff]
      %v452 = vld [vmem:[%s192 + $0x7f0] sm:$0xf]
      %v453 = vld [vmem:[%s192 + $0x7f8] sm:$0xf]
      %v454 = vld [vmem:[%s1] sm:$0xff]
      %v455 = vld [vmem:[%s1 + $0x8] sm:$0xff]
      %v456 = vld [vmem:[%s1 + $0x10] sm:$0xff]
      %v457 = vld [vmem:[%s1 + $0x18] sm:$0xff]
      %v458 = vld [vmem:[%s1 + $0x20] sm:$0xff]
      %v459 = vld [vmem:[%s1 + $0x28] sm:$0xff]
      %v460 = vld [vmem:[%s1 + $0x30] sm:$0xff]
      %v461 = vld [vmem:[%s1 + $0x38] sm:$0xff]
      %v462 = vld [vmem:[%s1 + $0x40] sm:$0xff]
      %v463 = vld [vmem:[%s1 + $0x48] sm:$0xff]
      %v464 = vld [vmem:[%s1 + $0x50] sm:$0xff]
      %v465 = vld [vmem:[%s1 + $0x58] sm:$0xff]
      %v466 = vld [vmem:[%s1 + $0x60] sm:$0xff]
      %v467 = vld [vmem:[%s1 + $0x68] sm:$0xff]
      %v468 = vld [vmem:[%s1 + $0x70] sm:$0xff]
      %v469 = vld [vmem:[%s1 + $0x78] sm:$0xff]
      %v470 = vld [vmem:[%s1 + $0x80] sm:$0xff]
      %v471 = vld [vmem:[%s1 + $0x88] sm:$0xff]
      %v472 = vld [vmem:[%s1 + $0x90] sm:$0xff]
      %v473 = vld [vmem:[%s1 + $0x98] sm:$0xff]
      %v474 = vld [vmem:[%s1 + $0xa0] sm:$0xff]
      %v475 = vld [vmem:[%s1 + $0xa8] sm:$0xff]
      %v476 = vld [vmem:[%s1 + $0xb0] sm:$0xff]
      %v477 = vld [vmem:[%s1 + $0xb8] sm:$0xff]
      %v478 = vld [vmem:[%s2] sm:$0x1]
      %v480 = vperm.slane %v478, 0
      %vm482 = vcmask 523264
      %v484 = vsel %vm482, %v199, 0
      %v487 = vsel %vm482, %v201, 0
      %v490 = vsel %vm482, %v203, 0
      %v493 = vsel %vm482, %v205, 0
      %v496 = vsel %vm482, %v207, 0
      %v499 = vsel %vm482, %v209, 0
      %v502 = vsel %vm482, %v211, 0
      %v505 = vsel %vm482, %v213, 0
      %v508 = vsel %vm482, %v215, 0
      %v511 = vsel %vm482, %v217, 0
      %v514 = vsel %vm482, %v219, 0
      %v517 = vsel %vm482, %v221, 0
      %v520 = vsel %vm482, %v223, 0
      %v523 = vsel %vm482, %v225, 0
      %v526 = vsel %vm482, %v227, 0
      %v529 = vsel %vm482, %v229, 0
      %v532 = vsel %vm482, %v231, 0
      %v535 = vsel %vm482, %v233, 0
      %v538 = vsel %vm482, %v235, 0
      %v541 = vsel %vm482, %v237, 0
      %v544 = vsel %vm482, %v239, 0
      %v547 = vsel %vm482, %v241, 0
      %v550 = vsel %vm482, %v243, 0
      %v553 = vsel %vm482, %v245, 0
      %v556 = vsel %vm482, %v247, 0
      %v559 = vsel %vm482, %v249, 0
      %v562 = vsel %vm482, %v251, 0
      %v565 = vsel %vm482, %v253, 0
      %v568 = vsel %vm482, %v255, 0
      %v571 = vsel %vm482, %v257, 0
      %v574 = vsel %vm482, %v259, 0
      %v577 = vsel %vm482, %v261, 0
      %v580 = vsel %vm482, %v263, 0
      %v583 = vsel %vm482, %v265, 0
      %v586 = vsel %vm482, %v267, 0
      %v589 = vsel %vm482, %v269, 0
      %v592 = vsel %vm482, %v271, 0
      %v595 = vsel %vm482, %v273, 0
      %v598 = vsel %vm482, %v275, 0
      %v601 = vsel %vm482, %v277, 0
      %v604 = vsel %vm482, %v279, 0
      %v607 = vsel %vm482, %v281, 0
      %v610 = vsel %vm482, %v283, 0
      %v613 = vsel %vm482, %v285, 0
      %v616 = vsel %vm482, %v287, 0
      %v619 = vsel %vm482, %v289, 0
      %v622 = vsel %vm482, %v291, 0
      %v625 = vsel %vm482, %v293, 0
      %v628 = vsel %vm482, %v295, 0
      %v631 = vsel %vm482, %v297, 0
      %v634 = vsel %vm482, %v299, 0
      %v637 = vsel %vm482, %v301, 0
      %v640 = vsel %vm482, %v303, 0
      %v643 = vsel %vm482, %v305, 0
      %v646 = vsel %vm482, %v307, 0
      %v649 = vsel %vm482, %v309, 0
      %v652 = vsel %vm482, %v311, 0
      %v655 = vsel %vm482, %v313, 0
      %v658 = vsel %vm482, %v315, 0
      %v661 = vsel %vm482, %v317, 0
      %v664 = vsel %vm482, %v319, 0
      %v667 = vsel %vm482, %v321, 0
      %v670 = vsel %vm482, %v323, 0
      %v673 = vsel %vm482, %v325, 0
      %v676 = vsel %vm482, %v327, 0
      %v679 = vsel %vm482, %v329, 0
      %v682 = vsel %vm482, %v331, 0
      %v685 = vsel %vm482, %v333, 0
      %v688 = vsel %vm482, %v335, 0
      %v691 = vsel %vm482, %v337, 0
      %v694 = vsel %vm482, %v339, 0
      %v697 = vsel %vm482, %v341, 0
      %v700 = vsel %vm482, %v343, 0
      %v703 = vsel %vm482, %v345, 0
      %v706 = vsel %vm482, %v347, 0
      %v709 = vsel %vm482, %v349, 0
      %v712 = vsel %vm482, %v351, 0
      %v715 = vsel %vm482, %v353, 0
      %v718 = vsel %vm482, %v355, 0
      %v721 = vsel %vm482, %v357, 0
      %v724 = vsel %vm482, %v359, 0
      %v727 = vsel %vm482, %v361, 0
      %v730 = vsel %vm482, %v363, 0
      %v733 = vsel %vm482, %v365, 0
      %v736 = vsel %vm482, %v367, 0
      %v739 = vsel %vm482, %v369, 0
      %v742 = vsel %vm482, %v371, 0
      %v745 = vsel %vm482, %v373, 0
      %v748 = vsel %vm482, %v375, 0
      %v751 = vsel %vm482, %v377, 0
      %v754 = vsel %vm482, %v379, 0
      %v757 = vsel %vm482, %v381, 0
      %v760 = vsel %vm482, %v383, 0
      %v763 = vsel %vm482, %v385, 0
      %v766 = vsel %vm482, %v387, 0
      %v769 = vsel %vm482, %v389, 0
      %v772 = vsel %vm482, %v391, 0
      %v775 = vsel %vm482, %v393, 0
      %v778 = vsel %vm482, %v395, 0
      %v781 = vsel %vm482, %v397, 0
      %v784 = vsel %vm482, %v399, 0
      %v787 = vsel %vm482, %v401, 0
      %v790 = vsel %vm482, %v403, 0
      %v793 = vsel %vm482, %v405, 0
      %v796 = vsel %vm482, %v407, 0
      %v799 = vsel %vm482, %v409, 0
      %v802 = vsel %vm482, %v411, 0
      %v805 = vsel %vm482, %v413, 0
      %v808 = vsel %vm482, %v415, 0
      %v811 = vsel %vm482, %v417, 0
      %v814 = vsel %vm482, %v419, 0
      %v817 = vsel %vm482, %v421, 0
      %v820 = vsel %vm482, %v423, 0
      %v823 = vsel %vm482, %v425, 0
      %v826 = vsel %vm482, %v427, 0
      %v829 = vsel %vm482, %v429, 0
      %v832 = vsel %vm482, %v431, 0
      %v835 = vsel %vm482, %v433, 0
      %v838 = vsel %vm482, %v435, 0
      %v841 = vsel %vm482, %v437, 0
      %v844 = vsel %vm482, %v439, 0
      %v847 = vsel %vm482, %v441, 0
      %v850 = vsel %vm482, %v443, 0
      %v853 = vsel %vm482, %v445, 0
      %v856 = vsel %vm482, %v447, 0
      %v859 = vsel %vm482, %v449, 0
      %v862 = vsel %vm482, %v451, 0
      %v865 = vsel %vm482, %v453, 0
      %867 = vmatpush.msra.mxu0 %v469
      %868 = vmatpush.msra.mxu0 %v468
      %869 = vmatpush.msra.mxu0 %v467
      %870 = vmatpush.msra.mxu0 %v466
      %871 = vmatpush.msra.mxu0 %v465
      %872 = vmatpush.msra.mxu0 %v464
      %873 = vmatpush.msra.mxu0 %v463
      %874 = vmatpush.msra.mxu0 %v462
      %875 = vmatpush.msra.mxu0 %v461
      %876 = vmatpush.msra.mxu0 %v460
      %877 = vmatpush.msra.mxu0 %v459
      %878 = vmatpush.msra.mxu0 %v458
      %879 = vmatpush.msra.mxu0 %v457
      %880 = vmatpush.msra.mxu0 %v456
      %881 = vmatpush.msra.mxu0 %v455
      %882 = vmatpush.msra.mxu0 %v454
      %883 = vmatmul.f32.gmra.mxu0 %v198
      %v884 = vpop.f32.mrf.mxu0
      %v885 = vadd.f32 %v480, %v884
      %886 = vmatmul.f32.gmra.mxu0 %v200
      %v887 = vpop.f32.mrf.mxu0
      %v888 = vadd.f32 %v480, %v887
      %889 = vmatmul.f32.gmra.mxu0 %v202
      %v890 = vpop.f32.mrf.mxu0
      %v891 = vadd.f32 %v480, %v890
      %892 = vmatmul.f32.gmra.mxu0 %v204
      %v893 = vpop.f32.mrf.mxu0
      %v894 = vadd.f32 %v480, %v893
      %895 = vmatmul.f32.gmra.mxu0 %v206
      %v896 = vpop.f32.mrf.mxu0
      %v897 = vadd.f32 %v480, %v896
      %898 = vmatmul.f32.gmra.mxu0 %v208
      %v899 = vpop.f32.mrf.mxu0
      %v900 = vadd.f32 %v480, %v899
      %901 = vmatmul.f32.gmra.mxu0 %v210
      %v902 = vpop.f32.mrf.mxu0
      %v903 = vadd.f32 %v480, %v902
      %904 = vmatmul.f32.gmra.mxu0 %v212
      %v905 = vpop.f32.mrf.mxu0
      %v906 = vadd.f32 %v480, %v905
      %907 = vmatmul.f32.gmra.mxu0 %v214
      %v908 = vpop.f32.mrf.mxu0
      %v909 = vadd.f32 %v480, %v908
      %910 = vmatmul.f32.gmra.mxu0 %v216
      %v911 = vpop.f32.mrf.mxu0
      %v912 = vadd.f32 %v480, %v911
      %913 = vmatmul.f32.gmra.mxu0 %v218
      %v914 = vpop.f32.mrf.mxu0
      %v915 = vadd.f32 %v480, %v914
      %916 = vmatmul.f32.gmra.mxu0 %v220
      %v917 = vpop.f32.mrf.mxu0
      %v918 = vadd.f32 %v480, %v917
      %919 = vmatmul.f32.gmra.mxu0 %v222
      %v920 = vpop.f32.mrf.mxu0
      %v921 = vadd.f32 %v480, %v920
      %922 = vmatmul.f32.gmra.mxu0 %v224
      %v923 = vpop.f32.mrf.mxu0
      %v924 = vadd.f32 %v480, %v923
      %925 = vmatmul.f32.gmra.mxu0 %v226
      %v926 = vpop.f32.mrf.mxu0
      %v927 = vadd.f32 %v480, %v926
      %928 = vmatmul.f32.gmra.mxu0 %v228
      %v929 = vpop.f32.mrf.mxu0
      %v930 = vadd.f32 %v480, %v929
      %931 = vmatmul.f32.gmra.mxu0 %v230
      %v932 = vpop.f32.mrf.mxu0
      %v933 = vadd.f32 %v480, %v932
      %934 = vmatmul.f32.gmra.mxu0 %v232
      %v935 = vpop.f32.mrf.mxu0
      %v936 = vadd.f32 %v480, %v935
      %937 = vmatmul.f32.gmra.mxu0 %v234
      %v938 = vpop.f32.mrf.mxu0
      %v939 = vadd.f32 %v480, %v938
      %940 = vmatmul.f32.gmra.mxu0 %v236
      %v941 = vpop.f32.mrf.mxu0
      %v942 = vadd.f32 %v480, %v941
      %943 = vmatmul.f32.gmra.mxu0 %v238
      %v944 = vpop.f32.mrf.mxu0
      %v945 = vadd.f32 %v480, %v944
      %946 = vmatmul.f32.gmra.mxu0 %v240
      %v947 = vpop.f32.mrf.mxu0
      %v948 = vadd.f32 %v480, %v947
      %949 = vmatmul.f32.gmra.mxu0 %v242
      %v950 = vpop.f32.mrf.mxu0
      %v951 = vadd.f32 %v480, %v950
      %952 = vmatmul.f32.gmra.mxu0 %v244
      %v953 = vpop.f32.mrf.mxu0
      %v954 = vadd.f32 %v480, %v953
      %955 = vmatmul.f32.gmra.mxu0 %v246
      %v956 = vpop.f32.mrf.mxu0
      %v957 = vadd.f32 %v480, %v956
      %958 = vmatmul.f32.gmra.mxu0 %v248
      %v959 = vpop.f32.mrf.mxu0
      %v960 = vadd.f32 %v480, %v959
      %961 = vmatmul.f32.gmra.mxu0 %v250
      %v962 = vpop.f32.mrf.mxu0
      %v963 = vadd.f32 %v480, %v962
      %964 = vmatmul.f32.gmra.mxu0 %v252
      %v965 = vpop.f32.mrf.mxu0
      %v966 = vadd.f32 %v480, %v965
      %967 = vmatmul.f32.gmra.mxu0 %v254
      %v968 = vpop.f32.mrf.mxu0
      %v969 = vadd.f32 %v480, %v968
      %970 = vmatmul.f32.gmra.mxu0 %v256
      %v971 = vpop.f32.mrf.mxu0
      %v972 = vadd.f32 %v480, %v971
      %973 = vmatmul.f32.gmra.mxu0 %v258
      %v974 = vpop.f32.mrf.mxu0
      %v975 = vadd.f32 %v480, %v974
      %976 = vmatmul.f32.gmra.mxu0 %v260
      %v977 = vpop.f32.mrf.mxu0
      %v978 = vadd.f32 %v480, %v977
      %979 = vmatmul.f32.gmra.mxu0 %v262
      %v980 = vpop.f32.mrf.mxu0
      %v981 = vadd.f32 %v480, %v980
      %982 = vmatmul.f32.gmra.mxu0 %v264
      %v983 = vpop.f32.mrf.mxu0
      %v984 = vadd.f32 %v480, %v983
      %985 = vmatmul.f32.gmra.mxu0 %v266
      %v986 = vpop.f32.mrf.mxu0
      %v987 = vadd.f32 %v480, %v986
      %988 = vmatmul.f32.gmra.mxu0 %v268
      %v989 = vpop.f32.mrf.mxu0
      %v990 = vadd.f32 %v480, %v989
      %991 = vmatmul.f32.gmra.mxu0 %v270
      %v992 = vpop.f32.mrf.mxu0
      %v993 = vadd.f32 %v480, %v992
      %994 = vmatmul.f32.gmra.mxu0 %v272
      %v995 = vpop.f32.mrf.mxu0
      %v996 = vadd.f32 %v480, %v995
      %997 = vmatmul.f32.gmra.mxu0 %v274
      %v998 = vpop.f32.mrf.mxu0
      %v999 = vadd.f32 %v480, %v998
      %1000 = vmatmul.f32.gmra.mxu0 %v276
      %v1001 = vpop.f32.mrf.mxu0
      %v1002 = vadd.f32 %v480, %v1001
      %1003 = vmatmul.f32.gmra.mxu0 %v278
      %v1004 = vpop.f32.mrf.mxu0
      %v1005 = vadd.f32 %v480, %v1004
      %1006 = vmatmul.f32.gmra.mxu0 %v280
      %v1007 = vpop.f32.mrf.mxu0
      %v1008 = vadd.f32 %v480, %v1007
      %1009 = vmatmul.f32.gmra.mxu0 %v282
      %v1010 = vpop.f32.mrf.mxu0
      %v1011 = vadd.f32 %v480, %v1010
      %1012 = vmatmul.f32.gmra.mxu0 %v284
      %v1013 = vpop.f32.mrf.mxu0
      %v1014 = vadd.f32 %v480, %v1013
      %1015 = vmatmul.f32.gmra.mxu0 %v286
      %v1016 = vpop.f32.mrf.mxu0
      %v1017 = vadd.f32 %v480, %v1016
      %1018 = vmatmul.f32.gmra.mxu0 %v288
      %v1019 = vpop.f32.mrf.mxu0
      %v1020 = vadd.f32 %v480, %v1019
      %1021 = vmatmul.f32.gmra.mxu0 %v290
      %v1022 = vpop.f32.mrf.mxu0
      %v1023 = vadd.f32 %v480, %v1022
      %1024 = vmatmul.f32.gmra.mxu0 %v292
      %v1025 = vpop.f32.mrf.mxu0
      %v1026 = vadd.f32 %v480, %v1025
      %1027 = vmatmul.f32.gmra.mxu0 %v294
      %v1028 = vpop.f32.mrf.mxu0
      %v1029 = vadd.f32 %v480, %v1028
      %1030 = vmatmul.f32.gmra.mxu0 %v296
      %v1031 = vpop.f32.mrf.mxu0
      %v1032 = vadd.f32 %v480, %v1031
      %1033 = vmatmul.f32.gmra.mxu0 %v298
      %v1034 = vpop.f32.mrf.mxu0
      %v1035 = vadd.f32 %v480, %v1034
      %1036 = vmatmul.f32.gmra.mxu0 %v300
      %v1037 = vpop.f32.mrf.mxu0
      %v1038 = vadd.f32 %v480, %v1037
      %1039 = vmatmul.f32.gmra.mxu0 %v302
      %v1040 = vpop.f32.mrf.mxu0
      %v1041 = vadd.f32 %v480, %v1040
      %1042 = vmatmul.f32.gmra.mxu0 %v304
      %v1043 = vpop.f32.mrf.mxu0
      %v1044 = vadd.f32 %v480, %v1043
      %1045 = vmatmul.f32.gmra.mxu0 %v306
      %v1046 = vpop.f32.mrf.mxu0
      %v1047 = vadd.f32 %v480, %v1046
      %1048 = vmatmul.f32.gmra.mxu0 %v308
      %v1049 = vpop.f32.mrf.mxu0
      %v1050 = vadd.f32 %v480, %v1049
      %1051 = vmatmul.f32.gmra.mxu0 %v310
      %v1052 = vpop.f32.mrf.mxu0
      %v1053 = vadd.f32 %v480, %v1052
      %1054 = vmatmul.f32.gmra.mxu0 %v312
      %v1055 = vpop.f32.mrf.mxu0
      %v1056 = vadd.f32 %v480, %v1055
      %1057 = vmatmul.f32.gmra.mxu0 %v314
      %v1058 = vpop.f32.mrf.mxu0
      %v1059 = vadd.f32 %v480, %v1058
      %1060 = vmatmul.f32.gmra.mxu0 %v316
      %v1061 = vpop.f32.mrf.mxu0
      %v1062 = vadd.f32 %v480, %v1061
      %1063 = vmatmul.f32.gmra.mxu0 %v318
      %v1064 = vpop.f32.mrf.mxu0
      %v1065 = vadd.f32 %v480, %v1064
      %1066 = vmatmul.f32.gmra.mxu0 %v320
      %v1067 = vpop.f32.mrf.mxu0
      %v1068 = vadd.f32 %v480, %v1067
      %1069 = vmatmul.f32.gmra.mxu0 %v322
      %v1070 = vpop.f32.mrf.mxu0
      %v1071 = vadd.f32 %v480, %v1070
      %1072 = vmatmul.f32.gmra.mxu0 %v324
      %v1073 = vpop.f32.mrf.mxu0
      %v1074 = vadd.f32 %v480, %v1073
      %1075 = vmatmul.f32.gmra.mxu0 %v326
      %v1076 = vpop.f32.mrf.mxu0
      %v1077 = vadd.f32 %v480, %v1076
      %1078 = vmatmul.f32.gmra.mxu0 %v328
      %v1079 = vpop.f32.mrf.mxu0
      %v1080 = vadd.f32 %v480, %v1079
      %1081 = vmatmul.f32.gmra.mxu0 %v330
      %v1082 = vpop.f32.mrf.mxu0
      %v1083 = vadd.f32 %v480, %v1082
      %1084 = vmatmul.f32.gmra.mxu0 %v332
      %v1085 = vpop.f32.mrf.mxu0
      %v1086 = vadd.f32 %v480, %v1085
      %1087 = vmatmul.f32.gmra.mxu0 %v334
      %v1088 = vpop.f32.mrf.mxu0
      %v1089 = vadd.f32 %v480, %v1088
      %1090 = vmatmul.f32.gmra.mxu0 %v336
      %v1091 = vpop.f32.mrf.mxu0
      %v1092 = vadd.f32 %v480, %v1091
      %1093 = vmatmul.f32.gmra.mxu0 %v338
      %v1094 = vpop.f32.mrf.mxu0
      %v1095 = vadd.f32 %v480, %v1094
      %1096 = vmatmul.f32.gmra.mxu0 %v340
      %v1097 = vpop.f32.mrf.mxu0
      %v1098 = vadd.f32 %v480, %v1097
      %1099 = vmatmul.f32.gmra.mxu0 %v342
      %v1100 = vpop.f32.mrf.mxu0
      %v1101 = vadd.f32 %v480, %v1100
      %1102 = vmatmul.f32.gmra.mxu0 %v344
      %v1103 = vpop.f32.mrf.mxu0
      %v1104 = vadd.f32 %v480, %v1103
      %1105 = vmatmul.f32.gmra.mxu0 %v346
      %v1106 = vpop.f32.mrf.mxu0
      %v1107 = vadd.f32 %v480, %v1106
      %1108 = vmatmul.f32.gmra.mxu0 %v348
      %v1109 = vpop.f32.mrf.mxu0
      %v1110 = vadd.f32 %v480, %v1109
      %1111 = vmatmul.f32.gmra.mxu0 %v350
      %v1112 = vpop.f32.mrf.mxu0
      %v1113 = vadd.f32 %v480, %v1112
      %1114 = vmatmul.f32.gmra.mxu0 %v352
      %v1115 = vpop.f32.mrf.mxu0
      %v1116 = vadd.f32 %v480, %v1115
      %1117 = vmatmul.f32.gmra.mxu0 %v354
      %v1118 = vpop.f32.mrf.mxu0
      %v1119 = vadd.f32 %v480, %v1118
      %1120 = vmatmul.f32.gmra.mxu0 %v356
      %v1121 = vpop.f32.mrf.mxu0
      %v1122 = vadd.f32 %v480, %v1121
      %1123 = vmatmul.f32.gmra.mxu0 %v358
      %v1124 = vpop.f32.mrf.mxu0
      %v1125 = vadd.f32 %v480, %v1124
      %1126 = vmatmul.f32.gmra.mxu0 %v360
      %v1127 = vpop.f32.mrf.mxu0
      %v1128 = vadd.f32 %v480, %v1127
      %1129 = vmatmul.f32.gmra.mxu0 %v362
      %v1130 = vpop.f32.mrf.mxu0
      %v1131 = vadd.f32 %v480, %v1130
      %1132 = vmatmul.f32.gmra.mxu0 %v364
      %v1133 = vpop.f32.mrf.mxu0
      %v1134 = vadd.f32 %v480, %v1133
      %1135 = vmatmul.f32.gmra.mxu0 %v366
      %v1136 = vpop.f32.mrf.mxu0
      %v1137 = vadd.f32 %v480, %v1136
      %1138 = vmatmul.f32.gmra.mxu0 %v368
      %v1139 = vpop.f32.mrf.mxu0
      %v1140 = vadd.f32 %v480, %v1139
      %1141 = vmatmul.f32.gmra.mxu0 %v370
      %v1142 = vpop.f32.mrf.mxu0
      %v1143 = vadd.f32 %v480, %v1142
      %1144 = vmatmul.f32.gmra.mxu0 %v372
      %v1145 = vpop.f32.mrf.mxu0
      %v1146 = vadd.f32 %v480, %v1145
      %1147 = vmatmul.f32.gmra.mxu0 %v374
      %v1148 = vpop.f32.mrf.mxu0
      %v1149 = vadd.f32 %v480, %v1148
      %1150 = vmatmul.f32.gmra.mxu0 %v376
      %v1151 = vpop.f32.mrf.mxu0
      %v1152 = vadd.f32 %v480, %v1151
      %1153 = vmatmul.f32.gmra.mxu0 %v378
      %v1154 = vpop.f32.mrf.mxu0
      %v1155 = vadd.f32 %v480, %v1154
      %1156 = vmatmul.f32.gmra.mxu0 %v380
      %v1157 = vpop.f32.mrf.mxu0
      %v1158 = vadd.f32 %v480, %v1157
      %1159 = vmatmul.f32.gmra.mxu0 %v382
      %v1160 = vpop.f32.mrf.mxu0
      %v1161 = vadd.f32 %v480, %v1160
      %1162 = vmatmul.f32.gmra.mxu0 %v384
      %v1163 = vpop.f32.mrf.mxu0
      %v1164 = vadd.f32 %v480, %v1163
      %1165 = vmatmul.f32.gmra.mxu0 %v386
      %v1166 = vpop.f32.mrf.mxu0
      %v1167 = vadd.f32 %v480, %v1166
      %1168 = vmatmul.f32.gmra.mxu0 %v388
      %v1169 = vpop.f32.mrf.mxu0
      %v1170 = vadd.f32 %v480, %v1169
      %1171 = vmatmul.f32.gmra.mxu0 %v390
      %v1172 = vpop.f32.mrf.mxu0
      %v1173 = vadd.f32 %v480, %v1172
      %1174 = vmatmul.f32.gmra.mxu0 %v392
      %v1175 = vpop.f32.mrf.mxu0
      %v1176 = vadd.f32 %v480, %v1175
      %1177 = vmatmul.f32.gmra.mxu0 %v394
      %v1178 = vpop.f32.mrf.mxu0
      %v1179 = vadd.f32 %v480, %v1178
      %1180 = vmatmul.f32.gmra.mxu0 %v396
      %v1181 = vpop.f32.mrf.mxu0
      %v1182 = vadd.f32 %v480, %v1181
      %1183 = vmatmul.f32.gmra.mxu0 %v398
      %v1184 = vpop.f32.mrf.mxu0
      %v1185 = vadd.f32 %v480, %v1184
      %1186 = vmatmul.f32.gmra.mxu0 %v400
      %v1187 = vpop.f32.mrf.mxu0
      %v1188 = vadd.f32 %v480, %v1187
      %1189 = vmatmul.f32.gmra.mxu0 %v402
      %v1190 = vpop.f32.mrf.mxu0
      %v1191 = vadd.f32 %v480, %v1190
      %1192 = vmatmul.f32.gmra.mxu0 %v404
      %v1193 = vpop.f32.mrf.mxu0
      %v1194 = vadd.f32 %v480, %v1193
      %1195 = vmatmul.f32.gmra.mxu0 %v406
      %v1196 = vpop.f32.mrf.mxu0
      %v1197 = vadd.f32 %v480, %v1196
      %1198 = vmatmul.f32.gmra.mxu0 %v408
      %v1199 = vpop.f32.mrf.mxu0
      %v1200 = vadd.f32 %v480, %v1199
      %1201 = vmatmul.f32.gmra.mxu0 %v410
      %v1202 = vpop.f32.mrf.mxu0
      %v1203 = vadd.f32 %v480, %v1202
      %1204 = vmatmul.f32.gmra.mxu0 %v412
      %v1205 = vpop.f32.mrf.mxu0
      %v1206 = vadd.f32 %v480, %v1205
      %1207 = vmatmul.f32.gmra.mxu0 %v414
      %v1208 = vpop.f32.mrf.mxu0
      %v1209 = vadd.f32 %v480, %v1208
      %1210 = vmatmul.f32.gmra.mxu0 %v416
      %v1211 = vpop.f32.mrf.mxu0
      %v1212 = vadd.f32 %v480, %v1211
      %1213 = vmatmul.f32.gmra.mxu0 %v418
      %v1214 = vpop.f32.mrf.mxu0
      %v1215 = vadd.f32 %v480, %v1214
      %1216 = vmatmul.f32.gmra.mxu0 %v420
      %v1217 = vpop.f32.mrf.mxu0
      %v1218 = vadd.f32 %v480, %v1217
      %1219 = vmatmul.f32.gmra.mxu0 %v422
      %v1220 = vpop.f32.mrf.mxu0
      %v1221 = vadd.f32 %v480, %v1220
      %1222 = vmatmul.f32.gmra.mxu0 %v424
      %v1223 = vpop.f32.mrf.mxu0
      %v1224 = vadd.f32 %v480, %v1223
      %1225 = vmatmul.f32.gmra.mxu0 %v426
      %v1226 = vpop.f32.mrf.mxu0
      %v1227 = vadd.f32 %v480, %v1226
      %1228 = vmatmul.f32.gmra.mxu0 %v428
      %v1229 = vpop.f32.mrf.mxu0
      %v1230 = vadd.f32 %v480, %v1229
      %1231 = vmatmul.f32.gmra.mxu0 %v430
      %v1232 = vpop.f32.mrf.mxu0
      %v1233 = vadd.f32 %v480, %v1232
      %1234 = vmatmul.f32.gmra.mxu0 %v432
      %v1235 = vpop.f32.mrf.mxu0
      %v1236 = vadd.f32 %v480, %v1235
      %1237 = vmatmul.f32.gmra.mxu0 %v434
      %v1238 = vpop.f32.mrf.mxu0
      %v1239 = vadd.f32 %v480, %v1238
      %1240 = vmatmul.f32.gmra.mxu0 %v436
      %v1241 = vpop.f32.mrf.mxu0
      %v1242 = vadd.f32 %v480, %v1241
      %1243 = vmatmul.f32.gmra.mxu0 %v438
      %v1244 = vpop.f32.mrf.mxu0
      %v1245 = vadd.f32 %v480, %v1244
      %1246 = vmatmul.f32.gmra.mxu0 %v440
      %v1247 = vpop.f32.mrf.mxu0
      %v1248 = vadd.f32 %v480, %v1247
      %1249 = vmatmul.f32.gmra.mxu0 %v442
      %v1250 = vpop.f32.mrf.mxu0
      %v1251 = vadd.f32 %v480, %v1250
      %1252 = vmatmul.f32.gmra.mxu0 %v444
      %v1253 = vpop.f32.mrf.mxu0
      %v1254 = vadd.f32 %v480, %v1253
      %1255 = vmatmul.f32.gmra.mxu0 %v446
      %v1256 = vpop.f32.mrf.mxu0
      %v1257 = vadd.f32 %v480, %v1256
      %1258 = vmatmul.f32.gmra.mxu0 %v448
      %v1259 = vpop.f32.mrf.mxu0
      %v1260 = vadd.f32 %v480, %v1259
      %1261 = vmatmul.f32.gmra.mxu0 %v450
      %v1262 = vpop.f32.mrf.mxu0
      %v1263 = vadd.f32 %v480, %v1262
      %1264 = vmatmul.f32.gmra.mxu0 %v452
      %v1265 = vpop.f32.mrf.mxu0
      %v1266 = vadd.f32 %v480, %v1265
      %1267 = vdwg.mxu0
      %1268 = vmatpush.msra.mxu0 0.0
      %1269 = vmatpush.msra.mxu0 0.0
      %1270 = vmatpush.msra.mxu0 0.0
      %1271 = vmatpush.msra.mxu0 0.0
      %1272 = vmatpush.msra.mxu0 0.0
      %1273 = vmatpush.msra.mxu0 0.0
      %1274 = vmatpush.msra.mxu0 0.0
      %1275 = vmatpush.msra.mxu0 0.0
      %1276 = vmatpush.msra.mxu0 %v477
      %1277 = vmatpush.msra.mxu0 %v476
      %1278 = vmatpush.msra.mxu0 %v475
      %1279 = vmatpush.msra.mxu0 %v474
      %1280 = vmatpush.msra.mxu0 %v473
      %1281 = vmatpush.msra.mxu0 %v472
      %1282 = vmatpush.msra.mxu0 %v471
      %1283 = vmatpush.msra.mxu0 %v470
      %1284 = vmatmul.f32.gmra.mxu0 %v484
      %v1285 = vpop.f32.mrf.mxu0
      %v1286 = vadd.f32 %v885, %v1285
      %1287 = vmatmul.f32.gmra.mxu0 %v487
      %v1288 = vpop.f32.mrf.mxu0
      %v1289 = vadd.f32 %v888, %v1288
      %1290 = vmatmul.f32.gmra.mxu0 %v490
      %v1291 = vpop.f32.mrf.mxu0
      %v1292 = vadd.f32 %v891, %v1291
      %1293 = vmatmul.f32.gmra.mxu0 %v493
      %v1294 = vpop.f32.mrf.mxu0
      %v1295 = vadd.f32 %v894, %v1294
      %1296 = vmatmul.f32.gmra.mxu0 %v496
      %v1297 = vpop.f32.mrf.mxu0
      %v1298 = vadd.f32 %v897, %v1297
      %1299 = vmatmul.f32.gmra.mxu0 %v499
      %v1300 = vpop.f32.mrf.mxu0
      %v1301 = vadd.f32 %v900, %v1300
      %1302 = vmatmul.f32.gmra.mxu0 %v502
      %v1303 = vpop.f32.mrf.mxu0
      %v1304 = vadd.f32 %v903, %v1303
      %1305 = vmatmul.f32.gmra.mxu0 %v505
      %v1306 = vpop.f32.mrf.mxu0
      %v1307 = vadd.f32 %v906, %v1306
      %1308 = vmatmul.f32.gmra.mxu0 %v508
      %v1309 = vpop.f32.mrf.mxu0
      %v1310 = vadd.f32 %v909, %v1309
      %1311 = vmatmul.f32.gmra.mxu0 %v511
      %v1312 = vpop.f32.mrf.mxu0
      %v1313 = vadd.f32 %v912, %v1312
      %1314 = vmatmul.f32.gmra.mxu0 %v514
      %v1315 = vpop.f32.mrf.mxu0
      %v1316 = vadd.f32 %v915, %v1315
      %1317 = vmatmul.f32.gmra.mxu0 %v517
      %v1318 = vpop.f32.mrf.mxu0
      %v1319 = vadd.f32 %v918, %v1318
      %1320 = vmatmul.f32.gmra.mxu0 %v520
      %v1321 = vpop.f32.mrf.mxu0
      %v1322 = vadd.f32 %v921, %v1321
      %1323 = vmatmul.f32.gmra.mxu0 %v523
      %v1324 = vpop.f32.mrf.mxu0
      %v1325 = vadd.f32 %v924, %v1324
      %1326 = vmatmul.f32.gmra.mxu0 %v526
      %v1327 = vpop.f32.mrf.mxu0
      %v1328 = vadd.f32 %v927, %v1327
      %1329 = vmatmul.f32.gmra.mxu0 %v529
      %v1330 = vpop.f32.mrf.mxu0
      %v1331 = vadd.f32 %v930, %v1330
      %1332 = vmatmul.f32.gmra.mxu0 %v532
      %v1333 = vpop.f32.mrf.mxu0
      %v1334 = vadd.f32 %v933, %v1333
      %1335 = vmatmul.f32.gmra.mxu0 %v535
      %v1336 = vpop.f32.mrf.mxu0
      %v1337 = vadd.f32 %v936, %v1336
      %1338 = vmatmul.f32.gmra.mxu0 %v538
      %v1339 = vpop.f32.mrf.mxu0
      %v1340 = vadd.f32 %v939, %v1339
      %1341 = vmatmul.f32.gmra.mxu0 %v541
      %v1342 = vpop.f32.mrf.mxu0
      %v1343 = vadd.f32 %v942, %v1342
      %1344 = vmatmul.f32.gmra.mxu0 %v544
      %v1345 = vpop.f32.mrf.mxu0
      %v1346 = vadd.f32 %v945, %v1345
      %1347 = vmatmul.f32.gmra.mxu0 %v547
      %v1348 = vpop.f32.mrf.mxu0
      %v1349 = vadd.f32 %v948, %v1348
      %1350 = vmatmul.f32.gmra.mxu0 %v550
      %v1351 = vpop.f32.mrf.mxu0
      %v1352 = vadd.f32 %v951, %v1351
      %1353 = vmatmul.f32.gmra.mxu0 %v553
      %v1354 = vpop.f32.mrf.mxu0
      %v1355 = vadd.f32 %v954, %v1354
      %1356 = vmatmul.f32.gmra.mxu0 %v556
      %v1357 = vpop.f32.mrf.mxu0
      %v1358 = vadd.f32 %v957, %v1357
      %1359 = vmatmul.f32.gmra.mxu0 %v559
      %v1360 = vpop.f32.mrf.mxu0
      %v1361 = vadd.f32 %v960, %v1360
      %1362 = vmatmul.f32.gmra.mxu0 %v562
      %v1363 = vpop.f32.mrf.mxu0
      %v1364 = vadd.f32 %v963, %v1363
      %1365 = vmatmul.f32.gmra.mxu0 %v565
      %v1366 = vpop.f32.mrf.mxu0
      %v1367 = vadd.f32 %v966, %v1366
      %1368 = vmatmul.f32.gmra.mxu0 %v568
      %v1369 = vpop.f32.mrf.mxu0
      %v1370 = vadd.f32 %v969, %v1369
      %1371 = vmatmul.f32.gmra.mxu0 %v571
      %v1372 = vpop.f32.mrf.mxu0
      %v1373 = vadd.f32 %v972, %v1372
      %1374 = vmatmul.f32.gmra.mxu0 %v574
      %v1375 = vpop.f32.mrf.mxu0
      %v1376 = vadd.f32 %v975, %v1375
      %1377 = vmatmul.f32.gmra.mxu0 %v577
      %v1378 = vpop.f32.mrf.mxu0
      %v1379 = vadd.f32 %v978, %v1378
      %1380 = vmatmul.f32.gmra.mxu0 %v580
      %v1381 = vpop.f32.mrf.mxu0
      %v1382 = vadd.f32 %v981, %v1381
      %1383 = vmatmul.f32.gmra.mxu0 %v583
      %v1384 = vpop.f32.mrf.mxu0
      %v1385 = vadd.f32 %v984, %v1384
      %1386 = vmatmul.f32.gmra.mxu0 %v586
      %v1387 = vpop.f32.mrf.mxu0
      %v1388 = vadd.f32 %v987, %v1387
      %1389 = vmatmul.f32.gmra.mxu0 %v589
      %v1390 = vpop.f32.mrf.mxu0
      %v1391 = vadd.f32 %v990, %v1390
      %1392 = vmatmul.f32.gmra.mxu0 %v592
      %v1393 = vpop.f32.mrf.mxu0
      %v1394 = vadd.f32 %v993, %v1393
      %1395 = vmatmul.f32.gmra.mxu0 %v595
      %v1396 = vpop.f32.mrf.mxu0
      %v1397 = vadd.f32 %v996, %v1396
      %1398 = vmatmul.f32.gmra.mxu0 %v598
      %v1399 = vpop.f32.mrf.mxu0
      %v1400 = vadd.f32 %v999, %v1399
      %1401 = vmatmul.f32.gmra.mxu0 %v601
      %v1402 = vpop.f32.mrf.mxu0
      %v1403 = vadd.f32 %v1002, %v1402
      %1404 = vmatmul.f32.gmra.mxu0 %v604
      %v1405 = vpop.f32.mrf.mxu0
      %v1406 = vadd.f32 %v1005, %v1405
      %1407 = vmatmul.f32.gmra.mxu0 %v607
      %v1408 = vpop.f32.mrf.mxu0
      %v1409 = vadd.f32 %v1008, %v1408
      %1410 = vmatmul.f32.gmra.mxu0 %v610
      %v1411 = vpop.f32.mrf.mxu0
      %v1412 = vadd.f32 %v1011, %v1411
      %1413 = vmatmul.f32.gmra.mxu0 %v613
      %v1414 = vpop.f32.mrf.mxu0
      %v1415 = vadd.f32 %v1014, %v1414
      %1416 = vmatmul.f32.gmra.mxu0 %v616
      %v1417 = vpop.f32.mrf.mxu0
      %v1418 = vadd.f32 %v1017, %v1417
      %1419 = vmatmul.f32.gmra.mxu0 %v619
      %v1420 = vpop.f32.mrf.mxu0
      %v1421 = vadd.f32 %v1020, %v1420
      %1422 = vmatmul.f32.gmra.mxu0 %v622
      %v1423 = vpop.f32.mrf.mxu0
      %v1424 = vadd.f32 %v1023, %v1423
      %1425 = vmatmul.f32.gmra.mxu0 %v625
      %v1426 = vpop.f32.mrf.mxu0
      %v1427 = vadd.f32 %v1026, %v1426
      %1428 = vmatmul.f32.gmra.mxu0 %v628
      %v1429 = vpop.f32.mrf.mxu0
      %v1430 = vadd.f32 %v1029, %v1429
      %1431 = vmatmul.f32.gmra.mxu0 %v631
      %v1432 = vpop.f32.mrf.mxu0
      %v1433 = vadd.f32 %v1032, %v1432
      %1434 = vmatmul.f32.gmra.mxu0 %v634
      %v1435 = vpop.f32.mrf.mxu0
      %v1436 = vadd.f32 %v1035, %v1435
      %1437 = vmatmul.f32.gmra.mxu0 %v637
      %v1438 = vpop.f32.mrf.mxu0
      %v1439 = vadd.f32 %v1038, %v1438
      %1440 = vmatmul.f32.gmra.mxu0 %v640
      %v1441 = vpop.f32.mrf.mxu0
      %v1442 = vadd.f32 %v1041, %v1441
      %1443 = vmatmul.f32.gmra.mxu0 %v643
      %v1444 = vpop.f32.mrf.mxu0
      %v1445 = vadd.f32 %v1044, %v1444
      %1446 = vmatmul.f32.gmra.mxu0 %v646
      %v1447 = vpop.f32.mrf.mxu0
      %v1448 = vadd.f32 %v1047, %v1447
      %1449 = vmatmul.f32.gmra.mxu0 %v649
      %v1450 = vpop.f32.mrf.mxu0
      %v1451 = vadd.f32 %v1050, %v1450
      %1452 = vmatmul.f32.gmra.mxu0 %v652
      %v1453 = vpop.f32.mrf.mxu0
      %v1454 = vadd.f32 %v1053, %v1453
      %1455 = vmatmul.f32.gmra.mxu0 %v655
      %v1456 = vpop.f32.mrf.mxu0
      %v1457 = vadd.f32 %v1056, %v1456
      %1458 = vmatmul.f32.gmra.mxu0 %v658
      %v1459 = vpop.f32.mrf.mxu0
      %v1460 = vadd.f32 %v1059, %v1459
      %1461 = vmatmul.f32.gmra.mxu0 %v661
      %v1462 = vpop.f32.mrf.mxu0
      %v1463 = vadd.f32 %v1062, %v1462
      %1464 = vmatmul.f32.gmra.mxu0 %v664
      %v1465 = vpop.f32.mrf.mxu0
      %v1466 = vadd.f32 %v1065, %v1465
      %1467 = vmatmul.f32.gmra.mxu0 %v667
      %v1468 = vpop.f32.mrf.mxu0
      %v1469 = vadd.f32 %v1068, %v1468
      %1470 = vmatmul.f32.gmra.mxu0 %v670
      %v1471 = vpop.f32.mrf.mxu0
      %v1472 = vadd.f32 %v1071, %v1471
      %1473 = vmatmul.f32.gmra.mxu0 %v673
      %v1474 = vpop.f32.mrf.mxu0
      %v1475 = vadd.f32 %v1074, %v1474
      %1476 = vmatmul.f32.gmra.mxu0 %v676
      %v1477 = vpop.f32.mrf.mxu0
      %v1478 = vadd.f32 %v1077, %v1477
      %1479 = vmatmul.f32.gmra.mxu0 %v679
      %v1480 = vpop.f32.mrf.mxu0
      %v1481 = vadd.f32 %v1080, %v1480
      %1482 = vmatmul.f32.gmra.mxu0 %v682
      %v1483 = vpop.f32.mrf.mxu0
      %v1484 = vadd.f32 %v1083, %v1483
      %1485 = vmatmul.f32.gmra.mxu0 %v685
      %v1486 = vpop.f32.mrf.mxu0
      %v1487 = vadd.f32 %v1086, %v1486
      %1488 = vmatmul.f32.gmra.mxu0 %v688
      %v1489 = vpop.f32.mrf.mxu0
      %v1490 = vadd.f32 %v1089, %v1489
      %1491 = vmatmul.f32.gmra.mxu0 %v691
      %v1492 = vpop.f32.mrf.mxu0
      %v1493 = vadd.f32 %v1092, %v1492
      %1494 = vmatmul.f32.gmra.mxu0 %v694
      %v1495 = vpop.f32.mrf.mxu0
      %v1496 = vadd.f32 %v1095, %v1495
      %1497 = vmatmul.f32.gmra.mxu0 %v697
      %v1498 = vpop.f32.mrf.mxu0
      %v1499 = vadd.f32 %v1098, %v1498
      %1500 = vmatmul.f32.gmra.mxu0 %v700
      %v1501 = vpop.f32.mrf.mxu0
      %v1502 = vadd.f32 %v1101, %v1501
      %1503 = vmatmul.f32.gmra.mxu0 %v703
      %v1504 = vpop.f32.mrf.mxu0
      %v1505 = vadd.f32 %v1104, %v1504
      %1506 = vmatmul.f32.gmra.mxu0 %v706
      %v1507 = vpop.f32.mrf.mxu0
      %v1508 = vadd.f32 %v1107, %v1507
      %1509 = vmatmul.f32.gmra.mxu0 %v709
      %v1510 = vpop.f32.mrf.mxu0
      %v1511 = vadd.f32 %v1110, %v1510
      %1512 = vmatmul.f32.gmra.mxu0 %v712
      %v1513 = vpop.f32.mrf.mxu0
      %v1514 = vadd.f32 %v1113, %v1513
      %1515 = vmatmul.f32.gmra.mxu0 %v715
      %v1516 = vpop.f32.mrf.mxu0
      %v1517 = vadd.f32 %v1116, %v1516
      %1518 = vmatmul.f32.gmra.mxu0 %v718
      %v1519 = vpop.f32.mrf.mxu0
      %v1520 = vadd.f32 %v1119, %v1519
      %1521 = vmatmul.f32.gmra.mxu0 %v721
      %v1522 = vpop.f32.mrf.mxu0
      %v1523 = vadd.f32 %v1122, %v1522
      %1524 = vmatmul.f32.gmra.mxu0 %v724
      %v1525 = vpop.f32.mrf.mxu0
      %v1526 = vadd.f32 %v1125, %v1525
      %1527 = vmatmul.f32.gmra.mxu0 %v727
      %v1528 = vpop.f32.mrf.mxu0
      %v1529 = vadd.f32 %v1128, %v1528
      %1530 = vmatmul.f32.gmra.mxu0 %v730
      %v1531 = vpop.f32.mrf.mxu0
      %v1532 = vadd.f32 %v1131, %v1531
      %1533 = vmatmul.f32.gmra.mxu0 %v733
      %v1534 = vpop.f32.mrf.mxu0
      %v1535 = vadd.f32 %v1134, %v1534
      %1536 = vmatmul.f32.gmra.mxu0 %v736
      %v1537 = vpop.f32.mrf.mxu0
      %v1538 = vadd.f32 %v1137, %v1537
      %1539 = vmatmul.f32.gmra.mxu0 %v739
      %v1540 = vpop.f32.mrf.mxu0
      %v1541 = vadd.f32 %v1140, %v1540
      %1542 = vmatmul.f32.gmra.mxu0 %v742
      %v1543 = vpop.f32.mrf.mxu0
      %v1544 = vadd.f32 %v1143, %v1543
      %1545 = vmatmul.f32.gmra.mxu0 %v745
      %v1546 = vpop.f32.mrf.mxu0
      %v1547 = vadd.f32 %v1146, %v1546
      %1548 = vmatmul.f32.gmra.mxu0 %v748
      %v1549 = vpop.f32.mrf.mxu0
      %v1550 = vadd.f32 %v1149, %v1549
      %1551 = vmatmul.f32.gmra.mxu0 %v751
      %v1552 = vpop.f32.mrf.mxu0
      %v1553 = vadd.f32 %v1152, %v1552
      %1554 = vmatmul.f32.gmra.mxu0 %v754
      %v1555 = vpop.f32.mrf.mxu0
      %v1556 = vadd.f32 %v1155, %v1555
      %1557 = vmatmul.f32.gmra.mxu0 %v757
      %v1558 = vpop.f32.mrf.mxu0
      %v1559 = vadd.f32 %v1158, %v1558
      %1560 = vmatmul.f32.gmra.mxu0 %v760
      %v1561 = vpop.f32.mrf.mxu0
      %v1562 = vadd.f32 %v1161, %v1561
      %1563 = vmatmul.f32.gmra.mxu0 %v763
      %v1564 = vpop.f32.mrf.mxu0
      %v1565 = vadd.f32 %v1164, %v1564
      %1566 = vmatmul.f32.gmra.mxu0 %v766
      %v1567 = vpop.f32.mrf.mxu0
      %v1568 = vadd.f32 %v1167, %v1567
      %1569 = vmatmul.f32.gmra.mxu0 %v769
      %v1570 = vpop.f32.mrf.mxu0
      %v1571 = vadd.f32 %v1170, %v1570
      %1572 = vmatmul.f32.gmra.mxu0 %v772
      %v1573 = vpop.f32.mrf.mxu0
      %v1574 = vadd.f32 %v1173, %v1573
      %1575 = vmatmul.f32.gmra.mxu0 %v775
      %v1576 = vpop.f32.mrf.mxu0
      %v1577 = vadd.f32 %v1176, %v1576
      %1578 = vmatmul.f32.gmra.mxu0 %v778
      %v1579 = vpop.f32.mrf.mxu0
      %v1580 = vadd.f32 %v1179, %v1579
      %1581 = vmatmul.f32.gmra.mxu0 %v781
      %v1582 = vpop.f32.mrf.mxu0
      %v1583 = vadd.f32 %v1182, %v1582
      %1584 = vmatmul.f32.gmra.mxu0 %v784
      %v1585 = vpop.f32.mrf.mxu0
      %v1586 = vadd.f32 %v1185, %v1585
      %1587 = vmatmul.f32.gmra.mxu0 %v787
      %v1588 = vpop.f32.mrf.mxu0
      %v1589 = vadd.f32 %v1188, %v1588
      %1590 = vmatmul.f32.gmra.mxu0 %v790
      %v1591 = vpop.f32.mrf.mxu0
      %v1592 = vadd.f32 %v1191, %v1591
      %1593 = vmatmul.f32.gmra.mxu0 %v793
      %v1594 = vpop.f32.mrf.mxu0
      %v1595 = vadd.f32 %v1194, %v1594
      %1596 = vmatmul.f32.gmra.mxu0 %v796
      %v1597 = vpop.f32.mrf.mxu0
      %v1598 = vadd.f32 %v1197, %v1597
      %1599 = vmatmul.f32.gmra.mxu0 %v799
      %v1600 = vpop.f32.mrf.mxu0
      %v1601 = vadd.f32 %v1200, %v1600
      %1602 = vmatmul.f32.gmra.mxu0 %v802
      %v1603 = vpop.f32.mrf.mxu0
      %v1604 = vadd.f32 %v1203, %v1603
      %1605 = vmatmul.f32.gmra.mxu0 %v805
      %v1606 = vpop.f32.mrf.mxu0
      %v1607 = vadd.f32 %v1206, %v1606
      %1608 = vmatmul.f32.gmra.mxu0 %v808
      %v1609 = vpop.f32.mrf.mxu0
      %v1610 = vadd.f32 %v1209, %v1609
      %1611 = vmatmul.f32.gmra.mxu0 %v811
      %v1612 = vpop.f32.mrf.mxu0
      %v1613 = vadd.f32 %v1212, %v1612
      %1614 = vmatmul.f32.gmra.mxu0 %v814
      %v1615 = vpop.f32.mrf.mxu0
      %v1616 = vadd.f32 %v1215, %v1615
      %1617 = vmatmul.f32.gmra.mxu0 %v817
      %v1618 = vpop.f32.mrf.mxu0
      %v1619 = vadd.f32 %v1218, %v1618
      %1620 = vmatmul.f32.gmra.mxu0 %v820
      %v1621 = vpop.f32.mrf.mxu0
      %v1622 = vadd.f32 %v1221, %v1621
      %1623 = vmatmul.f32.gmra.mxu0 %v823
      %v1624 = vpop.f32.mrf.mxu0
      %v1625 = vadd.f32 %v1224, %v1624
      %1626 = vmatmul.f32.gmra.mxu0 %v826
      %v1627 = vpop.f32.mrf.mxu0
      %v1628 = vadd.f32 %v1227, %v1627
      %1629 = vmatmul.f32.gmra.mxu0 %v829
      %v1630 = vpop.f32.mrf.mxu0
      %v1631 = vadd.f32 %v1230, %v1630
      %1632 = vmatmul.f32.gmra.mxu0 %v832
      %v1633 = vpop.f32.mrf.mxu0
      %v1634 = vadd.f32 %v1233, %v1633
      %1635 = vmatmul.f32.gmra.mxu0 %v835
      %v1636 = vpop.f32.mrf.mxu0
      %v1637 = vadd.f32 %v1236, %v1636
      %1638 = vmatmul.f32.gmra.mxu0 %v838
      %v1639 = vpop.f32.mrf.mxu0
      %v1640 = vadd.f32 %v1239, %v1639
      %1641 = vmatmul.f32.gmra.mxu0 %v841
      %v1642 = vpop.f32.mrf.mxu0
      %v1643 = vadd.f32 %v1242, %v1642
      %1644 = vmatmul.f32.gmra.mxu0 %v844
      %v1645 = vpop.f32.mrf.mxu0
      %v1646 = vadd.f32 %v1245, %v1645
      %1647 = vmatmul.f32.gmra.mxu0 %v847
      %v1648 = vpop.f32.mrf.mxu0
      %v1649 = vadd.f32 %v1248, %v1648
      %1650 = vmatmul.f32.gmra.mxu0 %v850
      %v1651 = vpop.f32.mrf.mxu0
      %v1652 = vadd.f32 %v1251, %v1651
      %1653 = vmatmul.f32.gmra.mxu0 %v853
      %v1654 = vpop.f32.mrf.mxu0
      %v1655 = vadd.f32 %v1254, %v1654
      %1656 = vmatmul.f32.gmra.mxu0 %v856
      %v1657 = vpop.f32.mrf.mxu0
      %v1658 = vadd.f32 %v1257, %v1657
      %1659 = vmatmul.f32.gmra.mxu0 %v859
      %v1660 = vpop.f32.mrf.mxu0
      %v1661 = vadd.f32 %v1260, %v1660
      %1662 = vmatmul.f32.gmra.mxu0 %v862
      %v1663 = vpop.f32.mrf.mxu0
      %v1664 = vadd.f32 %v1263, %v1663
      %1665 = vmatmul.f32.gmra.mxu0 %v865
      %v1666 = vpop.f32.mrf.mxu0
      %v1667 = vadd.f32 %v1266, %v1666
      %1668 = vdwg.mxu0
      %v1669 = vmax.f32 %v1286, 0.0
      %v1670 = vmax.f32 %v1289, 0.0
      %v1671 = vmax.f32 %v1292, 0.0
      %v1672 = vmax.f32 %v1295, 0.0
      %v1673 = vmax.f32 %v1298, 0.0
      %v1674 = vmax.f32 %v1301, 0.0
      %v1675 = vmax.f32 %v1304, 0.0
      %v1676 = vmax.f32 %v1307, 0.0
      %v1677 = vmax.f32 %v1310, 0.0
      %v1678 = vmax.f32 %v1313, 0.0
      %v1679 = vmax.f32 %v1316, 0.0
      %v1680 = vmax.f32 %v1319, 0.0
      %v1681 = vmax.f32 %v1322, 0.0
      %v1682 = vmax.f32 %v1325, 0.0
      %v1683 = vmax.f32 %v1328, 0.0
      %v1684 = vmax.f32 %v1331, 0.0
      %v1685 = vmax.f32 %v1334, 0.0
      %v1686 = vmax.f32 %v1337, 0.0
      %v1687 = vmax.f32 %v1340, 0.0
      %v1688 = vmax.f32 %v1343, 0.0
      %v1689 = vmax.f32 %v1346, 0.0
      %v1690 = vmax.f32 %v1349, 0.0
      %v1691 = vmax.f32 %v1352, 0.0
      %v1692 = vmax.f32 %v1355, 0.0
      %v1693 = vmax.f32 %v1358, 0.0
      %v1694 = vmax.f32 %v1361, 0.0
      %v1695 = vmax.f32 %v1364, 0.0
      %v1696 = vmax.f32 %v1367, 0.0
      %v1697 = vmax.f32 %v1370, 0.0
      %v1698 = vmax.f32 %v1373, 0.0
      %v1699 = vmax.f32 %v1376, 0.0
      %v1700 = vmax.f32 %v1379, 0.0
      %v1701 = vmax.f32 %v1382, 0.0
      %v1702 = vmax.f32 %v1385, 0.0
      %v1703 = vmax.f32 %v1388, 0.0
      %v1704 = vmax.f32 %v1391, 0.0
      %v1705 = vmax.f32 %v1394, 0.0
      %v1706 = vmax.f32 %v1397, 0.0
      %v1707 = vmax.f32 %v1400, 0.0
      %v1708 = vmax.f32 %v1403, 0.0
      %v1709 = vmax.f32 %v1406, 0.0
      %v1710 = vmax.f32 %v1409, 0.0
      %v1711 = vmax.f32 %v1412, 0.0
      %v1712 = vmax.f32 %v1415, 0.0
      %v1713 = vmax.f32 %v1418, 0.0
      %v1714 = vmax.f32 %v1421, 0.0
      %v1715 = vmax.f32 %v1424, 0.0
      %v1716 = vmax.f32 %v1427, 0.0
      %v1717 = vmax.f32 %v1430, 0.0
      %v1718 = vmax.f32 %v1433, 0.0
      %v1719 = vmax.f32 %v1436, 0.0
      %v1720 = vmax.f32 %v1439, 0.0
      %v1721 = vmax.f32 %v1442, 0.0
      %v1722 = vmax.f32 %v1445, 0.0
      %v1723 = vmax.f32 %v1448, 0.0
      %v1724 = vmax.f32 %v1451, 0.0
      %v1725 = vmax.f32 %v1454, 0.0
      %v1726 = vmax.f32 %v1457, 0.0
      %v1727 = vmax.f32 %v1460, 0.0
      %v1728 = vmax.f32 %v1463, 0.0
      %v1729 = vmax.f32 %v1466, 0.0
      %v1730 = vmax.f32 %v1469, 0.0
      %v1731 = vmax.f32 %v1472, 0.0
      %v1732 = vmax.f32 %v1475, 0.0
      %v1733 = vmax.f32 %v1478, 0.0
      %v1734 = vmax.f32 %v1481, 0.0
      %v1735 = vmax.f32 %v1484, 0.0
      %v1736 = vmax.f32 %v1487, 0.0
      %v1737 = vmax.f32 %v1490, 0.0
      %v1738 = vmax.f32 %v1493, 0.0
      %v1739 = vmax.f32 %v1496, 0.0
      %v1740 = vmax.f32 %v1499, 0.0
      %v1741 = vmax.f32 %v1502, 0.0
      %v1742 = vmax.f32 %v1505, 0.0
      %v1743 = vmax.f32 %v1508, 0.0
      %v1744 = vmax.f32 %v1511, 0.0
      %v1745 = vmax.f32 %v1514, 0.0
      %v1746 = vmax.f32 %v1517, 0.0
      %v1747 = vmax.f32 %v1520, 0.0
      %v1748 = vmax.f32 %v1523, 0.0
      %v1749 = vmax.f32 %v1526, 0.0
      %v1750 = vmax.f32 %v1529, 0.0
      %v1751 = vmax.f32 %v1532, 0.0
      %v1752 = vmax.f32 %v1535, 0.0
      %v1753 = vmax.f32 %v1538, 0.0
      %v1754 = vmax.f32 %v1541, 0.0
      %v1755 = vmax.f32 %v1544, 0.0
      %v1756 = vmax.f32 %v1547, 0.0
      %v1757 = vmax.f32 %v1550, 0.0
      %v1758 = vmax.f32 %v1553, 0.0
      %v1759 = vmax.f32 %v1556, 0.0
      %v1760 = vmax.f32 %v1559, 0.0
      %v1761 = vmax.f32 %v1562, 0.0
      %v1762 = vmax.f32 %v1565, 0.0
      %v1763 = vmax.f32 %v1568, 0.0
      %v1764 = vmax.f32 %v1571, 0.0
      %v1765 = vmax.f32 %v1574, 0.0
      %v1766 = vmax.f32 %v1577, 0.0
      %v1767 = vmax.f32 %v1580, 0.0
      %v1768 = vmax.f32 %v1583, 0.0
      %v1769 = vmax.f32 %v1586, 0.0
      %v1770 = vmax.f32 %v1589, 0.0
      %v1771 = vmax.f32 %v1592, 0.0
      %v1772 = vmax.f32 %v1595, 0.0
      %v1773 = vmax.f32 %v1598, 0.0
      %v1774 = vmax.f32 %v1601, 0.0
      %v1775 = vmax.f32 %v1604, 0.0
      %v1776 = vmax.f32 %v1607, 0.0
      %v1777 = vmax.f32 %v1610, 0.0
      %v1778 = vmax.f32 %v1613, 0.0
      %v1779 = vmax.f32 %v1616, 0.0
      %v1780 = vmax.f32 %v1619, 0.0
      %v1781 = vmax.f32 %v1622, 0.0
      %v1782 = vmax.f32 %v1625, 0.0
      %v1783 = vmax.f32 %v1628, 0.0
      %v1784 = vmax.f32 %v1631, 0.0
      %v1785 = vmax.f32 %v1634, 0.0
      %v1786 = vmax.f32 %v1637, 0.0
      %v1787 = vmax.f32 %v1640, 0.0
      %v1788 = vmax.f32 %v1643, 0.0
      %v1789 = vmax.f32 %v1646, 0.0
      %v1790 = vmax.f32 %v1649, 0.0
      %v1791 = vmax.f32 %v1652, 0.0
      %v1792 = vmax.f32 %v1655, 0.0
      %v1793 = vmax.f32 %v1658, 0.0
      %v1794 = vmax.f32 %v1661, 0.0
      %v1795 = vmax.f32 %v1664, 0.0
      %v1796 = vmax.f32 %v1667, 0.0
      %v1797 = vld [vmem:[%s3] sm:$0xff]
      %v1798 = vld [vmem:[%s3 + $0x8] sm:$0xff]
      %v1799 = vld [vmem:[%s3 + $0x10] sm:$0xff]
      %v1800 = vld [vmem:[%s3 + $0x18] sm:$0xff]
      %v1801 = vld [vmem:[%s3 + $0x20] sm:$0xff]
      %v1802 = vld [vmem:[%s3 + $0x28] sm:$0xff]
      %v1803 = vld [vmem:[%s3 + $0x30] sm:$0xff]
      %v1804 = vld [vmem:[%s3 + $0x38] sm:$0xff]
      %v1805 = vld [vmem:[%s3 + $0x40] sm:$0xff]
      %v1806 = vld [vmem:[%s3 + $0x48] sm:$0xff]
      %v1807 = vld [vmem:[%s3 + $0x50] sm:$0xff]
      %v1808 = vld [vmem:[%s3 + $0x58] sm:$0xff]
      %v1809 = vld [vmem:[%s3 + $0x60] sm:$0xff]
      %v1810 = vld [vmem:[%s3 + $0x68] sm:$0xff]
      %v1811 = vld [vmem:[%s3 + $0x70] sm:$0xff]
      %v1812 = vld [vmem:[%s3 + $0x78] sm:$0xff]
      %v1813 = vld [vmem:[%s3 + $0x80] sm:$0xff]
      %v1814 = vld [vmem:[%s3 + $0x88] sm:$0xff]
      %v1815 = vld [vmem:[%s3 + $0x90] sm:$0xff]
      %v1816 = vld [vmem:[%s3 + $0x98] sm:$0xff]
      %v1817 = vld [vmem:[%s3 + $0xa0] sm:$0xff]
      %v1818 = vld [vmem:[%s3 + $0xa8] sm:$0xff]
      %v1819 = vld [vmem:[%s3 + $0xb0] sm:$0xff]
      %v1820 = vld [vmem:[%s3 + $0xb8] sm:$0xff]
      %v1821 = vld [vmem:[%s3 + $0xc0] sm:$0xff]
      %v1822 = vld [vmem:[%s3 + $0xc8] sm:$0xff]
      %v1823 = vld [vmem:[%s3 + $0xd0] sm:$0xff]
      %v1824 = vld [vmem:[%s3 + $0xd8] sm:$0xff]
      %v1825 = vld [vmem:[%s3 + $0xe0] sm:$0xff]
      %v1826 = vld [vmem:[%s3 + $0xe8] sm:$0xff]
      %v1827 = vld [vmem:[%s3 + $0xf0] sm:$0xff]
      %v1828 = vld [vmem:[%s3 + $0xf8] sm:$0xff]
      %v1829 = vld [vmem:[%s3 + $0x100] sm:$0xff]
      %v1830 = vld [vmem:[%s3 + $0x108] sm:$0xff]
      %v1831 = vld [vmem:[%s3 + $0x110] sm:$0xff]
      %v1832 = vld [vmem:[%s3 + $0x118] sm:$0xff]
      %v1833 = vld [vmem:[%s3 + $0x120] sm:$0xff]
      %v1834 = vld [vmem:[%s3 + $0x128] sm:$0xff]
      %v1835 = vld [vmem:[%s3 + $0x130] sm:$0xff]
      %v1836 = vld [vmem:[%s3 + $0x138] sm:$0xff]
      %v1837 = vld [vmem:[%s3 + $0x140] sm:$0xff]
      %v1838 = vld [vmem:[%s3 + $0x148] sm:$0xff]
      %v1839 = vld [vmem:[%s3 + $0x150] sm:$0xff]
      %v1840 = vld [vmem:[%s3 + $0x158] sm:$0xff]
      %v1841 = vld [vmem:[%s3 + $0x160] sm:$0xff]
      %v1842 = vld [vmem:[%s3 + $0x168] sm:$0xff]
      %v1843 = vld [vmem:[%s3 + $0x170] sm:$0xff]
      %v1844 = vld [vmem:[%s3 + $0x178] sm:$0xff]
      %v1845 = vld [vmem:[%s3 + $0x180] sm:$0xff]
      %v1846 = vld [vmem:[%s3 + $0x188] sm:$0xff]
      %v1847 = vld [vmem:[%s3 + $0x190] sm:$0xff]
      %v1848 = vld [vmem:[%s3 + $0x198] sm:$0xff]
      %v1849 = vld [vmem:[%s3 + $0x1a0] sm:$0xff]
      %v1850 = vld [vmem:[%s3 + $0x1a8] sm:$0xff]
      %v1851 = vld [vmem:[%s3 + $0x1b0] sm:$0xff]
      %v1852 = vld [vmem:[%s3 + $0x1b8] sm:$0xff]
      %v1853 = vld [vmem:[%s3 + $0x1c0] sm:$0xff]
      %v1854 = vld [vmem:[%s3 + $0x1c8] sm:$0xff]
      %v1855 = vld [vmem:[%s3 + $0x1d0] sm:$0xff]
      %v1856 = vld [vmem:[%s3 + $0x1d8] sm:$0xff]
      %v1857 = vld [vmem:[%s3 + $0x1e0] sm:$0xff]
      %v1858 = vld [vmem:[%s3 + $0x1e8] sm:$0xff]
      %v1859 = vld [vmem:[%s3 + $0x1f0] sm:$0xff]
      %v1860 = vld [vmem:[%s3 + $0x1f8] sm:$0xff]
      %v1861 = vld [vmem:[%s3 + $0x200] sm:$0xff]
      %v1862 = vld [vmem:[%s3 + $0x208] sm:$0xff]
      %v1863 = vld [vmem:[%s3 + $0x210] sm:$0xff]
      %v1864 = vld [vmem:[%s3 + $0x218] sm:$0xff]
      %v1865 = vld [vmem:[%s3 + $0x220] sm:$0xff]
      %v1866 = vld [vmem:[%s3 + $0x228] sm:$0xff]
      %v1867 = vld [vmem:[%s3 + $0x230] sm:$0xff]
      %v1868 = vld [vmem:[%s3 + $0x238] sm:$0xff]
      %v1869 = vld [vmem:[%s3 + $0x240] sm:$0xff]
      %v1870 = vld [vmem:[%s3 + $0x248] sm:$0xff]
      %v1871 = vld [vmem:[%s3 + $0x250] sm:$0xff]
      %v1872 = vld [vmem:[%s3 + $0x258] sm:$0xff]
      %v1873 = vld [vmem:[%s3 + $0x260] sm:$0xff]
      %v1874 = vld [vmem:[%s3 + $0x268] sm:$0xff]
      %v1875 = vld [vmem:[%s3 + $0x270] sm:$0xff]
      %v1876 = vld [vmem:[%s3 + $0x278] sm:$0xff]
      %v1877 = vld [vmem:[%s3 + $0x280] sm:$0xff]
      %v1878 = vld [vmem:[%s3 + $0x288] sm:$0xff]
      %v1879 = vld [vmem:[%s3 + $0x290] sm:$0xff]
      %v1880 = vld [vmem:[%s3 + $0x298] sm:$0xff]
      %v1881 = vld [vmem:[%s3 + $0x2a0] sm:$0xff]
      %v1882 = vld [vmem:[%s3 + $0x2a8] sm:$0xff]
      %v1883 = vld [vmem:[%s3 + $0x2b0] sm:$0xff]
      %v1884 = vld [vmem:[%s3 + $0x2b8] sm:$0xff]
      %v1885 = vld [vmem:[%s3 + $0x2c0] sm:$0xff]
      %v1886 = vld [vmem:[%s3 + $0x2c8] sm:$0xff]
      %v1887 = vld [vmem:[%s3 + $0x2d0] sm:$0xff]
      %v1888 = vld [vmem:[%s3 + $0x2d8] sm:$0xff]
      %v1889 = vld [vmem:[%s3 + $0x2e0] sm:$0xff]
      %v1890 = vld [vmem:[%s3 + $0x2e8] sm:$0xff]
      %v1891 = vld [vmem:[%s3 + $0x2f0] sm:$0xff]
      %v1892 = vld [vmem:[%s3 + $0x2f8] sm:$0xff]
      %v1893 = vld [vmem:[%s3 + $0x300] sm:$0xff]
      %v1894 = vld [vmem:[%s3 + $0x308] sm:$0xff]
      %v1895 = vld [vmem:[%s3 + $0x310] sm:$0xff]
      %v1896 = vld [vmem:[%s3 + $0x318] sm:$0xff]
      %v1897 = vld [vmem:[%s3 + $0x320] sm:$0xff]
      %v1898 = vld [vmem:[%s3 + $0x328] sm:$0xff]
      %v1899 = vld [vmem:[%s3 + $0x330] sm:$0xff]
      %v1900 = vld [vmem:[%s3 + $0x338] sm:$0xff]
      %v1901 = vld [vmem:[%s3 + $0x340] sm:$0xff]
      %v1902 = vld [vmem:[%s3 + $0x348] sm:$0xff]
      %v1903 = vld [vmem:[%s3 + $0x350] sm:$0xff]
      %v1904 = vld [vmem:[%s3 + $0x358] sm:$0xff]
      %v1905 = vld [vmem:[%s3 + $0x360] sm:$0xff]
      %v1906 = vld [vmem:[%s3 + $0x368] sm:$0xff]
      %v1907 = vld [vmem:[%s3 + $0x370] sm:$0xff]
      %v1908 = vld [vmem:[%s3 + $0x378] sm:$0xff]
      %v1909 = vld [vmem:[%s3 + $0x380] sm:$0xff]
      %v1910 = vld [vmem:[%s3 + $0x388] sm:$0xff]
      %v1911 = vld [vmem:[%s3 + $0x390] sm:$0xff]
      %v1912 = vld [vmem:[%s3 + $0x398] sm:$0xff]
      %v1913 = vld [vmem:[%s3 + $0x3a0] sm:$0xff]
      %v1914 = vld [vmem:[%s3 + $0x3a8] sm:$0xff]
      %v1915 = vld [vmem:[%s3 + $0x3b0] sm:$0xff]
      %v1916 = vld [vmem:[%s3 + $0x3b8] sm:$0xff]
      %v1917 = vld [vmem:[%s3 + $0x3c0] sm:$0xff]
      %v1918 = vld [vmem:[%s3 + $0x3c8] sm:$0xff]
      %v1919 = vld [vmem:[%s3 + $0x3d0] sm:$0xff]
      %v1920 = vld [vmem:[%s3 + $0x3d8] sm:$0xff]
      %v1921 = vld [vmem:[%s3 + $0x3e0] sm:$0xff]
      %v1922 = vld [vmem:[%s3 + $0x3e8] sm:$0xff]
      %v1923 = vld [vmem:[%s3 + $0x3f0] sm:$0xff]
      %v1924 = vld [vmem:[%s3 + $0x3f8] sm:$0xf]
      %vm1925 = vcmp.gt.f32.partialorder %v1797, 0.5
      %vm1926 = vcmp.gt.f32.partialorder %v1798, 0.5
      %vm1927 = vcmp.gt.f32.partialorder %v1799, 0.5
      %vm1928 = vcmp.gt.f32.partialorder %v1800, 0.5
      %vm1929 = vcmp.gt.f32.partialorder %v1801, 0.5
      %vm1930 = vcmp.gt.f32.partialorder %v1802, 0.5
      %vm1931 = vcmp.gt.f32.partialorder %v1803, 0.5
      %vm1932 = vcmp.gt.f32.partialorder %v1804, 0.5
      %vm1933 = vcmp.gt.f32.partialorder %v1805, 0.5
      %vm1934 = vcmp.gt.f32.partialorder %v1806, 0.5
      %vm1935 = vcmp.gt.f32.partialorder %v1807, 0.5
      %vm1936 = vcmp.gt.f32.partialorder %v1808, 0.5
      %vm1937 = vcmp.gt.f32.partialorder %v1809, 0.5
      %vm1938 = vcmp.gt.f32.partialorder %v1810, 0.5
      %vm1939 = vcmp.gt.f32.partialorder %v1811, 0.5
      %vm1940 = vcmp.gt.f32.partialorder %v1812, 0.5
      %vm1941 = vcmp.gt.f32.partialorder %v1813, 0.5
      %vm1942 = vcmp.gt.f32.partialorder %v1814, 0.5
      %vm1943 = vcmp.gt.f32.partialorder %v1815, 0.5
      %vm1944 = vcmp.gt.f32.partialorder %v1816, 0.5
      %vm1945 = vcmp.gt.f32.partialorder %v1817, 0.5
      %vm1946 = vcmp.gt.f32.partialorder %v1818, 0.5
      %vm1947 = vcmp.gt.f32.partialorder %v1819, 0.5
      %vm1948 = vcmp.gt.f32.partialorder %v1820, 0.5
      %vm1949 = vcmp.gt.f32.partialorder %v1821, 0.5
      %vm1950 = vcmp.gt.f32.partialorder %v1822, 0.5
      %vm1951 = vcmp.gt.f32.partialorder %v1823, 0.5
      %vm1952 = vcmp.gt.f32.partialorder %v1824, 0.5
      %vm1953 = vcmp.gt.f32.partialorder %v1825, 0.5
      %vm1954 = vcmp.gt.f32.partialorder %v1826, 0.5
      %vm1955 = vcmp.gt.f32.partialorder %v1827, 0.5
      %vm1956 = vcmp.gt.f32.partialorder %v1828, 0.5
      %vm1957 = vcmp.gt.f32.partialorder %v1829, 0.5
      %vm1958 = vcmp.gt.f32.partialorder %v1830, 0.5
      %vm1959 = vcmp.gt.f32.partialorder %v1831, 0.5
      %vm1960 = vcmp.gt.f32.partialorder %v1832, 0.5
      %vm1961 = vcmp.gt.f32.partialorder %v1833, 0.5
      %vm1962 = vcmp.gt.f32.partialorder %v1834, 0.5
      %vm1963 = vcmp.gt.f32.partialorder %v1835, 0.5
      %vm1964 = vcmp.gt.f32.partialorder %v1836, 0.5
      %vm1965 = vcmp.gt.f32.partialorder %v1837, 0.5
      %vm1966 = vcmp.gt.f32.partialorder %v1838, 0.5
      %vm1967 = vcmp.gt.f32.partialorder %v1839, 0.5
      %vm1968 = vcmp.gt.f32.partialorder %v1840, 0.5
      %vm1969 = vcmp.gt.f32.partialorder %v1841, 0.5
      %vm1970 = vcmp.gt.f32.partialorder %v1842, 0.5
      %vm1971 = vcmp.gt.f32.partialorder %v1843, 0.5
      %vm1972 = vcmp.gt.f32.partialorder %v1844, 0.5
      %vm1973 = vcmp.gt.f32.partialorder %v1845, 0.5
      %vm1974 = vcmp.gt.f32.partialorder %v1846, 0.5
      %vm1975 = vcmp.gt.f32.partialorder %v1847, 0.5
      %vm1976 = vcmp.gt.f32.partialorder %v1848, 0.5
      %vm1977 = vcmp.gt.f32.partialorder %v1849, 0.5
      %vm1978 = vcmp.gt.f32.partialorder %v1850, 0.5
      %vm1979 = vcmp.gt.f32.partialorder %v1851, 0.5
      %vm1980 = vcmp.gt.f32.partialorder %v1852, 0.5
      %vm1981 = vcmp.gt.f32.partialorder %v1853, 0.5
      %vm1982 = vcmp.gt.f32.partialorder %v1854, 0.5
      %vm1983 = vcmp.gt.f32.partialorder %v1855, 0.5
      %vm1984 = vcmp.gt.f32.partialorder %v1856, 0.5
      %vm1985 = vcmp.gt.f32.partialorder %v1857, 0.5
      %vm1986 = vcmp.gt.f32.partialorder %v1858, 0.5
      %vm1987 = vcmp.gt.f32.partialorder %v1859, 0.5
      %vm1988 = vcmp.gt.f32.partialorder %v1860, 0.5
      %vm1989 = vcmp.gt.f32.partialorder %v1861, 0.5
      %vm1990 = vcmp.gt.f32.partialorder %v1862, 0.5
      %vm1991 = vcmp.gt.f32.partialorder %v1863, 0.5
      %vm1992 = vcmp.gt.f32.partialorder %v1864, 0.5
      %vm1993 = vcmp.gt.f32.partialorder %v1865, 0.5
      %vm1994 = vcmp.gt.f32.partialorder %v1866, 0.5
      %vm1995 = vcmp.gt.f32.partialorder %v1867, 0.5
      %vm1996 = vcmp.gt.f32.partialorder %v1868, 0.5
      %vm1997 = vcmp.gt.f32.partialorder %v1869, 0.5
      %vm1998 = vcmp.gt.f32.partialorder %v1870, 0.5
      %vm1999 = vcmp.gt.f32.partialorder %v1871, 0.5
      %vm2000 = vcmp.gt.f32.partialorder %v1872, 0.5
      %vm2001 = vcmp.gt.f32.partialorder %v1873, 0.5
      %vm2002 = vcmp.gt.f32.partialorder %v1874, 0.5
      %vm2003 = vcmp.gt.f32.partialorder %v1875, 0.5
      %vm2004 = vcmp.gt.f32.partialorder %v1876, 0.5
      %vm2005 = vcmp.gt.f32.partialorder %v1877, 0.5
      %vm2006 = vcmp.gt.f32.partialorder %v1878, 0.5
      %vm2007 = vcmp.gt.f32.partialorder %v1879, 0.5
      %vm2008 = vcmp.gt.f32.partialorder %v1880, 0.5
      %vm2009 = vcmp.gt.f32.partialorder %v1881, 0.5
      %vm2010 = vcmp.gt.f32.partialorder %v1882, 0.5
      %vm2011 = vcmp.gt.f32.partialorder %v1883, 0.5
      %vm2012 = vcmp.gt.f32.partialorder %v1884, 0.5
      %vm2013 = vcmp.gt.f32.partialorder %v1885, 0.5
      %vm2014 = vcmp.gt.f32.partialorder %v1886, 0.5
      %vm2015 = vcmp.gt.f32.partialorder %v1887, 0.5
      %vm2016 = vcmp.gt.f32.partialorder %v1888, 0.5
      %vm2017 = vcmp.gt.f32.partialorder %v1889, 0.5
      %vm2018 = vcmp.gt.f32.partialorder %v1890, 0.5
      %vm2019 = vcmp.gt.f32.partialorder %v1891, 0.5
      %vm2020 = vcmp.gt.f32.partialorder %v1892, 0.5
      %vm2021 = vcmp.gt.f32.partialorder %v1893, 0.5
      %vm2022 = vcmp.gt.f32.partialorder %v1894, 0.5
      %vm2023 = vcmp.gt.f32.partialorder %v1895, 0.5
      %vm2024 = vcmp.gt.f32.partialorder %v1896, 0.5
      %vm2025 = vcmp.gt.f32.partialorder %v1897, 0.5
      %vm2026 = vcmp.gt.f32.partialorder %v1898, 0.5
      %vm2027 = vcmp.gt.f32.partialorder %v1899, 0.5
      %vm2028 = vcmp.gt.f32.partialorder %v1900, 0.5
      %vm2029 = vcmp.gt.f32.partialorder %v1901, 0.5
      %vm2030 = vcmp.gt.f32.partialorder %v1902, 0.5
      %vm2031 = vcmp.gt.f32.partialorder %v1903, 0.5
      %vm2032 = vcmp.gt.f32.partialorder %v1904, 0.5
      %vm2033 = vcmp.gt.f32.partialorder %v1905, 0.5
      %vm2034 = vcmp.gt.f32.partialorder %v1906, 0.5
      %vm2035 = vcmp.gt.f32.partialorder %v1907, 0.5
      %vm2036 = vcmp.gt.f32.partialorder %v1908, 0.5
      %vm2037 = vcmp.gt.f32.partialorder %v1909, 0.5
      %vm2038 = vcmp.gt.f32.partialorder %v1910, 0.5
      %vm2039 = vcmp.gt.f32.partialorder %v1911, 0.5
      %vm2040 = vcmp.gt.f32.partialorder %v1912, 0.5
      %vm2041 = vcmp.gt.f32.partialorder %v1913, 0.5
      %vm2042 = vcmp.gt.f32.partialorder %v1914, 0.5
      %vm2043 = vcmp.gt.f32.partialorder %v1915, 0.5
      %vm2044 = vcmp.gt.f32.partialorder %v1916, 0.5
      %vm2045 = vcmp.gt.f32.partialorder %v1917, 0.5
      %vm2046 = vcmp.gt.f32.partialorder %v1918, 0.5
      %vm2047 = vcmp.gt.f32.partialorder %v1919, 0.5
      %vm2048 = vcmp.gt.f32.partialorder %v1920, 0.5
      %vm2049 = vcmp.gt.f32.partialorder %v1921, 0.5
      %vm2050 = vcmp.gt.f32.partialorder %v1922, 0.5
      %vm2051 = vcmp.gt.f32.partialorder %v1923, 0.5
      %vm2052 = vcmp.gt.f32.partialorder %v1924, 0.5
      %v2053 = vsel %vm1925, %v1669, -1e+30
      %v2054 = vsel %vm1926, %v1670, -1e+30
      %v2055 = vsel %vm1927, %v1671, -1e+30
      %v2056 = vsel %vm1928, %v1672, -1e+30
      %v2057 = vsel %vm1929, %v1673, -1e+30
      %v2058 = vsel %vm1930, %v1674, -1e+30
      %v2059 = vsel %vm1931, %v1675, -1e+30
      %v2060 = vsel %vm1932, %v1676, -1e+30
      %v2061 = vsel %vm1933, %v1677, -1e+30
      %v2062 = vsel %vm1934, %v1678, -1e+30
      %v2063 = vsel %vm1935, %v1679, -1e+30
      %v2064 = vsel %vm1936, %v1680, -1e+30
      %v2065 = vsel %vm1937, %v1681, -1e+30
      %v2066 = vsel %vm1938, %v1682, -1e+30
      %v2067 = vsel %vm1939, %v1683, -1e+30
      %v2068 = vsel %vm1940, %v1684, -1e+30
      %v2069 = vsel %vm1941, %v1685, -1e+30
      %v2070 = vsel %vm1942, %v1686, -1e+30
      %v2071 = vsel %vm1943, %v1687, -1e+30
      %v2072 = vsel %vm1944, %v1688, -1e+30
      %v2073 = vsel %vm1945, %v1689, -1e+30
      %v2074 = vsel %vm1946, %v1690, -1e+30
      %v2075 = vsel %vm1947, %v1691, -1e+30
      %v2076 = vsel %vm1948, %v1692, -1e+30
      %v2077 = vsel %vm1949, %v1693, -1e+30
      %v2078 = vsel %vm1950, %v1694, -1e+30
      %v2079 = vsel %vm1951, %v1695, -1e+30
      %v2080 = vsel %vm1952, %v1696, -1e+30
      %v2081 = vsel %vm1953, %v1697, -1e+30
      %v2082 = vsel %vm1954, %v1698, -1e+30
      %v2083 = vsel %vm1955, %v1699, -1e+30
      %v2084 = vsel %vm1956, %v1700, -1e+30
      %v2085 = vsel %vm1957, %v1701, -1e+30
      %v2086 = vsel %vm1958, %v1702, -1e+30
      %v2087 = vsel %vm1959, %v1703, -1e+30
      %v2088 = vsel %vm1960, %v1704, -1e+30
      %v2089 = vsel %vm1961, %v1705, -1e+30
      %v2090 = vsel %vm1962, %v1706, -1e+30
      %v2091 = vsel %vm1963, %v1707, -1e+30
      %v2092 = vsel %vm1964, %v1708, -1e+30
      %v2093 = vsel %vm1965, %v1709, -1e+30
      %v2094 = vsel %vm1966, %v1710, -1e+30
      %v2095 = vsel %vm1967, %v1711, -1e+30
      %v2096 = vsel %vm1968, %v1712, -1e+30
      %v2097 = vsel %vm1969, %v1713, -1e+30
      %v2098 = vsel %vm1970, %v1714, -1e+30
      %v2099 = vsel %vm1971, %v1715, -1e+30
      %v2100 = vsel %vm1972, %v1716, -1e+30
      %v2101 = vsel %vm1973, %v1717, -1e+30
      %v2102 = vsel %vm1974, %v1718, -1e+30
      %v2103 = vsel %vm1975, %v1719, -1e+30
      %v2104 = vsel %vm1976, %v1720, -1e+30
      %v2105 = vsel %vm1977, %v1721, -1e+30
      %v2106 = vsel %vm1978, %v1722, -1e+30
      %v2107 = vsel %vm1979, %v1723, -1e+30
      %v2108 = vsel %vm1980, %v1724, -1e+30
      %v2109 = vsel %vm1981, %v1725, -1e+30
      %v2110 = vsel %vm1982, %v1726, -1e+30
      %v2111 = vsel %vm1983, %v1727, -1e+30
      %v2112 = vsel %vm1984, %v1728, -1e+30
      %v2113 = vsel %vm1985, %v1729, -1e+30
      %v2114 = vsel %vm1986, %v1730, -1e+30
      %v2115 = vsel %vm1987, %v1731, -1e+30
      %v2116 = vsel %vm1988, %v1732, -1e+30
      %v2117 = vsel %vm1989, %v1733, -1e+30
      %v2118 = vsel %vm1990, %v1734, -1e+30
      %v2119 = vsel %vm1991, %v1735, -1e+30
      %v2120 = vsel %vm1992, %v1736, -1e+30
      %v2121 = vsel %vm1993, %v1737, -1e+30
      %v2122 = vsel %vm1994, %v1738, -1e+30
      %v2123 = vsel %vm1995, %v1739, -1e+30
      %v2124 = vsel %vm1996, %v1740, -1e+30
      %v2125 = vsel %vm1997, %v1741, -1e+30
      %v2126 = vsel %vm1998, %v1742, -1e+30
      %v2127 = vsel %vm1999, %v1743, -1e+30
      %v2128 = vsel %vm2000, %v1744, -1e+30
      %v2129 = vsel %vm2001, %v1745, -1e+30
      %v2130 = vsel %vm2002, %v1746, -1e+30
      %v2131 = vsel %vm2003, %v1747, -1e+30
      %v2132 = vsel %vm2004, %v1748, -1e+30
      %v2133 = vsel %vm2005, %v1749, -1e+30
      %v2134 = vsel %vm2006, %v1750, -1e+30
      %v2135 = vsel %vm2007, %v1751, -1e+30
      %v2136 = vsel %vm2008, %v1752, -1e+30
      %v2137 = vsel %vm2009, %v1753, -1e+30
      %v2138 = vsel %vm2010, %v1754, -1e+30
      %v2139 = vsel %vm2011, %v1755, -1e+30
      %v2140 = vsel %vm2012, %v1756, -1e+30
      %v2141 = vsel %vm2013, %v1757, -1e+30
      %v2142 = vsel %vm2014, %v1758, -1e+30
      %v2143 = vsel %vm2015, %v1759, -1e+30
      %v2144 = vsel %vm2016, %v1760, -1e+30
      %v2145 = vsel %vm2017, %v1761, -1e+30
      %v2146 = vsel %vm2018, %v1762, -1e+30
      %v2147 = vsel %vm2019, %v1763, -1e+30
      %v2148 = vsel %vm2020, %v1764, -1e+30
      %v2149 = vsel %vm2021, %v1765, -1e+30
      %v2150 = vsel %vm2022, %v1766, -1e+30
      %v2151 = vsel %vm2023, %v1767, -1e+30
      %v2152 = vsel %vm2024, %v1768, -1e+30
      %v2153 = vsel %vm2025, %v1769, -1e+30
      %v2154 = vsel %vm2026, %v1770, -1e+30
      %v2155 = vsel %vm2027, %v1771, -1e+30
      %v2156 = vsel %vm2028, %v1772, -1e+30
      %v2157 = vsel %vm2029, %v1773, -1e+30
      %v2158 = vsel %vm2030, %v1774, -1e+30
      %v2159 = vsel %vm2031, %v1775, -1e+30
      %v2160 = vsel %vm2032, %v1776, -1e+30
      %v2161 = vsel %vm2033, %v1777, -1e+30
      %v2162 = vsel %vm2034, %v1778, -1e+30
      %v2163 = vsel %vm2035, %v1779, -1e+30
      %v2164 = vsel %vm2036, %v1780, -1e+30
      %v2165 = vsel %vm2037, %v1781, -1e+30
      %v2166 = vsel %vm2038, %v1782, -1e+30
      %v2167 = vsel %vm2039, %v1783, -1e+30
      %v2168 = vsel %vm2040, %v1784, -1e+30
      %v2169 = vsel %vm2041, %v1785, -1e+30
      %v2170 = vsel %vm2042, %v1786, -1e+30
      %v2171 = vsel %vm2043, %v1787, -1e+30
      %v2172 = vsel %vm2044, %v1788, -1e+30
      %v2173 = vsel %vm2045, %v1789, -1e+30
      %v2174 = vsel %vm2046, %v1790, -1e+30
      %v2175 = vsel %vm2047, %v1791, -1e+30
      %v2176 = vsel %vm2048, %v1792, -1e+30
      %v2177 = vsel %vm2049, %v1793, -1e+30
      %v2178 = vsel %vm2050, %v1794, -1e+30
      %v2179 = vsel %vm2051, %v1795, -1e+30
      %v2180 = vsel %vm2052, %v1796, -1e+30
      %2181 = vmax.xlane.f32.xlu0 %v2053
      %v2182 = vpop.xlane.xlu0 %2181
      %2183 = vmax.xlane.f32.xlu0 %v2054
      %v2184 = vpop.xlane.xlu0 %2183
      %2185 = vmax.xlane.f32.xlu0 %v2055
      %v2186 = vpop.xlane.xlu0 %2185
      %2187 = vmax.xlane.f32.xlu0 %v2056
      %v2188 = vpop.xlane.xlu0 %2187
      %2189 = vmax.xlane.f32.xlu0 %v2057
      %v2190 = vpop.xlane.xlu0 %2189
      %2191 = vmax.xlane.f32.xlu0 %v2058
      %v2192 = vpop.xlane.xlu0 %2191
      %2193 = vmax.xlane.f32.xlu0 %v2059
      %v2194 = vpop.xlane.xlu0 %2193
      %2195 = vmax.xlane.f32.xlu0 %v2060
      %v2196 = vpop.xlane.xlu0 %2195
      %2197 = vmax.xlane.f32.xlu0 %v2061
      %v2198 = vpop.xlane.xlu0 %2197
      %2199 = vmax.xlane.f32.xlu0 %v2062
      %v2200 = vpop.xlane.xlu0 %2199
      %2201 = vmax.xlane.f32.xlu0 %v2063
      %v2202 = vpop.xlane.xlu0 %2201
      %2203 = vmax.xlane.f32.xlu0 %v2064
      %v2204 = vpop.xlane.xlu0 %2203
      %2205 = vmax.xlane.f32.xlu0 %v2065
      %v2206 = vpop.xlane.xlu0 %2205
      %2207 = vmax.xlane.f32.xlu0 %v2066
      %v2208 = vpop.xlane.xlu0 %2207
      %2209 = vmax.xlane.f32.xlu0 %v2067
      %v2210 = vpop.xlane.xlu0 %2209
      %2211 = vmax.xlane.f32.xlu0 %v2068
      %v2212 = vpop.xlane.xlu0 %2211
      %2213 = vmax.xlane.f32.xlu0 %v2069
      %v2214 = vpop.xlane.xlu0 %2213
      %2215 = vmax.xlane.f32.xlu0 %v2070
      %v2216 = vpop.xlane.xlu0 %2215
      %2217 = vmax.xlane.f32.xlu0 %v2071
      %v2218 = vpop.xlane.xlu0 %2217
      %2219 = vmax.xlane.f32.xlu0 %v2072
      %v2220 = vpop.xlane.xlu0 %2219
      %2221 = vmax.xlane.f32.xlu0 %v2073
      %v2222 = vpop.xlane.xlu0 %2221
      %2223 = vmax.xlane.f32.xlu0 %v2074
      %v2224 = vpop.xlane.xlu0 %2223
      %2225 = vmax.xlane.f32.xlu0 %v2075
      %v2226 = vpop.xlane.xlu0 %2225
      %2227 = vmax.xlane.f32.xlu0 %v2076
      %v2228 = vpop.xlane.xlu0 %2227
      %2229 = vmax.xlane.f32.xlu0 %v2077
      %v2230 = vpop.xlane.xlu0 %2229
      %2231 = vmax.xlane.f32.xlu0 %v2078
      %v2232 = vpop.xlane.xlu0 %2231
      %2233 = vmax.xlane.f32.xlu0 %v2079
      %v2234 = vpop.xlane.xlu0 %2233
      %2235 = vmax.xlane.f32.xlu0 %v2080
      %v2236 = vpop.xlane.xlu0 %2235
      %2237 = vmax.xlane.f32.xlu0 %v2081
      %v2238 = vpop.xlane.xlu0 %2237
      %2239 = vmax.xlane.f32.xlu0 %v2082
      %v2240 = vpop.xlane.xlu0 %2239
      %2241 = vmax.xlane.f32.xlu0 %v2083
      %v2242 = vpop.xlane.xlu0 %2241
      %2243 = vmax.xlane.f32.xlu0 %v2084
      %v2244 = vpop.xlane.xlu0 %2243
      %2245 = vmax.xlane.f32.xlu0 %v2085
      %v2246 = vpop.xlane.xlu0 %2245
      %2247 = vmax.xlane.f32.xlu0 %v2086
      %v2248 = vpop.xlane.xlu0 %2247
      %2249 = vmax.xlane.f32.xlu0 %v2087
      %v2250 = vpop.xlane.xlu0 %2249
      %2251 = vmax.xlane.f32.xlu0 %v2088
      %v2252 = vpop.xlane.xlu0 %2251
      %2253 = vmax.xlane.f32.xlu0 %v2089
      %v2254 = vpop.xlane.xlu0 %2253
      %2255 = vmax.xlane.f32.xlu0 %v2090
      %v2256 = vpop.xlane.xlu0 %2255
      %2257 = vmax.xlane.f32.xlu0 %v2091
      %v2258 = vpop.xlane.xlu0 %2257
      %2259 = vmax.xlane.f32.xlu0 %v2092
      %v2260 = vpop.xlane.xlu0 %2259
      %2261 = vmax.xlane.f32.xlu0 %v2093
      %v2262 = vpop.xlane.xlu0 %2261
      %2263 = vmax.xlane.f32.xlu0 %v2094
      %v2264 = vpop.xlane.xlu0 %2263
      %2265 = vmax.xlane.f32.xlu0 %v2095
      %v2266 = vpop.xlane.xlu0 %2265
      %2267 = vmax.xlane.f32.xlu0 %v2096
      %v2268 = vpop.xlane.xlu0 %2267
      %2269 = vmax.xlane.f32.xlu0 %v2097
      %v2270 = vpop.xlane.xlu0 %2269
      %2271 = vmax.xlane.f32.xlu0 %v2098
      %v2272 = vpop.xlane.xlu0 %2271
      %2273 = vmax.xlane.f32.xlu0 %v2099
      %v2274 = vpop.xlane.xlu0 %2273
      %2275 = vmax.xlane.f32.xlu0 %v2100
      %v2276 = vpop.xlane.xlu0 %2275
      %2277 = vmax.xlane.f32.xlu0 %v2101
      %v2278 = vpop.xlane.xlu0 %2277
      %2279 = vmax.xlane.f32.xlu0 %v2102
      %v2280 = vpop.xlane.xlu0 %2279
      %2281 = vmax.xlane.f32.xlu0 %v2103
      %v2282 = vpop.xlane.xlu0 %2281
      %2283 = vmax.xlane.f32.xlu0 %v2104
      %v2284 = vpop.xlane.xlu0 %2283
      %2285 = vmax.xlane.f32.xlu0 %v2105
      %v2286 = vpop.xlane.xlu0 %2285
      %2287 = vmax.xlane.f32.xlu0 %v2106
      %v2288 = vpop.xlane.xlu0 %2287
      %2289 = vmax.xlane.f32.xlu0 %v2107
      %v2290 = vpop.xlane.xlu0 %2289
      %2291 = vmax.xlane.f32.xlu0 %v2108
      %v2292 = vpop.xlane.xlu0 %2291
      %2293 = vmax.xlane.f32.xlu0 %v2109
      %v2294 = vpop.xlane.xlu0 %2293
      %2295 = vmax.xlane.f32.xlu0 %v2110
      %v2296 = vpop.xlane.xlu0 %2295
      %2297 = vmax.xlane.f32.xlu0 %v2111
      %v2298 = vpop.xlane.xlu0 %2297
      %2299 = vmax.xlane.f32.xlu0 %v2112
      %v2300 = vpop.xlane.xlu0 %2299
      %2301 = vmax.xlane.f32.xlu0 %v2113
      %v2302 = vpop.xlane.xlu0 %2301
      %2303 = vmax.xlane.f32.xlu0 %v2114
      %v2304 = vpop.xlane.xlu0 %2303
      %2305 = vmax.xlane.f32.xlu0 %v2115
      %v2306 = vpop.xlane.xlu0 %2305
      %2307 = vmax.xlane.f32.xlu0 %v2116
      %v2308 = vpop.xlane.xlu0 %2307
      %2309 = vmax.xlane.f32.xlu0 %v2117
      %v2310 = vpop.xlane.xlu0 %2309
      %2311 = vmax.xlane.f32.xlu0 %v2118
      %v2312 = vpop.xlane.xlu0 %2311
      %2313 = vmax.xlane.f32.xlu0 %v2119
      %v2314 = vpop.xlane.xlu0 %2313
      %2315 = vmax.xlane.f32.xlu0 %v2120
      %v2316 = vpop.xlane.xlu0 %2315
      %2317 = vmax.xlane.f32.xlu0 %v2121
      %v2318 = vpop.xlane.xlu0 %2317
      %2319 = vmax.xlane.f32.xlu0 %v2122
      %v2320 = vpop.xlane.xlu0 %2319
      %2321 = vmax.xlane.f32.xlu0 %v2123
      %v2322 = vpop.xlane.xlu0 %2321
      %2323 = vmax.xlane.f32.xlu0 %v2124
      %v2324 = vpop.xlane.xlu0 %2323
      %2325 = vmax.xlane.f32.xlu0 %v2125
      %v2326 = vpop.xlane.xlu0 %2325
      %2327 = vmax.xlane.f32.xlu0 %v2126
      %v2328 = vpop.xlane.xlu0 %2327
      %2329 = vmax.xlane.f32.xlu0 %v2127
      %v2330 = vpop.xlane.xlu0 %2329
      %2331 = vmax.xlane.f32.xlu0 %v2128
      %v2332 = vpop.xlane.xlu0 %2331
      %2333 = vmax.xlane.f32.xlu0 %v2129
      %v2334 = vpop.xlane.xlu0 %2333
      %2335 = vmax.xlane.f32.xlu0 %v2130
      %v2336 = vpop.xlane.xlu0 %2335
      %2337 = vmax.xlane.f32.xlu0 %v2131
      %v2338 = vpop.xlane.xlu0 %2337
      %2339 = vmax.xlane.f32.xlu0 %v2132
      %v2340 = vpop.xlane.xlu0 %2339
      %2341 = vmax.xlane.f32.xlu0 %v2133
      %v2342 = vpop.xlane.xlu0 %2341
      %2343 = vmax.xlane.f32.xlu0 %v2134
      %v2344 = vpop.xlane.xlu0 %2343
      %2345 = vmax.xlane.f32.xlu0 %v2135
      %v2346 = vpop.xlane.xlu0 %2345
      %2347 = vmax.xlane.f32.xlu0 %v2136
      %v2348 = vpop.xlane.xlu0 %2347
      %2349 = vmax.xlane.f32.xlu0 %v2137
      %v2350 = vpop.xlane.xlu0 %2349
      %2351 = vmax.xlane.f32.xlu0 %v2138
      %v2352 = vpop.xlane.xlu0 %2351
      %2353 = vmax.xlane.f32.xlu0 %v2139
      %v2354 = vpop.xlane.xlu0 %2353
      %2355 = vmax.xlane.f32.xlu0 %v2140
      %v2356 = vpop.xlane.xlu0 %2355
      %2357 = vmax.xlane.f32.xlu0 %v2141
      %v2358 = vpop.xlane.xlu0 %2357
      %2359 = vmax.xlane.f32.xlu0 %v2142
      %v2360 = vpop.xlane.xlu0 %2359
      %2361 = vmax.xlane.f32.xlu0 %v2143
      %v2362 = vpop.xlane.xlu0 %2361
      %2363 = vmax.xlane.f32.xlu0 %v2144
      %v2364 = vpop.xlane.xlu0 %2363
      %2365 = vmax.xlane.f32.xlu0 %v2145
      %v2366 = vpop.xlane.xlu0 %2365
      %2367 = vmax.xlane.f32.xlu0 %v2146
      %v2368 = vpop.xlane.xlu0 %2367
      %2369 = vmax.xlane.f32.xlu0 %v2147
      %v2370 = vpop.xlane.xlu0 %2369
      %2371 = vmax.xlane.f32.xlu0 %v2148
      %v2372 = vpop.xlane.xlu0 %2371
      %2373 = vmax.xlane.f32.xlu0 %v2149
      %v2374 = vpop.xlane.xlu0 %2373
      %2375 = vmax.xlane.f32.xlu0 %v2150
      %v2376 = vpop.xlane.xlu0 %2375
      %2377 = vmax.xlane.f32.xlu0 %v2151
      %v2378 = vpop.xlane.xlu0 %2377
      %2379 = vmax.xlane.f32.xlu0 %v2152
      %v2380 = vpop.xlane.xlu0 %2379
      %2381 = vmax.xlane.f32.xlu0 %v2153
      %v2382 = vpop.xlane.xlu0 %2381
      %2383 = vmax.xlane.f32.xlu0 %v2154
      %v2384 = vpop.xlane.xlu0 %2383
      %2385 = vmax.xlane.f32.xlu0 %v2155
      %v2386 = vpop.xlane.xlu0 %2385
      %2387 = vmax.xlane.f32.xlu0 %v2156
      %v2388 = vpop.xlane.xlu0 %2387
      %2389 = vmax.xlane.f32.xlu0 %v2157
      %v2390 = vpop.xlane.xlu0 %2389
      %2391 = vmax.xlane.f32.xlu0 %v2158
      %v2392 = vpop.xlane.xlu0 %2391
      %2393 = vmax.xlane.f32.xlu0 %v2159
      %v2394 = vpop.xlane.xlu0 %2393
      %2395 = vmax.xlane.f32.xlu0 %v2160
      %v2396 = vpop.xlane.xlu0 %2395
      %2397 = vmax.xlane.f32.xlu0 %v2161
      %v2398 = vpop.xlane.xlu0 %2397
      %2399 = vmax.xlane.f32.xlu0 %v2162
      %v2400 = vpop.xlane.xlu0 %2399
      %2401 = vmax.xlane.f32.xlu0 %v2163
      %v2402 = vpop.xlane.xlu0 %2401
      %2403 = vmax.xlane.f32.xlu0 %v2164
      %v2404 = vpop.xlane.xlu0 %2403
      %2405 = vmax.xlane.f32.xlu0 %v2165
      %v2406 = vpop.xlane.xlu0 %2405
      %2407 = vmax.xlane.f32.xlu0 %v2166
      %v2408 = vpop.xlane.xlu0 %2407
      %2409 = vmax.xlane.f32.xlu0 %v2167
      %v2410 = vpop.xlane.xlu0 %2409
      %2411 = vmax.xlane.f32.xlu0 %v2168
      %v2412 = vpop.xlane.xlu0 %2411
      %2413 = vmax.xlane.f32.xlu0 %v2169
      %v2414 = vpop.xlane.xlu0 %2413
      %2415 = vmax.xlane.f32.xlu0 %v2170
      %v2416 = vpop.xlane.xlu0 %2415
      %2417 = vmax.xlane.f32.xlu0 %v2171
      %v2418 = vpop.xlane.xlu0 %2417
      %2419 = vmax.xlane.f32.xlu0 %v2172
      %v2420 = vpop.xlane.xlu0 %2419
      %2421 = vmax.xlane.f32.xlu0 %v2173
      %v2422 = vpop.xlane.xlu0 %2421
      %2423 = vmax.xlane.f32.xlu0 %v2174
      %v2424 = vpop.xlane.xlu0 %2423
      %2425 = vmax.xlane.f32.xlu0 %v2175
      %v2426 = vpop.xlane.xlu0 %2425
      %2427 = vmax.xlane.f32.xlu0 %v2176
      %v2428 = vpop.xlane.xlu0 %2427
      %2429 = vmax.xlane.f32.xlu0 %v2177
      %v2430 = vpop.xlane.xlu0 %2429
      %2431 = vmax.xlane.f32.xlu0 %v2178
      %v2432 = vpop.xlane.xlu0 %2431
      %2433 = vmax.xlane.f32.xlu0 %v2179
      %v2434 = vpop.xlane.xlu0 %2433
      %vm2435 = vcmask 1043456
      %v2436 = vsel %vm2435, %v2180, -inf
      %2437 = vmax.xlane.f32.xlu0 %v2436
      %v2438 = vpop.xlane.xlu0 %2437
      %v2439 = vmax.f32 %v2182, %v2190
      %v2440 = vmax.f32 %v2184, %v2192
      %v2441 = vmax.f32 %v2186, %v2194
      %v2442 = vmax.f32 %v2188, %v2196
      %v2443 = vmax.f32 %v2439, %v2198
      %v2444 = vmax.f32 %v2440, %v2200
      %v2445 = vmax.f32 %v2441, %v2202
      %v2446 = vmax.f32 %v2442, %v2204
      %v2447 = vmax.f32 %v2443, %v2206
      %v2448 = vmax.f32 %v2444, %v2208
      %v2449 = vmax.f32 %v2445, %v2210
      %v2450 = vmax.f32 %v2446, %v2212
      %v2451 = vmax.f32 %v2447, %v2214
      %v2452 = vmax.f32 %v2448, %v2216
      %v2453 = vmax.f32 %v2449, %v2218
      %v2454 = vmax.f32 %v2450, %v2220
      %v2455 = vmax.f32 %v2451, %v2222
      %v2456 = vmax.f32 %v2452, %v2224
      %v2457 = vmax.f32 %v2453, %v2226
      %v2458 = vmax.f32 %v2454, %v2228
      %v2459 = vmax.f32 %v2455, %v2230
      %v2460 = vmax.f32 %v2456, %v2232
      %v2461 = vmax.f32 %v2457, %v2234
      %v2462 = vmax.f32 %v2458, %v2236
      %v2463 = vmax.f32 %v2459, %v2238
      %v2464 = vmax.f32 %v2460, %v2240
      %v2465 = vmax.f32 %v2461, %v2242
      %v2466 = vmax.f32 %v2462, %v2244
      %v2467 = vmax.f32 %v2463, %v2246
      %v2468 = vmax.f32 %v2464, %v2248
      %v2469 = vmax.f32 %v2465, %v2250
      %v2470 = vmax.f32 %v2466, %v2252
      %v2471 = vmax.f32 %v2467, %v2254
      %v2472 = vmax.f32 %v2468, %v2256
      %v2473 = vmax.f32 %v2469, %v2258
      %v2474 = vmax.f32 %v2470, %v2260
      %v2475 = vmax.f32 %v2471, %v2262
      %v2476 = vmax.f32 %v2472, %v2264
      %v2477 = vmax.f32 %v2473, %v2266
      %v2478 = vmax.f32 %v2474, %v2268
      %v2479 = vmax.f32 %v2475, %v2270
      %v2480 = vmax.f32 %v2476, %v2272
      %v2481 = vmax.f32 %v2477, %v2274
      %v2482 = vmax.f32 %v2478, %v2276
      %v2483 = vmax.f32 %v2479, %v2278
      %v2484 = vmax.f32 %v2480, %v2280
      %v2485 = vmax.f32 %v2481, %v2282
      %v2486 = vmax.f32 %v2482, %v2284
      %v2487 = vmax.f32 %v2483, %v2286
      %v2488 = vmax.f32 %v2484, %v2288
      %v2489 = vmax.f32 %v2485, %v2290
      %v2490 = vmax.f32 %v2486, %v2292
      %v2491 = vmax.f32 %v2487, %v2294
      %v2492 = vmax.f32 %v2488, %v2296
      %v2493 = vmax.f32 %v2489, %v2298
      %v2494 = vmax.f32 %v2490, %v2300
      %v2495 = vmax.f32 %v2491, %v2302
      %v2496 = vmax.f32 %v2492, %v2304
      %v2497 = vmax.f32 %v2493, %v2306
      %v2498 = vmax.f32 %v2494, %v2308
      %v2499 = vmax.f32 %v2495, %v2310
      %v2500 = vmax.f32 %v2496, %v2312
      %v2501 = vmax.f32 %v2497, %v2314
      %v2502 = vmax.f32 %v2498, %v2316
      %v2503 = vmax.f32 %v2499, %v2318
      %v2504 = vmax.f32 %v2500, %v2320
      %v2505 = vmax.f32 %v2501, %v2322
      %v2506 = vmax.f32 %v2502, %v2324
      %v2507 = vmax.f32 %v2503, %v2326
      %v2508 = vmax.f32 %v2504, %v2328
      %v2509 = vmax.f32 %v2505, %v2330
      %v2510 = vmax.f32 %v2506, %v2332
      %v2511 = vmax.f32 %v2507, %v2334
      %v2512 = vmax.f32 %v2508, %v2336
      %v2513 = vmax.f32 %v2509, %v2338
      %v2514 = vmax.f32 %v2510, %v2340
      %v2515 = vmax.f32 %v2511, %v2342
      %v2516 = vmax.f32 %v2512, %v2344
      %v2517 = vmax.f32 %v2513, %v2346
      %v2518 = vmax.f32 %v2514, %v2348
      %v2519 = vmax.f32 %v2515, %v2350
      %v2520 = vmax.f32 %v2516, %v2352
      %v2521 = vmax.f32 %v2517, %v2354
      %v2522 = vmax.f32 %v2518, %v2356
      %v2523 = vmax.f32 %v2519, %v2358
      %v2524 = vmax.f32 %v2520, %v2360
      %v2525 = vmax.f32 %v2521, %v2362
      %v2526 = vmax.f32 %v2522, %v2364
      %v2527 = vmax.f32 %v2523, %v2366
      %v2528 = vmax.f32 %v2524, %v2368
      %v2529 = vmax.f32 %v2525, %v2370
      %v2530 = vmax.f32 %v2526, %v2372
      %v2531 = vmax.f32 %v2527, %v2374
      %v2532 = vmax.f32 %v2528, %v2376
      %v2533 = vmax.f32 %v2529, %v2378
      %v2534 = vmax.f32 %v2530, %v2380
      %v2535 = vmax.f32 %v2531, %v2382
      %v2536 = vmax.f32 %v2532, %v2384
      %v2537 = vmax.f32 %v2533, %v2386
      %v2538 = vmax.f32 %v2534, %v2388
      %v2539 = vmax.f32 %v2535, %v2390
      %v2540 = vmax.f32 %v2536, %v2392
      %v2541 = vmax.f32 %v2537, %v2394
      %v2542 = vmax.f32 %v2538, %v2396
      %v2543 = vmax.f32 %v2539, %v2398
      %v2544 = vmax.f32 %v2540, %v2400
      %v2545 = vmax.f32 %v2541, %v2402
      %v2546 = vmax.f32 %v2542, %v2404
      %v2547 = vmax.f32 %v2543, %v2406
      %v2548 = vmax.f32 %v2544, %v2408
      %v2549 = vmax.f32 %v2545, %v2410
      %v2550 = vmax.f32 %v2546, %v2412
      %v2551 = vmax.f32 %v2547, %v2414
      %v2552 = vmax.f32 %v2548, %v2416
      %v2553 = vmax.f32 %v2549, %v2418
      %v2554 = vmax.f32 %v2550, %v2420
      %v2555 = vmax.f32 %v2551, %v2422
      %v2556 = vmax.f32 %v2552, %v2424
      %v2557 = vmax.f32 %v2553, %v2426
      %v2558 = vmax.f32 %v2554, %v2428
      %v2559 = vmax.f32 %v2555, %v2430
      %v2560 = vmax.f32 %v2556, %v2432
      %v2561 = vmax.f32 %v2557, %v2434
      %v2562 = vsel %vm2435, %v2438, -inf
      %v2563 = vmax.f32 %v2558, %v2562
      %v2564 = vmax.f32 %v2559, %v2560
      %v2565 = vmax.f32 %v2561, %v2563
      %v2566 = vmax.f32 %v2564, %v2565
      %v2567 = vrot.slane %v2566, 4
      %v2568 = vmax.f32 %v2566, %v2567
      %v2569 = vrot.slane %v2568, 2
      %v2570 = vmax.f32 %v2568, %v2569
      %v2571 = vrot.slane %v2570, 1
      %v2572 = vmax.f32 %v2570, %v2571
      %v2573 = vsub.f32 %v1669, %v2572
      %v2574 = vsub.f32 %v1670, %v2572
      %v2575 = vsub.f32 %v1671, %v2572
      %v2576 = vsub.f32 %v1672, %v2572
      %v2577 = vsub.f32 %v1673, %v2572
      %v2578 = vsub.f32 %v1674, %v2572
      %v2579 = vsub.f32 %v1675, %v2572
      %v2580 = vsub.f32 %v1676, %v2572
      %v2581 = vsub.f32 %v1677, %v2572
      %v2582 = vsub.f32 %v1678, %v2572
      %v2583 = vsub.f32 %v1679, %v2572
      %v2584 = vsub.f32 %v1680, %v2572
      %v2585 = vsub.f32 %v1681, %v2572
      %v2586 = vsub.f32 %v1682, %v2572
      %v2587 = vsub.f32 %v1683, %v2572
      %v2588 = vsub.f32 %v1684, %v2572
      %v2589 = vsub.f32 %v1685, %v2572
      %v2590 = vsub.f32 %v1686, %v2572
      %v2591 = vsub.f32 %v1687, %v2572
      %v2592 = vsub.f32 %v1688, %v2572
      %v2593 = vsub.f32 %v1689, %v2572
      %v2594 = vsub.f32 %v1690, %v2572
      %v2595 = vsub.f32 %v1691, %v2572
      %v2596 = vsub.f32 %v1692, %v2572
      %v2597 = vsub.f32 %v1693, %v2572
      %v2598 = vsub.f32 %v1694, %v2572
      %v2599 = vsub.f32 %v1695, %v2572
      %v2600 = vsub.f32 %v1696, %v2572
      %v2601 = vsub.f32 %v1697, %v2572
      %v2602 = vsub.f32 %v1698, %v2572
      %v2603 = vsub.f32 %v1699, %v2572
      %v2604 = vsub.f32 %v1700, %v2572
      %v2605 = vsub.f32 %v1701, %v2572
      %v2606 = vsub.f32 %v1702, %v2572
      %v2607 = vsub.f32 %v1703, %v2572
      %v2608 = vsub.f32 %v1704, %v2572
      %v2609 = vsub.f32 %v1705, %v2572
      %v2610 = vsub.f32 %v1706, %v2572
      %v2611 = vsub.f32 %v1707, %v2572
      %v2612 = vsub.f32 %v1708, %v2572
      %v2613 = vsub.f32 %v1709, %v2572
      %v2614 = vsub.f32 %v1710, %v2572
      %v2615 = vsub.f32 %v1711, %v2572
      %v2616 = vsub.f32 %v1712, %v2572
      %v2617 = vsub.f32 %v1713, %v2572
      %v2618 = vsub.f32 %v1714, %v2572
      %v2619 = vsub.f32 %v1715, %v2572
      %v2620 = vsub.f32 %v1716, %v2572
      %v2621 = vsub.f32 %v1717, %v2572
      %v2622 = vsub.f32 %v1718, %v2572
      %v2623 = vsub.f32 %v1719, %v2572
      %v2624 = vsub.f32 %v1720, %v2572
      %v2625 = vsub.f32 %v1721, %v2572
      %v2626 = vsub.f32 %v1722, %v2572
      %v2627 = vsub.f32 %v1723, %v2572
      %v2628 = vsub.f32 %v1724, %v2572
      %v2629 = vsub.f32 %v1725, %v2572
      %v2630 = vsub.f32 %v1726, %v2572
      %v2631 = vsub.f32 %v1727, %v2572
      %v2632 = vsub.f32 %v1728, %v2572
      %v2633 = vsub.f32 %v1729, %v2572
      %v2634 = vsub.f32 %v1730, %v2572
      %v2635 = vsub.f32 %v1731, %v2572
      %v2636 = vsub.f32 %v1732, %v2572
      %v2637 = vsub.f32 %v1733, %v2572
      %v2638 = vsub.f32 %v1734, %v2572
      %v2639 = vsub.f32 %v1735, %v2572
      %v2640 = vsub.f32 %v1736, %v2572
      %v2641 = vsub.f32 %v1737, %v2572
      %v2642 = vsub.f32 %v1738, %v2572
      %v2643 = vsub.f32 %v1739, %v2572
      %v2644 = vsub.f32 %v1740, %v2572
      %v2645 = vsub.f32 %v1741, %v2572
      %v2646 = vsub.f32 %v1742, %v2572
      %v2647 = vsub.f32 %v1743, %v2572
      %v2648 = vsub.f32 %v1744, %v2572
      %v2649 = vsub.f32 %v1745, %v2572
      %v2650 = vsub.f32 %v1746, %v2572
      %v2651 = vsub.f32 %v1747, %v2572
      %v2652 = vsub.f32 %v1748, %v2572
      %v2653 = vsub.f32 %v1749, %v2572
      %v2654 = vsub.f32 %v1750, %v2572
      %v2655 = vsub.f32 %v1751, %v2572
      %v2656 = vsub.f32 %v1752, %v2572
      %v2657 = vsub.f32 %v1753, %v2572
      %v2658 = vsub.f32 %v1754, %v2572
      %v2659 = vsub.f32 %v1755, %v2572
      %v2660 = vsub.f32 %v1756, %v2572
      %v2661 = vsub.f32 %v1757, %v2572
      %v2662 = vsub.f32 %v1758, %v2572
      %v2663 = vsub.f32 %v1759, %v2572
      %v2664 = vsub.f32 %v1760, %v2572
      %v2665 = vsub.f32 %v1761, %v2572
      %v2666 = vsub.f32 %v1762, %v2572
      %v2667 = vsub.f32 %v1763, %v2572
      %v2668 = vsub.f32 %v1764, %v2572
      %v2669 = vsub.f32 %v1765, %v2572
      %v2670 = vsub.f32 %v1766, %v2572
      %v2671 = vsub.f32 %v1767, %v2572
      %v2672 = vsub.f32 %v1768, %v2572
      %v2673 = vsub.f32 %v1769, %v2572
      %v2674 = vsub.f32 %v1770, %v2572
      %v2675 = vsub.f32 %v1771, %v2572
      %v2676 = vsub.f32 %v1772, %v2572
      %v2677 = vsub.f32 %v1773, %v2572
      %v2678 = vsub.f32 %v1774, %v2572
      %v2679 = vsub.f32 %v1775, %v2572
      %v2680 = vsub.f32 %v1776, %v2572
      %v2681 = vsub.f32 %v1777, %v2572
      %v2682 = vsub.f32 %v1778, %v2572
      %v2683 = vsub.f32 %v1779, %v2572
      %v2684 = vsub.f32 %v1780, %v2572
      %v2685 = vsub.f32 %v1781, %v2572
      %v2686 = vsub.f32 %v1782, %v2572
      %v2687 = vsub.f32 %v1783, %v2572
      %v2688 = vsub.f32 %v1784, %v2572
      %v2689 = vsub.f32 %v1785, %v2572
      %v2690 = vsub.f32 %v1786, %v2572
      %v2691 = vsub.f32 %v1787, %v2572
      %v2692 = vsub.f32 %v1788, %v2572
      %v2693 = vsub.f32 %v1789, %v2572
      %v2694 = vsub.f32 %v1790, %v2572
      %v2695 = vsub.f32 %v1791, %v2572
      %v2696 = vsub.f32 %v1792, %v2572
      %v2697 = vsub.f32 %v1793, %v2572
      %v2698 = vsub.f32 %v1794, %v2572
      %v2699 = vsub.f32 %v1795, %v2572
      %v2700 = vsub.f32 %v1796, %v2572
      %v2701 = vmul.f32 %v2573, 1.442695
      %v2702 = vpow.pop %v2701
      %v2703 = vmul.f32 %v2574, 1.442695
      %v2704 = vpow.pop %v2703
      %v2705 = vmul.f32 %v2575, 1.442695
      %v2706 = vpow.pop %v2705
      %v2707 = vmul.f32 %v2576, 1.442695
      %v2708 = vpow.pop %v2707
      %v2709 = vmul.f32 %v2577, 1.442695
      %v2710 = vpow.pop %v2709
      %v2711 = vmul.f32 %v2578, 1.442695
      %v2712 = vpow.pop %v2711
      %v2713 = vmul.f32 %v2579, 1.442695
      %v2714 = vpow.pop %v2713
      %v2715 = vmul.f32 %v2580, 1.442695
      %v2716 = vpow.pop %v2715
      %v2717 = vmul.f32 %v2581, 1.442695
      %v2718 = vpow.pop %v2717
      %v2719 = vmul.f32 %v2582, 1.442695
      %v2720 = vpow.pop %v2719
      %v2721 = vmul.f32 %v2583, 1.442695
      %v2722 = vpow.pop %v2721
      %v2723 = vmul.f32 %v2584, 1.442695
      %v2724 = vpow.pop %v2723
      %v2725 = vmul.f32 %v2585, 1.442695
      %v2726 = vpow.pop %v2725
      %v2727 = vmul.f32 %v2586, 1.442695
      %v2728 = vpow.pop %v2727
      %v2729 = vmul.f32 %v2587, 1.442695
      %v2730 = vpow.pop %v2729
      %v2731 = vmul.f32 %v2588, 1.442695
      %v2732 = vpow.pop %v2731
      %v2733 = vmul.f32 %v2589, 1.442695
      %v2734 = vpow.pop %v2733
      %v2735 = vmul.f32 %v2590, 1.442695
      %v2736 = vpow.pop %v2735
      %v2737 = vmul.f32 %v2591, 1.442695
      %v2738 = vpow.pop %v2737
      %v2739 = vmul.f32 %v2592, 1.442695
      %v2740 = vpow.pop %v2739
      %v2741 = vmul.f32 %v2593, 1.442695
      %v2742 = vpow.pop %v2741
      %v2743 = vmul.f32 %v2594, 1.442695
      %v2744 = vpow.pop %v2743
      %v2745 = vmul.f32 %v2595, 1.442695
      %v2746 = vpow.pop %v2745
      %v2747 = vmul.f32 %v2596, 1.442695
      %v2748 = vpow.pop %v2747
      %v2749 = vmul.f32 %v2597, 1.442695
      %v2750 = vpow.pop %v2749
      %v2751 = vmul.f32 %v2598, 1.442695
      %v2752 = vpow.pop %v2751
      %v2753 = vmul.f32 %v2599, 1.442695
      %v2754 = vpow.pop %v2753
      %v2755 = vmul.f32 %v2600, 1.442695
      %v2756 = vpow.pop %v2755
      %v2757 = vmul.f32 %v2601, 1.442695
      %v2758 = vpow.pop %v2757
      %v2759 = vmul.f32 %v2602, 1.442695
      %v2760 = vpow.pop %v2759
      %v2761 = vmul.f32 %v2603, 1.442695
      %v2762 = vpow.pop %v2761
      %v2763 = vmul.f32 %v2604, 1.442695
      %v2764 = vpow.pop %v2763
      %v2765 = vmul.f32 %v2605, 1.442695
      %v2766 = vpow.pop %v2765
      %v2767 = vmul.f32 %v2606, 1.442695
      %v2768 = vpow.pop %v2767
      %v2769 = vmul.f32 %v2607, 1.442695
      %v2770 = vpow.pop %v2769
      %v2771 = vmul.f32 %v2608, 1.442695
      %v2772 = vpow.pop %v2771
      %v2773 = vmul.f32 %v2609, 1.442695
      %v2774 = vpow.pop %v2773
      %v2775 = vmul.f32 %v2610, 1.442695
      %v2776 = vpow.pop %v2775
      %v2777 = vmul.f32 %v2611, 1.442695
      %v2778 = vpow.pop %v2777
      %v2779 = vmul.f32 %v2612, 1.442695
      %v2780 = vpow.pop %v2779
      %v2781 = vmul.f32 %v2613, 1.442695
      %v2782 = vpow.pop %v2781
      %v2783 = vmul.f32 %v2614, 1.442695
      %v2784 = vpow.pop %v2783
      %v2785 = vmul.f32 %v2615, 1.442695
      %v2786 = vpow.pop %v2785
      %v2787 = vmul.f32 %v2616, 1.442695
      %v2788 = vpow.pop %v2787
      %v2789 = vmul.f32 %v2617, 1.442695
      %v2790 = vpow.pop %v2789
      %v2791 = vmul.f32 %v2618, 1.442695
      %v2792 = vpow.pop %v2791
      %v2793 = vmul.f32 %v2619, 1.442695
      %v2794 = vpow.pop %v2793
      %v2795 = vmul.f32 %v2620, 1.442695
      %v2796 = vpow.pop %v2795
      %v2797 = vmul.f32 %v2621, 1.442695
      %v2798 = vpow.pop %v2797
      %v2799 = vmul.f32 %v2622, 1.442695
      %v2800 = vpow.pop %v2799
      %v2801 = vmul.f32 %v2623, 1.442695
      %v2802 = vpow.pop %v2801
      %v2803 = vmul.f32 %v2624, 1.442695
      %v2804 = vpow.pop %v2803
      %v2805 = vmul.f32 %v2625, 1.442695
      %v2806 = vpow.pop %v2805
      %v2807 = vmul.f32 %v2626, 1.442695
      %v2808 = vpow.pop %v2807
      %v2809 = vmul.f32 %v2627, 1.442695
      %v2810 = vpow.pop %v2809
      %v2811 = vmul.f32 %v2628, 1.442695
      %v2812 = vpow.pop %v2811
      %v2813 = vmul.f32 %v2629, 1.442695
      %v2814 = vpow.pop %v2813
      %v2815 = vmul.f32 %v2630, 1.442695
      %v2816 = vpow.pop %v2815
      %v2817 = vmul.f32 %v2631, 1.442695
      %v2818 = vpow.pop %v2817
      %v2819 = vmul.f32 %v2632, 1.442695
      %v2820 = vpow.pop %v2819
      %v2821 = vmul.f32 %v2633, 1.442695
      %v2822 = vpow.pop %v2821
      %v2823 = vmul.f32 %v2634, 1.442695
      %v2824 = vpow.pop %v2823
      %v2825 = vmul.f32 %v2635, 1.442695
      %v2826 = vpow.pop %v2825
      %v2827 = vmul.f32 %v2636, 1.442695
      %v2828 = vpow.pop %v2827
      %v2829 = vmul.f32 %v2637, 1.442695
      %v2830 = vpow.pop %v2829
      %v2831 = vmul.f32 %v2638, 1.442695
      %v2832 = vpow.pop %v2831
      %v2833 = vmul.f32 %v2639, 1.442695
      %v2834 = vpow.pop %v2833
      %v2835 = vmul.f32 %v2640, 1.442695
      %v2836 = vpow.pop %v2835
      %v2837 = vmul.f32 %v2641, 1.442695
      %v2838 = vpow.pop %v2837
      %v2839 = vmul.f32 %v2642, 1.442695
      %v2840 = vpow.pop %v2839
      %v2841 = vmul.f32 %v2643, 1.442695
      %v2842 = vpow.pop %v2841
      %v2843 = vmul.f32 %v2644, 1.442695
      %v2844 = vpow.pop %v2843
      %v2845 = vmul.f32 %v2645, 1.442695
      %v2846 = vpow.pop %v2845
      %v2847 = vmul.f32 %v2646, 1.442695
      %v2848 = vpow.pop %v2847
      %v2849 = vmul.f32 %v2647, 1.442695
      %v2850 = vpow.pop %v2849
      %v2851 = vmul.f32 %v2648, 1.442695
      %v2852 = vpow.pop %v2851
      %v2853 = vmul.f32 %v2649, 1.442695
      %v2854 = vpow.pop %v2853
      %v2855 = vmul.f32 %v2650, 1.442695
      %v2856 = vpow.pop %v2855
      %v2857 = vmul.f32 %v2651, 1.442695
      %v2858 = vpow.pop %v2857
      %v2859 = vmul.f32 %v2652, 1.442695
      %v2860 = vpow.pop %v2859
      %v2861 = vmul.f32 %v2653, 1.442695
      %v2862 = vpow.pop %v2861
      %v2863 = vmul.f32 %v2654, 1.442695
      %v2864 = vpow.pop %v2863
      %v2865 = vmul.f32 %v2655, 1.442695
      %v2866 = vpow.pop %v2865
      %v2867 = vmul.f32 %v2656, 1.442695
      %v2868 = vpow.pop %v2867
      %v2869 = vmul.f32 %v2657, 1.442695
      %v2870 = vpow.pop %v2869
      %v2871 = vmul.f32 %v2658, 1.442695
      %v2872 = vpow.pop %v2871
      %v2873 = vmul.f32 %v2659, 1.442695
      %v2874 = vpow.pop %v2873
      %v2875 = vmul.f32 %v2660, 1.442695
      %v2876 = vpow.pop %v2875
      %v2877 = vmul.f32 %v2661, 1.442695
      %v2878 = vpow.pop %v2877
      %v2879 = vmul.f32 %v2662, 1.442695
      %v2880 = vpow.pop %v2879
      %v2881 = vmul.f32 %v2663, 1.442695
      %v2882 = vpow.pop %v2881
      %v2883 = vmul.f32 %v2664, 1.442695
      %v2884 = vpow.pop %v2883
      %v2885 = vmul.f32 %v2665, 1.442695
      %v2886 = vpow.pop %v2885
      %v2887 = vmul.f32 %v2666, 1.442695
      %v2888 = vpow.pop %v2887
      %v2889 = vmul.f32 %v2667, 1.442695
      %v2890 = vpow.pop %v2889
      %v2891 = vmul.f32 %v2668, 1.442695
      %v2892 = vpow.pop %v2891
      %v2893 = vmul.f32 %v2669, 1.442695
      %v2894 = vpow.pop %v2893
      %v2895 = vmul.f32 %v2670, 1.442695
      %v2896 = vpow.pop %v2895
      %v2897 = vmul.f32 %v2671, 1.442695
      %v2898 = vpow.pop %v2897
      %v2899 = vmul.f32 %v2672, 1.442695
      %v2900 = vpow.pop %v2899
      %v2901 = vmul.f32 %v2673, 1.442695
      %v2902 = vpow.pop %v2901
      %v2903 = vmul.f32 %v2674, 1.442695
      %v2904 = vpow.pop %v2903
      %v2905 = vmul.f32 %v2675, 1.442695
      %v2906 = vpow.pop %v2905
      %v2907 = vmul.f32 %v2676, 1.442695
      %v2908 = vpow.pop %v2907
      %v2909 = vmul.f32 %v2677, 1.442695
      %v2910 = vpow.pop %v2909
      %v2911 = vmul.f32 %v2678, 1.442695
      %v2912 = vpow.pop %v2911
      %v2913 = vmul.f32 %v2679, 1.442695
      %v2914 = vpow.pop %v2913
      %v2915 = vmul.f32 %v2680, 1.442695
      %v2916 = vpow.pop %v2915
      %v2917 = vmul.f32 %v2681, 1.442695
      %v2918 = vpow.pop %v2917
      %v2919 = vmul.f32 %v2682, 1.442695
      %v2920 = vpow.pop %v2919
      %v2921 = vmul.f32 %v2683, 1.442695
      %v2922 = vpow.pop %v2921
      %v2923 = vmul.f32 %v2684, 1.442695
      %v2924 = vpow.pop %v2923
      %v2925 = vmul.f32 %v2685, 1.442695
      %v2926 = vpow.pop %v2925
      %v2927 = vmul.f32 %v2686, 1.442695
      %v2928 = vpow.pop %v2927
      %v2929 = vmul.f32 %v2687, 1.442695
      %v2930 = vpow.pop %v2929
      %v2931 = vmul.f32 %v2688, 1.442695
      %v2932 = vpow.pop %v2931
      %v2933 = vmul.f32 %v2689, 1.442695
      %v2934 = vpow.pop %v2933
      %v2935 = vmul.f32 %v2690, 1.442695
      %v2936 = vpow.pop %v2935
      %v2937 = vmul.f32 %v2691, 1.442695
      %v2938 = vpow.pop %v2937
      %v2939 = vmul.f32 %v2692, 1.442695
      %v2940 = vpow.pop %v2939
      %v2941 = vmul.f32 %v2693, 1.442695
      %v2942 = vpow.pop %v2941
      %v2943 = vmul.f32 %v2694, 1.442695
      %v2944 = vpow.pop %v2943
      %v2945 = vmul.f32 %v2695, 1.442695
      %v2946 = vpow.pop %v2945
      %v2947 = vmul.f32 %v2696, 1.442695
      %v2948 = vpow.pop %v2947
      %v2949 = vmul.f32 %v2697, 1.442695
      %v2950 = vpow.pop %v2949
      %v2951 = vmul.f32 %v2698, 1.442695
      %v2952 = vpow.pop %v2951
      %v2953 = vmul.f32 %v2699, 1.442695
      %v2954 = vpow.pop %v2953
      %v2955 = vmul.f32 %v2700, 1.442695
      %v2956 = vpow.pop %v2955
      %v2957 = vsel %vm1925, %v2702, 0.0
      %v2958 = vsel %vm1926, %v2704, 0.0
      %v2959 = vsel %vm1927, %v2706, 0.0
      %v2960 = vsel %vm1928, %v2708, 0.0
      %v2961 = vsel %vm1929, %v2710, 0.0
      %v2962 = vsel %vm1930, %v2712, 0.0
      %v2963 = vsel %vm1931, %v2714, 0.0
      %v2964 = vsel %vm1932, %v2716, 0.0
      %v2965 = vsel %vm1933, %v2718, 0.0
      %v2966 = vsel %vm1934, %v2720, 0.0
      %v2967 = vsel %vm1935, %v2722, 0.0
      %v2968 = vsel %vm1936, %v2724, 0.0
      %v2969 = vsel %vm1937, %v2726, 0.0
      %v2970 = vsel %vm1938, %v2728, 0.0
      %v2971 = vsel %vm1939, %v2730, 0.0
      %v2972 = vsel %vm1940, %v2732, 0.0
      %v2973 = vsel %vm1941, %v2734, 0.0
      %v2974 = vsel %vm1942, %v2736, 0.0
      %v2975 = vsel %vm1943, %v2738, 0.0
      %v2976 = vsel %vm1944, %v2740, 0.0
      %v2977 = vsel %vm1945, %v2742, 0.0
      %v2978 = vsel %vm1946, %v2744, 0.0
      %v2979 = vsel %vm1947, %v2746, 0.0
      %v2980 = vsel %vm1948, %v2748, 0.0
      %v2981 = vsel %vm1949, %v2750, 0.0
      %v2982 = vsel %vm1950, %v2752, 0.0
      %v2983 = vsel %vm1951, %v2754, 0.0
      %v2984 = vsel %vm1952, %v2756, 0.0
      %v2985 = vsel %vm1953, %v2758, 0.0
      %v2986 = vsel %vm1954, %v2760, 0.0
      %v2987 = vsel %vm1955, %v2762, 0.0
      %v2988 = vsel %vm1956, %v2764, 0.0
      %v2989 = vsel %vm1957, %v2766, 0.0
      %v2990 = vsel %vm1958, %v2768, 0.0
      %v2991 = vsel %vm1959, %v2770, 0.0
      %v2992 = vsel %vm1960, %v2772, 0.0
      %v2993 = vsel %vm1961, %v2774, 0.0
      %v2994 = vsel %vm1962, %v2776, 0.0
      %v2995 = vsel %vm1963, %v2778, 0.0
      %v2996 = vsel %vm1964, %v2780, 0.0
      %v2997 = vsel %vm1965, %v2782, 0.0
      %v2998 = vsel %vm1966, %v2784, 0.0
      %v2999 = vsel %vm1967, %v2786, 0.0
      %v3000 = vsel %vm1968, %v2788, 0.0
      %v3001 = vsel %vm1969, %v2790, 0.0
      %v3002 = vsel %vm1970, %v2792, 0.0
      %v3003 = vsel %vm1971, %v2794, 0.0
      %v3004 = vsel %vm1972, %v2796, 0.0
      %v3005 = vsel %vm1973, %v2798, 0.0
      %v3006 = vsel %vm1974, %v2800, 0.0
      %v3007 = vsel %vm1975, %v2802, 0.0
      %v3008 = vsel %vm1976, %v2804, 0.0
      %v3009 = vsel %vm1977, %v2806, 0.0
      %v3010 = vsel %vm1978, %v2808, 0.0
      %v3011 = vsel %vm1979, %v2810, 0.0
      %v3012 = vsel %vm1980, %v2812, 0.0
      %v3013 = vsel %vm1981, %v2814, 0.0
      %v3014 = vsel %vm1982, %v2816, 0.0
      %v3015 = vsel %vm1983, %v2818, 0.0
      %v3016 = vsel %vm1984, %v2820, 0.0
      %v3017 = vsel %vm1985, %v2822, 0.0
      %v3018 = vsel %vm1986, %v2824, 0.0
      %v3019 = vsel %vm1987, %v2826, 0.0
      %v3020 = vsel %vm1988, %v2828, 0.0
      %v3021 = vsel %vm1989, %v2830, 0.0
      %v3022 = vsel %vm1990, %v2832, 0.0
      %v3023 = vsel %vm1991, %v2834, 0.0
      %v3024 = vsel %vm1992, %v2836, 0.0
      %v3025 = vsel %vm1993, %v2838, 0.0
      %v3026 = vsel %vm1994, %v2840, 0.0
      %v3027 = vsel %vm1995, %v2842, 0.0
      %v3028 = vsel %vm1996, %v2844, 0.0
      %v3029 = vsel %vm1997, %v2846, 0.0
      %v3030 = vsel %vm1998, %v2848, 0.0
      %v3031 = vsel %vm1999, %v2850, 0.0
      %v3032 = vsel %vm2000, %v2852, 0.0
      %v3033 = vsel %vm2001, %v2854, 0.0
      %v3034 = vsel %vm2002, %v2856, 0.0
      %v3035 = vsel %vm2003, %v2858, 0.0
      %v3036 = vsel %vm2004, %v2860, 0.0
      %v3037 = vsel %vm2005, %v2862, 0.0
      %v3038 = vsel %vm2006, %v2864, 0.0
      %v3039 = vsel %vm2007, %v2866, 0.0
      %v3040 = vsel %vm2008, %v2868, 0.0
      %v3041 = vsel %vm2009, %v2870, 0.0
      %v3042 = vsel %vm2010, %v2872, 0.0
      %v3043 = vsel %vm2011, %v2874, 0.0
      %v3044 = vsel %vm2012, %v2876, 0.0
      %v3045 = vsel %vm2013, %v2878, 0.0
      %v3046 = vsel %vm2014, %v2880, 0.0
      %v3047 = vsel %vm2015, %v2882, 0.0
      %v3048 = vsel %vm2016, %v2884, 0.0
      %v3049 = vsel %vm2017, %v2886, 0.0
      %v3050 = vsel %vm2018, %v2888, 0.0
      %v3051 = vsel %vm2019, %v2890, 0.0
      %v3052 = vsel %vm2020, %v2892, 0.0
      %v3053 = vsel %vm2021, %v2894, 0.0
      %v3054 = vsel %vm2022, %v2896, 0.0
      %v3055 = vsel %vm2023, %v2898, 0.0
      %v3056 = vsel %vm2024, %v2900, 0.0
      %v3057 = vsel %vm2025, %v2902, 0.0
      %v3058 = vsel %vm2026, %v2904, 0.0
      %v3059 = vsel %vm2027, %v2906, 0.0
      %v3060 = vsel %vm2028, %v2908, 0.0
      %v3061 = vsel %vm2029, %v2910, 0.0
      %v3062 = vsel %vm2030, %v2912, 0.0
      %v3063 = vsel %vm2031, %v2914, 0.0
      %v3064 = vsel %vm2032, %v2916, 0.0
      %v3065 = vsel %vm2033, %v2918, 0.0
      %v3066 = vsel %vm2034, %v2920, 0.0
      %v3067 = vsel %vm2035, %v2922, 0.0
      %v3068 = vsel %vm2036, %v2924, 0.0
      %v3069 = vsel %vm2037, %v2926, 0.0
      %v3070 = vsel %vm2038, %v2928, 0.0
      %v3071 = vsel %vm2039, %v2930, 0.0
      %v3072 = vsel %vm2040, %v2932, 0.0
      %v3073 = vsel %vm2041, %v2934, 0.0
      %v3074 = vsel %vm2042, %v2936, 0.0
      %v3075 = vsel %vm2043, %v2938, 0.0
      %v3076 = vsel %vm2044, %v2940, 0.0
      %v3077 = vsel %vm2045, %v2942, 0.0
      %v3078 = vsel %vm2046, %v2944, 0.0
      %v3079 = vsel %vm2047, %v2946, 0.0
      %v3080 = vsel %vm2048, %v2948, 0.0
      %v3081 = vsel %vm2049, %v2950, 0.0
      %v3082 = vsel %vm2050, %v2952, 0.0
      %v3083 = vsel %vm2051, %v2954, 0.0
      %v3084 = vsel %vm2052, %v2956, 0.0
      %3085 = vadd.xlane.f32.xlu0 %v2957
      %v3086 = vpop.xlane.xlu0 %3085
      %3087 = vadd.xlane.f32.xlu0 %v2958
      %v3088 = vpop.xlane.xlu0 %3087
      %3089 = vadd.xlane.f32.xlu0 %v2959
      %v3090 = vpop.xlane.xlu0 %3089
      %3091 = vadd.xlane.f32.xlu0 %v2960
      %v3092 = vpop.xlane.xlu0 %3091
      %3093 = vadd.xlane.f32.xlu0 %v2961
      %v3094 = vpop.xlane.xlu0 %3093
      %3095 = vadd.xlane.f32.xlu0 %v2962
      %v3096 = vpop.xlane.xlu0 %3095
      %3097 = vadd.xlane.f32.xlu0 %v2963
      %v3098 = vpop.xlane.xlu0 %3097
      %3099 = vadd.xlane.f32.xlu0 %v2964
      %v3100 = vpop.xlane.xlu0 %3099
      %3101 = vadd.xlane.f32.xlu0 %v2965
      %v3102 = vpop.xlane.xlu0 %3101
      %3103 = vadd.xlane.f32.xlu0 %v2966
      %v3104 = vpop.xlane.xlu0 %3103
      %3105 = vadd.xlane.f32.xlu0 %v2967
      %v3106 = vpop.xlane.xlu0 %3105
      %3107 = vadd.xlane.f32.xlu0 %v2968
      %v3108 = vpop.xlane.xlu0 %3107
      %3109 = vadd.xlane.f32.xlu0 %v2969
      %v3110 = vpop.xlane.xlu0 %3109
      %3111 = vadd.xlane.f32.xlu0 %v2970
      %v3112 = vpop.xlane.xlu0 %3111
      %3113 = vadd.xlane.f32.xlu0 %v2971
      %v3114 = vpop.xlane.xlu0 %3113
      %3115 = vadd.xlane.f32.xlu0 %v2972
      %v3116 = vpop.xlane.xlu0 %3115
      %3117 = vadd.xlane.f32.xlu0 %v2973
      %v3118 = vpop.xlane.xlu0 %3117
      %3119 = vadd.xlane.f32.xlu0 %v2974
      %v3120 = vpop.xlane.xlu0 %3119
      %3121 = vadd.xlane.f32.xlu0 %v2975
      %v3122 = vpop.xlane.xlu0 %3121
      %3123 = vadd.xlane.f32.xlu0 %v2976
      %v3124 = vpop.xlane.xlu0 %3123
      %3125 = vadd.xlane.f32.xlu0 %v2977
      %v3126 = vpop.xlane.xlu0 %3125
      %3127 = vadd.xlane.f32.xlu0 %v2978
      %v3128 = vpop.xlane.xlu0 %3127
      %3129 = vadd.xlane.f32.xlu0 %v2979
      %v3130 = vpop.xlane.xlu0 %3129
      %3131 = vadd.xlane.f32.xlu0 %v2980
      %v3132 = vpop.xlane.xlu0 %3131
      %3133 = vadd.xlane.f32.xlu0 %v2981
      %v3134 = vpop.xlane.xlu0 %3133
      %3135 = vadd.xlane.f32.xlu0 %v2982
      %v3136 = vpop.xlane.xlu0 %3135
      %3137 = vadd.xlane.f32.xlu0 %v2983
      %v3138 = vpop.xlane.xlu0 %3137
      %3139 = vadd.xlane.f32.xlu0 %v2984
      %v3140 = vpop.xlane.xlu0 %3139
      %3141 = vadd.xlane.f32.xlu0 %v2985
      %v3142 = vpop.xlane.xlu0 %3141
      %3143 = vadd.xlane.f32.xlu0 %v2986
      %v3144 = vpop.xlane.xlu0 %3143
      %3145 = vadd.xlane.f32.xlu0 %v2987
      %v3146 = vpop.xlane.xlu0 %3145
      %3147 = vadd.xlane.f32.xlu0 %v2988
      %v3148 = vpop.xlane.xlu0 %3147
      %3149 = vadd.xlane.f32.xlu0 %v2989
      %v3150 = vpop.xlane.xlu0 %3149
      %3151 = vadd.xlane.f32.xlu0 %v2990
      %v3152 = vpop.xlane.xlu0 %3151
      %3153 = vadd.xlane.f32.xlu0 %v2991
      %v3154 = vpop.xlane.xlu0 %3153
      %3155 = vadd.xlane.f32.xlu0 %v2992
      %v3156 = vpop.xlane.xlu0 %3155
      %3157 = vadd.xlane.f32.xlu0 %v2993
      %v3158 = vpop.xlane.xlu0 %3157
      %3159 = vadd.xlane.f32.xlu0 %v2994
      %v3160 = vpop.xlane.xlu0 %3159
      %3161 = vadd.xlane.f32.xlu0 %v2995
      %v3162 = vpop.xlane.xlu0 %3161
      %3163 = vadd.xlane.f32.xlu0 %v2996
      %v3164 = vpop.xlane.xlu0 %3163
      %3165 = vadd.xlane.f32.xlu0 %v2997
      %v3166 = vpop.xlane.xlu0 %3165
      %3167 = vadd.xlane.f32.xlu0 %v2998
      %v3168 = vpop.xlane.xlu0 %3167
      %3169 = vadd.xlane.f32.xlu0 %v2999
      %v3170 = vpop.xlane.xlu0 %3169
      %3171 = vadd.xlane.f32.xlu0 %v3000
      %v3172 = vpop.xlane.xlu0 %3171
      %3173 = vadd.xlane.f32.xlu0 %v3001
      %v3174 = vpop.xlane.xlu0 %3173
      %3175 = vadd.xlane.f32.xlu0 %v3002
      %v3176 = vpop.xlane.xlu0 %3175
      %3177 = vadd.xlane.f32.xlu0 %v3003
      %v3178 = vpop.xlane.xlu0 %3177
      %3179 = vadd.xlane.f32.xlu0 %v3004
      %v3180 = vpop.xlane.xlu0 %3179
      %3181 = vadd.xlane.f32.xlu0 %v3005
      %v3182 = vpop.xlane.xlu0 %3181
      %3183 = vadd.xlane.f32.xlu0 %v3006
      %v3184 = vpop.xlane.xlu0 %3183
      %3185 = vadd.xlane.f32.xlu0 %v3007
      %v3186 = vpop.xlane.xlu0 %3185
      %3187 = vadd.xlane.f32.xlu0 %v3008
      %v3188 = vpop.xlane.xlu0 %3187
      %3189 = vadd.xlane.f32.xlu0 %v3009
      %v3190 = vpop.xlane.xlu0 %3189
      %3191 = vadd.xlane.f32.xlu0 %v3010
      %v3192 = vpop.xlane.xlu0 %3191
      %3193 = vadd.xlane.f32.xlu0 %v3011
      %v3194 = vpop.xlane.xlu0 %3193
      %3195 = vadd.xlane.f32.xlu0 %v3012
      %v3196 = vpop.xlane.xlu0 %3195
      %3197 = vadd.xlane.f32.xlu0 %v3013
      %v3198 = vpop.xlane.xlu0 %3197
      %3199 = vadd.xlane.f32.xlu0 %v3014
      %v3200 = vpop.xlane.xlu0 %3199
      %3201 = vadd.xlane.f32.xlu0 %v3015
      %v3202 = vpop.xlane.xlu0 %3201
      %3203 = vadd.xlane.f32.xlu0 %v3016
      %v3204 = vpop.xlane.xlu0 %3203
      %3205 = vadd.xlane.f32.xlu0 %v3017
      %v3206 = vpop.xlane.xlu0 %3205
      %3207 = vadd.xlane.f32.xlu0 %v3018
      %v3208 = vpop.xlane.xlu0 %3207
      %3209 = vadd.xlane.f32.xlu0 %v3019
      %v3210 = vpop.xlane.xlu0 %3209
      %3211 = vadd.xlane.f32.xlu0 %v3020
      %v3212 = vpop.xlane.xlu0 %3211
      %3213 = vadd.xlane.f32.xlu0 %v3021
      %v3214 = vpop.xlane.xlu0 %3213
      %3215 = vadd.xlane.f32.xlu0 %v3022
      %v3216 = vpop.xlane.xlu0 %3215
      %3217 = vadd.xlane.f32.xlu0 %v3023
      %v3218 = vpop.xlane.xlu0 %3217
      %3219 = vadd.xlane.f32.xlu0 %v3024
      %v3220 = vpop.xlane.xlu0 %3219
      %3221 = vadd.xlane.f32.xlu0 %v3025
      %v3222 = vpop.xlane.xlu0 %3221
      %3223 = vadd.xlane.f32.xlu0 %v3026
      %v3224 = vpop.xlane.xlu0 %3223
      %3225 = vadd.xlane.f32.xlu0 %v3027
      %v3226 = vpop.xlane.xlu0 %3225
      %3227 = vadd.xlane.f32.xlu0 %v3028
      %v3228 = vpop.xlane.xlu0 %3227
      %3229 = vadd.xlane.f32.xlu0 %v3029
      %v3230 = vpop.xlane.xlu0 %3229
      %3231 = vadd.xlane.f32.xlu0 %v3030
      %v3232 = vpop.xlane.xlu0 %3231
      %3233 = vadd.xlane.f32.xlu0 %v3031
      %v3234 = vpop.xlane.xlu0 %3233
      %3235 = vadd.xlane.f32.xlu0 %v3032
      %v3236 = vpop.xlane.xlu0 %3235
      %3237 = vadd.xlane.f32.xlu0 %v3033
      %v3238 = vpop.xlane.xlu0 %3237
      %3239 = vadd.xlane.f32.xlu0 %v3034
      %v3240 = vpop.xlane.xlu0 %3239
      %3241 = vadd.xlane.f32.xlu0 %v3035
      %v3242 = vpop.xlane.xlu0 %3241
      %3243 = vadd.xlane.f32.xlu0 %v3036
      %v3244 = vpop.xlane.xlu0 %3243
      %3245 = vadd.xlane.f32.xlu0 %v3037
      %v3246 = vpop.xlane.xlu0 %3245
      %3247 = vadd.xlane.f32.xlu0 %v3038
      %v3248 = vpop.xlane.xlu0 %3247
      %3249 = vadd.xlane.f32.xlu0 %v3039
      %v3250 = vpop.xlane.xlu0 %3249
      %3251 = vadd.xlane.f32.xlu0 %v3040
      %v3252 = vpop.xlane.xlu0 %3251
      %3253 = vadd.xlane.f32.xlu0 %v3041
      %v3254 = vpop.xlane.xlu0 %3253
      %3255 = vadd.xlane.f32.xlu0 %v3042
      %v3256 = vpop.xlane.xlu0 %3255
      %3257 = vadd.xlane.f32.xlu0 %v3043
      %v3258 = vpop.xlane.xlu0 %3257
      %3259 = vadd.xlane.f32.xlu0 %v3044
      %v3260 = vpop.xlane.xlu0 %3259
      %3261 = vadd.xlane.f32.xlu0 %v3045
      %v3262 = vpop.xlane.xlu0 %3261
      %3263 = vadd.xlane.f32.xlu0 %v3046
      %v3264 = vpop.xlane.xlu0 %3263
      %3265 = vadd.xlane.f32.xlu0 %v3047
      %v3266 = vpop.xlane.xlu0 %3265
      %3267 = vadd.xlane.f32.xlu0 %v3048
      %v3268 = vpop.xlane.xlu0 %3267
      %3269 = vadd.xlane.f32.xlu0 %v3049
      %v3270 = vpop.xlane.xlu0 %3269
      %3271 = vadd.xlane.f32.xlu0 %v3050
      %v3272 = vpop.xlane.xlu0 %3271
      %3273 = vadd.xlane.f32.xlu0 %v3051
      %v3274 = vpop.xlane.xlu0 %3273
      %3275 = vadd.xlane.f32.xlu0 %v3052
      %v3276 = vpop.xlane.xlu0 %3275
      %3277 = vadd.xlane.f32.xlu0 %v3053
      %v3278 = vpop.xlane.xlu0 %3277
      %3279 = vadd.xlane.f32.xlu0 %v3054
      %v3280 = vpop.xlane.xlu0 %3279
      %3281 = vadd.xlane.f32.xlu0 %v3055
      %v3282 = vpop.xlane.xlu0 %3281
      %3283 = vadd.xlane.f32.xlu0 %v3056
      %v3284 = vpop.xlane.xlu0 %3283
      %3285 = vadd.xlane.f32.xlu0 %v3057
      %v3286 = vpop.xlane.xlu0 %3285
      %3287 = vadd.xlane.f32.xlu0 %v3058
      %v3288 = vpop.xlane.xlu0 %3287
      %3289 = vadd.xlane.f32.xlu0 %v3059
      %v3290 = vpop.xlane.xlu0 %3289
      %3291 = vadd.xlane.f32.xlu0 %v3060
      %v3292 = vpop.xlane.xlu0 %3291
      %3293 = vadd.xlane.f32.xlu0 %v3061
      %v3294 = vpop.xlane.xlu0 %3293
      %3295 = vadd.xlane.f32.xlu0 %v3062
      %v3296 = vpop.xlane.xlu0 %3295
      %3297 = vadd.xlane.f32.xlu0 %v3063
      %v3298 = vpop.xlane.xlu0 %3297
      %3299 = vadd.xlane.f32.xlu0 %v3064
      %v3300 = vpop.xlane.xlu0 %3299
      %3301 = vadd.xlane.f32.xlu0 %v3065
      %v3302 = vpop.xlane.xlu0 %3301
      %3303 = vadd.xlane.f32.xlu0 %v3066
      %v3304 = vpop.xlane.xlu0 %3303
      %3305 = vadd.xlane.f32.xlu0 %v3067
      %v3306 = vpop.xlane.xlu0 %3305
      %3307 = vadd.xlane.f32.xlu0 %v3068
      %v3308 = vpop.xlane.xlu0 %3307
      %3309 = vadd.xlane.f32.xlu0 %v3069
      %v3310 = vpop.xlane.xlu0 %3309
      %3311 = vadd.xlane.f32.xlu0 %v3070
      %v3312 = vpop.xlane.xlu0 %3311
      %3313 = vadd.xlane.f32.xlu0 %v3071
      %v3314 = vpop.xlane.xlu0 %3313
      %3315 = vadd.xlane.f32.xlu0 %v3072
      %v3316 = vpop.xlane.xlu0 %3315
      %3317 = vadd.xlane.f32.xlu0 %v3073
      %v3318 = vpop.xlane.xlu0 %3317
      %3319 = vadd.xlane.f32.xlu0 %v3074
      %v3320 = vpop.xlane.xlu0 %3319
      %3321 = vadd.xlane.f32.xlu0 %v3075
      %v3322 = vpop.xlane.xlu0 %3321
      %3323 = vadd.xlane.f32.xlu0 %v3076
      %v3324 = vpop.xlane.xlu0 %3323
      %3325 = vadd.xlane.f32.xlu0 %v3077
      %v3326 = vpop.xlane.xlu0 %3325
      %3327 = vadd.xlane.f32.xlu0 %v3078
      %v3328 = vpop.xlane.xlu0 %3327
      %3329 = vadd.xlane.f32.xlu0 %v3079
      %v3330 = vpop.xlane.xlu0 %3329
      %3331 = vadd.xlane.f32.xlu0 %v3080
      %v3332 = vpop.xlane.xlu0 %3331
      %3333 = vadd.xlane.f32.xlu0 %v3081
      %v3334 = vpop.xlane.xlu0 %3333
      %3335 = vadd.xlane.f32.xlu0 %v3082
      %v3336 = vpop.xlane.xlu0 %3335
      %3337 = vadd.xlane.f32.xlu0 %v3083
      %v3338 = vpop.xlane.xlu0 %3337
      %v3339 = vsel %vm2435, %v3084, 0.0
      %3340 = vadd.xlane.f32.xlu0 %v3339
      %v3341 = vpop.xlane.xlu0 %3340
      %v3342 = vadd.f32 %v3086, %v3088
      %v3343 = vadd.f32 %v3342, %v3090
      %v3344 = vadd.f32 %v3343, %v3092
      %v3345 = vadd.f32 %v3344, %v3094
      %v3346 = vadd.f32 %v3345, %v3096
      %v3347 = vadd.f32 %v3346, %v3098
      %v3348 = vadd.f32 %v3347, %v3100
      %v3349 = vadd.f32 %v3348, %v3102
      %v3350 = vadd.f32 %v3349, %v3104
      %v3351 = vadd.f32 %v3350, %v3106
      %v3352 = vadd.f32 %v3351, %v3108
      %v3353 = vadd.f32 %v3352, %v3110
      %v3354 = vadd.f32 %v3353, %v3112
      %v3355 = vadd.f32 %v3354, %v3114
      %v3356 = vadd.f32 %v3355, %v3116
      %v3357 = vadd.f32 %v3356, %v3118
      %v3358 = vadd.f32 %v3357, %v3120
      %v3359 = vadd.f32 %v3358, %v3122
      %v3360 = vadd.f32 %v3359, %v3124
      %v3361 = vadd.f32 %v3360, %v3126
      %v3362 = vadd.f32 %v3361, %v3128
      %v3363 = vadd.f32 %v3362, %v3130
      %v3364 = vadd.f32 %v3363, %v3132
      %v3365 = vadd.f32 %v3364, %v3134
      %v3366 = vadd.f32 %v3365, %v3136
      %v3367 = vadd.f32 %v3366, %v3138
      %v3368 = vadd.f32 %v3367, %v3140
      %v3369 = vadd.f32 %v3368, %v3142
      %v3370 = vadd.f32 %v3369, %v3144
      %v3371 = vadd.f32 %v3370, %v3146
      %v3372 = vadd.f32 %v3371, %v3148
      %v3373 = vadd.f32 %v3372, %v3150
      %v3374 = vadd.f32 %v3373, %v3152
      %v3375 = vadd.f32 %v3374, %v3154
      %v3376 = vadd.f32 %v3375, %v3156
      %v3377 = vadd.f32 %v3376, %v3158
      %v3378 = vadd.f32 %v3377, %v3160
      %v3379 = vadd.f32 %v3378, %v3162
      %v3380 = vadd.f32 %v3379, %v3164
      %v3381 = vadd.f32 %v3380, %v3166
      %v3382 = vadd.f32 %v3381, %v3168
      %v3383 = vadd.f32 %v3382, %v3170
      %v3384 = vadd.f32 %v3383, %v3172
      %v3385 = vadd.f32 %v3384, %v3174
      %v3386 = vadd.f32 %v3385, %v3176
      %v3387 = vadd.f32 %v3386, %v3178
      %v3388 = vadd.f32 %v3387, %v3180
      %v3389 = vadd.f32 %v3388, %v3182
      %v3390 = vadd.f32 %v3389, %v3184
      %v3391 = vadd.f32 %v3390, %v3186
      %v3392 = vadd.f32 %v3391, %v3188
      %v3393 = vadd.f32 %v3392, %v3190
      %v3394 = vadd.f32 %v3393, %v3192
      %v3395 = vadd.f32 %v3394, %v3194
      %v3396 = vadd.f32 %v3395, %v3196
      %v3397 = vadd.f32 %v3396, %v3198
      %v3398 = vadd.f32 %v3397, %v3200
      %v3399 = vadd.f32 %v3398, %v3202
      %v3400 = vadd.f32 %v3399, %v3204
      %v3401 = vadd.f32 %v3400, %v3206
      %v3402 = vadd.f32 %v3401, %v3208
      %v3403 = vadd.f32 %v3402, %v3210
      %v3404 = vadd.f32 %v3403, %v3212
      %v3405 = vadd.f32 %v3404, %v3214
      %v3406 = vadd.f32 %v3405, %v3216
      %v3407 = vadd.f32 %v3406, %v3218
      %v3408 = vadd.f32 %v3407, %v3220
      %v3409 = vadd.f32 %v3408, %v3222
      %v3410 = vadd.f32 %v3409, %v3224
      %v3411 = vadd.f32 %v3410, %v3226
      %v3412 = vadd.f32 %v3411, %v3228
      %v3413 = vadd.f32 %v3412, %v3230
      %v3414 = vadd.f32 %v3413, %v3232
      %v3415 = vadd.f32 %v3414, %v3234
      %v3416 = vadd.f32 %v3415, %v3236
      %v3417 = vadd.f32 %v3416, %v3238
      %v3418 = vadd.f32 %v3417, %v3240
      %v3419 = vadd.f32 %v3418, %v3242
      %v3420 = vadd.f32 %v3419, %v3244
      %v3421 = vadd.f32 %v3420, %v3246
      %v3422 = vadd.f32 %v3421, %v3248
      %v3423 = vadd.f32 %v3422, %v3250
      %v3424 = vadd.f32 %v3423, %v3252
      %v3425 = vadd.f32 %v3424, %v3254
      %v3426 = vadd.f32 %v3425, %v3256
      %v3427 = vadd.f32 %v3426, %v3258
      %v3428 = vadd.f32 %v3427, %v3260
      %v3429 = vadd.f32 %v3428, %v3262
      %v3430 = vadd.f32 %v3429, %v3264
      %v3431 = vadd.f32 %v3430, %v3266
      %v3432 = vadd.f32 %v3431, %v3268
      %v3433 = vadd.f32 %v3432, %v3270
      %v3434 = vadd.f32 %v3433, %v3272
      %v3435 = vadd.f32 %v3434, %v3274
      %v3436 = vadd.f32 %v3435, %v3276
      %v3437 = vadd.f32 %v3436, %v3278
      %v3438 = vadd.f32 %v3437, %v3280
      %v3439 = vadd.f32 %v3438, %v3282
      %v3440 = vadd.f32 %v3439, %v3284
      %v3441 = vadd.f32 %v3440, %v3286
      %v3442 = vadd.f32 %v3441, %v3288
      %v3443 = vadd.f32 %v3442, %v3290
      %v3444 = vadd.f32 %v3443, %v3292
      %v3445 = vadd.f32 %v3444, %v3294
      %v3446 = vadd.f32 %v3445, %v3296
      %v3447 = vadd.f32 %v3446, %v3298
      %v3448 = vadd.f32 %v3447, %v3300
      %v3449 = vadd.f32 %v3448, %v3302
      %v3450 = vadd.f32 %v3449, %v3304
      %v3451 = vadd.f32 %v3450, %v3306
      %v3452 = vadd.f32 %v3451, %v3308
      %v3453 = vadd.f32 %v3452, %v3310
      %v3454 = vadd.f32 %v3453, %v3312
      %v3455 = vadd.f32 %v3454, %v3314
      %v3456 = vadd.f32 %v3455, %v3316
      %v3457 = vadd.f32 %v3456, %v3318
      %v3458 = vadd.f32 %v3457, %v3320
      %v3459 = vadd.f32 %v3458, %v3322
      %v3460 = vadd.f32 %v3459, %v3324
      %v3461 = vadd.f32 %v3460, %v3326
      %v3462 = vadd.f32 %v3461, %v3328
      %v3463 = vadd.f32 %v3462, %v3330
      %v3464 = vadd.f32 %v3463, %v3332
      %v3465 = vadd.f32 %v3464, %v3334
      %v3466 = vadd.f32 %v3465, %v3336
      %v3467 = vadd.f32 %v3466, %v3338
      %v3468 = vsel %vm2435, %v3341, 0.0
      %v3469 = vadd.f32 %v3467, %v3468
      %v3470 = vrot.slane %v3469, 4
      %v3471 = vadd.f32 %v3469, %v3470
      %v3472 = vrot.slane %v3471, 2
      %v3473 = vadd.f32 %v3471, %v3472
      %v3474 = vrot.slane %v3473, 1
      %v3475 = vadd.f32 %v3473, %v3474
      %v3476 = vrcp.pop %v3475
      %v3477 = vmul.f32 %v3475, %v3476
      %v3478 = vsub.f32 2.0, %v3477
      %v3479 = vmul.f32 %v3476, %v3478
      %v3480 = vmul.f32 %v2957, %v3479
      %v3481 = vmul.f32 %v2958, %v3479
      %v3482 = vmul.f32 %v2959, %v3479
      %v3483 = vmul.f32 %v2960, %v3479
      %v3484 = vmul.f32 %v2961, %v3479
      %v3485 = vmul.f32 %v2962, %v3479
      %v3486 = vmul.f32 %v2963, %v3479
      %v3487 = vmul.f32 %v2964, %v3479
      %v3488 = vmul.f32 %v2965, %v3479
      %v3489 = vmul.f32 %v2966, %v3479
      %v3490 = vmul.f32 %v2967, %v3479
      %v3491 = vmul.f32 %v2968, %v3479
      %v3492 = vmul.f32 %v2969, %v3479
      %v3493 = vmul.f32 %v2970, %v3479
      %v3494 = vmul.f32 %v2971, %v3479
      %v3495 = vmul.f32 %v2972, %v3479
      %v3496 = vmul.f32 %v2973, %v3479
      %v3497 = vmul.f32 %v2974, %v3479
      %v3498 = vmul.f32 %v2975, %v3479
      %v3499 = vmul.f32 %v2976, %v3479
      %v3500 = vmul.f32 %v2977, %v3479
      %v3501 = vmul.f32 %v2978, %v3479
      %v3502 = vmul.f32 %v2979, %v3479
      %v3503 = vmul.f32 %v2980, %v3479
      %v3504 = vmul.f32 %v2981, %v3479
      %v3505 = vmul.f32 %v2982, %v3479
      %v3506 = vmul.f32 %v2983, %v3479
      %v3507 = vmul.f32 %v2984, %v3479
      %v3508 = vmul.f32 %v2985, %v3479
      %v3509 = vmul.f32 %v2986, %v3479
      %v3510 = vmul.f32 %v2987, %v3479
      %v3511 = vmul.f32 %v2988, %v3479
      %v3512 = vmul.f32 %v2989, %v3479
      %v3513 = vmul.f32 %v2990, %v3479
      %v3514 = vmul.f32 %v2991, %v3479
      %v3515 = vmul.f32 %v2992, %v3479
      %v3516 = vmul.f32 %v2993, %v3479
      %v3517 = vmul.f32 %v2994, %v3479
      %v3518 = vmul.f32 %v2995, %v3479
      %v3519 = vmul.f32 %v2996, %v3479
      %v3520 = vmul.f32 %v2997, %v3479
      %v3521 = vmul.f32 %v2998, %v3479
      %v3522 = vmul.f32 %v2999, %v3479
      %v3523 = vmul.f32 %v3000, %v3479
      %v3524 = vmul.f32 %v3001, %v3479
      %v3525 = vmul.f32 %v3002, %v3479
      %v3526 = vmul.f32 %v3003, %v3479
      %v3527 = vmul.f32 %v3004, %v3479
      %v3528 = vmul.f32 %v3005, %v3479
      %v3529 = vmul.f32 %v3006, %v3479
      %v3530 = vmul.f32 %v3007, %v3479
      %v3531 = vmul.f32 %v3008, %v3479
      %v3532 = vmul.f32 %v3009, %v3479
      %v3533 = vmul.f32 %v3010, %v3479
      %v3534 = vmul.f32 %v3011, %v3479
      %v3535 = vmul.f32 %v3012, %v3479
      %v3536 = vmul.f32 %v3013, %v3479
      %v3537 = vmul.f32 %v3014, %v3479
      %v3538 = vmul.f32 %v3015, %v3479
      %v3539 = vmul.f32 %v3016, %v3479
      %v3540 = vmul.f32 %v3017, %v3479
      %v3541 = vmul.f32 %v3018, %v3479
      %v3542 = vmul.f32 %v3019, %v3479
      %v3543 = vmul.f32 %v3020, %v3479
      %v3544 = vmul.f32 %v3021, %v3479
      %v3545 = vmul.f32 %v3022, %v3479
      %v3546 = vmul.f32 %v3023, %v3479
      %v3547 = vmul.f32 %v3024, %v3479
      %v3548 = vmul.f32 %v3025, %v3479
      %v3549 = vmul.f32 %v3026, %v3479
      %v3550 = vmul.f32 %v3027, %v3479
      %v3551 = vmul.f32 %v3028, %v3479
      %v3552 = vmul.f32 %v3029, %v3479
      %v3553 = vmul.f32 %v3030, %v3479
      %v3554 = vmul.f32 %v3031, %v3479
      %v3555 = vmul.f32 %v3032, %v3479
      %v3556 = vmul.f32 %v3033, %v3479
      %v3557 = vmul.f32 %v3034, %v3479
      %v3558 = vmul.f32 %v3035, %v3479
      %v3559 = vmul.f32 %v3036, %v3479
      %v3560 = vmul.f32 %v3037, %v3479
      %v3561 = vmul.f32 %v3038, %v3479
      %v3562 = vmul.f32 %v3039, %v3479
      %v3563 = vmul.f32 %v3040, %v3479
      %v3564 = vmul.f32 %v3041, %v3479
      %v3565 = vmul.f32 %v3042, %v3479
      %v3566 = vmul.f32 %v3043, %v3479
      %v3567 = vmul.f32 %v3044, %v3479
      %v3568 = vmul.f32 %v3045, %v3479
      %v3569 = vmul.f32 %v3046, %v3479
      %v3570 = vmul.f32 %v3047, %v3479
      %v3571 = vmul.f32 %v3048, %v3479
      %v3572 = vmul.f32 %v3049, %v3479
      %v3573 = vmul.f32 %v3050, %v3479
      %v3574 = vmul.f32 %v3051, %v3479
      %v3575 = vmul.f32 %v3052, %v3479
      %v3576 = vmul.f32 %v3053, %v3479
      %v3577 = vmul.f32 %v3054, %v3479
      %v3578 = vmul.f32 %v3055, %v3479
      %v3579 = vmul.f32 %v3056, %v3479
      %v3580 = vmul.f32 %v3057, %v3479
      %v3581 = vmul.f32 %v3058, %v3479
      %v3582 = vmul.f32 %v3059, %v3479
      %v3583 = vmul.f32 %v3060, %v3479
      %v3584 = vmul.f32 %v3061, %v3479
      %v3585 = vmul.f32 %v3062, %v3479
      %v3586 = vmul.f32 %v3063, %v3479
      %v3587 = vmul.f32 %v3064, %v3479
      %v3588 = vmul.f32 %v3065, %v3479
      %v3589 = vmul.f32 %v3066, %v3479
      %v3590 = vmul.f32 %v3067, %v3479
      %v3591 = vmul.f32 %v3068, %v3479
      %v3592 = vmul.f32 %v3069, %v3479
      %v3593 = vmul.f32 %v3070, %v3479
      %v3594 = vmul.f32 %v3071, %v3479
      %v3595 = vmul.f32 %v3072, %v3479
      %v3596 = vmul.f32 %v3073, %v3479
      %v3597 = vmul.f32 %v3074, %v3479
      %v3598 = vmul.f32 %v3075, %v3479
      %v3599 = vmul.f32 %v3076, %v3479
      %v3600 = vmul.f32 %v3077, %v3479
      %v3601 = vmul.f32 %v3078, %v3479
      %v3602 = vmul.f32 %v3079, %v3479
      %v3603 = vmul.f32 %v3080, %v3479
      %v3604 = vmul.f32 %v3081, %v3479
      %v3605 = vmul.f32 %v3082, %v3479
      %v3606 = vmul.f32 %v3083, %v3479
      %v3607 = vmul.f32 %v3084, %v3479
      %3608 = vst [vmem:[%s197] sm:$0xff] %v3480
      %3609 = vst [vmem:[%s197 + $0x8] sm:$0xff] %v3481
      %3610 = vst [vmem:[%s197 + $0x10] sm:$0xff] %v3482
      %3611 = vst [vmem:[%s197 + $0x18] sm:$0xff] %v3483
      %3612 = vst [vmem:[%s197 + $0x20] sm:$0xff] %v3484
      %3613 = vst [vmem:[%s197 + $0x28] sm:$0xff] %v3485
      %3614 = vst [vmem:[%s197 + $0x30] sm:$0xff] %v3486
      %3615 = vst [vmem:[%s197 + $0x38] sm:$0xff] %v3487
      %3616 = vst [vmem:[%s197 + $0x40] sm:$0xff] %v3488
      %3617 = vst [vmem:[%s197 + $0x48] sm:$0xff] %v3489
      %3618 = vst [vmem:[%s197 + $0x50] sm:$0xff] %v3490
      %3619 = vst [vmem:[%s197 + $0x58] sm:$0xff] %v3491
      %3620 = vst [vmem:[%s197 + $0x60] sm:$0xff] %v3492
      %3621 = vst [vmem:[%s197 + $0x68] sm:$0xff] %v3493
      %3622 = vst [vmem:[%s197 + $0x70] sm:$0xff] %v3494
      %3623 = vst [vmem:[%s197 + $0x78] sm:$0xff] %v3495
      %3624 = vst [vmem:[%s197 + $0x80] sm:$0xff] %v3496
      %3625 = vst [vmem:[%s197 + $0x88] sm:$0xff] %v3497
      %3626 = vst [vmem:[%s197 + $0x90] sm:$0xff] %v3498
      %3627 = vst [vmem:[%s197 + $0x98] sm:$0xff] %v3499
      %3628 = vst [vmem:[%s197 + $0xa0] sm:$0xff] %v3500
      %3629 = vst [vmem:[%s197 + $0xa8] sm:$0xff] %v3501
      %3630 = vst [vmem:[%s197 + $0xb0] sm:$0xff] %v3502
      %3631 = vst [vmem:[%s197 + $0xb8] sm:$0xff] %v3503
      %3632 = vst [vmem:[%s197 + $0xc0] sm:$0xff] %v3504
      %3633 = vst [vmem:[%s197 + $0xc8] sm:$0xff] %v3505
      %3634 = vst [vmem:[%s197 + $0xd0] sm:$0xff] %v3506
      %3635 = vst [vmem:[%s197 + $0xd8] sm:$0xff] %v3507
      %3636 = vst [vmem:[%s197 + $0xe0] sm:$0xff] %v3508
      %3637 = vst [vmem:[%s197 + $0xe8] sm:$0xff] %v3509
      %3638 = vst [vmem:[%s197 + $0xf0] sm:$0xff] %v3510
      %3639 = vst [vmem:[%s197 + $0xf8] sm:$0xff] %v3511
      %3640 = vst [vmem:[%s197 + $0x100] sm:$0xff] %v3512
      %3641 = vst [vmem:[%s197 + $0x108] sm:$0xff] %v3513
      %3642 = vst [vmem:[%s197 + $0x110] sm:$0xff] %v3514
      %3643 = vst [vmem:[%s197 + $0x118] sm:$0xff] %v3515
      %3644 = vst [vmem:[%s197 + $0x120] sm:$0xff] %v3516
      %3645 = vst [vmem:[%s197 + $0x128] sm:$0xff] %v3517
      %3646 = vst [vmem:[%s197 + $0x130] sm:$0xff] %v3518
      %3647 = vst [vmem:[%s197 + $0x138] sm:$0xff] %v3519
      %3648 = vst [vmem:[%s197 + $0x140] sm:$0xff] %v3520
      %3649 = vst [vmem:[%s197 + $0x148] sm:$0xff] %v3521
      %3650 = vst [vmem:[%s197 + $0x150] sm:$0xff] %v3522
      %3651 = vst [vmem:[%s197 + $0x158] sm:$0xff] %v3523
      %3652 = vst [vmem:[%s197 + $0x160] sm:$0xff] %v3524
      %3653 = vst [vmem:[%s197 + $0x168] sm:$0xff] %v3525
      %3654 = vst [vmem:[%s197 + $0x170] sm:$0xff] %v3526
      %3655 = vst [vmem:[%s197 + $0x178] sm:$0xff] %v3527
      %3656 = vst [vmem:[%s197 + $0x180] sm:$0xff] %v3528
      %3657 = vst [vmem:[%s197 + $0x188] sm:$0xff] %v3529
      %3658 = vst [vmem:[%s197 + $0x190] sm:$0xff] %v3530
      %3659 = vst [vmem:[%s197 + $0x198] sm:$0xff] %v3531
      %3660 = vst [vmem:[%s197 + $0x1a0] sm:$0xff] %v3532
      %3661 = vst [vmem:[%s197 + $0x1a8] sm:$0xff] %v3533
      %3662 = vst [vmem:[%s197 + $0x1b0] sm:$0xff] %v3534
      %3663 = vst [vmem:[%s197 + $0x1b8] sm:$0xff] %v3535
      %3664 = vst [vmem:[%s197 + $0x1c0] sm:$0xff] %v3536
      %3665 = vst [vmem:[%s197 + $0x1c8] sm:$0xff] %v3537
      %3666 = vst [vmem:[%s197 + $0x1d0] sm:$0xff] %v3538
      %3667 = vst [vmem:[%s197 + $0x1d8] sm:$0xff] %v3539
      %3668 = vst [vmem:[%s197 + $0x1e0] sm:$0xff] %v3540
      %3669 = vst [vmem:[%s197 + $0x1e8] sm:$0xff] %v3541
      %3670 = vst [vmem:[%s197 + $0x1f0] sm:$0xff] %v3542
      %3671 = vst [vmem:[%s197 + $0x1f8] sm:$0xff] %v3543
      %3672 = vst [vmem:[%s197 + $0x200] sm:$0xff] %v3544
      %3673 = vst [vmem:[%s197 + $0x208] sm:$0xff] %v3545
      %3674 = vst [vmem:[%s197 + $0x210] sm:$0xff] %v3546
      %3675 = vst [vmem:[%s197 + $0x218] sm:$0xff] %v3547
      %3676 = vst [vmem:[%s197 + $0x220] sm:$0xff] %v3548
      %3677 = vst [vmem:[%s197 + $0x228] sm:$0xff] %v3549
      %3678 = vst [vmem:[%s197 + $0x230] sm:$0xff] %v3550
      %3679 = vst [vmem:[%s197 + $0x238] sm:$0xff] %v3551
      %3680 = vst [vmem:[%s197 + $0x240] sm:$0xff] %v3552
      %3681 = vst [vmem:[%s197 + $0x248] sm:$0xff] %v3553
      %3682 = vst [vmem:[%s197 + $0x250] sm:$0xff] %v3554
      %3683 = vst [vmem:[%s197 + $0x258] sm:$0xff] %v3555
      %3684 = vst [vmem:[%s197 + $0x260] sm:$0xff] %v3556
      %3685 = vst [vmem:[%s197 + $0x268] sm:$0xff] %v3557
      %3686 = vst [vmem:[%s197 + $0x270] sm:$0xff] %v3558
      %3687 = vst [vmem:[%s197 + $0x278] sm:$0xff] %v3559
      %3688 = vst [vmem:[%s197 + $0x280] sm:$0xff] %v3560
      %3689 = vst [vmem:[%s197 + $0x288] sm:$0xff] %v3561
      %3690 = vst [vmem:[%s197 + $0x290] sm:$0xff] %v3562
      %3691 = vst [vmem:[%s197 + $0x298] sm:$0xff] %v3563
      %3692 = vst [vmem:[%s197 + $0x2a0] sm:$0xff] %v3564
      %3693 = vst [vmem:[%s197 + $0x2a8] sm:$0xff] %v3565
      %3694 = vst [vmem:[%s197 + $0x2b0] sm:$0xff] %v3566
      %3695 = vst [vmem:[%s197 + $0x2b8] sm:$0xff] %v3567
      %3696 = vst [vmem:[%s197 + $0x2c0] sm:$0xff] %v3568
      %3697 = vst [vmem:[%s197 + $0x2c8] sm:$0xff] %v3569
      %3698 = vst [vmem:[%s197 + $0x2d0] sm:$0xff] %v3570
      %3699 = vst [vmem:[%s197 + $0x2d8] sm:$0xff] %v3571
      %3700 = vst [vmem:[%s197 + $0x2e0] sm:$0xff] %v3572
      %3701 = vst [vmem:[%s197 + $0x2e8] sm:$0xff] %v3573
      %3702 = vst [vmem:[%s197 + $0x2f0] sm:$0xff] %v3574
      %3703 = vst [vmem:[%s197 + $0x2f8] sm:$0xff] %v3575
      %3704 = vst [vmem:[%s197 + $0x300] sm:$0xff] %v3576
      %3705 = vst [vmem:[%s197 + $0x308] sm:$0xff] %v3577
      %3706 = vst [vmem:[%s197 + $0x310] sm:$0xff] %v3578
      %3707 = vst [vmem:[%s197 + $0x318] sm:$0xff] %v3579
      %3708 = vst [vmem:[%s197 + $0x320] sm:$0xff] %v3580
      %3709 = vst [vmem:[%s197 + $0x328] sm:$0xff] %v3581
      %3710 = vst [vmem:[%s197 + $0x330] sm:$0xff] %v3582
      %3711 = vst [vmem:[%s197 + $0x338] sm:$0xff] %v3583
      %3712 = vst [vmem:[%s197 + $0x340] sm:$0xff] %v3584
      %3713 = vst [vmem:[%s197 + $0x348] sm:$0xff] %v3585
      %3714 = vst [vmem:[%s197 + $0x350] sm:$0xff] %v3586
      %3715 = vst [vmem:[%s197 + $0x358] sm:$0xff] %v3587
      %3716 = vst [vmem:[%s197 + $0x360] sm:$0xff] %v3588
      %3717 = vst [vmem:[%s197 + $0x368] sm:$0xff] %v3589
      %3718 = vst [vmem:[%s197 + $0x370] sm:$0xff] %v3590
      %3719 = vst [vmem:[%s197 + $0x378] sm:$0xff] %v3591
      %3720 = vst [vmem:[%s197 + $0x380] sm:$0xff] %v3592
      %3721 = vst [vmem:[%s197 + $0x388] sm:$0xff] %v3593
      %3722 = vst [vmem:[%s197 + $0x390] sm:$0xff] %v3594
      %3723 = vst [vmem:[%s197 + $0x398] sm:$0xff] %v3595
      %3724 = vst [vmem:[%s197 + $0x3a0] sm:$0xff] %v3596
      %3725 = vst [vmem:[%s197 + $0x3a8] sm:$0xff] %v3597
      %3726 = vst [vmem:[%s197 + $0x3b0] sm:$0xff] %v3598
      %3727 = vst [vmem:[%s197 + $0x3b8] sm:$0xff] %v3599
      %3728 = vst [vmem:[%s197 + $0x3c0] sm:$0xff] %v3600
      %3729 = vst [vmem:[%s197 + $0x3c8] sm:$0xff] %v3601
      %3730 = vst [vmem:[%s197 + $0x3d0] sm:$0xff] %v3602
      %3731 = vst [vmem:[%s197 + $0x3d8] sm:$0xff] %v3603
      %3732 = vst [vmem:[%s197 + $0x3e0] sm:$0xff] %v3604
      %3733 = vst [vmem:[%s197 + $0x3e8] sm:$0xff] %v3605
      %3734 = vst [vmem:[%s197 + $0x3f0] sm:$0xff] %v3606
      %3735 = vst [vmem:[%s197 + $0x3f8] sm:$0xf] %v3607
      %p3736 = scmp.lt.s32.totalorder %s15, 1
      %s3737 = scalar_select %p3736, %s15, 1
      %s3738 = smul.addr %s3737, 128
      %s3739 = smul.addr %s3738, 8
      %s3740 = scalar_lea.vmem %s4, %s3739
      // Predicated region
      $region37: #{molecular_icvae_forward.13} parent=35 // pred_check
        %p3741 = pneg %p122
      $region38: #{molecular_icvae_forward.13} parent=35 // pred_check_branch
        %3743 = sbr.rel (%p3741) target = $region40
      $region39: #{molecular_icvae_forward.13} parent=35 // pred_region
        _
      $region40: #{molecular_icvae_forward.13} parent=35 // pred_fallthru
        _
    $region36: #{molecular_icvae_forward.13} parent=5 // pred_fallthru
      _
    %p3744 = scmp.le.s32.totalorder 2, %s10
    // Predicated region
    $region41: #{molecular_icvae_forward.13} parent=5 // pred_check
      %p3745 = pneg %p3744
    $region42: #{molecular_icvae_forward.13} parent=5 // pred_check_branch
      %3747 = sbr.rel (%p3745) target = $region44
    $region43: #{molecular_icvae_forward.13} parent=5 // pred_region
      %s3748 = ssub.s32 %s10, 2
      // Predicated region
      $region45: #{molecular_icvae_forward.13} parent=43 // pred_check
        %p3749 = pneg %p128
      $region46: #{molecular_icvae_forward.13} parent=43 // pred_check_branch
        %3751 = sbr.rel (%p3749) target = $region48
      $region47: #{molecular_icvae_forward.13} parent=43 // pred_region
        %p3752 = scmp.lt.s32.totalorder %s16, 1
        %s3753 = scalar_select %p3752, %s16, 1
        %s3754 = smul.addr %s3753, 128
        %s3755 = smul.addr %s3754, 8
        %s3756 = scalar_lea.vmem %s4, %s3755
      $region48: #{molecular_icvae_forward.13} parent=43 // pred_fallthru
        _
    $region44: #{molecular_icvae_forward.13} parent=5 // pred_fallthru
      _
  $region6: #{molecular_icvae_forward.13} parent=0 // loop_footer
    %s14 = sadd.s32 1, %s10
  $region7: #{molecular_icvae_forward.13} parent=0 // loop_footer_branch
    %9 = sbr.rel target = $region3
  $region8: #{molecular_icvae_forward.13} parent=0 // loop_exit
    _

</llo_original>
